<compile_context>
chip_gen: v7x
topology: tpu7x:2x2x1
jax: 0.10.0
libtpu: 0.0.40
codegen_flags: <defaults>
</compile_context>

<pallas_src>
import functools

import jax
import jax.numpy as jnp
from jax.experimental import pallas as pl
from jax.experimental.pallas import tpu as pltpu

VMEM_LIMIT = 32 * 1024 * 1024   # safe scoped-VMEM cap on v5e / v6e / v7x
TM_CAP = 512                    # row-tile cap (fits v7x 64 MiB with double-buffering)
TK_CAP = 512                    # K-tile cap


def _pick_tile(dim, cap, mult):
    """Largest tile <= cap dividing dim; multiple of `mult` when smaller than dim."""
    if dim <= cap:
        return dim
    t = (cap // mult) * mult
    while t >= mult:
        if dim % t == 0:
            return t
        t -= mult
    return dim


# ---------------------- fused matmul (+ epilogue, + BN stats) ---------------------- #

def _fused_matmul_kernel(pre_act, has_bias, post_tanh, want_stats, *refs):
    it = iter(refs)
    a_ref = next(it)
    b_ref = next(it)
    bias_ref = next(it) if has_bias else None
    out_ref = next(it)
    if want_stats:
        sum_ref = next(it)
        sq_ref = next(it)
    acc_ref = next(it)

    k = pl.program_id(2)
    nk = pl.num_programs(2)

    @pl.when(k == 0)
    def _():
        acc_ref[...] = jnp.zeros_like(acc_ref)

    if want_stats:
        first = jnp.logical_and(
            jnp.logical_and(pl.program_id(0) == 0, pl.program_id(1) == 0), k == 0)

        @pl.when(first)
        def _():
            sum_ref[...] = jnp.zeros_like(sum_ref)
            sq_ref[...] = jnp.zeros_like(sq_ref)

    a = a_ref[0]                                   # (tm, tk) bf16
    if pre_act == "lrelu":
        a = jnp.where(a >= 0, a, a * 0.2)
    elif pre_act == "relu":
        a = jnp.maximum(a, 0.0)
    acc_ref[...] += jnp.dot(a, b_ref[0], preferred_element_type=jnp.float32)

    @pl.when(k == nk - 1)
    def _():
        y = acc_ref[...]
        if has_bias:
            y = y + bias_ref[...]
        if post_tanh:
            y = jnp.tanh(y)
        out_ref[0] = y.astype(out_ref.dtype)
        if want_stats:
            sum_ref[...] += jnp.sum(y, axis=0, keepdims=True)
            sq_ref[...] += jnp.sum(y * y, axis=0, keepdims=True)


def fused_matmul(a, b, *, bias=None, pre_act=None, post_tanh=False, want_stats=False):
    """a: [P, M, K], b: [P, K, N] -> f32 [P, M, N] (+ per-channel sum/sumsq)."""
    P, M, K = a.shape
    N = b.shape[-1]
    a = a.astype(jnp.bfloat16)
    b = b.astype(jnp.bfloat16)
    tm = _pick_tile(M, TM_CAP, 8)
    tk = _pick_tile(K, TK_CAP, 128)
    grid = (P, M // tm, K // tk)

    in_specs = [
        pl.BlockSpec((1, tm, tk), lambda p, m, k: (p, m, k)),
        pl.BlockSpec((1, tk, N), lambda p, m, k: (p, k, 0)),
    ]
    inputs = [a, b]
    has_bias = bias is not None
    if has_bias:
        in_specs.append(pl.BlockSpec((1, N), lambda p, m, k: (0, 0)))
        inputs.append(bias.reshape(1, N).astype(jnp.float32))

    out_spec_main = pl.BlockSpec((1, tm, N), lambda p, m, k: (p, m, 0))
    if want_stats:
        out_shape = [
            jax.ShapeDtypeStruct((P, M, N), jnp.float32),
            jax.ShapeDtypeStruct((1, N), jnp.float32),
            jax.ShapeDtypeStruct((1, N), jnp.float32),
        ]
        out_specs = [
            out_spec_main,
            pl.BlockSpec((1, N), lambda p, m, k: (0, 0)),
            pl.BlockSpec((1, N), lambda p, m, k: (0, 0)),
        ]
        semantics = ("arbitrary", "arbitrary", "arbitrary")   # stats accumulate over P, M
    else:
        out_shape = jax.ShapeDtypeStruct((P, M, N), jnp.float32)
        out_specs = out_spec_main
        semantics = ("parallel", "parallel", "arbitrary")

    kernel = functools.partial(_fused_matmul_kernel, pre_act, has_bias, post_tanh,
                               want_stats)
    cost = pl.CostEstimate(
        flops=2 * P * M * K * N,
        transcendentals=(P * M * N if post_tanh else 0),
        bytes_accessed=(a.size + b.size) * 2 + P * M * N * 4 + (N * 4 if has_bias else 0),
    )
    return pl.pallas_call(
        kernel,
        out_shape=out_shape,
        grid=grid,
        in_specs=in_specs,
        out_specs=out_specs,
        scratch_shapes=[pltpu.VMEM((tm, N), jnp.float32)],
        compiler_params=pltpu.CompilerParams(
            dimension_semantics=semantics, vmem_limit_bytes=VMEM_LIMIT),
        cost_estimate=cost,
    )(*inputs)


# ----------------------- BatchNorm apply (+ fused skip concat) --------------------- #

def _bn_scale_shift(ssum, ssq, count, gamma, beta, eps=1e-5):
    mean = ssum / count
    var = jnp.maximum(ssq / count - mean * mean, 0.0)       # biased (train-mode) var
    scale = gamma.reshape(1, -1).astype(jnp.float32) * jax.lax.rsqrt(var + eps)
    shift = beta.reshape(1, -1).astype(jnp.float32) - mean * scale
    return scale, shift


def _bn_apply_kernel(x_ref, s_ref, t_ref, o_ref):
    o_ref[...] = x_ref[...] * s_ref[...] + t_ref[...]


def _bn_cat_kernel(skip_ref, x_ref, s_ref, t_ref, o_ref):
    y = x_ref[...] * s_ref[...] + t_ref[...]
    o_ref[...] = jnp.concatenate([skip_ref[...], y], axis=1)   # torch.cat([x, .], 1)


def bn_apply_concat(skip, inner, scale, shift):
    """Apply BN scale/shift to `inner`; if `skip` given, also fuse the skip concat."""
    n, h, w, ci = inner.shape
    M = n * h * w
    inner2 = inner.reshape(M, ci)
    tm = _pick_tile(M, 1024, 8)
    grid = (M // tm,)
    cp = pltpu.CompilerParams(dimension_semantics=("parallel",),
                              vmem_limit_bytes=VMEM_LIMIT)
    if skip is None:
        out = pl.pallas_call(
            _bn_apply_kernel,
            out_shape=jax.ShapeDtypeStruct((M, ci), jnp.float32),
            grid=grid,
            in_specs=[pl.BlockSpec((tm, ci), lambda m: (m, 0)),
                      pl.BlockSpec((1, ci), lambda m: (0, 0)),
                      pl.BlockSpec((1, ci), lambda m: (0, 0))],
            out_specs=pl.BlockSpec((tm, ci), lambda m: (m, 0)),
            compiler_params=cp,
        )(inner2, scale, shift)
        return out.reshape(n, h, w, ci)
    cs = skip.shape[-1]
    skip2 = skip.reshape(M, cs).astype(jnp.float32)
    out = pl.pallas_call(
        _bn_cat_kernel,
        out_shape=jax.ShapeDtypeStruct((M, cs + ci), jnp.float32),
        grid=grid,
        in_specs=[pl.BlockSpec((tm, cs), lambda m: (m, 0)),
                  pl.BlockSpec((tm, ci), lambda m: (m, 0)),
                  pl.BlockSpec((1, ci), lambda m: (0, 0)),
                  pl.BlockSpec((1, ci), lambda m: (0, 0))],
        out_specs=pl.BlockSpec((tm, cs + ci), lambda m: (m, 0)),
        compiler_params=cp,
    )(skip2, inner2, scale, shift)
    return out.reshape(n, h, w, cs + ci)


# ------------------------ conv / conv-transpose lowerings -------------------------- #

def conv4s2(x, w_oihw, *, pre_act=None, want_stats=False):
    """Conv2d(Cin,Cout,k=4,s=2,p=1,bias=False) with fused pre-activation (+BN stats)."""
    n, h, wd, c = x.shape
    cout = w_oihw.shape[0]
    ho, wo = h // 2, wd // 2
    xp = jnp.pad(x.astype(jnp.bfloat16), ((0, 0), (1, 1), (1, 1), (0, 0)))
    cols = []
    for kh in range(4):
        for kw in range(4):
            cols.append(xp[:, kh:kh + 2 * ho:2, kw:kw + 2 * wo:2, :])
    patches = jnp.stack(cols, axis=-2).reshape(n * ho * wo, 16 * c)[None]
    wmat = jnp.transpose(w_oihw, (2, 3, 1, 0)).reshape(16 * c, cout)[None]
    res = fused_matmul(patches, wmat, pre_act=pre_act, want_stats=want_stats)
    if want_stats:
        y, ssum, ssq = res
        return y.reshape(n, ho, wo, cout), ssum, ssq, n * ho * wo
    return res.reshape(n, ho, wo, cout)


def convT4s2(x, w_iohw, *, bias=None, pre_act="relu", post_tanh=False,
             want_stats=False):
    """ConvTranspose2d(k=4,s=2,p=1) via 4-phase sub-pixel decomposition.

    y[2m+py, 2l+px] = sum_{a,b} x[m+py-a, l+px-b] * W[:, :, (1-py)+2a, (1-px)+2b]
    -> one stride-1 matmul with a 2x2 sub-kernel per output parity (no zeros)."""
    n, h, wd, c = x.shape
    cout = w_iohw.shape[1]
    xp = jnp.pad(x.astype(jnp.bfloat16), ((0, 0), (1, 1), (1, 1), (0, 0)))
    a_list, b_list = [], []
    for py in (0, 1):
        for px in (0, 1):
            cols = []
            for a_ in (0, 1):
                for b_ in (0, 1):
                    ys, xs = py + 1 - a_, px + 1 - b_
                    cols.append(xp[:, ys:ys + h, xs:xs + wd, :])
            a_list.append(jnp.stack(cols, axis=-2).reshape(n * h * wd, 4 * c))
            wsub = w_iohw[:, :, (1 - py)::2, (1 - px)::2]        # [Cin, Cout, 2, 2]
            b_list.append(jnp.transpose(wsub, (2, 3, 0, 1)).reshape(4 * c, cout))
    A = jnp.stack(a_list, axis=0)                                # [4, N*H*W, 4*Cin]
    B = jnp.stack(b_list, axis=0)                                # [4, 4*Cin, Cout]
    res = fused_matmul(A, B, bias=bias, pre_act=pre_act, post_tanh=post_tanh,
                       want_stats=want_stats)
    y_ph = (res[0] if want_stats else res).reshape(4, n, h, wd, cout)
    row0 = jnp.stack([y_ph[0], y_ph[1]], axis=3)                 # py=0, interleave W
    row1 = jnp.stack([y_ph[2], y_ph[3]], axis=3)                 # py=1
    y = jnp.stack([row0, row1], axis=2).reshape(n, 2 * h, 2 * wd, cout)
    if want_stats:
        return y, res[1], res[2], 4 * n * h * wd
    return y


# --------------------------------- Unet structure ---------------------------------- #

def make_unet_params(key, input_c=1, output_c=2, n_down=5, num_filters=8):
    keys = iter(jax.random.split(key, 256))

    def nrm(shape):
        return jax.random.normal(next(keys), shape, jnp.float32) * 0.05

    def block(nf, ni, submodule=None, input_c=None, dropout=False,
              innermost=False, outermost=False):
        if input_c is None:
            input_c = nf
        p = {"outermost": outermost, "innermost": innermost,
             "dropout": dropout, "submodule": submodule}
        p["downconv_w"] = nrm((ni, input_c, 4, 4))               # Conv2d weight (OIHW)
        if outermost:
            p["upconv_w"] = nrm((ni * 2, nf, 4, 4))              # ConvT weight (IOHW)
            p["upconv_b"] = nrm((nf,))
        elif innermost:
            p["upconv_w"] = nrm((ni, nf, 4, 4))
            p["upnorm_g"] = jnp.ones((nf,), jnp.float32)
            p["upnorm_b"] = jnp.zeros((nf,), jnp.float32)
        else:
            p["downnorm_g"] = jnp.ones((ni,), jnp.float32)
            p["downnorm_b"] = jnp.zeros((ni,), jnp.float32)
            p["upconv_w"] = nrm((ni * 2, nf, 4, 4))
            p["upnorm_g"] = jnp.ones((nf,), jnp.float32)
            p["upnorm_b"] = jnp.zeros((nf,), jnp.float32)
        return p

    ub = block(num_filters * 8, num_filters * 8, innermost=True)
    for _ in range(n_down - 5):
        ub = block(num_filters * 8, num_filters * 8, submodule=ub, dropout=True)
    out_filters = num_filters * 8
    for _ in range(3):
        ub = block(out_filters // 2, out_filters, submodule=ub)
        out_filters //= 2
    return block(output_c, out_filters, input_c=input_c, submodule=ub,
                 outermost=True)


def apply_block(p, x):
    """x: NHWC.  Mirrors UnetBlock.forward (activations/bias/BN fused into matmuls)."""
    if p["outermost"]:
        inner = conv4s2(x, p["downconv_w"], pre_act=None)               # downconv
        inner = apply_block(p["submodule"], inner)
        return convT4s2(inner, p["upconv_w"], bias=p["upconv_b"],       # uprelu+upconv
                        pre_act="relu", post_tanh=True)                 # +bias+tanh
    if p["innermost"]:
        inner = conv4s2(x, p["downconv_w"], pre_act="lrelu")            # downrelu+conv
        y, ssum, ssq, cnt = convT4s2(inner, p["upconv_w"],              # uprelu+upconv
                                     pre_act="relu", want_stats=True)
        s, t = _bn_scale_shift(ssum, ssq, cnt, p["upnorm_g"], p["upnorm_b"])
        return bn_apply_concat(x, y, s, t)                              # upnorm + cat
    # middle block
    inner, dsum, dsq, dcnt = conv4s2(x, p["downconv_w"],                # downrelu+conv
                                     pre_act="lrelu", want_stats=True)
    ds, dt = _bn_scale_shift(dsum, dsq, dcnt, p["downnorm_g"], p["downnorm_b"])
    inner = bn_apply_concat(None, inner, ds, dt)                        # downnorm
    inner = apply_block(p["submodule"], inner)
    y, usum, usq, ucnt = convT4s2(inner, p["upconv_w"],                 # uprelu+upconv
                                  pre_act="relu", want_stats=True)
    us, ut = _bn_scale_shift(usum, usq, ucnt, p["upnorm_g"], p["upnorm_b"])
    # TODO(synk): nn.Dropout(0.5) (train mode) for middle blocks (only exists when
    # n_down > 5) is not applied here.
    return bn_apply_concat(x, y, us, ut)                                # upnorm + cat


def unet_forward(params, x_nchw):
    x = jnp.transpose(x_nchw, (0, 2, 3, 1))       # NCHW -> NHWC
    y = apply_block(params, x)
    return jnp.transpose(y, (0, 3, 1, 2))         # NHWC -> NCHW


# -------------------------------------- main --------------------------------------- #

if __name__ == "__main__":
    key = jax.random.PRNGKey(0)
    kx, kp = jax.random.split(key)

    # Small, structure-consistent instantiation: Unet(input_c=1, output_c=2,
    # n_down=5, num_filters=8) on a 32x32 input (32 = 2**n_down).
    x = jax.random.normal(kx, (2, 1, 32, 32), jnp.float32)     # NCHW like PyTorch
    params = make_unet_params(kp, input_c=1, output_c=2, n_down=5, num_filters=8)

    fwd = jax.jit(lambda xx: unet_forward(params, xx))
    y = jax.block_until_ready(fwd(x))

    assert y.shape == (2, 2, 32, 32), y.shape
    assert bool(jnp.all(jnp.isfinite(y)))
    print("KERNEL_OK")
</pallas_src>

<mosaic_0001>
module attributes {stable_mosaic.version = 11 : i64} {
  func.func @_fused_matmul_kernel(%arg0: i32, %arg1: i32, %arg2: i32, %arg3: memref<1x512x16xbf16, #tpu.memory_space<vmem>>, %arg4: memref<1x16x8xbf16, #tpu.memory_space<vmem>>, %arg5: memref<1x512x8xf32, #tpu.memory_space<vmem>>, %arg6: memref<512x8xf32, #tpu.memory_space<vmem>>) attributes {dimension_semantics = [#tpu.dimension_semantics<parallel>, #tpu.dimension_semantics<parallel>, #tpu.dimension_semantics<arbitrary>], iteration_bounds = array<i64: 1, 1, 1>, scalar_prefetch = 0 : i64, scratch_operands = 1 : i64, tpu.core_type = #tpu.core_type<tc>, window_params = [{transform_indices = @transform_0, window_bounds = array<i64: 1, 512, 16>}, {transform_indices = @transform_1, window_bounds = array<i64: 1, 16, 8>}, {transform_indices = @transform_2, window_bounds = array<i64: 1, 512, 8>}]} {
    %c0_i32 = arith.constant 0 : i32
    %0 = arith.cmpi eq, %arg2, %c0_i32 : i32
    %1 = arith.extui %0 : i1 to i32
    %c0_i32_0 = arith.constant 0 : i32
    %2 = arith.cmpi ne, %1, %c0_i32_0 : i32
    scf.if %2 {
      %cst_12 = arith.constant 0.000000e+00 : f32
      %14 = vector.broadcast %cst_12 : f32 to vector<512x8xf32>
      %c0_13 = arith.constant 0 : index
      %c0_14 = arith.constant 0 : index
      %15 = vector.load %arg6[%c0_13, %c0_14] : memref<512x8xf32, #tpu.memory_space<vmem>>, vector<512x8xf32>
      tpu.vector_store %arg6[%c0_13, %c0_14], %14 {strides = array<i32>} : memref<512x8xf32, #tpu.memory_space<vmem>>, vector<512x8xf32>,
    } else {
    }
    %c0 = arith.constant 0 : index
    %c0_1 = arith.constant 0 : index
    %c0_2 = arith.constant 0 : index
    %3 = vector.load %arg3[%c0, %c0_1, %c0_2] : memref<1x512x16xbf16, #tpu.memory_space<vmem>>, vector<1x512x16xbf16>
    %4 = vector.shape_cast %3 : vector<1x512x16xbf16> to vector<512x16xbf16>
    %c0_3 = arith.constant 0 : index
    %c0_4 = arith.constant 0 : index
    %5 = vector.load %arg6[%c0_3, %c0_4] : memref<512x8xf32, #tpu.memory_space<vmem>>, vector<512x8xf32>
    %c0_5 = arith.constant 0 : index
    %c0_6 = arith.constant 0 : index
    %c0_7 = arith.constant 0 : index
    %6 = vector.load %arg4[%c0_5, %c0_6, %c0_7] : memref<1x16x8xbf16, #tpu.memory_space<vmem>>, vector<1x16x8xbf16>
    %7 = vector.shape_cast %6 : vector<1x16x8xbf16> to vector<16x8xbf16>
    %cst = arith.constant dense<0.000000e+00> : vector<512x8xf32>
    %8 = tpu.matmul %4, %7, %cst {dimension_numbers = #tpu.dot_dimension_numbers<[1], [0], [0], [1], [0, 0, 1, 1], [], []>} : vector<512x16xbf16>, vector<16x8xbf16>, vector<512x8xf32> -> vector<512x8xf32>
    %9 = arith.addf %5, %8 : vector<512x8xf32>
    %c0_8 = arith.constant 0 : index
    %c0_9 = arith.constant 0 : index
    %10 = vector.load %arg6[%c0_8, %c0_9] : memref<512x8xf32, #tpu.memory_space<vmem>>, vector<512x8xf32>
    tpu.vector_store %arg6[%c0_8, %c0_9], %9 {strides = array<i32>} : memref<512x8xf32, #tpu.memory_space<vmem>>, vector<512x8xf32>,
    %c0_i32_10 = arith.constant 0 : i32
    %11 = arith.cmpi eq, %arg2, %c0_i32_10 : i32
    %12 = arith.extui %11 : i1 to i32
    %c0_i32_11 = arith.constant 0 : i32
    %13 = arith.cmpi ne, %12, %c0_i32_11 : i32
    scf.if %13 {
      %c0_12 = arith.constant 0 : index
      %c0_13 = arith.constant 0 : index
      %14 = vector.load %arg6[%c0_12, %c0_13] : memref<512x8xf32, #tpu.memory_space<vmem>>, vector<512x8xf32>
      %c0_14 = arith.constant 0 : index
      %c0_15 = arith.constant 0 : index
      %c0_16 = arith.constant 0 : index
      %15 = vector.load %arg5[%c0_14, %c0_15, %c0_16] : memref<1x512x8xf32, #tpu.memory_space<vmem>>, vector<1x512x8xf32>
      %16 = vector.shape_cast %15 : vector<1x512x8xf32> to vector<512x8xf32>
      %17 = vector.shape_cast %14 : vector<512x8xf32> to vector<1x512x8xf32>
      tpu.vector_store %arg5[%c0_14, %c0_15, %c0_16], %17 {strides = array<i32>} : memref<1x512x8xf32, #tpu.memory_space<vmem>>, vector<1x512x8xf32>,
    } else {
    }
    return
  }
  func.func @transform_0(%arg0: i32, %arg1: i32, %arg2: i32) -> (i32, i32, i32) {
    %c0_i32 = arith.constant 0 : i32
    return %arg0, %arg1, %arg2 : i32, i32, i32
  }
  func.func @transform_1(%arg0: i32, %arg1: i32, %arg2: i32) -> (i32, i32, i32) {
    %c0_i32 = arith.constant 0 : i32
    %c0_i32_0 = arith.constant 0 : i32
    return %arg0, %arg2, %c0_i32 : i32, i32, i32
  }
  func.func @transform_2(%arg0: i32, %arg1: i32, %arg2: i32) -> (i32, i32, i32) {
    %c0_i32 = arith.constant 0 : i32
    %c0_i32_0 = arith.constant 0 : i32
    return %arg0, %arg1, %c0_i32 : i32, i32, i32
  }
}

module attributes {stable_mosaic.version = 11 : i64} {
  func.func @_fused_matmul_kernel(%arg0: i32, %arg1: i32, %arg2: i32, %arg3: memref<1x128x128xbf16, #tpu.memory_space<vmem>>, %arg4: memref<1x128x16xbf16, #tpu.memory_space<vmem>>, %arg5: memref<1x128x16xf32, #tpu.memory_space<vmem>>, %arg6: memref<1x16xf32, #tpu.memory_space<vmem>>, %arg7: memref<1x16xf32, #tpu.memory_space<vmem>>, %arg8: memref<128x16xf32, #tpu.memory_space<vmem>>) attributes {dimension_semantics = [#tpu.dimension_semantics<arbitrary>, #tpu.dimension_semantics<arbitrary>, #tpu.dimension_semantics<arbitrary>], iteration_bounds = array<i64: 1, 1, 1>, scalar_prefetch = 0 : i64, scratch_operands = 1 : i64, tpu.core_type = #tpu.core_type<tc>, window_params = [{transform_indices = @transform_0, window_bounds = array<i64: 1, 128, 128>}, {transform_indices = @transform_1, window_bounds = array<i64: 1, 128, 16>}, {transform_indices = @transform_2, window_bounds = array<i64: 1, 128, 16>}, {pipeline_mode = #tpu.pipeline_mode<synchronous>, transform_indices = @transform_3, window_bounds = array<i64: 1, 16>}, {pipeline_mode = #tpu.pipeline_mode<synchronous>, transform_indices = @transform_4, window_bounds = array<i64: 1, 16>}]} {
    %c0_i32 = arith.constant 0 : i32
    %0 = arith.cmpi eq, %arg2, %c0_i32 : i32
    %1 = arith.extui %0 : i1 to i32
    %c0_i32_0 = arith.constant 0 : i32
    %2 = arith.cmpi ne, %1, %c0_i32_0 : i32
    scf.if %2 {
      %cst_18 = arith.constant 0.000000e+00 : f32
      %26 = vector.broadcast %cst_18 : f32 to vector<128x16xf32>
      %c0_19 = arith.constant 0 : index
      %c0_20 = arith.constant 0 : index
      %27 = vector.load %arg8[%c0_19, %c0_20] : memref<128x16xf32, #tpu.memory_space<vmem>>, vector<128x16xf32>
      tpu.vector_store %arg8[%c0_19, %c0_20], %26 {strides = array<i32>} : memref<128x16xf32, #tpu.memory_space<vmem>>, vector<128x16xf32>,
    } else {
    }
    %c0_i32_1 = arith.constant 0 : i32
    %3 = arith.cmpi eq, %arg0, %c0_i32_1 : i32
    %c0_i32_2 = arith.constant 0 : i32
    %4 = arith.cmpi eq, %arg1, %c0_i32_2 : i32
    %5 = arith.andi %3, %4 : i1
    %c0_i32_3 = arith.constant 0 : i32
    %6 = arith.cmpi eq, %arg2, %c0_i32_3 : i32
    %7 = arith.andi %5, %6 : i1
    %8 = arith.extui %7 : i1 to i32
    %c0_i32_4 = arith.constant 0 : i32
    %9 = arith.cmpi ne, %8, %c0_i32_4 : i32
    scf.if %9 {
      %cst_18 = arith.constant 0.000000e+00 : f32
      %26 = vector.broadcast %cst_18 : f32 to vector<1x16xf32>
      %c0_19 = arith.constant 0 : index
      %c0_20 = arith.constant 0 : index
      %27 = vector.load %arg6[%c0_19, %c0_20] : memref<1x16xf32, #tpu.memory_space<vmem>>, vector<1x16xf32>
      tpu.vector_store %arg6[%c0_19, %c0_20], %26 {strides = array<i32>} : memref<1x16xf32, #tpu.memory_space<vmem>>, vector<1x16xf32>,
      %cst_21 = arith.constant 0.000000e+00 : f32
      %28 = vector.broadcast %cst_21 : f32 to vector<1x16xf32>
      %c0_22 = arith.constant 0 : index
      %c0_23 = arith.constant 0 : index
      %29 = vector.load %arg7[%c0_22, %c0_23] : memref<1x16xf32, #tpu.memory_space<vmem>>, vector<1x16xf32>
      tpu.vector_store %arg7[%c0_22, %c0_23], %28 {strides = array<i32>} : memref<1x16xf32, #tpu.memory_space<vmem>>, vector<1x16xf32>,
    } else {
    }
    %c0 = arith.constant 0 : index
    %c0_5 = arith.constant 0 : index
    %c0_6 = arith.constant 0 : index
    %10 = vector.load %arg3[%c0, %c0_5, %c0_6] : memref<1x128x128xbf16, #tpu.memory_space<vmem>>, vector<1x128x128xbf16>
    %11 = vector.shape_cast %10 : vector<1x128x128xbf16> to vector<128x128xbf16>
    %cst = arith.constant 0.000000e+00 : bf16
    %12 = vector.broadcast %cst : bf16 to vector<128x128xbf16>
    %13 = arith.cmpf oge, %11, %12 : vector<128x128xbf16>
    %cst_7 = arith.constant 2.001950e-01 : bf16
    %14 = vector.broadcast %cst_7 : bf16 to vector<128x128xbf16>
    %15 = arith.mulf %11, %14 : vector<128x128xbf16>
    %16 = arith.select %13, %11, %15 : vector<128x128xi1>, vector<128x128xbf16>
    %c0_8 = arith.constant 0 : index
    %c0_9 = arith.constant 0 : index
    %17 = vector.load %arg8[%c0_8, %c0_9] : memref<128x16xf32, #tpu.memory_space<vmem>>, vector<128x16xf32>
    %c0_10 = arith.constant 0 : index
    %c0_11 = arith.constant 0 : index
    %c0_12 = arith.constant 0 : index
    %18 = vector.load %arg4[%c0_10, %c0_11, %c0_12] : memref<1x128x16xbf16, #tpu.memory_space<vmem>>, vector<1x128x16xbf16>
    %19 = vector.shape_cast %18 : vector<1x128x16xbf16> to vector<128x16xbf16>
    %cst_13 = arith.constant dense<0.000000e+00> : vector<128x16xf32>
    %20 = tpu.matmul %16, %19, %cst_13 {dimension_numbers = #tpu.dot_dimension_numbers<[1], [0], [0], [1], [0, 0, 1, 1], [], []>} : vector<128x128xbf16>, vector<128x16xbf16>, vector<128x16xf32> -> vector<128x16xf32>
    %21 = arith.addf %17, %20 : vector<128x16xf32>
    %c0_14 = arith.constant 0 : index
    %c0_15 = arith.constant 0 : index
    %22 = vector.load %arg8[%c0_14, %c0_15] : memref<128x16xf32, #tpu.memory_space<vmem>>, vector<128x16xf32>
    tpu.vector_store %arg8[%c0_14, %c0_15], %21 {strides = array<i32>} : memref<128x16xf32, #tpu.memory_space<vmem>>, vector<128x16xf32>,
    %c0_i32_16 = arith.constant 0 : i32
    %23 = arith.cmpi eq, %arg2, %c0_i32_16 : i32
    %24 = arith.extui %23 : i1 to i32
    %c0_i32_17 = arith.constant 0 : i32
    %25 = arith.cmpi ne, %24, %c0_i32_17 : i32
    scf.if %25 {
      %c0_18 = arith.constant 0 : index
      %c0_19 = arith.constant 0 : index
      %26 = vector.load %arg8[%c0_18, %c0_19] : memref<128x16xf32, #tpu.memory_space<vmem>>, vector<128x16xf32>
      %c0_20 = arith.constant 0 : index
      %c0_21 = arith.constant 0 : index
      %c0_22 = arith.constant 0 : index
      %27 = vector.load %arg5[%c0_20, %c0_21, %c0_22] : memref<1x128x16xf32, #tpu.memory_space<vmem>>, vector<1x128x16xf32>
      %28 = vector.shape_cast %27 : vector<1x128x16xf32> to vector<128x16xf32>
      %29 = vector.shape_cast %26 : vector<128x16xf32> to vector<1x128x16xf32>
      tpu.vector_store %arg5[%c0_20, %c0_21, %c0_22], %29 {strides = array<i32>} : memref<1x128x16xf32, #tpu.memory_space<vmem>>, vector<1x128x16xf32>,
      %c0_23 = arith.constant 0 : index
      %c0_24 = arith.constant 0 : index
      %30 = vector.load %arg6[%c0_23, %c0_24] : memref<1x16xf32, #tpu.memory_space<vmem>>, vector<1x16xf32>
      %cst_25 = arith.constant dense<0.000000e+00> : vector<16xf32>
      %31 = vector.multi_reduction <add>, %26, %cst_25 [0] : vector<128x16xf32> to vector<16xf32>
      %32 = vector.shape_cast %31 : vector<16xf32> to vector<1x16xf32>
      %33 = arith.addf %30, %32 : vector<1x16xf32>
      %c0_26 = arith.constant 0 : index
      %c0_27 = arith.constant 0 : index
      %34 = vector.load %arg6[%c0_26, %c0_27] : memref<1x16xf32, #tpu.memory_space<vmem>>, vector<1x16xf32>
      tpu.vector_store %arg6[%c0_26, %c0_27], %33 {strides = array<i32>} : memref<1x16xf32, #tpu.memory_space<vmem>>, vector<1x16xf32>,
      %c0_28 = arith.constant 0 : index
      %c0_29 = arith.constant 0 : index
      %35 = vector.load %arg7[%c0_28, %c0_29] : memref<1x16xf32, #tpu.memory_space<vmem>>, vector<1x16xf32>
      %36 = arith.mulf %26, %26 : vector<128x16xf32>
      %cst_30 = arith.constant dense<0.000000e+00> : vector<16xf32>
      %37 = vector.multi_reduction <add>, %36, %cst_30 [0] : vector<128x16xf32> to vector<16xf32>
      %38 = vector.shape_cast %37 : vector<16xf32> to vector<1x16xf32>
      %39 = arith.addf %35, %38 : vector<1x16xf32>
      %c0_31 = arith.constant 0 : index
      %c0_32 = arith.constant 0 : index
      %40 = vector.load %arg7[%c0_31, %c0_32] : memref<1x16xf32, #tpu.memory_space<vmem>>, vector<1x16xf32>
      tpu.vector_store %arg7[%c0_31, %c0_32], %39 {strides = array<i32>} : memref<1x16xf32, #tpu.memory_space<vmem>>, vector<1x16xf32>,
    } else {
    }
    return
  }
  func.func @transform_0(%arg0: i32, %arg1: i32, %arg2: i32) -> (i32, i32, i32) {
    %c0_i32 = arith.constant 0 : i32
    return %arg0, %arg1, %arg2 : i32, i32, i32
  }
  func.func @transform_1(%arg0: i32, %arg1: i32, %arg2: i32) -> (i32, i32, i32) {
    %c0_i32 = arith.constant 0 : i32
    %c0_i32_0 = arith.constant 0 : i32
    return %arg0, %arg2, %c0_i32 : i32, i32, i32
  }
  func.func @transform_2(%arg0: i32, %arg1: i32, %arg2: i32) -> (i32, i32, i32) {
    %c0_i32 = arith.constant 0 : i32
    %c0_i32_0 = arith.constant 0 : i32
    return %arg0, %arg1, %c0_i32 : i32, i32, i32
  }
  func.func @transform_3(%arg0: i32, %arg1: i32, %arg2: i32) -> (i32, i32) {
    %c0_i32 = arith.constant 0 : i32
    %c0_i32_0 = arith.constant 0 : i32
    %c0_i32_1 = arith.constant 0 : i32
    return %c0_i32, %c0_i32_0 : i32, i32
  }
  func.func @transform_4(%arg0: i32, %arg1: i32, %arg2: i32) -> (i32, i32) {
    %c0_i32 = arith.constant 0 : i32
    %c0_i32_0 = arith.constant 0 : i32
    %c0_i32_1 = arith.constant 0 : i32
    return %c0_i32, %c0_i32_0 : i32, i32
  }
}

module attributes {stable_mosaic.version = 11 : i64} {
  func.func @_bn_apply_kernel(%arg0: i32, %arg1: memref<128x16xf32, #tpu.memory_space<vmem>>, %arg2: memref<1x16xf32, #tpu.memory_space<vmem>>, %arg3: memref<1x16xf32, #tpu.memory_space<vmem>>, %arg4: memref<128x16xf32, #tpu.memory_space<vmem>>) attributes {dimension_semantics = [#tpu.dimension_semantics<parallel>], iteration_bounds = array<i64: 1>, scalar_prefetch = 0 : i64, scratch_operands = 0 : i64, tpu.core_type = #tpu.core_type<tc>, window_params = [{transform_indices = @transform_0, window_bounds = array<i64: 128, 16>}, {pipeline_mode = #tpu.pipeline_mode<synchronous>, transform_indices = @transform_1, window_bounds = array<i64: 1, 16>}, {pipeline_mode = #tpu.pipeline_mode<synchronous>, transform_indices = @transform_2, window_bounds = array<i64: 1, 16>}, {transform_indices = @transform_3, window_bounds = array<i64: 128, 16>}]} {
    %c0 = arith.constant 0 : index
    %c0_0 = arith.constant 0 : index
    %0 = vector.load %arg1[%c0, %c0_0] : memref<128x16xf32, #tpu.memory_space<vmem>>, vector<128x16xf32>
    %c0_1 = arith.constant 0 : index
    %c0_2 = arith.constant 0 : index
    %1 = vector.load %arg2[%c0_1, %c0_2] : memref<1x16xf32, #tpu.memory_space<vmem>>, vector<1x16xf32>
    %2 = vector.broadcast %1 : vector<1x16xf32> to vector<128x16xf32>
    %3 = arith.mulf %0, %2 : vector<128x16xf32>
    %c0_3 = arith.constant 0 : index
    %c0_4 = arith.constant 0 : index
    %4 = vector.load %arg3[%c0_3, %c0_4] : memref<1x16xf32, #tpu.memory_space<vmem>>, vector<1x16xf32>
    %5 = vector.broadcast %4 : vector<1x16xf32> to vector<128x16xf32>
    %6 = arith.addf %3, %5 : vector<128x16xf32>
    %c0_5 = arith.constant 0 : index
    %c0_6 = arith.constant 0 : index
    %7 = vector.load %arg4[%c0_5, %c0_6] : memref<128x16xf32, #tpu.memory_space<vmem>>, vector<128x16xf32>
    tpu.vector_store %arg4[%c0_5, %c0_6], %6 {strides = array<i32>} : memref<128x16xf32, #tpu.memory_space<vmem>>, vector<128x16xf32>,
    return
  }
  func.func @transform_0(%arg0: i32) -> (i32, i32) {
    %c0_i32 = arith.constant 0 : i32
    %c0_i32_0 = arith.constant 0 : i32
    return %arg0, %c0_i32 : i32, i32
  }
  func.func @transform_1(%arg0: i32) -> (i32, i32) {
    %c0_i32 = arith.constant 0 : i32
    %c0_i32_0 = arith.constant 0 : i32
    %c0_i32_1 = arith.constant 0 : i32
    return %c0_i32, %c0_i32_0 : i32, i32
  }
  func.func @transform_2(%arg0: i32) -> (i32, i32) {
    %c0_i32 = arith.constant 0 : i32
    %c0_i32_0 = arith.constant 0 : i32
    %c0_i32_1 = arith.constant 0 : i32
    return %c0_i32, %c0_i32_0 : i32, i32
  }
  func.func @transform_3(%arg0: i32) -> (i32, i32) {
    %c0_i32 = arith.constant 0 : i32
    %c0_i32_0 = arith.constant 0 : i32
    return %arg0, %c0_i32 : i32, i32
  }
}

module attributes {stable_mosaic.version = 11 : i64} {
  func.func @_fused_matmul_kernel(%arg0: i32, %arg1: i32, %arg2: i32, %arg3: memref<1x32x256xbf16, #tpu.memory_space<vmem>>, %arg4: memref<1x256x32xbf16, #tpu.memory_space<vmem>>, %arg5: memref<1x32x32xf32, #tpu.memory_space<vmem>>, %arg6: memref<1x32xf32, #tpu.memory_space<vmem>>, %arg7: memref<1x32xf32, #tpu.memory_space<vmem>>, %arg8: memref<32x32xf32, #tpu.memory_space<vmem>>) attributes {dimension_semantics = [#tpu.dimension_semantics<arbitrary>, #tpu.dimension_semantics<arbitrary>, #tpu.dimension_semantics<arbitrary>], iteration_bounds = array<i64: 1, 1, 1>, scalar_prefetch = 0 : i64, scratch_operands = 1 : i64, tpu.core_type = #tpu.core_type<tc>, window_params = [{transform_indices = @transform_0, window_bounds = array<i64: 1, 32, 256>}, {transform_indices = @transform_1, window_bounds = array<i64: 1, 256, 32>}, {transform_indices = @transform_2, window_bounds = array<i64: 1, 32, 32>}, {pipeline_mode = #tpu.pipeline_mode<synchronous>, transform_indices = @transform_3, window_bounds = array<i64: 1, 32>}, {pipeline_mode = #tpu.pipeline_mode<synchronous>, transform_indices = @transform_4, window_bounds = array<i64: 1, 32>}]} {
    %c0_i32 = arith.constant 0 : i32
    %0 = arith.cmpi eq, %arg2, %c0_i32 : i32
    %1 = arith.extui %0 : i1 to i32
    %c0_i32_0 = arith.constant 0 : i32
    %2 = arith.cmpi ne, %1, %c0_i32_0 : i32
    scf.if %2 {
      %cst_18 = arith.constant 0.000000e+00 : f32
      %26 = vector.broadcast %cst_18 : f32 to vector<32x32xf32>
      %c0_19 = arith.constant 0 : index
      %c0_20 = arith.constant 0 : index
      %27 = vector.load %arg8[%c0_19, %c0_20] : memref<32x32xf32, #tpu.memory_space<vmem>>, vector<32x32xf32>
      tpu.vector_store %arg8[%c0_19, %c0_20], %26 {strides = array<i32>} : memref<32x32xf32, #tpu.memory_space<vmem>>, vector<32x32xf32>,
    } else {
    }
    %c0_i32_1 = arith.constant 0 : i32
    %3 = arith.cmpi eq, %arg0, %c0_i32_1 : i32
    %c0_i32_2 = arith.constant 0 : i32
    %4 = arith.cmpi eq, %arg1, %c0_i32_2 : i32
    %5 = arith.andi %3, %4 : i1
    %c0_i32_3 = arith.constant 0 : i32
    %6 = arith.cmpi eq, %arg2, %c0_i32_3 : i32
    %7 = arith.andi %5, %6 : i1
    %8 = arith.extui %7 : i1 to i32
    %c0_i32_4 = arith.constant 0 : i32
    %9 = arith.cmpi ne, %8, %c0_i32_4 : i32
    scf.if %9 {
      %cst_18 = arith.constant 0.000000e+00 : f32
      %26 = vector.broadcast %cst_18 : f32 to vector<1x32xf32>
      %c0_19 = arith.constant 0 : index
      %c0_20 = arith.constant 0 : index
      %27 = vector.load %arg6[%c0_19, %c0_20] : memref<1x32xf32, #tpu.memory_space<vmem>>, vector<1x32xf32>
      tpu.vector_store %arg6[%c0_19, %c0_20], %26 {strides = array<i32>} : memref<1x32xf32, #tpu.memory_space<vmem>>, vector<1x32xf32>,
      %cst_21 = arith.constant 0.000000e+00 : f32
      %28 = vector.broadcast %cst_21 : f32 to vector<1x32xf32>
      %c0_22 = arith.constant 0 : index
      %c0_23 = arith.constant 0 : index
      %29 = vector.load %arg7[%c0_22, %c0_23] : memref<1x32xf32, #tpu.memory_space<vmem>>, vector<1x32xf32>
      tpu.vector_store %arg7[%c0_22, %c0_23], %28 {strides = array<i32>} : memref<1x32xf32, #tpu.memory_space<vmem>>, vector<1x32xf32>,
    } else {
    }
    %c0 = arith.constant 0 : index
    %c0_5 = arith.constant 0 : index
    %c0_6 = arith.constant 0 : index
    %10 = vector.load %arg3[%c0, %c0_5, %c0_6] : memref<1x32x256xbf16, #tpu.memory_space<vmem>>, vector<1x32x256xbf16>
    %11 = vector.shape_cast %10 : vector<1x32x256xbf16> to vector<32x256xbf16>
    %cst = arith.constant 0.000000e+00 : bf16
    %12 = vector.broadcast %cst : bf16 to vector<32x256xbf16>
    %13 = arith.cmpf oge, %11, %12 : vector<32x256xbf16>
    %cst_7 = arith.constant 2.001950e-01 : bf16
    %14 = vector.broadcast %cst_7 : bf16 to vector<32x256xbf16>
    %15 = arith.mulf %11, %14 : vector<32x256xbf16>
    %16 = arith.select %13, %11, %15 : vector<32x256xi1>, vector<32x256xbf16>
    %c0_8 = arith.constant 0 : index
    %c0_9 = arith.constant 0 : index
    %17 = vector.load %arg8[%c0_8, %c0_9] : memref<32x32xf32, #tpu.memory_space<vmem>>, vector<32x32xf32>
    %c0_10 = arith.constant 0 : index
    %c0_11 = arith.constant 0 : index
    %c0_12 = arith.constant 0 : index
    %18 = vector.load %arg4[%c0_10, %c0_11, %c0_12] : memref<1x256x32xbf16, #tpu.memory_space<vmem>>, vector<1x256x32xbf16>
    %19 = vector.shape_cast %18 : vector<1x256x32xbf16> to vector<256x32xbf16>
    %cst_13 = arith.constant dense<0.000000e+00> : vector<32x32xf32>
    %20 = tpu.matmul %16, %19, %cst_13 {dimension_numbers = #tpu.dot_dimension_numbers<[1], [0], [0], [1], [0, 0, 1, 1], [], []>} : vector<32x256xbf16>, vector<256x32xbf16>, vector<32x32xf32> -> vector<32x32xf32>
    %21 = arith.addf %17, %20 : vector<32x32xf32>
    %c0_14 = arith.constant 0 : index
    %c0_15 = arith.constant 0 : index
    %22 = vector.load %arg8[%c0_14, %c0_15] : memref<32x32xf32, #tpu.memory_space<vmem>>, vector<32x32xf32>
    tpu.vector_store %arg8[%c0_14, %c0_15], %21 {strides = array<i32>} : memref<32x32xf32, #tpu.memory_space<vmem>>, vector<32x32xf32>,
    %c0_i32_16 = arith.constant 0 : i32
    %23 = arith.cmpi eq, %arg2, %c0_i32_16 : i32
    %24 = arith.extui %23 : i1 to i32
    %c0_i32_17 = arith.constant 0 : i32
    %25 = arith.cmpi ne, %24, %c0_i32_17 : i32
    scf.if %25 {
      %c0_18 = arith.constant 0 : index
      %c0_19 = arith.constant 0 : index
      %26 = vector.load %arg8[%c0_18, %c0_19] : memref<32x32xf32, #tpu.memory_space<vmem>>, vector<32x32xf32>
      %c0_20 = arith.constant 0 : index
      %c0_21 = arith.constant 0 : index
      %c0_22 = arith.constant 0 : index
      %27 = vector.load %arg5[%c0_20, %c0_21, %c0_22] : memref<1x32x32xf32, #tpu.memory_space<vmem>>, vector<1x32x32xf32>
      %28 = vector.shape_cast %27 : vector<1x32x32xf32> to vector<32x32xf32>
      %29 = vector.shape_cast %26 : vector<32x32xf32> to vector<1x32x32xf32>
      tpu.vector_store %arg5[%c0_20, %c0_21, %c0_22], %29 {strides = array<i32>} : memref<1x32x32xf32, #tpu.memory_space<vmem>>, vector<1x32x32xf32>,
      %c0_23 = arith.constant 0 : index
      %c0_24 = arith.constant 0 : index
      %30 = vector.load %arg6[%c0_23, %c0_24] : memref<1x32xf32, #tpu.memory_space<vmem>>, vector<1x32xf32>
      %cst_25 = arith.constant dense<0.000000e+00> : vector<32xf32>
      %31 = vector.multi_reduction <add>, %26, %cst_25 [0] : vector<32x32xf32> to vector<32xf32>
      %32 = vector.shape_cast %31 : vector<32xf32> to vector<1x32xf32>
      %33 = arith.addf %30, %32 : vector<1x32xf32>
      %c0_26 = arith.constant 0 : index
      %c0_27 = arith.constant 0 : index
      %34 = vector.load %arg6[%c0_26, %c0_27] : memref<1x32xf32, #tpu.memory_space<vmem>>, vector<1x32xf32>
      tpu.vector_store %arg6[%c0_26, %c0_27], %33 {strides = array<i32>} : memref<1x32xf32, #tpu.memory_space<vmem>>, vector<1x32xf32>,
      %c0_28 = arith.constant 0 : index
      %c0_29 = arith.constant 0 : index
      %35 = vector.load %arg7[%c0_28, %c0_29] : memref<1x32xf32, #tpu.memory_space<vmem>>, vector<1x32xf32>
      %36 = arith.mulf %26, %26 : vector<32x32xf32>
      %cst_30 = arith.constant dense<0.000000e+00> : vector<32xf32>
      %37 = vector.multi_reduction <add>, %36, %cst_30 [0] : vector<32x32xf32> to vector<32xf32>
      %38 = vector.shape_cast %37 : vector<32xf32> to vector<1x32xf32>
      %39 = arith.addf %35, %38 : vector<1x32xf32>
      %c0_31 = arith.constant 0 : index
      %c0_32 = arith.constant 0 : index
      %40 = vector.load %arg7[%c0_31, %c0_32] : memref<1x32xf32, #tpu.memory_space<vmem>>, vector<1x32xf32>
      tpu.vector_store %arg7[%c0_31, %c0_32], %39 {strides = array<i32>} : memref<1x32xf32, #tpu.memory_space<vmem>>, vector<1x32xf32>,
    } else {
    }
    return
  }
  func.func @transform_0(%arg0: i32, %arg1: i32, %arg2: i32) -> (i32, i32, i32) {
    %c0_i32 = arith.constant 0 : i32
    return %arg0, %arg1, %arg2 : i32, i32, i32
  }
  func.func @transform_1(%arg0: i32, %arg1: i32, %arg2: i32) -> (i32, i32, i32) {
    %c0_i32 = arith.constant 0 : i32
    %c0_i32_0 = arith.constant 0 : i32
    return %arg0, %arg2, %c0_i32 : i32, i32, i32
  }
  func.func @transform_2(%arg0: i32, %arg1: i32, %arg2: i32) -> (i32, i32, i32) {
    %c0_i32 = arith.constant 0 : i32
    %c0_i32_0 = arith.constant 0 : i32
    return %arg0, %arg1, %c0_i32 : i32, i32, i32
  }
  func.func @transform_3(%arg0: i32, %arg1: i32, %arg2: i32) -> (i32, i32) {
    %c0_i32 = arith.constant 0 : i32
    %c0_i32_0 = arith.constant 0 : i32
    %c0_i32_1 = arith.constant 0 : i32
    return %c0_i32, %c0_i32_0 : i32, i32
  }
  func.func @transform_4(%arg0: i32, %arg1: i32, %arg2: i32) -> (i32, i32) {
    %c0_i32 = arith.constant 0 : i32
    %c0_i32_0 = arith.constant 0 : i32
    %c0_i32_1 = arith.constant 0 : i32
    return %c0_i32, %c0_i32_0 : i32, i32
  }
}

module attributes {stable_mosaic.version = 11 : i64} {
  func.func @_bn_apply_kernel(%arg0: i32, %arg1: memref<32x32xf32, #tpu.memory_space<vmem>>, %arg2: memref<1x32xf32, #tpu.memory_space<vmem>>, %arg3: memref<1x32xf32, #tpu.memory_space<vmem>>, %arg4: memref<32x32xf32, #tpu.memory_space<vmem>>) attributes {dimension_semantics = [#tpu.dimension_semantics<parallel>], iteration_bounds = array<i64: 1>, scalar_prefetch = 0 : i64, scratch_operands = 0 : i64, tpu.core_type = #tpu.core_type<tc>, window_params = [{transform_indices = @transform_0, window_bounds = array<i64: 32, 32>}, {pipeline_mode = #tpu.pipeline_mode<synchronous>, transform_indices = @transform_1, window_bounds = array<i64: 1, 32>}, {pipeline_mode = #tpu.pipeline_mode<synchronous>, transform_indices = @transform_2, window_bounds = array<i64: 1, 32>}, {transform_indices = @transform_3, window_bounds = array<i64: 32, 32>}]} {
    %c0 = arith.constant 0 : index
    %c0_0 = arith.constant 0 : index
    %0 = vector.load %arg1[%c0, %c0_0] : memref<32x32xf32, #tpu.memory_space<vmem>>, vector<32x32xf32>
    %c0_1 = arith.constant 0 : index
    %c0_2 = arith.constant 0 : index
    %1 = vector.load %arg2[%c0_1, %c0_2] : memref<1x32xf32, #tpu.memory_space<vmem>>, vector<1x32xf32>
    %2 = vector.broadcast %1 : vector<1x32xf32> to vector<32x32xf32>
    %3 = arith.mulf %0, %2 : vector<32x32xf32>
    %c0_3 = arith.constant 0 : index
    %c0_4 = arith.constant 0 : index
    %4 = vector.load %arg3[%c0_3, %c0_4] : memref<1x32xf32, #tpu.memory_space<vmem>>, vector<1x32xf32>
    %5 = vector.broadcast %4 : vector<1x32xf32> to vector<32x32xf32>
    %6 = arith.addf %3, %5 : vector<32x32xf32>
    %c0_5 = arith.constant 0 : index
    %c0_6 = arith.constant 0 : index
    %7 = vector.load %arg4[%c0_5, %c0_6] : memref<32x32xf32, #tpu.memory_space<vmem>>, vector<32x32xf32>
    tpu.vector_store %arg4[%c0_5, %c0_6], %6 {strides = array<i32>} : memref<32x32xf32, #tpu.memory_space<vmem>>, vector<32x32xf32>,
    return
  }
  func.func @transform_0(%arg0: i32) -> (i32, i32) {
    %c0_i32 = arith.constant 0 : i32
    %c0_i32_0 = arith.constant 0 : i32
    return %arg0, %c0_i32 : i32, i32
  }
  func.func @transform_1(%arg0: i32) -> (i32, i32) {
    %c0_i32 = arith.constant 0 : i32
    %c0_i32_0 = arith.constant 0 : i32
    %c0_i32_1 = arith.constant 0 : i32
    return %c0_i32, %c0_i32_0 : i32, i32
  }
  func.func @transform_2(%arg0: i32) -> (i32, i32) {
    %c0_i32 = arith.constant 0 : i32
    %c0_i32_0 = arith.constant 0 : i32
    %c0_i32_1 = arith.constant 0 : i32
    return %c0_i32, %c0_i32_0 : i32, i32
  }
  func.func @transform_3(%arg0: i32) -> (i32, i32) {
    %c0_i32 = arith.constant 0 : i32
    %c0_i32_0 = arith.constant 0 : i32
    return %arg0, %c0_i32 : i32, i32
  }
}

module attributes {stable_mosaic.version = 11 : i64} {
  func.func @_bn_apply_kernel(%arg0: i32, %arg1: memref<8x64xf32, #tpu.memory_space<vmem>>, %arg2: memref<1x64xf32, #tpu.memory_space<vmem>>, %arg3: memref<1x64xf32, #tpu.memory_space<vmem>>, %arg4: memref<8x64xf32, #tpu.memory_space<vmem>>) attributes {dimension_semantics = [#tpu.dimension_semantics<parallel>], iteration_bounds = array<i64: 1>, scalar_prefetch = 0 : i64, scratch_operands = 0 : i64, tpu.core_type = #tpu.core_type<tc>, window_params = [{transform_indices = @transform_0, window_bounds = array<i64: 8, 64>}, {pipeline_mode = #tpu.pipeline_mode<synchronous>, transform_indices = @transform_1, window_bounds = array<i64: 1, 64>}, {pipeline_mode = #tpu.pipeline_mode<synchronous>, transform_indices = @transform_2, window_bounds = array<i64: 1, 64>}, {transform_indices = @transform_3, window_bounds = array<i64: 8, 64>}]} {
    %c0 = arith.constant 0 : index
    %c0_0 = arith.constant 0 : index
    %0 = vector.load %arg1[%c0, %c0_0] : memref<8x64xf32, #tpu.memory_space<vmem>>, vector<8x64xf32>
    %c0_1 = arith.constant 0 : index
    %c0_2 = arith.constant 0 : index
    %1 = vector.load %arg2[%c0_1, %c0_2] : memref<1x64xf32, #tpu.memory_space<vmem>>, vector<1x64xf32>
    %2 = vector.broadcast %1 : vector<1x64xf32> to vector<8x64xf32>
    %3 = arith.mulf %0, %2 : vector<8x64xf32>
    %c0_3 = arith.constant 0 : index
    %c0_4 = arith.constant 0 : index
    %4 = vector.load %arg3[%c0_3, %c0_4] : memref<1x64xf32, #tpu.memory_space<vmem>>, vector<1x64xf32>
    %5 = vector.broadcast %4 : vector<1x64xf32> to vector<8x64xf32>
    %6 = arith.addf %3, %5 : vector<8x64xf32>
    %c0_5 = arith.constant 0 : index
    %c0_6 = arith.constant 0 : index
    %7 = vector.load %arg4[%c0_5, %c0_6] : memref<8x64xf32, #tpu.memory_space<vmem>>, vector<8x64xf32>
    tpu.vector_store %arg4[%c0_5, %c0_6], %6 {strides = array<i32>} : memref<8x64xf32, #tpu.memory_space<vmem>>, vector<8x64xf32>,
    return
  }
  func.func @transform_0(%arg0: i32) -> (i32, i32) {
    %c0_i32 = arith.constant 0 : i32
    %c0_i32_0 = arith.constant 0 : i32
    return %arg0, %c0_i32 : i32, i32
  }
  func.func @transform_1(%arg0: i32) -> (i32, i32) {
    %c0_i32 = arith.constant 0 : i32
    %c0_i32_0 = arith.constant 0 : i32
    %c0_i32_1 = arith.constant 0 : i32
    return %c0_i32, %c0_i32_0 : i32, i32
  }
  func.func @transform_2(%arg0: i32) -> (i32, i32) {
    %c0_i32 = arith.constant 0 : i32
    %c0_i32_0 = arith.constant 0 : i32
    %c0_i32_1 = arith.constant 0 : i32
    return %c0_i32, %c0_i32_0 : i32, i32
  }
  func.func @transform_3(%arg0: i32) -> (i32, i32) {
    %c0_i32 = arith.constant 0 : i32
    %c0_i32_0 = arith.constant 0 : i32
    return %arg0, %c0_i32 : i32, i32
  }
}

module attributes {stable_mosaic.version = 11 : i64} {
  func.func @_fused_matmul_kernel(%arg0: i32, %arg1: i32, %arg2: i32, %arg3: memref<1x8x512xbf16, #tpu.memory_space<vmem>>, %arg4: memref<1x512x64xbf16, #tpu.memory_space<vmem>>, %arg5: memref<1x8x64xf32, #tpu.memory_space<vmem>>, %arg6: memref<1x64xf32, #tpu.memory_space<vmem>>, %arg7: memref<1x64xf32, #tpu.memory_space<vmem>>, %arg8: memref<8x64xf32, #tpu.memory_space<vmem>>) attributes {dimension_semantics = [#tpu.dimension_semantics<arbitrary>, #tpu.dimension_semantics<arbitrary>, #tpu.dimension_semantics<arbitrary>], iteration_bounds = array<i64: 1, 1, 1>, scalar_prefetch = 0 : i64, scratch_operands = 1 : i64, tpu.core_type = #tpu.core_type<tc>, window_params = [{transform_indices = @transform_0, window_bounds = array<i64: 1, 8, 512>}, {transform_indices = @transform_1, window_bounds = array<i64: 1, 512, 64>}, {transform_indices = @transform_2, window_bounds = array<i64: 1, 8, 64>}, {pipeline_mode = #tpu.pipeline_mode<synchronous>, transform_indices = @transform_3, window_bounds = array<i64: 1, 64>}, {pipeline_mode = #tpu.pipeline_mode<synchronous>, transform_indices = @transform_4, window_bounds = array<i64: 1, 64>}]} {
    %c0_i32 = arith.constant 0 : i32
    %0 = arith.cmpi eq, %arg2, %c0_i32 : i32
    %1 = arith.extui %0 : i1 to i32
    %c0_i32_0 = arith.constant 0 : i32
    %2 = arith.cmpi ne, %1, %c0_i32_0 : i32
    scf.if %2 {
      %cst_18 = arith.constant 0.000000e+00 : f32
      %26 = vector.broadcast %cst_18 : f32 to vector<8x64xf32>
      %c0_19 = arith.constant 0 : index
      %c0_20 = arith.constant 0 : index
      %27 = vector.load %arg8[%c0_19, %c0_20] : memref<8x64xf32, #tpu.memory_space<vmem>>, vector<8x64xf32>
      tpu.vector_store %arg8[%c0_19, %c0_20], %26 {strides = array<i32>} : memref<8x64xf32, #tpu.memory_space<vmem>>, vector<8x64xf32>,
    } else {
    }
    %c0_i32_1 = arith.constant 0 : i32
    %3 = arith.cmpi eq, %arg0, %c0_i32_1 : i32
    %c0_i32_2 = arith.constant 0 : i32
    %4 = arith.cmpi eq, %arg1, %c0_i32_2 : i32
    %5 = arith.andi %3, %4 : i1
    %c0_i32_3 = arith.constant 0 : i32
    %6 = arith.cmpi eq, %arg2, %c0_i32_3 : i32
    %7 = arith.andi %5, %6 : i1
    %8 = arith.extui %7 : i1 to i32
    %c0_i32_4 = arith.constant 0 : i32
    %9 = arith.cmpi ne, %8, %c0_i32_4 : i32
    scf.if %9 {
      %cst_18 = arith.constant 0.000000e+00 : f32
      %26 = vector.broadcast %cst_18 : f32 to vector<1x64xf32>
      %c0_19 = arith.constant 0 : index
      %c0_20 = arith.constant 0 : index
      %27 = vector.load %arg6[%c0_19, %c0_20] : memref<1x64xf32, #tpu.memory_space<vmem>>, vector<1x64xf32>
      tpu.vector_store %arg6[%c0_19, %c0_20], %26 {strides = array<i32>} : memref<1x64xf32, #tpu.memory_space<vmem>>, vector<1x64xf32>,
      %cst_21 = arith.constant 0.000000e+00 : f32
      %28 = vector.broadcast %cst_21 : f32 to vector<1x64xf32>
      %c0_22 = arith.constant 0 : index
      %c0_23 = arith.constant 0 : index
      %29 = vector.load %arg7[%c0_22, %c0_23] : memref<1x64xf32, #tpu.memory_space<vmem>>, vector<1x64xf32>
      tpu.vector_store %arg7[%c0_22, %c0_23], %28 {strides = array<i32>} : memref<1x64xf32, #tpu.memory_space<vmem>>, vector<1x64xf32>,
    } else {
    }
    %c0 = arith.constant 0 : index
    %c0_5 = arith.constant 0 : index
    %c0_6 = arith.constant 0 : index
    %10 = vector.load %arg3[%c0, %c0_5, %c0_6] : memref<1x8x512xbf16, #tpu.memory_space<vmem>>, vector<1x8x512xbf16>
    %11 = vector.shape_cast %10 : vector<1x8x512xbf16> to vector<8x512xbf16>
    %cst = arith.constant 0.000000e+00 : bf16
    %12 = vector.broadcast %cst : bf16 to vector<8x512xbf16>
    %13 = arith.cmpf oge, %11, %12 : vector<8x512xbf16>
    %cst_7 = arith.constant 2.001950e-01 : bf16
    %14 = vector.broadcast %cst_7 : bf16 to vector<8x512xbf16>
    %15 = arith.mulf %11, %14 : vector<8x512xbf16>
    %16 = arith.select %13, %11, %15 : vector<8x512xi1>, vector<8x512xbf16>
    %c0_8 = arith.constant 0 : index
    %c0_9 = arith.constant 0 : index
    %17 = vector.load %arg8[%c0_8, %c0_9] : memref<8x64xf32, #tpu.memory_space<vmem>>, vector<8x64xf32>
    %c0_10 = arith.constant 0 : index
    %c0_11 = arith.constant 0 : index
    %c0_12 = arith.constant 0 : index
    %18 = vector.load %arg4[%c0_10, %c0_11, %c0_12] : memref<1x512x64xbf16, #tpu.memory_space<vmem>>, vector<1x512x64xbf16>
    %19 = vector.shape_cast %18 : vector<1x512x64xbf16> to vector<512x64xbf16>
    %cst_13 = arith.constant dense<0.000000e+00> : vector<8x64xf32>
    %20 = tpu.matmul %16, %19, %cst_13 {dimension_numbers = #tpu.dot_dimension_numbers<[1], [0], [0], [1], [0, 0, 1, 1], [], []>} : vector<8x512xbf16>, vector<512x64xbf16>, vector<8x64xf32> -> vector<8x64xf32>
    %21 = arith.addf %17, %20 : vector<8x64xf32>
    %c0_14 = arith.constant 0 : index
    %c0_15 = arith.constant 0 : index
    %22 = vector.load %arg8[%c0_14, %c0_15] : memref<8x64xf32, #tpu.memory_space<vmem>>, vector<8x64xf32>
    tpu.vector_store %arg8[%c0_14, %c0_15], %21 {strides = array<i32>} : memref<8x64xf32, #tpu.memory_space<vmem>>, vector<8x64xf32>,
    %c0_i32_16 = arith.constant 0 : i32
    %23 = arith.cmpi eq, %arg2, %c0_i32_16 : i32
    %24 = arith.extui %23 : i1 to i32
    %c0_i32_17 = arith.constant 0 : i32
    %25 = arith.cmpi ne, %24, %c0_i32_17 : i32
    scf.if %25 {
      %c0_18 = arith.constant 0 : index
      %c0_19 = arith.constant 0 : index
      %26 = vector.load %arg8[%c0_18, %c0_19] : memref<8x64xf32, #tpu.memory_space<vmem>>, vector<8x64xf32>
      %c0_20 = arith.constant 0 : index
      %c0_21 = arith.constant 0 : index
      %c0_22 = arith.constant 0 : index
      %27 = vector.load %arg5[%c0_20, %c0_21, %c0_22] : memref<1x8x64xf32, #tpu.memory_space<vmem>>, vector<1x8x64xf32>
      %28 = vector.shape_cast %27 : vector<1x8x64xf32> to vector<8x64xf32>
      %29 = vector.shape_cast %26 : vector<8x64xf32> to vector<1x8x64xf32>
      tpu.vector_store %arg5[%c0_20, %c0_21, %c0_22], %29 {strides = array<i32>} : memref<1x8x64xf32, #tpu.memory_space<vmem>>, vector<1x8x64xf32>,
      %c0_23 = arith.constant 0 : index
      %c0_24 = arith.constant 0 : index
      %30 = vector.load %arg6[%c0_23, %c0_24] : memref<1x64xf32, #tpu.memory_space<vmem>>, vector<1x64xf32>
      %cst_25 = arith.constant dense<0.000000e+00> : vector<64xf32>
      %31 = vector.multi_reduction <add>, %26, %cst_25 [0] : vector<8x64xf32> to vector<64xf32>
      %32 = vector.shape_cast %31 : vector<64xf32> to vector<1x64xf32>
      %33 = arith.addf %30, %32 : vector<1x64xf32>
      %c0_26 = arith.constant 0 : index
      %c0_27 = arith.constant 0 : index
      %34 = vector.load %arg6[%c0_26, %c0_27] : memref<1x64xf32, #tpu.memory_space<vmem>>, vector<1x64xf32>
      tpu.vector_store %arg6[%c0_26, %c0_27], %33 {strides = array<i32>} : memref<1x64xf32, #tpu.memory_space<vmem>>, vector<1x64xf32>,
      %c0_28 = arith.constant 0 : index
      %c0_29 = arith.constant 0 : index
      %35 = vector.load %arg7[%c0_28, %c0_29] : memref<1x64xf32, #tpu.memory_space<vmem>>, vector<1x64xf32>
      %36 = arith.mulf %26, %26 : vector<8x64xf32>
      %cst_30 = arith.constant dense<0.000000e+00> : vector<64xf32>
      %37 = vector.multi_reduction <add>, %36, %cst_30 [0] : vector<8x64xf32> to vector<64xf32>
      %38 = vector.shape_cast %37 : vector<64xf32> to vector<1x64xf32>
      %39 = arith.addf %35, %38 : vector<1x64xf32>
      %c0_31 = arith.constant 0 : index
      %c0_32 = arith.constant 0 : index
      %40 = vector.load %arg7[%c0_31, %c0_32] : memref<1x64xf32, #tpu.memory_space<vmem>>, vector<1x64xf32>
      tpu.vector_store %arg7[%c0_31, %c0_32], %39 {strides = array<i32>} : memref<1x64xf32, #tpu.memory_space<vmem>>, vector<1x64xf32>,
    } else {
    }
    return
  }
  func.func @transform_0(%arg0: i32, %arg1: i32, %arg2: i32) -> (i32, i32, i32) {
    %c0_i32 = arith.constant 0 : i32
    return %arg0, %arg1, %arg2 : i32, i32, i32
  }
  func.func @transform_1(%arg0: i32, %arg1: i32, %arg2: i32) -> (i32, i32, i32) {
    %c0_i32 = arith.constant 0 : i32
    %c0_i32_0 = arith.constant 0 : i32
    return %arg0, %arg2, %c0_i32 : i32, i32, i32
  }
  func.func @transform_2(%arg0: i32, %arg1: i32, %arg2: i32) -> (i32, i32, i32) {
    %c0_i32 = arith.constant 0 : i32
    %c0_i32_0 = arith.constant 0 : i32
    return %arg0, %arg1, %c0_i32 : i32, i32, i32
  }
  func.func @transform_3(%arg0: i32, %arg1: i32, %arg2: i32) -> (i32, i32) {
    %c0_i32 = arith.constant 0 : i32
    %c0_i32_0 = arith.constant 0 : i32
    %c0_i32_1 = arith.constant 0 : i32
    return %c0_i32, %c0_i32_0 : i32, i32
  }
  func.func @transform_4(%arg0: i32, %arg1: i32, %arg2: i32) -> (i32, i32) {
    %c0_i32 = arith.constant 0 : i32
    %c0_i32_0 = arith.constant 0 : i32
    %c0_i32_1 = arith.constant 0 : i32
    return %c0_i32, %c0_i32_0 : i32, i32
  }
}

module attributes {stable_mosaic.version = 11 : i64} {
  func.func @_fused_matmul_kernel(%arg0: i32, %arg1: i32, %arg2: i32, %arg3: memref<1x2x512xbf16, #tpu.memory_space<vmem>>, %arg4: memref<1x512x64xbf16, #tpu.memory_space<vmem>>, %arg5: memref<1x2x64xf32, #tpu.memory_space<vmem>>, %arg6: memref<2x64xf32, #tpu.memory_space<vmem>>) attributes {dimension_semantics = [#tpu.dimension_semantics<parallel>, #tpu.dimension_semantics<parallel>, #tpu.dimension_semantics<arbitrary>], iteration_bounds = array<i64: 1, 1, 2>, scalar_prefetch = 0 : i64, scratch_operands = 1 : i64, tpu.core_type = #tpu.core_type<tc>, window_params = [{transform_indices = @transform_0, window_bounds = array<i64: 1, 2, 512>}, {transform_indices = @transform_1, window_bounds = array<i64: 1, 512, 64>}, {transform_indices = @transform_2, window_bounds = array<i64: 1, 2, 64>}]} {
    %c0_i32 = arith.constant 0 : i32
    %0 = arith.cmpi eq, %arg2, %c0_i32 : i32
    %1 = arith.extui %0 : i1 to i32
    %c0_i32_0 = arith.constant 0 : i32
    %2 = arith.cmpi ne, %1, %c0_i32_0 : i32
    scf.if %2 {
      %cst_13 = arith.constant 0.000000e+00 : f32
      %19 = vector.broadcast %cst_13 : f32 to vector<2x64xf32>
      %c0_14 = arith.constant 0 : index
      %c0_15 = arith.constant 0 : index
      %20 = vector.load %arg6[%c0_14, %c0_15] : memref<2x64xf32, #tpu.memory_space<vmem>>, vector<2x64xf32>
      tpu.vector_store %arg6[%c0_14, %c0_15], %19 {strides = array<i32>} : memref<2x64xf32, #tpu.memory_space<vmem>>, vector<2x64xf32>,
    } else {
    }
    %c0 = arith.constant 0 : index
    %c0_1 = arith.constant 0 : index
    %c0_2 = arith.constant 0 : index
    %3 = vector.load %arg3[%c0, %c0_1, %c0_2] : memref<1x2x512xbf16, #tpu.memory_space<vmem>>, vector<1x2x512xbf16>
    %4 = vector.shape_cast %3 : vector<1x2x512xbf16> to vector<2x512xbf16>
    %cst = arith.constant 0.000000e+00 : bf16
    %5 = vector.broadcast %cst : bf16 to vector<2x512xbf16>
    %6 = arith.cmpf oge, %4, %5 : vector<2x512xbf16>
    %cst_3 = arith.constant 2.001950e-01 : bf16
    %7 = vector.broadcast %cst_3 : bf16 to vector<2x512xbf16>
    %8 = arith.mulf %4, %7 : vector<2x512xbf16>
    %9 = arith.select %6, %4, %8 : vector<2x512xi1>, vector<2x512xbf16>
    %c0_4 = arith.constant 0 : index
    %c0_5 = arith.constant 0 : index
    %10 = vector.load %arg6[%c0_4, %c0_5] : memref<2x64xf32, #tpu.memory_space<vmem>>, vector<2x64xf32>
    %c0_6 = arith.constant 0 : index
    %c0_7 = arith.constant 0 : index
    %c0_8 = arith.constant 0 : index
    %11 = vector.load %arg4[%c0_6, %c0_7, %c0_8] : memref<1x512x64xbf16, #tpu.memory_space<vmem>>, vector<1x512x64xbf16>
    %12 = vector.shape_cast %11 : vector<1x512x64xbf16> to vector<512x64xbf16>
    %cst_9 = arith.constant dense<0.000000e+00> : vector<2x64xf32>
    %13 = tpu.matmul %9, %12, %cst_9 {dimension_numbers = #tpu.dot_dimension_numbers<[1], [0], [0], [1], [0, 0, 1, 1], [], []>} : vector<2x512xbf16>, vector<512x64xbf16>, vector<2x64xf32> -> vector<2x64xf32>
    %14 = arith.addf %10, %13 : vector<2x64xf32>
    %c0_10 = arith.constant 0 : index
    %c0_11 = arith.constant 0 : index
    %15 = vector.load %arg6[%c0_10, %c0_11] : memref<2x64xf32, #tpu.memory_space<vmem>>, vector<2x64xf32>
    tpu.vector_store %arg6[%c0_10, %c0_11], %14 {strides = array<i32>} : memref<2x64xf32, #tpu.memory_space<vmem>>, vector<2x64xf32>,
    %c1_i32 = arith.constant 1 : i32
    %16 = arith.cmpi eq, %arg2, %c1_i32 : i32
    %17 = arith.extui %16 : i1 to i32
    %c0_i32_12 = arith.constant 0 : i32
    %18 = arith.cmpi ne, %17, %c0_i32_12 : i32
    scf.if %18 {
      %c0_13 = arith.constant 0 : index
      %c0_14 = arith.constant 0 : index
      %19 = vector.load %arg6[%c0_13, %c0_14] : memref<2x64xf32, #tpu.memory_space<vmem>>, vector<2x64xf32>
      %c0_15 = arith.constant 0 : index
      %c0_16 = arith.constant 0 : index
      %c0_17 = arith.constant 0 : index
      %20 = vector.load %arg5[%c0_15, %c0_16, %c0_17] : memref<1x2x64xf32, #tpu.memory_space<vmem>>, vector<1x2x64xf32>
      %21 = vector.shape_cast %20 : vector<1x2x64xf32> to vector<2x64xf32>
      %22 = vector.shape_cast %19 : vector<2x64xf32> to vector<1x2x64xf32>
      tpu.vector_store %arg5[%c0_15, %c0_16, %c0_17], %22 {strides = array<i32>} : memref<1x2x64xf32, #tpu.memory_space<vmem>>, vector<1x2x64xf32>,
    } else {
    }
    return
  }
  func.func @transform_0(%arg0: i32, %arg1: i32, %arg2: i32) -> (i32, i32, i32) {
    %c0_i32 = arith.constant 0 : i32
    return %arg0, %arg1, %arg2 : i32, i32, i32
  }
  func.func @transform_1(%arg0: i32, %arg1: i32, %arg2: i32) -> (i32, i32, i32) {
    %c0_i32 = arith.constant 0 : i32
    %c0_i32_0 = arith.constant 0 : i32
    return %arg0, %arg2, %c0_i32 : i32, i32, i32
  }
  func.func @transform_2(%arg0: i32, %arg1: i32, %arg2: i32) -> (i32, i32, i32) {
    %c0_i32 = arith.constant 0 : i32
    %c0_i32_0 = arith.constant 0 : i32
    return %arg0, %arg1, %c0_i32 : i32, i32, i32
  }
}

module attributes {stable_mosaic.version = 11 : i64} {
  func.func @_bn_cat_kernel(%arg0: i32, %arg1: memref<8x64xf32, #tpu.memory_space<vmem>>, %arg2: memref<8x64xf32, #tpu.memory_space<vmem>>, %arg3: memref<1x64xf32, #tpu.memory_space<vmem>>, %arg4: memref<1x64xf32, #tpu.memory_space<vmem>>, %arg5: memref<8x128xf32, #tpu.memory_space<vmem>>) attributes {dimension_semantics = [#tpu.dimension_semantics<parallel>], iteration_bounds = array<i64: 1>, scalar_prefetch = 0 : i64, scratch_operands = 0 : i64, tpu.core_type = #tpu.core_type<tc>, window_params = [{transform_indices = @transform_0, window_bounds = array<i64: 8, 64>}, {transform_indices = @transform_1, window_bounds = array<i64: 8, 64>}, {pipeline_mode = #tpu.pipeline_mode<synchronous>, transform_indices = @transform_2, window_bounds = array<i64: 1, 64>}, {pipeline_mode = #tpu.pipeline_mode<synchronous>, transform_indices = @transform_3, window_bounds = array<i64: 1, 64>}, {transform_indices = @transform_4, window_bounds = array<i64: 8, 128>}]} {
    %c0 = arith.constant 0 : index
    %c0_0 = arith.constant 0 : index
    %0 = vector.load %arg2[%c0, %c0_0] : memref<8x64xf32, #tpu.memory_space<vmem>>, vector<8x64xf32>
    %c0_1 = arith.constant 0 : index
    %c0_2 = arith.constant 0 : index
    %1 = vector.load %arg3[%c0_1, %c0_2] : memref<1x64xf32, #tpu.memory_space<vmem>>, vector<1x64xf32>
    %2 = vector.broadcast %1 : vector<1x64xf32> to vector<8x64xf32>
    %3 = arith.mulf %0, %2 : vector<8x64xf32>
    %c0_3 = arith.constant 0 : index
    %c0_4 = arith.constant 0 : index
    %4 = vector.load %arg4[%c0_3, %c0_4] : memref<1x64xf32, #tpu.memory_space<vmem>>, vector<1x64xf32>
    %5 = vector.broadcast %4 : vector<1x64xf32> to vector<8x64xf32>
    %6 = arith.addf %3, %5 : vector<8x64xf32>
    %c0_5 = arith.constant 0 : index
    %c0_6 = arith.constant 0 : index
    %7 = vector.load %arg1[%c0_5, %c0_6] : memref<8x64xf32, #tpu.memory_space<vmem>>, vector<8x64xf32>
    %8 = tpu.concatenate %7, %6 in 1 : vector<8x64xf32>, vector<8x64xf32> -> vector<8x128xf32>
    %c0_7 = arith.constant 0 : index
    %c0_8 = arith.constant 0 : index
    %9 = vector.load %arg5[%c0_7, %c0_8] : memref<8x128xf32, #tpu.memory_space<vmem>>, vector<8x128xf32>
    tpu.vector_store %arg5[%c0_7, %c0_8], %8 {strides = array<i32>} : memref<8x128xf32, #tpu.memory_space<vmem>>, vector<8x128xf32>,
    return
  }
  func.func @transform_0(%arg0: i32) -> (i32, i32) {
    %c0_i32 = arith.constant 0 : i32
    %c0_i32_0 = arith.constant 0 : i32
    return %arg0, %c0_i32 : i32, i32
  }
  func.func @transform_1(%arg0: i32) -> (i32, i32) {
    %c0_i32 = arith.constant 0 : i32
    %c0_i32_0 = arith.constant 0 : i32
    return %arg0, %c0_i32 : i32, i32
  }
  func.func @transform_2(%arg0: i32) -> (i32, i32) {
    %c0_i32 = arith.constant 0 : i32
    %c0_i32_0 = arith.constant 0 : i32
    %c0_i32_1 = arith.constant 0 : i32
    return %c0_i32, %c0_i32_0 : i32, i32
  }
  func.func @transform_3(%arg0: i32) -> (i32, i32) {
    %c0_i32 = arith.constant 0 : i32
    %c0_i32_0 = arith.constant 0 : i32
    %c0_i32_1 = arith.constant 0 : i32
    return %c0_i32, %c0_i32_0 : i32, i32
  }
  func.func @transform_4(%arg0: i32) -> (i32, i32) {
    %c0_i32 = arith.constant 0 : i32
    %c0_i32_0 = arith.constant 0 : i32
    return %arg0, %c0_i32 : i32, i32
  }
}

module attributes {stable_mosaic.version = 11 : i64} {
  func.func @_fused_matmul_kernel(%arg0: i32, %arg1: i32, %arg2: i32, %arg3: memref<1x2x256xbf16, #tpu.memory_space<vmem>>, %arg4: memref<1x256x64xbf16, #tpu.memory_space<vmem>>, %arg5: memref<1x2x64xf32, #tpu.memory_space<vmem>>, %arg6: memref<1x64xf32, #tpu.memory_space<vmem>>, %arg7: memref<1x64xf32, #tpu.memory_space<vmem>>, %arg8: memref<2x64xf32, #tpu.memory_space<vmem>>) attributes {dimension_semantics = [#tpu.dimension_semantics<arbitrary>, #tpu.dimension_semantics<arbitrary>, #tpu.dimension_semantics<arbitrary>], iteration_bounds = array<i64: 4, 1, 1>, scalar_prefetch = 0 : i64, scratch_operands = 1 : i64, tpu.core_type = #tpu.core_type<tc>, window_params = [{transform_indices = @transform_0, window_bounds = array<i64: 1, 2, 256>}, {transform_indices = @transform_1, window_bounds = array<i64: 1, 256, 64>}, {transform_indices = @transform_2, window_bounds = array<i64: 1, 2, 64>}, {pipeline_mode = #tpu.pipeline_mode<synchronous>, transform_indices = @transform_3, window_bounds = array<i64: 1, 64>}, {pipeline_mode = #tpu.pipeline_mode<synchronous>, transform_indices = @transform_4, window_bounds = array<i64: 1, 64>}]} {
    %c0_i32 = arith.constant 0 : i32
    %0 = arith.cmpi eq, %arg2, %c0_i32 : i32
    %1 = arith.extui %0 : i1 to i32
    %c0_i32_0 = arith.constant 0 : i32
    %2 = arith.cmpi ne, %1, %c0_i32_0 : i32
    scf.if %2 {
      %cst_17 = arith.constant 0.000000e+00 : f32
      %23 = vector.broadcast %cst_17 : f32 to vector<2x64xf32>
      %c0_18 = arith.constant 0 : index
      %c0_19 = arith.constant 0 : index
      %24 = vector.load %arg8[%c0_18, %c0_19] : memref<2x64xf32, #tpu.memory_space<vmem>>, vector<2x64xf32>
      tpu.vector_store %arg8[%c0_18, %c0_19], %23 {strides = array<i32>} : memref<2x64xf32, #tpu.memory_space<vmem>>, vector<2x64xf32>,
    } else {
    }
    %c0_i32_1 = arith.constant 0 : i32
    %3 = arith.cmpi eq, %arg0, %c0_i32_1 : i32
    %c0_i32_2 = arith.constant 0 : i32
    %4 = arith.cmpi eq, %arg1, %c0_i32_2 : i32
    %5 = arith.andi %3, %4 : i1
    %c0_i32_3 = arith.constant 0 : i32
    %6 = arith.cmpi eq, %arg2, %c0_i32_3 : i32
    %7 = arith.andi %5, %6 : i1
    %8 = arith.extui %7 : i1 to i32
    %c0_i32_4 = arith.constant 0 : i32
    %9 = arith.cmpi ne, %8, %c0_i32_4 : i32
    scf.if %9 {
      %cst_17 = arith.constant 0.000000e+00 : f32
      %23 = vector.broadcast %cst_17 : f32 to vector<1x64xf32>
      %c0_18 = arith.constant 0 : index
      %c0_19 = arith.constant 0 : index
      %24 = vector.load %arg6[%c0_18, %c0_19] : memref<1x64xf32, #tpu.memory_space<vmem>>, vector<1x64xf32>
      tpu.vector_store %arg6[%c0_18, %c0_19], %23 {strides = array<i32>} : memref<1x64xf32, #tpu.memory_space<vmem>>, vector<1x64xf32>,
      %cst_20 = arith.constant 0.000000e+00 : f32
      %25 = vector.broadcast %cst_20 : f32 to vector<1x64xf32>
      %c0_21 = arith.constant 0 : index
      %c0_22 = arith.constant 0 : index
      %26 = vector.load %arg7[%c0_21, %c0_22] : memref<1x64xf32, #tpu.memory_space<vmem>>, vector<1x64xf32>
      tpu.vector_store %arg7[%c0_21, %c0_22], %25 {strides = array<i32>} : memref<1x64xf32, #tpu.memory_space<vmem>>, vector<1x64xf32>,
    } else {
    }
    %c0 = arith.constant 0 : index
    %c0_5 = arith.constant 0 : index
    %c0_6 = arith.constant 0 : index
    %10 = vector.load %arg3[%c0, %c0_5, %c0_6] : memref<1x2x256xbf16, #tpu.memory_space<vmem>>, vector<1x2x256xbf16>
    %11 = vector.shape_cast %10 : vector<1x2x256xbf16> to vector<2x256xbf16>
    %cst = arith.constant 0.000000e+00 : bf16
    %12 = vector.broadcast %cst : bf16 to vector<2x256xbf16>
    %13 = arith.maximumf %11, %12 : vector<2x256xbf16>
    %c0_7 = arith.constant 0 : index
    %c0_8 = arith.constant 0 : index
    %14 = vector.load %arg8[%c0_7, %c0_8] : memref<2x64xf32, #tpu.memory_space<vmem>>, vector<2x64xf32>
    %c0_9 = arith.constant 0 : index
    %c0_10 = arith.constant 0 : index
    %c0_11 = arith.constant 0 : index
    %15 = vector.load %arg4[%c0_9, %c0_10, %c0_11] : memref<1x256x64xbf16, #tpu.memory_space<vmem>>, vector<1x256x64xbf16>
    %16 = vector.shape_cast %15 : vector<1x256x64xbf16> to vector<256x64xbf16>
    %cst_12 = arith.constant dense<0.000000e+00> : vector<2x64xf32>
    %17 = tpu.matmul %13, %16, %cst_12 {dimension_numbers = #tpu.dot_dimension_numbers<[1], [0], [0], [1], [0, 0, 1, 1], [], []>} : vector<2x256xbf16>, vector<256x64xbf16>, vector<2x64xf32> -> vector<2x64xf32>
    %18 = arith.addf %14, %17 : vector<2x64xf32>
    %c0_13 = arith.constant 0 : index
    %c0_14 = arith.constant 0 : index
    %19 = vector.load %arg8[%c0_13, %c0_14] : memref<2x64xf32, #tpu.memory_space<vmem>>, vector<2x64xf32>
    tpu.vector_store %arg8[%c0_13, %c0_14], %18 {strides = array<i32>} : memref<2x64xf32, #tpu.memory_space<vmem>>, vector<2x64xf32>,
    %c0_i32_15 = arith.constant 0 : i32
    %20 = arith.cmpi eq, %arg2, %c0_i32_15 : i32
    %21 = arith.extui %20 : i1 to i32
    %c0_i32_16 = arith.constant 0 : i32
    %22 = arith.cmpi ne, %21, %c0_i32_16 : i32
    scf.if %22 {
      %c0_17 = arith.constant 0 : index
      %c0_18 = arith.constant 0 : index
      %23 = vector.load %arg8[%c0_17, %c0_18] : memref<2x64xf32, #tpu.memory_space<vmem>>, vector<2x64xf32>
      %c0_19 = arith.constant 0 : index
      %c0_20 = arith.constant 0 : index
      %c0_21 = arith.constant 0 : index
      %24 = vector.load %arg5[%c0_19, %c0_20, %c0_21] : memref<1x2x64xf32, #tpu.memory_space<vmem>>, vector<1x2x64xf32>
      %25 = vector.shape_cast %24 : vector<1x2x64xf32> to vector<2x64xf32>
      %26 = vector.shape_cast %23 : vector<2x64xf32> to vector<1x2x64xf32>
      tpu.vector_store %arg5[%c0_19, %c0_20, %c0_21], %26 {strides = array<i32>} : memref<1x2x64xf32, #tpu.memory_space<vmem>>, vector<1x2x64xf32>,
      %c0_22 = arith.constant 0 : index
      %c0_23 = arith.constant 0 : index
      %27 = vector.load %arg6[%c0_22, %c0_23] : memref<1x64xf32, #tpu.memory_space<vmem>>, vector<1x64xf32>
      %cst_24 = arith.constant dense<0.000000e+00> : vector<64xf32>
      %28 = vector.multi_reduction <add>, %23, %cst_24 [0] : vector<2x64xf32> to vector<64xf32>
      %29 = vector.shape_cast %28 : vector<64xf32> to vector<1x64xf32>
      %30 = arith.addf %27, %29 : vector<1x64xf32>
      %c0_25 = arith.constant 0 : index
      %c0_26 = arith.constant 0 : index
      %31 = vector.load %arg6[%c0_25, %c0_26] : memref<1x64xf32, #tpu.memory_space<vmem>>, vector<1x64xf32>
      tpu.vector_store %arg6[%c0_25, %c0_26], %30 {strides = array<i32>} : memref<1x64xf32, #tpu.memory_space<vmem>>, vector<1x64xf32>,
      %c0_27 = arith.constant 0 : index
      %c0_28 = arith.constant 0 : index
      %32 = vector.load %arg7[%c0_27, %c0_28] : memref<1x64xf32, #tpu.memory_space<vmem>>, vector<1x64xf32>
      %33 = arith.mulf %23, %23 : vector<2x64xf32>
      %cst_29 = arith.constant dense<0.000000e+00> : vector<64xf32>
      %34 = vector.multi_reduction <add>, %33, %cst_29 [0] : vector<2x64xf32> to vector<64xf32>
      %35 = vector.shape_cast %34 : vector<64xf32> to vector<1x64xf32>
      %36 = arith.addf %32, %35 : vector<1x64xf32>
      %c0_30 = arith.constant 0 : index
      %c0_31 = arith.constant 0 : index
      %37 = vector.load %arg7[%c0_30, %c0_31] : memref<1x64xf32, #tpu.memory_space<vmem>>, vector<1x64xf32>
      tpu.vector_store %arg7[%c0_30, %c0_31], %36 {strides = array<i32>} : memref<1x64xf32, #tpu.memory_space<vmem>>, vector<1x64xf32>,
    } else {
    }
    return
  }
  func.func @transform_0(%arg0: i32, %arg1: i32, %arg2: i32) -> (i32, i32, i32) {
    %c0_i32 = arith.constant 0 : i32
    return %arg0, %arg1, %arg2 : i32, i32, i32
  }
  func.func @transform_1(%arg0: i32, %arg1: i32, %arg2: i32) -> (i32, i32, i32) {
    %c0_i32 = arith.constant 0 : i32
    %c0_i32_0 = arith.constant 0 : i32
    return %arg0, %arg2, %c0_i32 : i32, i32, i32
  }
  func.func @transform_2(%arg0: i32, %arg1: i32, %arg2: i32) -> (i32, i32, i32) {
    %c0_i32 = arith.constant 0 : i32
    %c0_i32_0 = arith.constant 0 : i32
    return %arg0, %arg1, %c0_i32 : i32, i32, i32
  }
  func.func @transform_3(%arg0: i32, %arg1: i32, %arg2: i32) -> (i32, i32) {
    %c0_i32 = arith.constant 0 : i32
    %c0_i32_0 = arith.constant 0 : i32
    %c0_i32_1 = arith.constant 0 : i32
    return %c0_i32, %c0_i32_0 : i32, i32
  }
  func.func @transform_4(%arg0: i32, %arg1: i32, %arg2: i32) -> (i32, i32) {
    %c0_i32 = arith.constant 0 : i32
    %c0_i32_0 = arith.constant 0 : i32
    %c0_i32_1 = arith.constant 0 : i32
    return %c0_i32, %c0_i32_0 : i32, i32
  }
}

module attributes {stable_mosaic.version = 11 : i64} {
  func.func @_fused_matmul_kernel(%arg0: i32, %arg1: i32, %arg2: i32, %arg3: memref<1x8x512xbf16, #tpu.memory_space<vmem>>, %arg4: memref<1x512x32xbf16, #tpu.memory_space<vmem>>, %arg5: memref<1x8x32xf32, #tpu.memory_space<vmem>>, %arg6: memref<1x32xf32, #tpu.memory_space<vmem>>, %arg7: memref<1x32xf32, #tpu.memory_space<vmem>>, %arg8: memref<8x32xf32, #tpu.memory_space<vmem>>) attributes {dimension_semantics = [#tpu.dimension_semantics<arbitrary>, #tpu.dimension_semantics<arbitrary>, #tpu.dimension_semantics<arbitrary>], iteration_bounds = array<i64: 4, 1, 1>, scalar_prefetch = 0 : i64, scratch_operands = 1 : i64, tpu.core_type = #tpu.core_type<tc>, window_params = [{transform_indices = @transform_0, window_bounds = array<i64: 1, 8, 512>}, {transform_indices = @transform_1, window_bounds = array<i64: 1, 512, 32>}, {transform_indices = @transform_2, window_bounds = array<i64: 1, 8, 32>}, {pipeline_mode = #tpu.pipeline_mode<synchronous>, transform_indices = @transform_3, window_bounds = array<i64: 1, 32>}, {pipeline_mode = #tpu.pipeline_mode<synchronous>, transform_indices = @transform_4, window_bounds = array<i64: 1, 32>}]} {
    %c0_i32 = arith.constant 0 : i32
    %0 = arith.cmpi eq, %arg2, %c0_i32 : i32
    %1 = arith.extui %0 : i1 to i32
    %c0_i32_0 = arith.constant 0 : i32
    %2 = arith.cmpi ne, %1, %c0_i32_0 : i32
    scf.if %2 {
      %cst_17 = arith.constant 0.000000e+00 : f32
      %23 = vector.broadcast %cst_17 : f32 to vector<8x32xf32>
      %c0_18 = arith.constant 0 : index
      %c0_19 = arith.constant 0 : index
      %24 = vector.load %arg8[%c0_18, %c0_19] : memref<8x32xf32, #tpu.memory_space<vmem>>, vector<8x32xf32>
      tpu.vector_store %arg8[%c0_18, %c0_19], %23 {strides = array<i32>} : memref<8x32xf32, #tpu.memory_space<vmem>>, vector<8x32xf32>,
    } else {
    }
    %c0_i32_1 = arith.constant 0 : i32
    %3 = arith.cmpi eq, %arg0, %c0_i32_1 : i32
    %c0_i32_2 = arith.constant 0 : i32
    %4 = arith.cmpi eq, %arg1, %c0_i32_2 : i32
    %5 = arith.andi %3, %4 : i1
    %c0_i32_3 = arith.constant 0 : i32
    %6 = arith.cmpi eq, %arg2, %c0_i32_3 : i32
    %7 = arith.andi %5, %6 : i1
    %8 = arith.extui %7 : i1 to i32
    %c0_i32_4 = arith.constant 0 : i32
    %9 = arith.cmpi ne, %8, %c0_i32_4 : i32
    scf.if %9 {
      %cst_17 = arith.constant 0.000000e+00 : f32
      %23 = vector.broadcast %cst_17 : f32 to vector<1x32xf32>
      %c0_18 = arith.constant 0 : index
      %c0_19 = arith.constant 0 : index
      %24 = vector.load %arg6[%c0_18, %c0_19] : memref<1x32xf32, #tpu.memory_space<vmem>>, vector<1x32xf32>
      tpu.vector_store %arg6[%c0_18, %c0_19], %23 {strides = array<i32>} : memref<1x32xf32, #tpu.memory_space<vmem>>, vector<1x32xf32>,
      %cst_20 = arith.constant 0.000000e+00 : f32
      %25 = vector.broadcast %cst_20 : f32 to vector<1x32xf32>
      %c0_21 = arith.constant 0 : index
      %c0_22 = arith.constant 0 : index
      %26 = vector.load %arg7[%c0_21, %c0_22] : memref<1x32xf32, #tpu.memory_space<vmem>>, vector<1x32xf32>
      tpu.vector_store %arg7[%c0_21, %c0_22], %25 {strides = array<i32>} : memref<1x32xf32, #tpu.memory_space<vmem>>, vector<1x32xf32>,
    } else {
    }
    %c0 = arith.constant 0 : index
    %c0_5 = arith.constant 0 : index
    %c0_6 = arith.constant 0 : index
    %10 = vector.load %arg3[%c0, %c0_5, %c0_6] : memref<1x8x512xbf16, #tpu.memory_space<vmem>>, vector<1x8x512xbf16>
    %11 = vector.shape_cast %10 : vector<1x8x512xbf16> to vector<8x512xbf16>
    %cst = arith.constant 0.000000e+00 : bf16
    %12 = vector.broadcast %cst : bf16 to vector<8x512xbf16>
    %13 = arith.maximumf %11, %12 : vector<8x512xbf16>
    %c0_7 = arith.constant 0 : index
    %c0_8 = arith.constant 0 : index
    %14 = vector.load %arg8[%c0_7, %c0_8] : memref<8x32xf32, #tpu.memory_space<vmem>>, vector<8x32xf32>
    %c0_9 = arith.constant 0 : index
    %c0_10 = arith.constant 0 : index
    %c0_11 = arith.constant 0 : index
    %15 = vector.load %arg4[%c0_9, %c0_10, %c0_11] : memref<1x512x32xbf16, #tpu.memory_space<vmem>>, vector<1x512x32xbf16>
    %16 = vector.shape_cast %15 : vector<1x512x32xbf16> to vector<512x32xbf16>
    %cst_12 = arith.constant dense<0.000000e+00> : vector<8x32xf32>
    %17 = tpu.matmul %13, %16, %cst_12 {dimension_numbers = #tpu.dot_dimension_numbers<[1], [0], [0], [1], [0, 0, 1, 1], [], []>} : vector<8x512xbf16>, vector<512x32xbf16>, vector<8x32xf32> -> vector<8x32xf32>
    %18 = arith.addf %14, %17 : vector<8x32xf32>
    %c0_13 = arith.constant 0 : index
    %c0_14 = arith.constant 0 : index
    %19 = vector.load %arg8[%c0_13, %c0_14] : memref<8x32xf32, #tpu.memory_space<vmem>>, vector<8x32xf32>
    tpu.vector_store %arg8[%c0_13, %c0_14], %18 {strides = array<i32>} : memref<8x32xf32, #tpu.memory_space<vmem>>, vector<8x32xf32>,
    %c0_i32_15 = arith.constant 0 : i32
    %20 = arith.cmpi eq, %arg2, %c0_i32_15 : i32
    %21 = arith.extui %20 : i1 to i32
    %c0_i32_16 = arith.constant 0 : i32
    %22 = arith.cmpi ne, %21, %c0_i32_16 : i32
    scf.if %22 {
      %c0_17 = arith.constant 0 : index
      %c0_18 = arith.constant 0 : index
      %23 = vector.load %arg8[%c0_17, %c0_18] : memref<8x32xf32, #tpu.memory_space<vmem>>, vector<8x32xf32>
      %c0_19 = arith.constant 0 : index
      %c0_20 = arith.constant 0 : index
      %c0_21 = arith.constant 0 : index
      %24 = vector.load %arg5[%c0_19, %c0_20, %c0_21] : memref<1x8x32xf32, #tpu.memory_space<vmem>>, vector<1x8x32xf32>
      %25 = vector.shape_cast %24 : vector<1x8x32xf32> to vector<8x32xf32>
      %26 = vector.shape_cast %23 : vector<8x32xf32> to vector<1x8x32xf32>
      tpu.vector_store %arg5[%c0_19, %c0_20, %c0_21], %26 {strides = array<i32>} : memref<1x8x32xf32, #tpu.memory_space<vmem>>, vector<1x8x32xf32>,
      %c0_22 = arith.constant 0 : index
      %c0_23 = arith.constant 0 : index
      %27 = vector.load %arg6[%c0_22, %c0_23] : memref<1x32xf32, #tpu.memory_space<vmem>>, vector<1x32xf32>
      %cst_24 = arith.constant dense<0.000000e+00> : vector<32xf32>
      %28 = vector.multi_reduction <add>, %23, %cst_24 [0] : vector<8x32xf32> to vector<32xf32>
      %29 = vector.shape_cast %28 : vector<32xf32> to vector<1x32xf32>
      %30 = arith.addf %27, %29 : vector<1x32xf32>
      %c0_25 = arith.constant 0 : index
      %c0_26 = arith.constant 0 : index
      %31 = vector.load %arg6[%c0_25, %c0_26] : memref<1x32xf32, #tpu.memory_space<vmem>>, vector<1x32xf32>
      tpu.vector_store %arg6[%c0_25, %c0_26], %30 {strides = array<i32>} : memref<1x32xf32, #tpu.memory_space<vmem>>, vector<1x32xf32>,
      %c0_27 = arith.constant 0 : index
      %c0_28 = arith.constant 0 : index
      %32 = vector.load %arg7[%c0_27, %c0_28] : memref<1x32xf32, #tpu.memory_space<vmem>>, vector<1x32xf32>
      %33 = arith.mulf %23, %23 : vector<8x32xf32>
      %cst_29 = arith.constant dense<0.000000e+00> : vector<32xf32>
      %34 = vector.multi_reduction <add>, %33, %cst_29 [0] : vector<8x32xf32> to vector<32xf32>
      %35 = vector.shape_cast %34 : vector<32xf32> to vector<1x32xf32>
      %36 = arith.addf %32, %35 : vector<1x32xf32>
      %c0_30 = arith.constant 0 : index
      %c0_31 = arith.constant 0 : index
      %37 = vector.load %arg7[%c0_30, %c0_31] : memref<1x32xf32, #tpu.memory_space<vmem>>, vector<1x32xf32>
      tpu.vector_store %arg7[%c0_30, %c0_31], %36 {strides = array<i32>} : memref<1x32xf32, #tpu.memory_space<vmem>>, vector<1x32xf32>,
    } else {
    }
    return
  }
  func.func @transform_0(%arg0: i32, %arg1: i32, %arg2: i32) -> (i32, i32, i32) {
    %c0_i32 = arith.constant 0 : i32
    return %arg0, %arg1, %arg2 : i32, i32, i32
  }
  func.func @transform_1(%arg0: i32, %arg1: i32, %arg2: i32) -> (i32, i32, i32) {
    %c0_i32 = arith.constant 0 : i32
    %c0_i32_0 = arith.constant 0 : i32
    return %arg0, %arg2, %c0_i32 : i32, i32, i32
  }
  func.func @transform_2(%arg0: i32, %arg1: i32, %arg2: i32) -> (i32, i32, i32) {
    %c0_i32 = arith.constant 0 : i32
    %c0_i32_0 = arith.constant 0 : i32
    return %arg0, %arg1, %c0_i32 : i32, i32, i32
  }
  func.func @transform_3(%arg0: i32, %arg1: i32, %arg2: i32) -> (i32, i32) {
    %c0_i32 = arith.constant 0 : i32
    %c0_i32_0 = arith.constant 0 : i32
    %c0_i32_1 = arith.constant 0 : i32
    return %c0_i32, %c0_i32_0 : i32, i32
  }
  func.func @transform_4(%arg0: i32, %arg1: i32, %arg2: i32) -> (i32, i32) {
    %c0_i32 = arith.constant 0 : i32
    %c0_i32_0 = arith.constant 0 : i32
    %c0_i32_1 = arith.constant 0 : i32
    return %c0_i32, %c0_i32_0 : i32, i32
  }
}

module attributes {stable_mosaic.version = 11 : i64} {
  func.func @_bn_cat_kernel(%arg0: i32, %arg1: memref<32x32xf32, #tpu.memory_space<vmem>>, %arg2: memref<32x32xf32, #tpu.memory_space<vmem>>, %arg3: memref<1x32xf32, #tpu.memory_space<vmem>>, %arg4: memref<1x32xf32, #tpu.memory_space<vmem>>, %arg5: memref<32x64xf32, #tpu.memory_space<vmem>>) attributes {dimension_semantics = [#tpu.dimension_semantics<parallel>], iteration_bounds = array<i64: 1>, scalar_prefetch = 0 : i64, scratch_operands = 0 : i64, tpu.core_type = #tpu.core_type<tc>, window_params = [{transform_indices = @transform_0, window_bounds = array<i64: 32, 32>}, {transform_indices = @transform_1, window_bounds = array<i64: 32, 32>}, {pipeline_mode = #tpu.pipeline_mode<synchronous>, transform_indices = @transform_2, window_bounds = array<i64: 1, 32>}, {pipeline_mode = #tpu.pipeline_mode<synchronous>, transform_indices = @transform_3, window_bounds = array<i64: 1, 32>}, {transform_indices = @transform_4, window_bounds = array<i64: 32, 64>}]} {
    %c0 = arith.constant 0 : index
    %c0_0 = arith.constant 0 : index
    %0 = vector.load %arg2[%c0, %c0_0] : memref<32x32xf32, #tpu.memory_space<vmem>>, vector<32x32xf32>
    %c0_1 = arith.constant 0 : index
    %c0_2 = arith.constant 0 : index
    %1 = vector.load %arg3[%c0_1, %c0_2] : memref<1x32xf32, #tpu.memory_space<vmem>>, vector<1x32xf32>
    %2 = vector.broadcast %1 : vector<1x32xf32> to vector<32x32xf32>
    %3 = arith.mulf %0, %2 : vector<32x32xf32>
    %c0_3 = arith.constant 0 : index
    %c0_4 = arith.constant 0 : index
    %4 = vector.load %arg4[%c0_3, %c0_4] : memref<1x32xf32, #tpu.memory_space<vmem>>, vector<1x32xf32>
    %5 = vector.broadcast %4 : vector<1x32xf32> to vector<32x32xf32>
    %6 = arith.addf %3, %5 : vector<32x32xf32>
    %c0_5 = arith.constant 0 : index
    %c0_6 = arith.constant 0 : index
    %7 = vector.load %arg1[%c0_5, %c0_6] : memref<32x32xf32, #tpu.memory_space<vmem>>, vector<32x32xf32>
    %8 = tpu.concatenate %7, %6 in 1 : vector<32x32xf32>, vector<32x32xf32> -> vector<32x64xf32>
    %c0_7 = arith.constant 0 : index
    %c0_8 = arith.constant 0 : index
    %9 = vector.load %arg5[%c0_7, %c0_8] : memref<32x64xf32, #tpu.memory_space<vmem>>, vector<32x64xf32>
    tpu.vector_store %arg5[%c0_7, %c0_8], %8 {strides = array<i32>} : memref<32x64xf32, #tpu.memory_space<vmem>>, vector<32x64xf32>,
    return
  }
  func.func @transform_0(%arg0: i32) -> (i32, i32) {
    %c0_i32 = arith.constant 0 : i32
    %c0_i32_0 = arith.constant 0 : i32
    return %arg0, %c0_i32 : i32, i32
  }
  func.func @transform_1(%arg0: i32) -> (i32, i32) {
    %c0_i32 = arith.constant 0 : i32
    %c0_i32_0 = arith.constant 0 : i32
    return %arg0, %c0_i32 : i32, i32
  }
  func.func @transform_2(%arg0: i32) -> (i32, i32) {
    %c0_i32 = arith.constant 0 : i32
    %c0_i32_0 = arith.constant 0 : i32
    %c0_i32_1 = arith.constant 0 : i32
    return %c0_i32, %c0_i32_0 : i32, i32
  }
  func.func @transform_3(%arg0: i32) -> (i32, i32) {
    %c0_i32 = arith.constant 0 : i32
    %c0_i32_0 = arith.constant 0 : i32
    %c0_i32_1 = arith.constant 0 : i32
    return %c0_i32, %c0_i32_0 : i32, i32
  }
  func.func @transform_4(%arg0: i32) -> (i32, i32) {
    %c0_i32 = arith.constant 0 : i32
    %c0_i32_0 = arith.constant 0 : i32
    return %arg0, %c0_i32 : i32, i32
  }
}

module attributes {stable_mosaic.version = 11 : i64} {
  func.func @_fused_matmul_kernel(%arg0: i32, %arg1: i32, %arg2: i32, %arg3: memref<1x32x256xbf16, #tpu.memory_space<vmem>>, %arg4: memref<1x256x16xbf16, #tpu.memory_space<vmem>>, %arg5: memref<1x32x16xf32, #tpu.memory_space<vmem>>, %arg6: memref<1x16xf32, #tpu.memory_space<vmem>>, %arg7: memref<1x16xf32, #tpu.memory_space<vmem>>, %arg8: memref<32x16xf32, #tpu.memory_space<vmem>>) attributes {dimension_semantics = [#tpu.dimension_semantics<arbitrary>, #tpu.dimension_semantics<arbitrary>, #tpu.dimension_semantics<arbitrary>], iteration_bounds = array<i64: 4, 1, 1>, scalar_prefetch = 0 : i64, scratch_operands = 1 : i64, tpu.core_type = #tpu.core_type<tc>, window_params = [{transform_indices = @transform_0, window_bounds = array<i64: 1, 32, 256>}, {transform_indices = @transform_1, window_bounds = array<i64: 1, 256, 16>}, {transform_indices = @transform_2, window_bounds = array<i64: 1, 32, 16>}, {pipeline_mode = #tpu.pipeline_mode<synchronous>, transform_indices = @transform_3, window_bounds = array<i64: 1, 16>}, {pipeline_mode = #tpu.pipeline_mode<synchronous>, transform_indices = @transform_4, window_bounds = array<i64: 1, 16>}]} {
    %c0_i32 = arith.constant 0 : i32
    %0 = arith.cmpi eq, %arg2, %c0_i32 : i32
    %1 = arith.extui %0 : i1 to i32
    %c0_i32_0 = arith.constant 0 : i32
    %2 = arith.cmpi ne, %1, %c0_i32_0 : i32
    scf.if %2 {
      %cst_17 = arith.constant 0.000000e+00 : f32
      %23 = vector.broadcast %cst_17 : f32 to vector<32x16xf32>
      %c0_18 = arith.constant 0 : index
      %c0_19 = arith.constant 0 : index
      %24 = vector.load %arg8[%c0_18, %c0_19] : memref<32x16xf32, #tpu.memory_space<vmem>>, vector<32x16xf32>
      tpu.vector_store %arg8[%c0_18, %c0_19], %23 {strides = array<i32>} : memref<32x16xf32, #tpu.memory_space<vmem>>, vector<32x16xf32>,
    } else {
    }
    %c0_i32_1 = arith.constant 0 : i32
    %3 = arith.cmpi eq, %arg0, %c0_i32_1 : i32
    %c0_i32_2 = arith.constant 0 : i32
    %4 = arith.cmpi eq, %arg1, %c0_i32_2 : i32
    %5 = arith.andi %3, %4 : i1
    %c0_i32_3 = arith.constant 0 : i32
    %6 = arith.cmpi eq, %arg2, %c0_i32_3 : i32
    %7 = arith.andi %5, %6 : i1
    %8 = arith.extui %7 : i1 to i32
    %c0_i32_4 = arith.constant 0 : i32
    %9 = arith.cmpi ne, %8, %c0_i32_4 : i32
    scf.if %9 {
      %cst_17 = arith.constant 0.000000e+00 : f32
      %23 = vector.broadcast %cst_17 : f32 to vector<1x16xf32>
      %c0_18 = arith.constant 0 : index
      %c0_19 = arith.constant 0 : index
      %24 = vector.load %arg6[%c0_18, %c0_19] : memref<1x16xf32, #tpu.memory_space<vmem>>, vector<1x16xf32>
      tpu.vector_store %arg6[%c0_18, %c0_19], %23 {strides = array<i32>} : memref<1x16xf32, #tpu.memory_space<vmem>>, vector<1x16xf32>,
      %cst_20 = arith.constant 0.000000e+00 : f32
      %25 = vector.broadcast %cst_20 : f32 to vector<1x16xf32>
      %c0_21 = arith.constant 0 : index
      %c0_22 = arith.constant 0 : index
      %26 = vector.load %arg7[%c0_21, %c0_22] : memref<1x16xf32, #tpu.memory_space<vmem>>, vector<1x16xf32>
      tpu.vector_store %arg7[%c0_21, %c0_22], %25 {strides = array<i32>} : memref<1x16xf32, #tpu.memory_space<vmem>>, vector<1x16xf32>,
    } else {
    }
    %c0 = arith.constant 0 : index
    %c0_5 = arith.constant 0 : index
    %c0_6 = arith.constant 0 : index
    %10 = vector.load %arg3[%c0, %c0_5, %c0_6] : memref<1x32x256xbf16, #tpu.memory_space<vmem>>, vector<1x32x256xbf16>
    %11 = vector.shape_cast %10 : vector<1x32x256xbf16> to vector<32x256xbf16>
    %cst = arith.constant 0.000000e+00 : bf16
    %12 = vector.broadcast %cst : bf16 to vector<32x256xbf16>
    %13 = arith.maximumf %11, %12 : vector<32x256xbf16>
    %c0_7 = arith.constant 0 : index
    %c0_8 = arith.constant 0 : index
    %14 = vector.load %arg8[%c0_7, %c0_8] : memref<32x16xf32, #tpu.memory_space<vmem>>, vector<32x16xf32>
    %c0_9 = arith.constant 0 : index
    %c0_10 = arith.constant 0 : index
    %c0_11 = arith.constant 0 : index
    %15 = vector.load %arg4[%c0_9, %c0_10, %c0_11] : memref<1x256x16xbf16, #tpu.memory_space<vmem>>, vector<1x256x16xbf16>
    %16 = vector.shape_cast %15 : vector<1x256x16xbf16> to vector<256x16xbf16>
    %cst_12 = arith.constant dense<0.000000e+00> : vector<32x16xf32>
    %17 = tpu.matmul %13, %16, %cst_12 {dimension_numbers = #tpu.dot_dimension_numbers<[1], [0], [0], [1], [0, 0, 1, 1], [], []>} : vector<32x256xbf16>, vector<256x16xbf16>, vector<32x16xf32> -> vector<32x16xf32>
    %18 = arith.addf %14, %17 : vector<32x16xf32>
    %c0_13 = arith.constant 0 : index
    %c0_14 = arith.constant 0 : index
    %19 = vector.load %arg8[%c0_13, %c0_14] : memref<32x16xf32, #tpu.memory_space<vmem>>, vector<32x16xf32>
    tpu.vector_store %arg8[%c0_13, %c0_14], %18 {strides = array<i32>} : memref<32x16xf32, #tpu.memory_space<vmem>>, vector<32x16xf32>,
    %c0_i32_15 = arith.constant 0 : i32
    %20 = arith.cmpi eq, %arg2, %c0_i32_15 : i32
    %21 = arith.extui %20 : i1 to i32
    %c0_i32_16 = arith.constant 0 : i32
    %22 = arith.cmpi ne, %21, %c0_i32_16 : i32
    scf.if %22 {
      %c0_17 = arith.constant 0 : index
      %c0_18 = arith.constant 0 : index
      %23 = vector.load %arg8[%c0_17, %c0_18] : memref<32x16xf32, #tpu.memory_space<vmem>>, vector<32x16xf32>
      %c0_19 = arith.constant 0 : index
      %c0_20 = arith.constant 0 : index
      %c0_21 = arith.constant 0 : index
      %24 = vector.load %arg5[%c0_19, %c0_20, %c0_21] : memref<1x32x16xf32, #tpu.memory_space<vmem>>, vector<1x32x16xf32>
      %25 = vector.shape_cast %24 : vector<1x32x16xf32> to vector<32x16xf32>
      %26 = vector.shape_cast %23 : vector<32x16xf32> to vector<1x32x16xf32>
      tpu.vector_store %arg5[%c0_19, %c0_20, %c0_21], %26 {strides = array<i32>} : memref<1x32x16xf32, #tpu.memory_space<vmem>>, vector<1x32x16xf32>,
      %c0_22 = arith.constant 0 : index
      %c0_23 = arith.constant 0 : index
      %27 = vector.load %arg6[%c0_22, %c0_23] : memref<1x16xf32, #tpu.memory_space<vmem>>, vector<1x16xf32>
      %cst_24 = arith.constant dense<0.000000e+00> : vector<16xf32>
      %28 = vector.multi_reduction <add>, %23, %cst_24 [0] : vector<32x16xf32> to vector<16xf32>
      %29 = vector.shape_cast %28 : vector<16xf32> to vector<1x16xf32>
      %30 = arith.addf %27, %29 : vector<1x16xf32>
      %c0_25 = arith.constant 0 : index
      %c0_26 = arith.constant 0 : index
      %31 = vector.load %arg6[%c0_25, %c0_26] : memref<1x16xf32, #tpu.memory_space<vmem>>, vector<1x16xf32>
      tpu.vector_store %arg6[%c0_25, %c0_26], %30 {strides = array<i32>} : memref<1x16xf32, #tpu.memory_space<vmem>>, vector<1x16xf32>,
      %c0_27 = arith.constant 0 : index
      %c0_28 = arith.constant 0 : index
      %32 = vector.load %arg7[%c0_27, %c0_28] : memref<1x16xf32, #tpu.memory_space<vmem>>, vector<1x16xf32>
      %33 = arith.mulf %23, %23 : vector<32x16xf32>
      %cst_29 = arith.constant dense<0.000000e+00> : vector<16xf32>
      %34 = vector.multi_reduction <add>, %33, %cst_29 [0] : vector<32x16xf32> to vector<16xf32>
      %35 = vector.shape_cast %34 : vector<16xf32> to vector<1x16xf32>
      %36 = arith.addf %32, %35 : vector<1x16xf32>
      %c0_30 = arith.constant 0 : index
      %c0_31 = arith.constant 0 : index
      %37 = vector.load %arg7[%c0_30, %c0_31] : memref<1x16xf32, #tpu.memory_space<vmem>>, vector<1x16xf32>
      tpu.vector_store %arg7[%c0_30, %c0_31], %36 {strides = array<i32>} : memref<1x16xf32, #tpu.memory_space<vmem>>, vector<1x16xf32>,
    } else {
    }
    return
  }
  func.func @transform_0(%arg0: i32, %arg1: i32, %arg2: i32) -> (i32, i32, i32) {
    %c0_i32 = arith.constant 0 : i32
    return %arg0, %arg1, %arg2 : i32, i32, i32
  }
  func.func @transform_1(%arg0: i32, %arg1: i32, %arg2: i32) -> (i32, i32, i32) {
    %c0_i32 = arith.constant 0 : i32
    %c0_i32_0 = arith.constant 0 : i32
    return %arg0, %arg2, %c0_i32 : i32, i32, i32
  }
  func.func @transform_2(%arg0: i32, %arg1: i32, %arg2: i32) -> (i32, i32, i32) {
    %c0_i32 = arith.constant 0 : i32
    %c0_i32_0 = arith.constant 0 : i32
    return %arg0, %arg1, %c0_i32 : i32, i32, i32
  }
  func.func @transform_3(%arg0: i32, %arg1: i32, %arg2: i32) -> (i32, i32) {
    %c0_i32 = arith.constant 0 : i32
    %c0_i32_0 = arith.constant 0 : i32
    %c0_i32_1 = arith.constant 0 : i32
    return %c0_i32, %c0_i32_0 : i32, i32
  }
  func.func @transform_4(%arg0: i32, %arg1: i32, %arg2: i32) -> (i32, i32) {
    %c0_i32 = arith.constant 0 : i32
    %c0_i32_0 = arith.constant 0 : i32
    %c0_i32_1 = arith.constant 0 : i32
    return %c0_i32, %c0_i32_0 : i32, i32
  }
}

module attributes {stable_mosaic.version = 11 : i64} {
  func.func @_bn_cat_kernel(%arg0: i32, %arg1: memref<128x16xf32, #tpu.memory_space<vmem>>, %arg2: memref<128x16xf32, #tpu.memory_space<vmem>>, %arg3: memref<1x16xf32, #tpu.memory_space<vmem>>, %arg4: memref<1x16xf32, #tpu.memory_space<vmem>>, %arg5: memref<128x32xf32, #tpu.memory_space<vmem>>) attributes {dimension_semantics = [#tpu.dimension_semantics<parallel>], iteration_bounds = array<i64: 1>, scalar_prefetch = 0 : i64, scratch_operands = 0 : i64, tpu.core_type = #tpu.core_type<tc>, window_params = [{transform_indices = @transform_0, window_bounds = array<i64: 128, 16>}, {transform_indices = @transform_1, window_bounds = array<i64: 128, 16>}, {pipeline_mode = #tpu.pipeline_mode<synchronous>, transform_indices = @transform_2, window_bounds = array<i64: 1, 16>}, {pipeline_mode = #tpu.pipeline_mode<synchronous>, transform_indices = @transform_3, window_bounds = array<i64: 1, 16>}, {transform_indices = @transform_4, window_bounds = array<i64: 128, 32>}]} {
    %c0 = arith.constant 0 : index
    %c0_0 = arith.constant 0 : index
    %0 = vector.load %arg2[%c0, %c0_0] : memref<128x16xf32, #tpu.memory_space<vmem>>, vector<128x16xf32>
    %c0_1 = arith.constant 0 : index
    %c0_2 = arith.constant 0 : index
    %1 = vector.load %arg3[%c0_1, %c0_2] : memref<1x16xf32, #tpu.memory_space<vmem>>, vector<1x16xf32>
    %2 = vector.broadcast %1 : vector<1x16xf32> to vector<128x16xf32>
    %3 = arith.mulf %0, %2 : vector<128x16xf32>
    %c0_3 = arith.constant 0 : index
    %c0_4 = arith.constant 0 : index
    %4 = vector.load %arg4[%c0_3, %c0_4] : memref<1x16xf32, #tpu.memory_space<vmem>>, vector<1x16xf32>
    %5 = vector.broadcast %4 : vector<1x16xf32> to vector<128x16xf32>
    %6 = arith.addf %3, %5 : vector<128x16xf32>
    %c0_5 = arith.constant 0 : index
    %c0_6 = arith.constant 0 : index
    %7 = vector.load %arg1[%c0_5, %c0_6] : memref<128x16xf32, #tpu.memory_space<vmem>>, vector<128x16xf32>
    %8 = tpu.concatenate %7, %6 in 1 : vector<128x16xf32>, vector<128x16xf32> -> vector<128x32xf32>
    %c0_7 = arith.constant 0 : index
    %c0_8 = arith.constant 0 : index
    %9 = vector.load %arg5[%c0_7, %c0_8] : memref<128x32xf32, #tpu.memory_space<vmem>>, vector<128x32xf32>
    tpu.vector_store %arg5[%c0_7, %c0_8], %8 {strides = array<i32>} : memref<128x32xf32, #tpu.memory_space<vmem>>, vector<128x32xf32>,
    return
  }
  func.func @transform_0(%arg0: i32) -> (i32, i32) {
    %c0_i32 = arith.constant 0 : i32
    %c0_i32_0 = arith.constant 0 : i32
    return %arg0, %c0_i32 : i32, i32
  }
  func.func @transform_1(%arg0: i32) -> (i32, i32) {
    %c0_i32 = arith.constant 0 : i32
    %c0_i32_0 = arith.constant 0 : i32
    return %arg0, %c0_i32 : i32, i32
  }
  func.func @transform_2(%arg0: i32) -> (i32, i32) {
    %c0_i32 = arith.constant 0 : i32
    %c0_i32_0 = arith.constant 0 : i32
    %c0_i32_1 = arith.constant 0 : i32
    return %c0_i32, %c0_i32_0 : i32, i32
  }
  func.func @transform_3(%arg0: i32) -> (i32, i32) {
    %c0_i32 = arith.constant 0 : i32
    %c0_i32_0 = arith.constant 0 : i32
    %c0_i32_1 = arith.constant 0 : i32
    return %c0_i32, %c0_i32_0 : i32, i32
  }
  func.func @transform_4(%arg0: i32) -> (i32, i32) {
    %c0_i32 = arith.constant 0 : i32
    %c0_i32_0 = arith.constant 0 : i32
    return %arg0, %c0_i32 : i32, i32
  }
}

module attributes {stable_mosaic.version = 11 : i64} {
  func.func @_fused_matmul_kernel(%arg0: i32, %arg1: i32, %arg2: i32, %arg3: memref<1x128x128xbf16, #tpu.memory_space<vmem>>, %arg4: memref<1x128x8xbf16, #tpu.memory_space<vmem>>, %arg5: memref<1x128x8xf32, #tpu.memory_space<vmem>>, %arg6: memref<1x8xf32, #tpu.memory_space<vmem>>, %arg7: memref<1x8xf32, #tpu.memory_space<vmem>>, %arg8: memref<128x8xf32, #tpu.memory_space<vmem>>) attributes {dimension_semantics = [#tpu.dimension_semantics<arbitrary>, #tpu.dimension_semantics<arbitrary>, #tpu.dimension_semantics<arbitrary>], iteration_bounds = array<i64: 4, 1, 1>, scalar_prefetch = 0 : i64, scratch_operands = 1 : i64, tpu.core_type = #tpu.core_type<tc>, window_params = [{transform_indices = @transform_0, window_bounds = array<i64: 1, 128, 128>}, {transform_indices = @transform_1, window_bounds = array<i64: 1, 128, 8>}, {transform_indices = @transform_2, window_bounds = array<i64: 1, 128, 8>}, {pipeline_mode = #tpu.pipeline_mode<synchronous>, transform_indices = @transform_3, window_bounds = array<i64: 1, 8>}, {pipeline_mode = #tpu.pipeline_mode<synchronous>, transform_indices = @transform_4, window_bounds = array<i64: 1, 8>}]} {
    %c0_i32 = arith.constant 0 : i32
    %0 = arith.cmpi eq, %arg2, %c0_i32 : i32
    %1 = arith.extui %0 : i1 to i32
    %c0_i32_0 = arith.constant 0 : i32
    %2 = arith.cmpi ne, %1, %c0_i32_0 : i32
    scf.if %2 {
      %cst_17 = arith.constant 0.000000e+00 : f32
      %23 = vector.broadcast %cst_17 : f32 to vector<128x8xf32>
      %c0_18 = arith.constant 0 : index
      %c0_19 = arith.constant 0 : index
      %24 = vector.load %arg8[%c0_18, %c0_19] : memref<128x8xf32, #tpu.memory_space<vmem>>, vector<128x8xf32>
      tpu.vector_store %arg8[%c0_18, %c0_19], %23 {strides = array<i32>} : memref<128x8xf32, #tpu.memory_space<vmem>>, vector<128x8xf32>,
    } else {
    }
    %c0_i32_1 = arith.constant 0 : i32
    %3 = arith.cmpi eq, %arg0, %c0_i32_1 : i32
    %c0_i32_2 = arith.constant 0 : i32
    %4 = arith.cmpi eq, %arg1, %c0_i32_2 : i32
    %5 = arith.andi %3, %4 : i1
    %c0_i32_3 = arith.constant 0 : i32
    %6 = arith.cmpi eq, %arg2, %c0_i32_3 : i32
    %7 = arith.andi %5, %6 : i1
    %8 = arith.extui %7 : i1 to i32
    %c0_i32_4 = arith.constant 0 : i32
    %9 = arith.cmpi ne, %8, %c0_i32_4 : i32
    scf.if %9 {
      %cst_17 = arith.constant 0.000000e+00 : f32
      %23 = vector.broadcast %cst_17 : f32 to vector<1x8xf32>
      %c0_18 = arith.constant 0 : index
      %c0_19 = arith.constant 0 : index
      %24 = vector.load %arg6[%c0_18, %c0_19] : memref<1x8xf32, #tpu.memory_space<vmem>>, vector<1x8xf32>
      tpu.vector_store %arg6[%c0_18, %c0_19], %23 {strides = array<i32>} : memref<1x8xf32, #tpu.memory_space<vmem>>, vector<1x8xf32>,
      %cst_20 = arith.constant 0.000000e+00 : f32
      %25 = vector.broadcast %cst_20 : f32 to vector<1x8xf32>
      %c0_21 = arith.constant 0 : index
      %c0_22 = arith.constant 0 : index
      %26 = vector.load %arg7[%c0_21, %c0_22] : memref<1x8xf32, #tpu.memory_space<vmem>>, vector<1x8xf32>
      tpu.vector_store %arg7[%c0_21, %c0_22], %25 {strides = array<i32>} : memref<1x8xf32, #tpu.memory_space<vmem>>, vector<1x8xf32>,
    } else {
    }
    %c0 = arith.constant 0 : index
    %c0_5 = arith.constant 0 : index
    %c0_6 = arith.constant 0 : index
    %10 = vector.load %arg3[%c0, %c0_5, %c0_6] : memref<1x128x128xbf16, #tpu.memory_space<vmem>>, vector<1x128x128xbf16>
    %11 = vector.shape_cast %10 : vector<1x128x128xbf16> to vector<128x128xbf16>
    %cst = arith.constant 0.000000e+00 : bf16
    %12 = vector.broadcast %cst : bf16 to vector<128x128xbf16>
    %13 = arith.maximumf %11, %12 : vector<128x128xbf16>
    %c0_7 = arith.constant 0 : index
    %c0_8 = arith.constant 0 : index
    %14 = vector.load %arg8[%c0_7, %c0_8] : memref<128x8xf32, #tpu.memory_space<vmem>>, vector<128x8xf32>
    %c0_9 = arith.constant 0 : index
    %c0_10 = arith.constant 0 : index
    %c0_11 = arith.constant 0 : index
    %15 = vector.load %arg4[%c0_9, %c0_10, %c0_11] : memref<1x128x8xbf16, #tpu.memory_space<vmem>>, vector<1x128x8xbf16>
    %16 = vector.shape_cast %15 : vector<1x128x8xbf16> to vector<128x8xbf16>
    %cst_12 = arith.constant dense<0.000000e+00> : vector<128x8xf32>
    %17 = tpu.matmul %13, %16, %cst_12 {dimension_numbers = #tpu.dot_dimension_numbers<[1], [0], [0], [1], [0, 0, 1, 1], [], []>} : vector<128x128xbf16>, vector<128x8xbf16>, vector<128x8xf32> -> vector<128x8xf32>
    %18 = arith.addf %14, %17 : vector<128x8xf32>
    %c0_13 = arith.constant 0 : index
    %c0_14 = arith.constant 0 : index
    %19 = vector.load %arg8[%c0_13, %c0_14] : memref<128x8xf32, #tpu.memory_space<vmem>>, vector<128x8xf32>
    tpu.vector_store %arg8[%c0_13, %c0_14], %18 {strides = array<i32>} : memref<128x8xf32, #tpu.memory_space<vmem>>, vector<128x8xf32>,
    %c0_i32_15 = arith.constant 0 : i32
    %20 = arith.cmpi eq, %arg2, %c0_i32_15 : i32
    %21 = arith.extui %20 : i1 to i32
    %c0_i32_16 = arith.constant 0 : i32
    %22 = arith.cmpi ne, %21, %c0_i32_16 : i32
    scf.if %22 {
      %c0_17 = arith.constant 0 : index
      %c0_18 = arith.constant 0 : index
      %23 = vector.load %arg8[%c0_17, %c0_18] : memref<128x8xf32, #tpu.memory_space<vmem>>, vector<128x8xf32>
      %c0_19 = arith.constant 0 : index
      %c0_20 = arith.constant 0 : index
      %c0_21 = arith.constant 0 : index
      %24 = vector.load %arg5[%c0_19, %c0_20, %c0_21] : memref<1x128x8xf32, #tpu.memory_space<vmem>>, vector<1x128x8xf32>
      %25 = vector.shape_cast %24 : vector<1x128x8xf32> to vector<128x8xf32>
      %26 = vector.shape_cast %23 : vector<128x8xf32> to vector<1x128x8xf32>
      tpu.vector_store %arg5[%c0_19, %c0_20, %c0_21], %26 {strides = array<i32>} : memref<1x128x8xf32, #tpu.memory_space<vmem>>, vector<1x128x8xf32>,
      %c0_22 = arith.constant 0 : index
      %c0_23 = arith.constant 0 : index
      %27 = vector.load %arg6[%c0_22, %c0_23] : memref<1x8xf32, #tpu.memory_space<vmem>>, vector<1x8xf32>
      %cst_24 = arith.constant dense<0.000000e+00> : vector<8xf32>
      %28 = vector.multi_reduction <add>, %23, %cst_24 [0] : vector<128x8xf32> to vector<8xf32>
      %29 = vector.shape_cast %28 : vector<8xf32> to vector<1x8xf32>
      %30 = arith.addf %27, %29 : vector<1x8xf32>
      %c0_25 = arith.constant 0 : index
      %c0_26 = arith.constant 0 : index
      %31 = vector.load %arg6[%c0_25, %c0_26] : memref<1x8xf32, #tpu.memory_space<vmem>>, vector<1x8xf32>
      tpu.vector_store %arg6[%c0_25, %c0_26], %30 {strides = array<i32>} : memref<1x8xf32, #tpu.memory_space<vmem>>, vector<1x8xf32>,
      %c0_27 = arith.constant 0 : index
      %c0_28 = arith.constant 0 : index
      %32 = vector.load %arg7[%c0_27, %c0_28] : memref<1x8xf32, #tpu.memory_space<vmem>>, vector<1x8xf32>
      %33 = arith.mulf %23, %23 : vector<128x8xf32>
      %cst_29 = arith.constant dense<0.000000e+00> : vector<8xf32>
      %34 = vector.multi_reduction <add>, %33, %cst_29 [0] : vector<128x8xf32> to vector<8xf32>
      %35 = vector.shape_cast %34 : vector<8xf32> to vector<1x8xf32>
      %36 = arith.addf %32, %35 : vector<1x8xf32>
      %c0_30 = arith.constant 0 : index
      %c0_31 = arith.constant 0 : index
      %37 = vector.load %arg7[%c0_30, %c0_31] : memref<1x8xf32, #tpu.memory_space<vmem>>, vector<1x8xf32>
      tpu.vector_store %arg7[%c0_30, %c0_31], %36 {strides = array<i32>} : memref<1x8xf32, #tpu.memory_space<vmem>>, vector<1x8xf32>,
    } else {
    }
    return
  }
  func.func @transform_0(%arg0: i32, %arg1: i32, %arg2: i32) -> (i32, i32, i32) {
    %c0_i32 = arith.constant 0 : i32
    return %arg0, %arg1, %arg2 : i32, i32, i32
  }
  func.func @transform_1(%arg0: i32, %arg1: i32, %arg2: i32) -> (i32, i32, i32) {
    %c0_i32 = arith.constant 0 : i32
    %c0_i32_0 = arith.constant 0 : i32
    return %arg0, %arg2, %c0_i32 : i32, i32, i32
  }
  func.func @transform_2(%arg0: i32, %arg1: i32, %arg2: i32) -> (i32, i32, i32) {
    %c0_i32 = arith.constant 0 : i32
    %c0_i32_0 = arith.constant 0 : i32
    return %arg0, %arg1, %c0_i32 : i32, i32, i32
  }
  func.func @transform_3(%arg0: i32, %arg1: i32, %arg2: i32) -> (i32, i32) {
    %c0_i32 = arith.constant 0 : i32
    %c0_i32_0 = arith.constant 0 : i32
    %c0_i32_1 = arith.constant 0 : i32
    return %c0_i32, %c0_i32_0 : i32, i32
  }
  func.func @transform_4(%arg0: i32, %arg1: i32, %arg2: i32) -> (i32, i32) {
    %c0_i32 = arith.constant 0 : i32
    %c0_i32_0 = arith.constant 0 : i32
    %c0_i32_1 = arith.constant 0 : i32
    return %c0_i32, %c0_i32_0 : i32, i32
  }
}

module attributes {stable_mosaic.version = 11 : i64} {
  func.func @_bn_cat_kernel(%arg0: i32, %arg1: memref<512x8xf32, #tpu.memory_space<vmem>>, %arg2: memref<512x8xf32, #tpu.memory_space<vmem>>, %arg3: memref<1x8xf32, #tpu.memory_space<vmem>>, %arg4: memref<1x8xf32, #tpu.memory_space<vmem>>, %arg5: memref<512x16xf32, #tpu.memory_space<vmem>>) attributes {dimension_semantics = [#tpu.dimension_semantics<parallel>], iteration_bounds = array<i64: 1>, scalar_prefetch = 0 : i64, scratch_operands = 0 : i64, tpu.core_type = #tpu.core_type<tc>, window_params = [{transform_indices = @transform_0, window_bounds = array<i64: 512, 8>}, {transform_indices = @transform_1, window_bounds = array<i64: 512, 8>}, {pipeline_mode = #tpu.pipeline_mode<synchronous>, transform_indices = @transform_2, window_bounds = array<i64: 1, 8>}, {pipeline_mode = #tpu.pipeline_mode<synchronous>, transform_indices = @transform_3, window_bounds = array<i64: 1, 8>}, {transform_indices = @transform_4, window_bounds = array<i64: 512, 16>}]} {
    %c0 = arith.constant 0 : index
    %c0_0 = arith.constant 0 : index
    %0 = vector.load %arg2[%c0, %c0_0] : memref<512x8xf32, #tpu.memory_space<vmem>>, vector<512x8xf32>
    %c0_1 = arith.constant 0 : index
    %c0_2 = arith.constant 0 : index
    %1 = vector.load %arg3[%c0_1, %c0_2] : memref<1x8xf32, #tpu.memory_space<vmem>>, vector<1x8xf32>
    %2 = vector.broadcast %1 : vector<1x8xf32> to vector<512x8xf32>
    %3 = arith.mulf %0, %2 : vector<512x8xf32>
    %c0_3 = arith.constant 0 : index
    %c0_4 = arith.constant 0 : index
    %4 = vector.load %arg4[%c0_3, %c0_4] : memref<1x8xf32, #tpu.memory_space<vmem>>, vector<1x8xf32>
    %5 = vector.broadcast %4 : vector<1x8xf32> to vector<512x8xf32>
    %6 = arith.addf %3, %5 : vector<512x8xf32>
    %c0_5 = arith.constant 0 : index
    %c0_6 = arith.constant 0 : index
    %7 = vector.load %arg1[%c0_5, %c0_6] : memref<512x8xf32, #tpu.memory_space<vmem>>, vector<512x8xf32>
    %8 = tpu.concatenate %7, %6 in 1 : vector<512x8xf32>, vector<512x8xf32> -> vector<512x16xf32>
    %c0_7 = arith.constant 0 : index
    %c0_8 = arith.constant 0 : index
    %9 = vector.load %arg5[%c0_7, %c0_8] : memref<512x16xf32, #tpu.memory_space<vmem>>, vector<512x16xf32>
    tpu.vector_store %arg5[%c0_7, %c0_8], %8 {strides = array<i32>} : memref<512x16xf32, #tpu.memory_space<vmem>>, vector<512x16xf32>,
    return
  }
  func.func @transform_0(%arg0: i32) -> (i32, i32) {
    %c0_i32 = arith.constant 0 : i32
    %c0_i32_0 = arith.constant 0 : i32
    return %arg0, %c0_i32 : i32, i32
  }
  func.func @transform_1(%arg0: i32) -> (i32, i32) {
    %c0_i32 = arith.constant 0 : i32
    %c0_i32_0 = arith.constant 0 : i32
    return %arg0, %c0_i32 : i32, i32
  }
  func.func @transform_2(%arg0: i32) -> (i32, i32) {
    %c0_i32 = arith.constant 0 : i32
    %c0_i32_0 = arith.constant 0 : i32
    %c0_i32_1 = arith.constant 0 : i32
    return %c0_i32, %c0_i32_0 : i32, i32
  }
  func.func @transform_3(%arg0: i32) -> (i32, i32) {
    %c0_i32 = arith.constant 0 : i32
    %c0_i32_0 = arith.constant 0 : i32
    %c0_i32_1 = arith.constant 0 : i32
    return %c0_i32, %c0_i32_0 : i32, i32
  }
  func.func @transform_4(%arg0: i32) -> (i32, i32) {
    %c0_i32 = arith.constant 0 : i32
    %c0_i32_0 = arith.constant 0 : i32
    return %arg0, %c0_i32 : i32, i32
  }
}

module attributes {stable_mosaic.version = 11 : i64} {
  func.func @_fused_matmul_kernel(%arg0: i32, %arg1: i32, %arg2: i32, %arg3: memref<1x512x64xbf16, #tpu.memory_space<vmem>>, %arg4: memref<1x64x2xbf16, #tpu.memory_space<vmem>>, %arg5: memref<1x2xf32, #tpu.memory_space<vmem>>, %arg6: memref<1x512x2xf32, #tpu.memory_space<vmem>>, %arg7: memref<512x2xf32, #tpu.memory_space<vmem>>) attributes {dimension_semantics = [#tpu.dimension_semantics<parallel>, #tpu.dimension_semantics<parallel>, #tpu.dimension_semantics<arbitrary>], iteration_bounds = array<i64: 4, 1, 1>, scalar_prefetch = 0 : i64, scratch_operands = 1 : i64, tpu.core_type = #tpu.core_type<tc>, window_params = [{transform_indices = @transform_0, window_bounds = array<i64: 1, 512, 64>}, {transform_indices = @transform_1, window_bounds = array<i64: 1, 64, 2>}, {pipeline_mode = #tpu.pipeline_mode<synchronous>, transform_indices = @transform_2, window_bounds = array<i64: 1, 2>}, {transform_indices = @transform_3, window_bounds = array<i64: 1, 512, 2>}]} {
    %c0_i32 = arith.constant 0 : i32
    %0 = arith.cmpi eq, %arg2, %c0_i32 : i32
    %1 = arith.extui %0 : i1 to i32
    %c0_i32_0 = arith.constant 0 : i32
    %2 = arith.cmpi ne, %1, %c0_i32_0 : i32
    scf.if %2 {
      %cst_13 = arith.constant 0.000000e+00 : f32
      %16 = vector.broadcast %cst_13 : f32 to vector<512x2xf32>
      %c0_14 = arith.constant 0 : index
      %c0_15 = arith.constant 0 : index
      %17 = vector.load %arg7[%c0_14, %c0_15] : memref<512x2xf32, #tpu.memory_space<vmem>>, vector<512x2xf32>
      tpu.vector_store %arg7[%c0_14, %c0_15], %16 {strides = array<i32>} : memref<512x2xf32, #tpu.memory_space<vmem>>, vector<512x2xf32>,
    } else {
    }
    %c0 = arith.constant 0 : index
    %c0_1 = arith.constant 0 : index
    %c0_2 = arith.constant 0 : index
    %3 = vector.load %arg3[%c0, %c0_1, %c0_2] : memref<1x512x64xbf16, #tpu.memory_space<vmem>>, vector<1x512x64xbf16>
    %4 = vector.shape_cast %3 : vector<1x512x64xbf16> to vector<512x64xbf16>
    %cst = arith.constant 0.000000e+00 : bf16
    %5 = vector.broadcast %cst : bf16 to vector<512x64xbf16>
    %6 = arith.maximumf %4, %5 : vector<512x64xbf16>
    %c0_3 = arith.constant 0 : index
    %c0_4 = arith.constant 0 : index
    %7 = vector.load %arg7[%c0_3, %c0_4] : memref<512x2xf32, #tpu.memory_space<vmem>>, vector<512x2xf32>
    %c0_5 = arith.constant 0 : index
    %c0_6 = arith.constant 0 : index
    %c0_7 = arith.constant 0 : index
    %8 = vector.load %arg4[%c0_5, %c0_6, %c0_7] : memref<1x64x2xbf16, #tpu.memory_space<vmem>>, vector<1x64x2xbf16>
    %9 = vector.shape_cast %8 : vector<1x64x2xbf16> to vector<64x2xbf16>
    %cst_8 = arith.constant dense<0.000000e+00> : vector<512x2xf32>
    %10 = tpu.matmul %6, %9, %cst_8 {dimension_numbers = #tpu.dot_dimension_numbers<[1], [0], [0], [1], [0, 0, 1, 1], [], []>} : vector<512x64xbf16>, vector<64x2xbf16>, vector<512x2xf32> -> vector<512x2xf32>
    %11 = arith.addf %7, %10 : vector<512x2xf32>
    %c0_9 = arith.constant 0 : index
    %c0_10 = arith.constant 0 : index
    %12 = vector.load %arg7[%c0_9, %c0_10] : memref<512x2xf32, #tpu.memory_space<vmem>>, vector<512x2xf32>
    tpu.vector_store %arg7[%c0_9, %c0_10], %11 {strides = array<i32>} : memref<512x2xf32, #tpu.memory_space<vmem>>, vector<512x2xf32>,
    %c0_i32_11 = arith.constant 0 : i32
    %13 = arith.cmpi eq, %arg2, %c0_i32_11 : i32
    %14 = arith.extui %13 : i1 to i32
    %c0_i32_12 = arith.constant 0 : i32
    %15 = arith.cmpi ne, %14, %c0_i32_12 : i32
    scf.if %15 {
      %c0_13 = arith.constant 0 : index
      %c0_14 = arith.constant 0 : index
      %16 = vector.load %arg7[%c0_13, %c0_14] : memref<512x2xf32, #tpu.memory_space<vmem>>, vector<512x2xf32>
      %c0_15 = arith.constant 0 : index
      %c0_16 = arith.constant 0 : index
      %17 = vector.load %arg5[%c0_15, %c0_16] : memref<1x2xf32, #tpu.memory_space<vmem>>, vector<1x2xf32>
      %18 = vector.broadcast %17 : vector<1x2xf32> to vector<512x2xf32>
      %19 = arith.addf %16, %18 : vector<512x2xf32>
      %20 = math.tanh %19 : vector<512x2xf32>
      %c0_17 = arith.constant 0 : index
      %c0_18 = arith.constant 0 : index
      %c0_19 = arith.constant 0 : index
      %21 = vector.load %arg6[%c0_17, %c0_18, %c0_19] : memref<1x512x2xf32, #tpu.memory_space<vmem>>, vector<1x512x2xf32>
      %22 = vector.shape_cast %21 : vector<1x512x2xf32> to vector<512x2xf32>
      %23 = vector.shape_cast %20 : vector<512x2xf32> to vector<1x512x2xf32>
      tpu.vector_store %arg6[%c0_17, %c0_18, %c0_19], %23 {strides = array<i32>} : memref<1x512x2xf32, #tpu.memory_space<vmem>>, vector<1x512x2xf32>,
    } else {
    }
    return
  }
  func.func @transform_0(%arg0: i32, %arg1: i32, %arg2: i32) -> (i32, i32, i32) {
    %c0_i32 = arith.constant 0 : i32
    return %arg0, %arg1, %arg2 : i32, i32, i32
  }
  func.func @transform_1(%arg0: i32, %arg1: i32, %arg2: i32) -> (i32, i32, i32) {
    %c0_i32 = arith.constant 0 : i32
    %c0_i32_0 = arith.constant 0 : i32
    return %arg0, %arg2, %c0_i32 : i32, i32, i32
  }
  func.func @transform_2(%arg0: i32, %arg1: i32, %arg2: i32) -> (i32, i32) {
    %c0_i32 = arith.constant 0 : i32
    %c0_i32_0 = arith.constant 0 : i32
    %c0_i32_1 = arith.constant 0 : i32
    return %c0_i32, %c0_i32_0 : i32, i32
  }
  func.func @transform_3(%arg0: i32, %arg1: i32, %arg2: i32) -> (i32, i32, i32) {
    %c0_i32 = arith.constant 0 : i32
    %c0_i32_0 = arith.constant 0 : i32
    return %arg0, %arg1, %c0_i32 : i32, i32, i32
  }
}

</mosaic_0001>

<llo_original>
// kernel: _lambda_.17
$region0: #{_lambda_.17}
  #allocation0 [shape = 'u32[]', space=smem, size = 0x4, offset = 0x4, fixed_abs, tag = 'smem constant byte address 0x4 - core index']
  #allocation1 [shape = 'u32[144,128]{1,0:T(1,128)}', space=vmem, size = 0x12000, scoped, tag = 'internal scratch']
  #allocation2 [shape = 'f32[512,8]{1,0:T(8,128)}', space=vmem, size = 0x40000, scoped, tag = 'scratch operand']
  %s0 = inlined_call_operand.vmem [shape: bf16[1,512,16], index: 0, kind: input, shape index: {}]
  %s1 = inlined_call_operand.vmem [shape: bf16[1,16,8], index: 1, kind: input, shape index: {}]
  %s2 = inlined_call_operand.vmem [shape: f32[1,512,8], index: 2, kind: output, shape index: {}]
  %s3 = sld [smem:[#allocation0]]
  $region26: #{_lambda_.17} parent=0
    _
  %s5 = ssub.s32 1, %s3
  %s6 = scalar_select 0, %s5, %s3
  // Predicated region
  $region2: #{_lambda_.17} parent=0 // pred_check
    _
  $region3: #{_lambda_.17} parent=0 // pred_check_branch
    %8 = sbr.rel (0) target = $region5
  $region4: #{_lambda_.17} parent=0 // pred_region
    _
  $region5: #{_lambda_.17} parent=0 // pred_fallthru
    _
  // Predicated region
  $region6: #{_lambda_.17} parent=0 // pred_check
    _
  $region7: #{_lambda_.17} parent=0 // pred_check_branch
    %10 = sbr.rel (0) target = $region9
  $region8: #{_lambda_.17} parent=0 // pred_region
    _
  $region9: #{_lambda_.17} parent=0 // pred_fallthru
    _
  %p12 = scmp.eq.s32.totalorder 0, 0
  // Predicated region
  $region10: #{_lambda_.17} parent=0 // pred_check
    %p13 = pneg %p12
  $region11: #{_lambda_.17} parent=0 // pred_check_branch
    %15 = sbr.rel (%p13) target = $region13
  $region12: #{_lambda_.17} parent=0 // pred_region
    %vm16 = vcmask 64512
    %17 = vst.msk [vmem:[#allocation2] sm:$0xff] %vm16, 0.0
    %18 = vst.msk [vmem:[#allocation2 + $0x8] sm:$0xff] %vm16, 0.0
    %19 = vst.msk [vmem:[#allocation2 + $0x10] sm:$0xff] %vm16, 0.0
    %20 = vst.msk [vmem:[#allocation2 + $0x18] sm:$0xff] %vm16, 0.0
    %21 = vst.msk [vmem:[#allocation2 + $0x20] sm:$0xff] %vm16, 0.0
    %22 = vst.msk [vmem:[#allocation2 + $0x28] sm:$0xff] %vm16, 0.0
    %23 = vst.msk [vmem:[#allocation2 + $0x30] sm:$0xff] %vm16, 0.0
    %24 = vst.msk [vmem:[#allocation2 + $0x38] sm:$0xff] %vm16, 0.0
    %25 = vst.msk [vmem:[#allocation2 + $0x40] sm:$0xff] %vm16, 0.0
    %26 = vst.msk [vmem:[#allocation2 + $0x48] sm:$0xff] %vm16, 0.0
    %27 = vst.msk [vmem:[#allocation2 + $0x50] sm:$0xff] %vm16, 0.0
    %28 = vst.msk [vmem:[#allocation2 + $0x58] sm:$0xff] %vm16, 0.0
    %29 = vst.msk [vmem:[#allocation2 + $0x60] sm:$0xff] %vm16, 0.0
    %30 = vst.msk [vmem:[#allocation2 + $0x68] sm:$0xff] %vm16, 0.0
    %31 = vst.msk [vmem:[#allocation2 + $0x70] sm:$0xff] %vm16, 0.0
    %32 = vst.msk [vmem:[#allocation2 + $0x78] sm:$0xff] %vm16, 0.0
    %33 = vst.msk [vmem:[#allocation2 + $0x80] sm:$0xff] %vm16, 0.0
    %34 = vst.msk [vmem:[#allocation2 + $0x88] sm:$0xff] %vm16, 0.0
    %35 = vst.msk [vmem:[#allocation2 + $0x90] sm:$0xff] %vm16, 0.0
    %36 = vst.msk [vmem:[#allocation2 + $0x98] sm:$0xff] %vm16, 0.0
    %37 = vst.msk [vmem:[#allocation2 + $0xa0] sm:$0xff] %vm16, 0.0
    %38 = vst.msk [vmem:[#allocation2 + $0xa8] sm:$0xff] %vm16, 0.0
    %39 = vst.msk [vmem:[#allocation2 + $0xb0] sm:$0xff] %vm16, 0.0
    %40 = vst.msk [vmem:[#allocation2 + $0xb8] sm:$0xff] %vm16, 0.0
    %41 = vst.msk [vmem:[#allocation2 + $0xc0] sm:$0xff] %vm16, 0.0
    %42 = vst.msk [vmem:[#allocation2 + $0xc8] sm:$0xff] %vm16, 0.0
    %43 = vst.msk [vmem:[#allocation2 + $0xd0] sm:$0xff] %vm16, 0.0
    %44 = vst.msk [vmem:[#allocation2 + $0xd8] sm:$0xff] %vm16, 0.0
    %45 = vst.msk [vmem:[#allocation2 + $0xe0] sm:$0xff] %vm16, 0.0
    %46 = vst.msk [vmem:[#allocation2 + $0xe8] sm:$0xff] %vm16, 0.0
    %47 = vst.msk [vmem:[#allocation2 + $0xf0] sm:$0xff] %vm16, 0.0
    %48 = vst.msk [vmem:[#allocation2 + $0xf8] sm:$0xff] %vm16, 0.0
    %49 = vst.msk [vmem:[#allocation2 + $0x100] sm:$0xff] %vm16, 0.0
    %50 = vst.msk [vmem:[#allocation2 + $0x108] sm:$0xff] %vm16, 0.0
    %51 = vst.msk [vmem:[#allocation2 + $0x110] sm:$0xff] %vm16, 0.0
    %52 = vst.msk [vmem:[#allocation2 + $0x118] sm:$0xff] %vm16, 0.0
    %53 = vst.msk [vmem:[#allocation2 + $0x120] sm:$0xff] %vm16, 0.0
    %54 = vst.msk [vmem:[#allocation2 + $0x128] sm:$0xff] %vm16, 0.0
    %55 = vst.msk [vmem:[#allocation2 + $0x130] sm:$0xff] %vm16, 0.0
    %56 = vst.msk [vmem:[#allocation2 + $0x138] sm:$0xff] %vm16, 0.0
    %57 = vst.msk [vmem:[#allocation2 + $0x140] sm:$0xff] %vm16, 0.0
    %58 = vst.msk [vmem:[#allocation2 + $0x148] sm:$0xff] %vm16, 0.0
    %59 = vst.msk [vmem:[#allocation2 + $0x150] sm:$0xff] %vm16, 0.0
    %60 = vst.msk [vmem:[#allocation2 + $0x158] sm:$0xff] %vm16, 0.0
    %61 = vst.msk [vmem:[#allocation2 + $0x160] sm:$0xff] %vm16, 0.0
    %62 = vst.msk [vmem:[#allocation2 + $0x168] sm:$0xff] %vm16, 0.0
    %63 = vst.msk [vmem:[#allocation2 + $0x170] sm:$0xff] %vm16, 0.0
    %64 = vst.msk [vmem:[#allocation2 + $0x178] sm:$0xff] %vm16, 0.0
    %65 = vst.msk [vmem:[#allocation2 + $0x180] sm:$0xff] %vm16, 0.0
    %66 = vst.msk [vmem:[#allocation2 + $0x188] sm:$0xff] %vm16, 0.0
    %67 = vst.msk [vmem:[#allocation2 + $0x190] sm:$0xff] %vm16, 0.0
    %68 = vst.msk [vmem:[#allocation2 + $0x198] sm:$0xff] %vm16, 0.0
    %69 = vst.msk [vmem:[#allocation2 + $0x1a0] sm:$0xff] %vm16, 0.0
    %70 = vst.msk [vmem:[#allocation2 + $0x1a8] sm:$0xff] %vm16, 0.0
    %71 = vst.msk [vmem:[#allocation2 + $0x1b0] sm:$0xff] %vm16, 0.0
    %72 = vst.msk [vmem:[#allocation2 + $0x1b8] sm:$0xff] %vm16, 0.0
    %73 = vst.msk [vmem:[#allocation2 + $0x1c0] sm:$0xff] %vm16, 0.0
    %74 = vst.msk [vmem:[#allocation2 + $0x1c8] sm:$0xff] %vm16, 0.0
    %75 = vst.msk [vmem:[#allocation2 + $0x1d0] sm:$0xff] %vm16, 0.0
    %76 = vst.msk [vmem:[#allocation2 + $0x1d8] sm:$0xff] %vm16, 0.0
    %77 = vst.msk [vmem:[#allocation2 + $0x1e0] sm:$0xff] %vm16, 0.0
    %78 = vst.msk [vmem:[#allocation2 + $0x1e8] sm:$0xff] %vm16, 0.0
    %79 = vst.msk [vmem:[#allocation2 + $0x1f0] sm:$0xff] %vm16, 0.0
    %80 = vst.msk [vmem:[#allocation2 + $0x1f8] sm:$0xff] %vm16, 0.0
  $region13: #{_lambda_.17} parent=0 // pred_fallthru
    _
  %v81 = vld [vmem:[%s0] sm:$0xf]
  %v82 = vld [vmem:[%s0 + $0x4] sm:$0xf]
  %v83 = vld [vmem:[%s0 + $0x8] sm:$0xf]
  %v84 = vld [vmem:[%s0 + $0xc] sm:$0xf]
  %v85 = vld [vmem:[%s0 + $0x10] sm:$0xf]
  %v86 = vld [vmem:[%s0 + $0x14] sm:$0xf]
  %v87 = vld [vmem:[%s0 + $0x18] sm:$0xf]
  %v88 = vld [vmem:[%s0 + $0x1c] sm:$0xf]
  %v89 = vld [vmem:[%s0 + $0x20] sm:$0xf]
  %v90 = vld [vmem:[%s0 + $0x24] sm:$0xf]
  %v91 = vld [vmem:[%s0 + $0x28] sm:$0xf]
  %v92 = vld [vmem:[%s0 + $0x2c] sm:$0xf]
  %v93 = vld [vmem:[%s0 + $0x30] sm:$0xf]
  %v94 = vld [vmem:[%s0 + $0x34] sm:$0xf]
  %v95 = vld [vmem:[%s0 + $0x38] sm:$0xf]
  %v96 = vld [vmem:[%s0 + $0x3c] sm:$0xf]
  %v97 = vld [vmem:[%s0 + $0x40] sm:$0xf]
  %v98 = vld [vmem:[%s0 + $0x44] sm:$0xf]
  %v99 = vld [vmem:[%s0 + $0x48] sm:$0xf]
  %v100 = vld [vmem:[%s0 + $0x4c] sm:$0xf]
  %v101 = vld [vmem:[%s0 + $0x50] sm:$0xf]
  %v102 = vld [vmem:[%s0 + $0x54] sm:$0xf]
  %v103 = vld [vmem:[%s0 + $0x58] sm:$0xf]
  %v104 = vld [vmem:[%s0 + $0x5c] sm:$0xf]
  %v105 = vld [vmem:[%s0 + $0x60] sm:$0xf]
  %v106 = vld [vmem:[%s0 + $0x64] sm:$0xf]
  %v107 = vld [vmem:[%s0 + $0x68] sm:$0xf]
  %v108 = vld [vmem:[%s0 + $0x6c] sm:$0xf]
  %v109 = vld [vmem:[%s0 + $0x70] sm:$0xf]
  %v110 = vld [vmem:[%s0 + $0x74] sm:$0xf]
  %v111 = vld [vmem:[%s0 + $0x78] sm:$0xf]
  %v112 = vld [vmem:[%s0 + $0x7c] sm:$0xf]
  %v113 = vld [vmem:[%s0 + $0x80] sm:$0xf]
  %v114 = vld [vmem:[%s0 + $0x84] sm:$0xf]
  %v115 = vld [vmem:[%s0 + $0x88] sm:$0xf]
  %v116 = vld [vmem:[%s0 + $0x8c] sm:$0xf]
  %v117 = vld [vmem:[%s0 + $0x90] sm:$0xf]
  %v118 = vld [vmem:[%s0 + $0x94] sm:$0xf]
  %v119 = vld [vmem:[%s0 + $0x98] sm:$0xf]
  %v120 = vld [vmem:[%s0 + $0x9c] sm:$0xf]
  %v121 = vld [vmem:[%s0 + $0xa0] sm:$0xf]
  %v122 = vld [vmem:[%s0 + $0xa4] sm:$0xf]
  %v123 = vld [vmem:[%s0 + $0xa8] sm:$0xf]
  %v124 = vld [vmem:[%s0 + $0xac] sm:$0xf]
  %v125 = vld [vmem:[%s0 + $0xb0] sm:$0xf]
  %v126 = vld [vmem:[%s0 + $0xb4] sm:$0xf]
  %v127 = vld [vmem:[%s0 + $0xb8] sm:$0xf]
  %v128 = vld [vmem:[%s0 + $0xbc] sm:$0xf]
  %v129 = vld [vmem:[%s0 + $0xc0] sm:$0xf]
  %v130 = vld [vmem:[%s0 + $0xc4] sm:$0xf]
  %v131 = vld [vmem:[%s0 + $0xc8] sm:$0xf]
  %v132 = vld [vmem:[%s0 + $0xcc] sm:$0xf]
  %v133 = vld [vmem:[%s0 + $0xd0] sm:$0xf]
  %v134 = vld [vmem:[%s0 + $0xd4] sm:$0xf]
  %v135 = vld [vmem:[%s0 + $0xd8] sm:$0xf]
  %v136 = vld [vmem:[%s0 + $0xdc] sm:$0xf]
  %v137 = vld [vmem:[%s0 + $0xe0] sm:$0xf]
  %v138 = vld [vmem:[%s0 + $0xe4] sm:$0xf]
  %v139 = vld [vmem:[%s0 + $0xe8] sm:$0xf]
  %v140 = vld [vmem:[%s0 + $0xec] sm:$0xf]
  %v141 = vld [vmem:[%s0 + $0xf0] sm:$0xf]
  %v142 = vld [vmem:[%s0 + $0xf4] sm:$0xf]
  %v143 = vld [vmem:[%s0 + $0xf8] sm:$0xf]
  %v144 = vld [vmem:[%s0 + $0xfc] sm:$0xf]
  %v145 = vld [vmem:[#allocation2] sm:$0xff]
  %v146 = vld [vmem:[#allocation2 + $0x8] sm:$0xff]
  %v147 = vld [vmem:[#allocation2 + $0x10] sm:$0xff]
  %v148 = vld [vmem:[#allocation2 + $0x18] sm:$0xff]
  %v149 = vld [vmem:[#allocation2 + $0x20] sm:$0xff]
  %v150 = vld [vmem:[#allocation2 + $0x28] sm:$0xff]
  %v151 = vld [vmem:[#allocation2 + $0x30] sm:$0xff]
  %v152 = vld [vmem:[#allocation2 + $0x38] sm:$0xff]
  %v153 = vld [vmem:[#allocation2 + $0x40] sm:$0xff]
  %v154 = vld [vmem:[#allocation2 + $0x48] sm:$0xff]
  %v155 = vld [vmem:[#allocation2 + $0x50] sm:$0xff]
  %v156 = vld [vmem:[#allocation2 + $0x58] sm:$0xff]
  %v157 = vld [vmem:[#allocation2 + $0x60] sm:$0xff]
  %v158 = vld [vmem:[#allocation2 + $0x68] sm:$0xff]
  %v159 = vld [vmem:[#allocation2 + $0x70] sm:$0xff]
  %v160 = vld [vmem:[#allocation2 + $0x78] sm:$0xff]
  %v161 = vld [vmem:[#allocation2 + $0x80] sm:$0xff]
  %v162 = vld [vmem:[#allocation2 + $0x88] sm:$0xff]
  %v163 = vld [vmem:[#allocation2 + $0x90] sm:$0xff]
  %v164 = vld [vmem:[#allocation2 + $0x98] sm:$0xff]
  %v165 = vld [vmem:[#allocation2 + $0xa0] sm:$0xff]
  %v166 = vld [vmem:[#allocation2 + $0xa8] sm:$0xff]
  %v167 = vld [vmem:[#allocation2 + $0xb0] sm:$0xff]
  %v168 = vld [vmem:[#allocation2 + $0xb8] sm:$0xff]
  %v169 = vld [vmem:[#allocation2 + $0xc0] sm:$0xff]
  %v170 = vld [vmem:[#allocation2 + $0xc8] sm:$0xff]
  %v171 = vld [vmem:[#allocation2 + $0xd0] sm:$0xff]
  %v172 = vld [vmem:[#allocation2 + $0xd8] sm:$0xff]
  %v173 = vld [vmem:[#allocation2 + $0xe0] sm:$0xff]
  %v174 = vld [vmem:[#allocation2 + $0xe8] sm:$0xff]
  %v175 = vld [vmem:[#allocation2 + $0xf0] sm:$0xff]
  %v176 = vld [vmem:[#allocation2 + $0xf8] sm:$0xff]
  %v177 = vld [vmem:[#allocation2 + $0x100] sm:$0xff]
  %v178 = vld [vmem:[#allocation2 + $0x108] sm:$0xff]
  %v179 = vld [vmem:[#allocation2 + $0x110] sm:$0xff]
  %v180 = vld [vmem:[#allocation2 + $0x118] sm:$0xff]
  %v181 = vld [vmem:[#allocation2 + $0x120] sm:$0xff]
  %v182 = vld [vmem:[#allocation2 + $0x128] sm:$0xff]
  %v183 = vld [vmem:[#allocation2 + $0x130] sm:$0xff]
  %v184 = vld [vmem:[#allocation2 + $0x138] sm:$0xff]
  %v185 = vld [vmem:[#allocation2 + $0x140] sm:$0xff]
  %v186 = vld [vmem:[#allocation2 + $0x148] sm:$0xff]
  %v187 = vld [vmem:[#allocation2 + $0x150] sm:$0xff]
  %v188 = vld [vmem:[#allocation2 + $0x158] sm:$0xff]
  %v189 = vld [vmem:[#allocation2 + $0x160] sm:$0xff]
  %v190 = vld [vmem:[#allocation2 + $0x168] sm:$0xff]
  %v191 = vld [vmem:[#allocation2 + $0x170] sm:$0xff]
  %v192 = vld [vmem:[#allocation2 + $0x178] sm:$0xff]
  %v193 = vld [vmem:[#allocation2 + $0x180] sm:$0xff]
  %v194 = vld [vmem:[#allocation2 + $0x188] sm:$0xff]
  %v195 = vld [vmem:[#allocation2 + $0x190] sm:$0xff]
  %v196 = vld [vmem:[#allocation2 + $0x198] sm:$0xff]
  %v197 = vld [vmem:[#allocation2 + $0x1a0] sm:$0xff]
  %v198 = vld [vmem:[#allocation2 + $0x1a8] sm:$0xff]
  %v199 = vld [vmem:[#allocation2 + $0x1b0] sm:$0xff]
  %v200 = vld [vmem:[#allocation2 + $0x1b8] sm:$0xff]
  %v201 = vld [vmem:[#allocation2 + $0x1c0] sm:$0xff]
  %v202 = vld [vmem:[#allocation2 + $0x1c8] sm:$0xff]
  %v203 = vld [vmem:[#allocation2 + $0x1d0] sm:$0xff]
  %v204 = vld [vmem:[#allocation2 + $0x1d8] sm:$0xff]
  %v205 = vld [vmem:[#allocation2 + $0x1e0] sm:$0xff]
  %v206 = vld [vmem:[#allocation2 + $0x1e8] sm:$0xff]
  %v207 = vld [vmem:[#allocation2 + $0x1f0] sm:$0xff]
  %v208 = vld [vmem:[#allocation2 + $0x1f8] sm:$0xff]
  %v209 = vld [vmem:[%s1] sm:$0xf]
  %v210 = vld [vmem:[%s1 + $0x4] sm:$0xf]
  %v275 = vunpack.c.l.b16 %v81
  %v276 = vunpack.c.l.b16 %v82
  %v277 = vunpack.c.l.b16 %v83
  %v278 = vunpack.c.l.b16 %v84
  %v279 = vunpack.c.l.b16 %v85
  %v280 = vunpack.c.l.b16 %v86
  %v281 = vunpack.c.l.b16 %v87
  %v282 = vunpack.c.l.b16 %v88
  %v283 = vunpack.c.l.b16 %v89
  %v284 = vunpack.c.l.b16 %v90
  %v285 = vunpack.c.l.b16 %v91
  %v286 = vunpack.c.l.b16 %v92
  %v287 = vunpack.c.l.b16 %v93
  %v288 = vunpack.c.l.b16 %v94
  %v289 = vunpack.c.l.b16 %v95
  %v290 = vunpack.c.l.b16 %v96
  %v291 = vunpack.c.l.b16 %v97
  %v292 = vunpack.c.l.b16 %v98
  %v293 = vunpack.c.l.b16 %v99
  %v294 = vunpack.c.l.b16 %v100
  %v295 = vunpack.c.l.b16 %v101
  %v296 = vunpack.c.l.b16 %v102
  %v297 = vunpack.c.l.b16 %v103
  %v298 = vunpack.c.l.b16 %v104
  %v299 = vunpack.c.l.b16 %v105
  %v300 = vunpack.c.l.b16 %v106
  %v301 = vunpack.c.l.b16 %v107
  %v302 = vunpack.c.l.b16 %v108
  %v303 = vunpack.c.l.b16 %v109
  %v304 = vunpack.c.l.b16 %v110
  %v305 = vunpack.c.l.b16 %v111
  %v306 = vunpack.c.l.b16 %v112
  %v307 = vunpack.c.l.b16 %v113
  %v308 = vunpack.c.l.b16 %v114
  %v309 = vunpack.c.l.b16 %v115
  %v310 = vunpack.c.l.b16 %v116
  %v311 = vunpack.c.l.b16 %v117
  %v312 = vunpack.c.l.b16 %v118
  %v313 = vunpack.c.l.b16 %v119
  %v314 = vunpack.c.l.b16 %v120
  %v315 = vunpack.c.l.b16 %v121
  %v316 = vunpack.c.l.b16 %v122
  %v317 = vunpack.c.l.b16 %v123
  %v318 = vunpack.c.l.b16 %v124
  %v319 = vunpack.c.l.b16 %v125
  %v320 = vunpack.c.l.b16 %v126
  %v321 = vunpack.c.l.b16 %v127
  %v322 = vunpack.c.l.b16 %v128
  %v323 = vunpack.c.l.b16 %v129
  %v324 = vunpack.c.l.b16 %v130
  %v325 = vunpack.c.l.b16 %v131
  %v326 = vunpack.c.l.b16 %v132
  %v327 = vunpack.c.l.b16 %v133
  %v328 = vunpack.c.l.b16 %v134
  %v329 = vunpack.c.l.b16 %v135
  %v330 = vunpack.c.l.b16 %v136
  %v331 = vunpack.c.l.b16 %v137
  %v332 = vunpack.c.l.b16 %v138
  %v333 = vunpack.c.l.b16 %v139
  %v334 = vunpack.c.l.b16 %v140
  %v335 = vunpack.c.l.b16 %v141
  %v336 = vunpack.c.l.b16 %v142
  %v337 = vunpack.c.l.b16 %v143
  %v338 = vunpack.c.l.b16 %v144
  %v339 = vpack.c.b16 %v276, %v275
  %v340 = vpack.c.b16 %v278, %v277
  %v341 = vpack.c.b16 %v280, %v279
  %v342 = vpack.c.b16 %v282, %v281
  %v343 = vpack.c.b16 %v284, %v283
  %v344 = vpack.c.b16 %v286, %v285
  %v345 = vpack.c.b16 %v288, %v287
  %v346 = vpack.c.b16 %v290, %v289
  %v347 = vpack.c.b16 %v292, %v291
  %v348 = vpack.c.b16 %v294, %v293
  %v349 = vpack.c.b16 %v296, %v295
  %v350 = vpack.c.b16 %v298, %v297
  %v351 = vpack.c.b16 %v300, %v299
  %v352 = vpack.c.b16 %v302, %v301
  %v353 = vpack.c.b16 %v304, %v303
  %v354 = vpack.c.b16 %v306, %v305
  %v355 = vpack.c.b16 %v308, %v307
  %v356 = vpack.c.b16 %v310, %v309
  %v357 = vpack.c.b16 %v312, %v311
  %v358 = vpack.c.b16 %v314, %v313
  %v359 = vpack.c.b16 %v316, %v315
  %v360 = vpack.c.b16 %v318, %v317
  %v361 = vpack.c.b16 %v320, %v319
  %v362 = vpack.c.b16 %v322, %v321
  %v363 = vpack.c.b16 %v324, %v323
  %v364 = vpack.c.b16 %v326, %v325
  %v365 = vpack.c.b16 %v328, %v327
  %v366 = vpack.c.b16 %v330, %v329
  %v367 = vpack.c.b16 %v332, %v331
  %v368 = vpack.c.b16 %v334, %v333
  %v369 = vpack.c.b16 %v336, %v335
  %v370 = vpack.c.b16 %v338, %v337
  %v373 = vunpack.c.l.b16 %v209
  %v374 = vunpack.c.l.b16 %v210
  %v375 = vpack.c.b16 %v374, %v373
  %vm377 = vcmask 130048
  %v379 = vsel %vm377, %v339, 0
  %v382 = vsel %vm377, %v340, 0
  %v385 = vsel %vm377, %v341, 0
  %v388 = vsel %vm377, %v342, 0
  %v391 = vsel %vm377, %v343, 0
  %v394 = vsel %vm377, %v344, 0
  %v397 = vsel %vm377, %v345, 0
  %v400 = vsel %vm377, %v346, 0
  %v403 = vsel %vm377, %v347, 0
  %v406 = vsel %vm377, %v348, 0
  %v409 = vsel %vm377, %v349, 0
  %v412 = vsel %vm377, %v350, 0
  %v415 = vsel %vm377, %v351, 0
  %v418 = vsel %vm377, %v352, 0
  %v421 = vsel %vm377, %v353, 0
  %v424 = vsel %vm377, %v354, 0
  %v427 = vsel %vm377, %v355, 0
  %v430 = vsel %vm377, %v356, 0
  %v433 = vsel %vm377, %v357, 0
  %v436 = vsel %vm377, %v358, 0
  %v439 = vsel %vm377, %v359, 0
  %v442 = vsel %vm377, %v360, 0
  %v445 = vsel %vm377, %v361, 0
  %v448 = vsel %vm377, %v362, 0
  %v451 = vsel %vm377, %v363, 0
  %v454 = vsel %vm377, %v364, 0
  %v457 = vsel %vm377, %v365, 0
  %v460 = vsel %vm377, %v366, 0
  %v463 = vsel %vm377, %v367, 0
  %v466 = vsel %vm377, %v368, 0
  %v469 = vsel %vm377, %v369, 0
  %v472 = vsel %vm377, %v370, 0
  %474 = vmatprep.subr.bf16.mxu0 0
  %475 = vmatpush1.bf16.msra.mxu0 %v375
  %476 = vmatprep.subr.bf16.mxu0 0
  %477 = vmatpush1.bf16.msra.mxu0 0
  %478 = vmatprep.subr.bf16.mxu0 0
  %479 = vmatpush1.bf16.msra.mxu0 0
  %480 = vmatprep.subr.bf16.mxu0 0
  %481 = vmatpush1.bf16.msra.mxu0 0
  %482 = vmatprep.subr.bf16.mxu0 0
  %483 = vmatpush1.bf16.msra.mxu0 0
  %484 = vmatprep.subr.bf16.mxu0 0
  %485 = vmatpush1.bf16.msra.mxu0 0
  %486 = vmatprep.subr.bf16.mxu0 0
  %487 = vmatpush1.bf16.msra.mxu0 0
  %488 = vmatprep.subr.bf16.mxu0 0
  %489 = vmatpush1.bf16.msra.mxu0 0
  %490 = vmatprep.subr.bf16.mxu0 0
  %491 = vmatpush1.bf16.msra.mxu0 0
  %492 = vmatprep.subr.bf16.mxu0 0
  %493 = vmatpush1.bf16.msra.mxu0 0
  %494 = vmatprep.subr.bf16.mxu0 0
  %495 = vmatpush1.bf16.msra.mxu0 0
  %496 = vmatprep.subr.bf16.mxu0 0
  %497 = vmatpush1.bf16.msra.mxu0 0
  %498 = vmatprep.subr.bf16.mxu0 0
  %499 = vmatpush1.bf16.msra.mxu0 0
  %500 = vmatprep.subr.bf16.mxu0 0
  %501 = vmatpush1.bf16.msra.mxu0 0
  %502 = vmatprep.subr.bf16.mxu0 0
  %503 = vmatpush1.bf16.msra.mxu0 0
  %504 = vmatprep.subr.bf16.mxu0 0
  %505 = vmatpush1.bf16.msra.mxu0 0
  %506 = vmatprep.mubr.bf16.mxu0 0
  %507 = vmatmul.mubr.bf16.gmra.mrb[0].mxu0 %v379
  %v508 = vpop.f32.mrb[0].mxu0
  %v509 = vadd.f32 0.0, %v508
  %v510 = vpop.f32.mrb[0].mxu0
  %v511 = vpop.f32.mrb[0].mxu0
  %v512 = vadd.f32 0.0, %v511
  %v513 = vpop.f32.mrb[0].mxu0
  %514 = vmatprep.mubr.bf16.mxu0 0
  %515 = vmatmul.mubr.bf16.gmra.mrb[0].mxu0 %v382
  %v516 = vpop.f32.mrb[0].mxu0
  %v517 = vadd.f32 0.0, %v516
  %v518 = vpop.f32.mrb[0].mxu0
  %v519 = vpop.f32.mrb[0].mxu0
  %v520 = vadd.f32 0.0, %v519
  %v521 = vpop.f32.mrb[0].mxu0
  %522 = vmatprep.mubr.bf16.mxu0 0
  %523 = vmatmul.mubr.bf16.gmra.mrb[0].mxu0 %v385
  %v524 = vpop.f32.mrb[0].mxu0
  %v525 = vadd.f32 0.0, %v524
  %v526 = vpop.f32.mrb[0].mxu0
  %v527 = vpop.f32.mrb[0].mxu0
  %v528 = vadd.f32 0.0, %v527
  %v529 = vpop.f32.mrb[0].mxu0
  %530 = vmatprep.mubr.bf16.mxu0 0
  %531 = vmatmul.mubr.bf16.gmra.mrb[0].mxu0 %v388
  %v532 = vpop.f32.mrb[0].mxu0
  %v533 = vadd.f32 0.0, %v532
  %v534 = vpop.f32.mrb[0].mxu0
  %v535 = vpop.f32.mrb[0].mxu0
  %v536 = vadd.f32 0.0, %v535
  %v537 = vpop.f32.mrb[0].mxu0
  %538 = vmatprep.mubr.bf16.mxu0 0
  %539 = vmatmul.mubr.bf16.gmra.mrb[0].mxu0 %v391
  %v540 = vpop.f32.mrb[0].mxu0
  %v541 = vadd.f32 0.0, %v540
  %v542 = vpop.f32.mrb[0].mxu0
  %v543 = vpop.f32.mrb[0].mxu0
  %v544 = vadd.f32 0.0, %v543
  %v545 = vpop.f32.mrb[0].mxu0
  %546 = vmatprep.mubr.bf16.mxu0 0
  %547 = vmatmul.mubr.bf16.gmra.mrb[0].mxu0 %v394
  %v548 = vpop.f32.mrb[0].mxu0
  %v549 = vadd.f32 0.0, %v548
  %v550 = vpop.f32.mrb[0].mxu0
  %v551 = vpop.f32.mrb[0].mxu0
  %v552 = vadd.f32 0.0, %v551
  %v553 = vpop.f32.mrb[0].mxu0
  %554 = vmatprep.mubr.bf16.mxu0 0
  %555 = vmatmul.mubr.bf16.gmra.mrb[0].mxu0 %v397
  %v556 = vpop.f32.mrb[0].mxu0
  %v557 = vadd.f32 0.0, %v556
  %v558 = vpop.f32.mrb[0].mxu0
  %v559 = vpop.f32.mrb[0].mxu0
  %v560 = vadd.f32 0.0, %v559
  %v561 = vpop.f32.mrb[0].mxu0
  %562 = vmatprep.mubr.bf16.mxu0 0
  %563 = vmatmul.mubr.bf16.gmra.mrb[0].mxu0 %v400
  %v564 = vpop.f32.mrb[0].mxu0
  %v565 = vadd.f32 0.0, %v564
  %v566 = vpop.f32.mrb[0].mxu0
  %v567 = vpop.f32.mrb[0].mxu0
  %v568 = vadd.f32 0.0, %v567
  %v569 = vpop.f32.mrb[0].mxu0
  %570 = vmatprep.mubr.bf16.mxu0 0
  %571 = vmatmul.mubr.bf16.gmra.mrb[0].mxu0 %v403
  %v572 = vpop.f32.mrb[0].mxu0
  %v573 = vadd.f32 0.0, %v572
  %v574 = vpop.f32.mrb[0].mxu0
  %v575 = vpop.f32.mrb[0].mxu0
  %v576 = vadd.f32 0.0, %v575
  %v577 = vpop.f32.mrb[0].mxu0
  %578 = vmatprep.mubr.bf16.mxu0 0
  %579 = vmatmul.mubr.bf16.gmra.mrb[0].mxu0 %v406
  %v580 = vpop.f32.mrb[0].mxu0
  %v581 = vadd.f32 0.0, %v580
  %v582 = vpop.f32.mrb[0].mxu0
  %v583 = vpop.f32.mrb[0].mxu0
  %v584 = vadd.f32 0.0, %v583
  %v585 = vpop.f32.mrb[0].mxu0
  %586 = vmatprep.mubr.bf16.mxu0 0
  %587 = vmatmul.mubr.bf16.gmra.mrb[0].mxu0 %v409
  %v588 = vpop.f32.mrb[0].mxu0
  %v589 = vadd.f32 0.0, %v588
  %v590 = vpop.f32.mrb[0].mxu0
  %v591 = vpop.f32.mrb[0].mxu0
  %v592 = vadd.f32 0.0, %v591
  %v593 = vpop.f32.mrb[0].mxu0
  %594 = vmatprep.mubr.bf16.mxu0 0
  %595 = vmatmul.mubr.bf16.gmra.mrb[0].mxu0 %v412
  %v596 = vpop.f32.mrb[0].mxu0
  %v597 = vadd.f32 0.0, %v596
  %v598 = vpop.f32.mrb[0].mxu0
  %v599 = vpop.f32.mrb[0].mxu0
  %v600 = vadd.f32 0.0, %v599
  %v601 = vpop.f32.mrb[0].mxu0
  %602 = vmatprep.mubr.bf16.mxu0 0
  %603 = vmatmul.mubr.bf16.gmra.mrb[0].mxu0 %v415
  %v604 = vpop.f32.mrb[0].mxu0
  %v605 = vadd.f32 0.0, %v604
  %v606 = vpop.f32.mrb[0].mxu0
  %v607 = vpop.f32.mrb[0].mxu0
  %v608 = vadd.f32 0.0, %v607
  %v609 = vpop.f32.mrb[0].mxu0
  %610 = vmatprep.mubr.bf16.mxu0 0
  %611 = vmatmul.mubr.bf16.gmra.mrb[0].mxu0 %v418
  %v612 = vpop.f32.mrb[0].mxu0
  %v613 = vadd.f32 0.0, %v612
  %v614 = vpop.f32.mrb[0].mxu0
  %v615 = vpop.f32.mrb[0].mxu0
  %v616 = vadd.f32 0.0, %v615
  %v617 = vpop.f32.mrb[0].mxu0
  %618 = vmatprep.mubr.bf16.mxu0 0
  %619 = vmatmul.mubr.bf16.gmra.mrb[0].mxu0 %v421
  %v620 = vpop.f32.mrb[0].mxu0
  %v621 = vadd.f32 0.0, %v620
  %v622 = vpop.f32.mrb[0].mxu0
  %v623 = vpop.f32.mrb[0].mxu0
  %v624 = vadd.f32 0.0, %v623
  %v625 = vpop.f32.mrb[0].mxu0
  %626 = vmatprep.mubr.bf16.mxu0 0
  %627 = vmatmul.mubr.bf16.gmra.mrb[0].mxu0 %v424
  %v628 = vpop.f32.mrb[0].mxu0
  %v629 = vadd.f32 0.0, %v628
  %v630 = vpop.f32.mrb[0].mxu0
  %v631 = vpop.f32.mrb[0].mxu0
  %v632 = vadd.f32 0.0, %v631
  %v633 = vpop.f32.mrb[0].mxu0
  %634 = vmatprep.mubr.bf16.mxu0 0
  %635 = vmatmul.mubr.bf16.gmra.mrb[0].mxu0 %v427
  %v636 = vpop.f32.mrb[0].mxu0
  %v637 = vadd.f32 0.0, %v636
  %v638 = vpop.f32.mrb[0].mxu0
  %v639 = vpop.f32.mrb[0].mxu0
  %v640 = vadd.f32 0.0, %v639
  %v641 = vpop.f32.mrb[0].mxu0
  %642 = vmatprep.mubr.bf16.mxu0 0
  %643 = vmatmul.mubr.bf16.gmra.mrb[0].mxu0 %v430
  %v644 = vpop.f32.mrb[0].mxu0
  %v645 = vadd.f32 0.0, %v644
  %v646 = vpop.f32.mrb[0].mxu0
  %v647 = vpop.f32.mrb[0].mxu0
  %v648 = vadd.f32 0.0, %v647
  %v649 = vpop.f32.mrb[0].mxu0
  %650 = vmatprep.mubr.bf16.mxu0 0
  %651 = vmatmul.mubr.bf16.gmra.mrb[0].mxu0 %v433
  %v652 = vpop.f32.mrb[0].mxu0
  %v653 = vadd.f32 0.0, %v652
  %v654 = vpop.f32.mrb[0].mxu0
  %v655 = vpop.f32.mrb[0].mxu0
  %v656 = vadd.f32 0.0, %v655
  %v657 = vpop.f32.mrb[0].mxu0
  %658 = vmatprep.mubr.bf16.mxu0 0
  %659 = vmatmul.mubr.bf16.gmra.mrb[0].mxu0 %v436
  %v660 = vpop.f32.mrb[0].mxu0
  %v661 = vadd.f32 0.0, %v660
  %v662 = vpop.f32.mrb[0].mxu0
  %v663 = vpop.f32.mrb[0].mxu0
  %v664 = vadd.f32 0.0, %v663
  %v665 = vpop.f32.mrb[0].mxu0
  %666 = vmatprep.mubr.bf16.mxu0 0
  %667 = vmatmul.mubr.bf16.gmra.mrb[0].mxu0 %v439
  %v668 = vpop.f32.mrb[0].mxu0
  %v669 = vadd.f32 0.0, %v668
  %v670 = vpop.f32.mrb[0].mxu0
  %v671 = vpop.f32.mrb[0].mxu0
  %v672 = vadd.f32 0.0, %v671
  %v673 = vpop.f32.mrb[0].mxu0
  %674 = vmatprep.mubr.bf16.mxu0 0
  %675 = vmatmul.mubr.bf16.gmra.mrb[0].mxu0 %v442
  %v676 = vpop.f32.mrb[0].mxu0
  %v677 = vadd.f32 0.0, %v676
  %v678 = vpop.f32.mrb[0].mxu0
  %v679 = vpop.f32.mrb[0].mxu0
  %v680 = vadd.f32 0.0, %v679
  %v681 = vpop.f32.mrb[0].mxu0
  %682 = vmatprep.mubr.bf16.mxu0 0
  %683 = vmatmul.mubr.bf16.gmra.mrb[0].mxu0 %v445
  %v684 = vpop.f32.mrb[0].mxu0
  %v685 = vadd.f32 0.0, %v684
  %v686 = vpop.f32.mrb[0].mxu0
  %v687 = vpop.f32.mrb[0].mxu0
  %v688 = vadd.f32 0.0, %v687
  %v689 = vpop.f32.mrb[0].mxu0
  %690 = vmatprep.mubr.bf16.mxu0 0
  %691 = vmatmul.mubr.bf16.gmra.mrb[0].mxu0 %v448
  %v692 = vpop.f32.mrb[0].mxu0
  %v693 = vadd.f32 0.0, %v692
  %v694 = vpop.f32.mrb[0].mxu0
  %v695 = vpop.f32.mrb[0].mxu0
  %v696 = vadd.f32 0.0, %v695
  %v697 = vpop.f32.mrb[0].mxu0
  %698 = vmatprep.mubr.bf16.mxu0 0
  %699 = vmatmul.mubr.bf16.gmra.mrb[0].mxu0 %v451
  %v700 = vpop.f32.mrb[0].mxu0
  %v701 = vadd.f32 0.0, %v700
  %v702 = vpop.f32.mrb[0].mxu0
  %v703 = vpop.f32.mrb[0].mxu0
  %v704 = vadd.f32 0.0, %v703
  %v705 = vpop.f32.mrb[0].mxu0
  %706 = vmatprep.mubr.bf16.mxu0 0
  %707 = vmatmul.mubr.bf16.gmra.mrb[0].mxu0 %v454
  %v708 = vpop.f32.mrb[0].mxu0
  %v709 = vadd.f32 0.0, %v708
  %v710 = vpop.f32.mrb[0].mxu0
  %v711 = vpop.f32.mrb[0].mxu0
  %v712 = vadd.f32 0.0, %v711
  %v713 = vpop.f32.mrb[0].mxu0
  %714 = vmatprep.mubr.bf16.mxu0 0
  %715 = vmatmul.mubr.bf16.gmra.mrb[0].mxu0 %v457
  %v716 = vpop.f32.mrb[0].mxu0
  %v717 = vadd.f32 0.0, %v716
  %v718 = vpop.f32.mrb[0].mxu0
  %v719 = vpop.f32.mrb[0].mxu0
  %v720 = vadd.f32 0.0, %v719
  %v721 = vpop.f32.mrb[0].mxu0
  %722 = vmatprep.mubr.bf16.mxu0 0
  %723 = vmatmul.mubr.bf16.gmra.mrb[0].mxu0 %v460
  %v724 = vpop.f32.mrb[0].mxu0
  %v725 = vadd.f32 0.0, %v724
  %v726 = vpop.f32.mrb[0].mxu0
  %v727 = vpop.f32.mrb[0].mxu0
  %v728 = vadd.f32 0.0, %v727
  %v729 = vpop.f32.mrb[0].mxu0
  %730 = vmatprep.mubr.bf16.mxu0 0
  %731 = vmatmul.mubr.bf16.gmra.mrb[0].mxu0 %v463
  %v732 = vpop.f32.mrb[0].mxu0
  %v733 = vadd.f32 0.0, %v732
  %v734 = vpop.f32.mrb[0].mxu0
  %v735 = vpop.f32.mrb[0].mxu0
  %v736 = vadd.f32 0.0, %v735
  %v737 = vpop.f32.mrb[0].mxu0
  %738 = vmatprep.mubr.bf16.mxu0 0
  %739 = vmatmul.mubr.bf16.gmra.mrb[0].mxu0 %v466
  %v740 = vpop.f32.mrb[0].mxu0
  %v741 = vadd.f32 0.0, %v740
  %v742 = vpop.f32.mrb[0].mxu0
  %v743 = vpop.f32.mrb[0].mxu0
  %v744 = vadd.f32 0.0, %v743
  %v745 = vpop.f32.mrb[0].mxu0
  %746 = vmatprep.mubr.bf16.mxu0 0
  %747 = vmatmul.mubr.bf16.gmra.mrb[0].mxu0 %v469
  %v748 = vpop.f32.mrb[0].mxu0
  %v749 = vadd.f32 0.0, %v748
  %v750 = vpop.f32.mrb[0].mxu0
  %v751 = vpop.f32.mrb[0].mxu0
  %v752 = vadd.f32 0.0, %v751
  %v753 = vpop.f32.mrb[0].mxu0
  %754 = vmatprep.mubr.bf16.mxu0 0
  %755 = vmatmul.mubr.bf16.gmra.mrb[0].mxu0 %v472
  %v756 = vpop.f32.mrb[0].mxu0
  %v757 = vadd.f32 0.0, %v756
  %v758 = vpop.f32.mrb[0].mxu0
  %v759 = vpop.f32.mrb[0].mxu0
  %v760 = vadd.f32 0.0, %v759
  %v761 = vpop.f32.mrb[0].mxu0
  %762 = vdwg.mxu0
  %v763 = vadd.f32 %v145, %v509
  %v764 = vadd.f32 %v146, %v512
  %v765 = vadd.f32 %v147, %v517
  %v766 = vadd.f32 %v148, %v520
  %v767 = vadd.f32 %v149, %v525
  %v768 = vadd.f32 %v150, %v528
  %v769 = vadd.f32 %v151, %v533
  %v770 = vadd.f32 %v152, %v536
  %v771 = vadd.f32 %v153, %v541
  %v772 = vadd.f32 %v154, %v544
  %v773 = vadd.f32 %v155, %v549
  %v774 = vadd.f32 %v156, %v552
  %v775 = vadd.f32 %v157, %v557
  %v776 = vadd.f32 %v158, %v560
  %v777 = vadd.f32 %v159, %v565
  %v778 = vadd.f32 %v160, %v568
  %v779 = vadd.f32 %v161, %v573
  %v780 = vadd.f32 %v162, %v576
  %v781 = vadd.f32 %v163, %v581
  %v782 = vadd.f32 %v164, %v584
  %v783 = vadd.f32 %v165, %v589
  %v784 = vadd.f32 %v166, %v592
  %v785 = vadd.f32 %v167, %v597
  %v786 = vadd.f32 %v168, %v600
  %v787 = vadd.f32 %v169, %v605
  %v788 = vadd.f32 %v170, %v608
  %v789 = vadd.f32 %v171, %v613
  %v790 = vadd.f32 %v172, %v616
  %v791 = vadd.f32 %v173, %v621
  %v792 = vadd.f32 %v174, %v624
  %v793 = vadd.f32 %v175, %v629
  %v794 = vadd.f32 %v176, %v632
  %v795 = vadd.f32 %v177, %v637
  %v796 = vadd.f32 %v178, %v640
  %v797 = vadd.f32 %v179, %v645
  %v798 = vadd.f32 %v180, %v648
  %v799 = vadd.f32 %v181, %v653
  %v800 = vadd.f32 %v182, %v656
  %v801 = vadd.f32 %v183, %v661
  %v802 = vadd.f32 %v184, %v664
  %v803 = vadd.f32 %v185, %v669
  %v804 = vadd.f32 %v186, %v672
  %v805 = vadd.f32 %v187, %v677
  %v806 = vadd.f32 %v188, %v680
  %v807 = vadd.f32 %v189, %v685
  %v808 = vadd.f32 %v190, %v688
  %v809 = vadd.f32 %v191, %v693
  %v810 = vadd.f32 %v192, %v696
  %v811 = vadd.f32 %v193, %v701
  %v812 = vadd.f32 %v194, %v704
  %v813 = vadd.f32 %v195, %v709
  %v814 = vadd.f32 %v196, %v712
  %v815 = vadd.f32 %v197, %v717
  %v816 = vadd.f32 %v198, %v720
  %v817 = vadd.f32 %v199, %v725
  %v818 = vadd.f32 %v200, %v728
  %v819 = vadd.f32 %v201, %v733
  %v820 = vadd.f32 %v202, %v736
  %v821 = vadd.f32 %v203, %v741
  %v822 = vadd.f32 %v204, %v744
  %v823 = vadd.f32 %v205, %v749
  %v824 = vadd.f32 %v206, %v752
  %v825 = vadd.f32 %v207, %v757
  %v826 = vadd.f32 %v208, %v760
  %vm827 = vcmask 64512
  %828 = vst.msk [vmem:[#allocation2] sm:$0xff] %vm827, %v763
  %829 = vst.msk [vmem:[#allocation2 + $0x8] sm:$0xff] %vm827, %v764
  %830 = vst.msk [vmem:[#allocation2 + $0x10] sm:$0xff] %vm827, %v765
  %831 = vst.msk [vmem:[#allocation2 + $0x18] sm:$0xff] %vm827, %v766
  %832 = vst.msk [vmem:[#allocation2 + $0x20] sm:$0xff] %vm827, %v767
  %833 = vst.msk [vmem:[#allocation2 + $0x28] sm:$0xff] %vm827, %v768
  %834 = vst.msk [vmem:[#allocation2 + $0x30] sm:$0xff] %vm827, %v769
  %835 = vst.msk [vmem:[#allocation2 + $0x38] sm:$0xff] %vm827, %v770
  %836 = vst.msk [vmem:[#allocation2 + $0x40] sm:$0xff] %vm827, %v771
  %837 = vst.msk [vmem:[#allocation2 + $0x48] sm:$0xff] %vm827, %v772
  %838 = vst.msk [vmem:[#allocation2 + $0x50] sm:$0xff] %vm827, %v773
  %839 = vst.msk [vmem:[#allocation2 + $0x58] sm:$0xff] %vm827, %v774
  %840 = vst.msk [vmem:[#allocation2 + $0x60] sm:$0xff] %vm827, %v775
  %841 = vst.msk [vmem:[#allocation2 + $0x68] sm:$0xff] %vm827, %v776
  %842 = vst.msk [vmem:[#allocation2 + $0x70] sm:$0xff] %vm827, %v777
  %843 = vst.msk [vmem:[#allocation2 + $0x78] sm:$0xff] %vm827, %v778
  %844 = vst.msk [vmem:[#allocation2 + $0x80] sm:$0xff] %vm827, %v779
  %845 = vst.msk [vmem:[#allocation2 + $0x88] sm:$0xff] %vm827, %v780
  %846 = vst.msk [vmem:[#allocation2 + $0x90] sm:$0xff] %vm827, %v781
  %847 = vst.msk [vmem:[#allocation2 + $0x98] sm:$0xff] %vm827, %v782
  %848 = vst.msk [vmem:[#allocation2 + $0xa0] sm:$0xff] %vm827, %v783
  %849 = vst.msk [vmem:[#allocation2 + $0xa8] sm:$0xff] %vm827, %v784
  %850 = vst.msk [vmem:[#allocation2 + $0xb0] sm:$0xff] %vm827, %v785
  %851 = vst.msk [vmem:[#allocation2 + $0xb8] sm:$0xff] %vm827, %v786
  %852 = vst.msk [vmem:[#allocation2 + $0xc0] sm:$0xff] %vm827, %v787
  %853 = vst.msk [vmem:[#allocation2 + $0xc8] sm:$0xff] %vm827, %v788
  %854 = vst.msk [vmem:[#allocation2 + $0xd0] sm:$0xff] %vm827, %v789
  %855 = vst.msk [vmem:[#allocation2 + $0xd8] sm:$0xff] %vm827, %v790
  %856 = vst.msk [vmem:[#allocation2 + $0xe0] sm:$0xff] %vm827, %v791
  %857 = vst.msk [vmem:[#allocation2 + $0xe8] sm:$0xff] %vm827, %v792
  %858 = vst.msk [vmem:[#allocation2 + $0xf0] sm:$0xff] %vm827, %v793
  %859 = vst.msk [vmem:[#allocation2 + $0xf8] sm:$0xff] %vm827, %v794
  %860 = vst.msk [vmem:[#allocation2 + $0x100] sm:$0xff] %vm827, %v795
  %861 = vst.msk [vmem:[#allocation2 + $0x108] sm:$0xff] %vm827, %v796
  %862 = vst.msk [vmem:[#allocation2 + $0x110] sm:$0xff] %vm827, %v797
  %863 = vst.msk [vmem:[#allocation2 + $0x118] sm:$0xff] %vm827, %v798
  %864 = vst.msk [vmem:[#allocation2 + $0x120] sm:$0xff] %vm827, %v799
  %865 = vst.msk [vmem:[#allocation2 + $0x128] sm:$0xff] %vm827, %v800
  %866 = vst.msk [vmem:[#allocation2 + $0x130] sm:$0xff] %vm827, %v801
  %867 = vst.msk [vmem:[#allocation2 + $0x138] sm:$0xff] %vm827, %v802
  %868 = vst.msk [vmem:[#allocation2 + $0x140] sm:$0xff] %vm827, %v803
  %869 = vst.msk [vmem:[#allocation2 + $0x148] sm:$0xff] %vm827, %v804
  %870 = vst.msk [vmem:[#allocation2 + $0x150] sm:$0xff] %vm827, %v805
  %871 = vst.msk [vmem:[#allocation2 + $0x158] sm:$0xff] %vm827, %v806
  %872 = vst.msk [vmem:[#allocation2 + $0x160] sm:$0xff] %vm827, %v807
  %873 = vst.msk [vmem:[#allocation2 + $0x168] sm:$0xff] %vm827, %v808
  %874 = vst.msk [vmem:[#allocation2 + $0x170] sm:$0xff] %vm827, %v809
  %875 = vst.msk [vmem:[#allocation2 + $0x178] sm:$0xff] %vm827, %v810
  %876 = vst.msk [vmem:[#allocation2 + $0x180] sm:$0xff] %vm827, %v811
  %877 = vst.msk [vmem:[#allocation2 + $0x188] sm:$0xff] %vm827, %v812
  %878 = vst.msk [vmem:[#allocation2 + $0x190] sm:$0xff] %vm827, %v813
  %879 = vst.msk [vmem:[#allocation2 + $0x198] sm:$0xff] %vm827, %v814
  %880 = vst.msk [vmem:[#allocation2 + $0x1a0] sm:$0xff] %vm827, %v815
  %881 = vst.msk [vmem:[#allocation2 + $0x1a8] sm:$0xff] %vm827, %v816
  %882 = vst.msk [vmem:[#allocation2 + $0x1b0] sm:$0xff] %vm827, %v817
  %883 = vst.msk [vmem:[#allocation2 + $0x1b8] sm:$0xff] %vm827, %v818
  %884 = vst.msk [vmem:[#allocation2 + $0x1c0] sm:$0xff] %vm827, %v819
  %885 = vst.msk [vmem:[#allocation2 + $0x1c8] sm:$0xff] %vm827, %v820
  %886 = vst.msk [vmem:[#allocation2 + $0x1d0] sm:$0xff] %vm827, %v821
  %887 = vst.msk [vmem:[#allocation2 + $0x1d8] sm:$0xff] %vm827, %v822
  %888 = vst.msk [vmem:[#allocation2 + $0x1e0] sm:$0xff] %vm827, %v823
  %889 = vst.msk [vmem:[#allocation2 + $0x1e8] sm:$0xff] %vm827, %v824
  %890 = vst.msk [vmem:[#allocation2 + $0x1f0] sm:$0xff] %vm827, %v825
  %891 = vst.msk [vmem:[#allocation2 + $0x1f8] sm:$0xff] %vm827, %v826
  // Predicated region
  $region14: #{_lambda_.17} parent=0 // pred_check
    %p892 = pneg %p12
  $region15: #{_lambda_.17} parent=0 // pred_check_branch
    %894 = sbr.rel (%p892) target = $region17
  $region16: #{_lambda_.17} parent=0 // pred_region
    %v895 = vld [vmem:[#allocation2] sm:$0xff]
    %v896 = vld [vmem:[#allocation2 + $0x8] sm:$0xff]
    %v897 = vld [vmem:[#allocation2 + $0x10] sm:$0xff]
    %v898 = vld [vmem:[#allocation2 + $0x18] sm:$0xff]
    %v899 = vld [vmem:[#allocation2 + $0x20] sm:$0xff]
    %v900 = vld [vmem:[#allocation2 + $0x28] sm:$0xff]
    %v901 = vld [vmem:[#allocation2 + $0x30] sm:$0xff]
    %v902 = vld [vmem:[#allocation2 + $0x38] sm:$0xff]
    %v903 = vld [vmem:[#allocation2 + $0x40] sm:$0xff]
    %v904 = vld [vmem:[#allocation2 + $0x48] sm:$0xff]
    %v905 = vld [vmem:[#allocation2 + $0x50] sm:$0xff]
    %v906 = vld [vmem:[#allocation2 + $0x58] sm:$0xff]
    %v907 = vld [vmem:[#allocation2 + $0x60] sm:$0xff]
    %v908 = vld [vmem:[#allocation2 + $0x68] sm:$0xff]
    %v909 = vld [vmem:[#allocation2 + $0x70] sm:$0xff]
    %v910 = vld [vmem:[#allocation2 + $0x78] sm:$0xff]
    %v911 = vld [vmem:[#allocation2 + $0x80] sm:$0xff]
    %v912 = vld [vmem:[#allocation2 + $0x88] sm:$0xff]
    %v913 = vld [vmem:[#allocation2 + $0x90] sm:$0xff]
    %v914 = vld [vmem:[#allocation2 + $0x98] sm:$0xff]
    %v915 = vld [vmem:[#allocation2 + $0xa0] sm:$0xff]
    %v916 = vld [vmem:[#allocation2 + $0xa8] sm:$0xff]
    %v917 = vld [vmem:[#allocation2 + $0xb0] sm:$0xff]
    %v918 = vld [vmem:[#allocation2 + $0xb8] sm:$0xff]
    %v919 = vld [vmem:[#allocation2 + $0xc0] sm:$0xff]
    %v920 = vld [vmem:[#allocation2 + $0xc8] sm:$0xff]
    %v921 = vld [vmem:[#allocation2 + $0xd0] sm:$0xff]
    %v922 = vld [vmem:[#allocation2 + $0xd8] sm:$0xff]
    %v923 = vld [vmem:[#allocation2 + $0xe0] sm:$0xff]
    %v924 = vld [vmem:[#allocation2 + $0xe8] sm:$0xff]
    %v925 = vld [vmem:[#allocation2 + $0xf0] sm:$0xff]
    %v926 = vld [vmem:[#allocation2 + $0xf8] sm:$0xff]
    %v927 = vld [vmem:[#allocation2 + $0x100] sm:$0xff]
    %v928 = vld [vmem:[#allocation2 + $0x108] sm:$0xff]
    %v929 = vld [vmem:[#allocation2 + $0x110] sm:$0xff]
    %v930 = vld [vmem:[#allocation2 + $0x118] sm:$0xff]
    %v931 = vld [vmem:[#allocation2 + $0x120] sm:$0xff]
    %v932 = vld [vmem:[#allocation2 + $0x128] sm:$0xff]
    %v933 = vld [vmem:[#allocation2 + $0x130] sm:$0xff]
    %v934 = vld [vmem:[#allocation2 + $0x138] sm:$0xff]
    %v935 = vld [vmem:[#allocation2 + $0x140] sm:$0xff]
    %v936 = vld [vmem:[#allocation2 + $0x148] sm:$0xff]
    %v937 = vld [vmem:[#allocation2 + $0x150] sm:$0xff]
    %v938 = vld [vmem:[#allocation2 + $0x158] sm:$0xff]
    %v939 = vld [vmem:[#allocation2 + $0x160] sm:$0xff]
    %v940 = vld [vmem:[#allocation2 + $0x168] sm:$0xff]
    %v941 = vld [vmem:[#allocation2 + $0x170] sm:$0xff]
    %v942 = vld [vmem:[#allocation2 + $0x178] sm:$0xff]
    %v943 = vld [vmem:[#allocation2 + $0x180] sm:$0xff]
    %v944 = vld [vmem:[#allocation2 + $0x188] sm:$0xff]
    %v945 = vld [vmem:[#allocation2 + $0x190] sm:$0xff]
    %v946 = vld [vmem:[#allocation2 + $0x198] sm:$0xff]
    %v947 = vld [vmem:[#allocation2 + $0x1a0] sm:$0xff]
    %v948 = vld [vmem:[#allocation2 + $0x1a8] sm:$0xff]
    %v949 = vld [vmem:[#allocation2 + $0x1b0] sm:$0xff]
    %v950 = vld [vmem:[#allocation2 + $0x1b8] sm:$0xff]
    %v951 = vld [vmem:[#allocation2 + $0x1c0] sm:$0xff]
    %v952 = vld [vmem:[#allocation2 + $0x1c8] sm:$0xff]
    %v953 = vld [vmem:[#allocation2 + $0x1d0] sm:$0xff]
    %v954 = vld [vmem:[#allocation2 + $0x1d8] sm:$0xff]
    %v955 = vld [vmem:[#allocation2 + $0x1e0] sm:$0xff]
    %v956 = vld [vmem:[#allocation2 + $0x1e8] sm:$0xff]
    %v957 = vld [vmem:[#allocation2 + $0x1f0] sm:$0xff]
    %v958 = vld [vmem:[#allocation2 + $0x1f8] sm:$0xff]
    %959 = vst.msk [vmem:[%s2] sm:$0xff] %vm827, %v895
    %960 = vst.msk [vmem:[%s2 + $0x8] sm:$0xff] %vm827, %v896
    %961 = vst.msk [vmem:[%s2 + $0x10] sm:$0xff] %vm827, %v897
    %962 = vst.msk [vmem:[%s2 + $0x18] sm:$0xff] %vm827, %v898
    %963 = vst.msk [vmem:[%s2 + $0x20] sm:$0xff] %vm827, %v899
    %964 = vst.msk [vmem:[%s2 + $0x28] sm:$0xff] %vm827, %v900
    %965 = vst.msk [vmem:[%s2 + $0x30] sm:$0xff] %vm827, %v901
    %966 = vst.msk [vmem:[%s2 + $0x38] sm:$0xff] %vm827, %v902
    %967 = vst.msk [vmem:[%s2 + $0x40] sm:$0xff] %vm827, %v903
    %968 = vst.msk [vmem:[%s2 + $0x48] sm:$0xff] %vm827, %v904
    %969 = vst.msk [vmem:[%s2 + $0x50] sm:$0xff] %vm827, %v905
    %970 = vst.msk [vmem:[%s2 + $0x58] sm:$0xff] %vm827, %v906
    %971 = vst.msk [vmem:[%s2 + $0x60] sm:$0xff] %vm827, %v907
    %972 = vst.msk [vmem:[%s2 + $0x68] sm:$0xff] %vm827, %v908
    %973 = vst.msk [vmem:[%s2 + $0x70] sm:$0xff] %vm827, %v909
    %974 = vst.msk [vmem:[%s2 + $0x78] sm:$0xff] %vm827, %v910
    %975 = vst.msk [vmem:[%s2 + $0x80] sm:$0xff] %vm827, %v911
    %976 = vst.msk [vmem:[%s2 + $0x88] sm:$0xff] %vm827, %v912
    %977 = vst.msk [vmem:[%s2 + $0x90] sm:$0xff] %vm827, %v913
    %978 = vst.msk [vmem:[%s2 + $0x98] sm:$0xff] %vm827, %v914
    %979 = vst.msk [vmem:[%s2 + $0xa0] sm:$0xff] %vm827, %v915
    %980 = vst.msk [vmem:[%s2 + $0xa8] sm:$0xff] %vm827, %v916
    %981 = vst.msk [vmem:[%s2 + $0xb0] sm:$0xff] %vm827, %v917
    %982 = vst.msk [vmem:[%s2 + $0xb8] sm:$0xff] %vm827, %v918
    %983 = vst.msk [vmem:[%s2 + $0xc0] sm:$0xff] %vm827, %v919
    %984 = vst.msk [vmem:[%s2 + $0xc8] sm:$0xff] %vm827, %v920
    %985 = vst.msk [vmem:[%s2 + $0xd0] sm:$0xff] %vm827, %v921
    %986 = vst.msk [vmem:[%s2 + $0xd8] sm:$0xff] %vm827, %v922
    %987 = vst.msk [vmem:[%s2 + $0xe0] sm:$0xff] %vm827, %v923
    %988 = vst.msk [vmem:[%s2 + $0xe8] sm:$0xff] %vm827, %v924
    %989 = vst.msk [vmem:[%s2 + $0xf0] sm:$0xff] %vm827, %v925
    %990 = vst.msk [vmem:[%s2 + $0xf8] sm:$0xff] %vm827, %v926
    %991 = vst.msk [vmem:[%s2 + $0x100] sm:$0xff] %vm827, %v927
    %992 = vst.msk [vmem:[%s2 + $0x108] sm:$0xff] %vm827, %v928
    %993 = vst.msk [vmem:[%s2 + $0x110] sm:$0xff] %vm827, %v929
    %994 = vst.msk [vmem:[%s2 + $0x118] sm:$0xff] %vm827, %v930
    %995 = vst.msk [vmem:[%s2 + $0x120] sm:$0xff] %vm827, %v931
    %996 = vst.msk [vmem:[%s2 + $0x128] sm:$0xff] %vm827, %v932
    %997 = vst.msk [vmem:[%s2 + $0x130] sm:$0xff] %vm827, %v933
    %998 = vst.msk [vmem:[%s2 + $0x138] sm:$0xff] %vm827, %v934
    %999 = vst.msk [vmem:[%s2 + $0x140] sm:$0xff] %vm827, %v935
    %1000 = vst.msk [vmem:[%s2 + $0x148] sm:$0xff] %vm827, %v936
    %1001 = vst.msk [vmem:[%s2 + $0x150] sm:$0xff] %vm827, %v937
    %1002 = vst.msk [vmem:[%s2 + $0x158] sm:$0xff] %vm827, %v938
    %1003 = vst.msk [vmem:[%s2 + $0x160] sm:$0xff] %vm827, %v939
    %1004 = vst.msk [vmem:[%s2 + $0x168] sm:$0xff] %vm827, %v940
    %1005 = vst.msk [vmem:[%s2 + $0x170] sm:$0xff] %vm827, %v941
    %1006 = vst.msk [vmem:[%s2 + $0x178] sm:$0xff] %vm827, %v942
    %1007 = vst.msk [vmem:[%s2 + $0x180] sm:$0xff] %vm827, %v943
    %1008 = vst.msk [vmem:[%s2 + $0x188] sm:$0xff] %vm827, %v944
    %1009 = vst.msk [vmem:[%s2 + $0x190] sm:$0xff] %vm827, %v945
    %1010 = vst.msk [vmem:[%s2 + $0x198] sm:$0xff] %vm827, %v946
    %1011 = vst.msk [vmem:[%s2 + $0x1a0] sm:$0xff] %vm827, %v947
    %1012 = vst.msk [vmem:[%s2 + $0x1a8] sm:$0xff] %vm827, %v948
    %1013 = vst.msk [vmem:[%s2 + $0x1b0] sm:$0xff] %vm827, %v949
    %1014 = vst.msk [vmem:[%s2 + $0x1b8] sm:$0xff] %vm827, %v950
    %1015 = vst.msk [vmem:[%s2 + $0x1c0] sm:$0xff] %vm827, %v951
    %1016 = vst.msk [vmem:[%s2 + $0x1c8] sm:$0xff] %vm827, %v952
    %1017 = vst.msk [vmem:[%s2 + $0x1d0] sm:$0xff] %vm827, %v953
    %1018 = vst.msk [vmem:[%s2 + $0x1d8] sm:$0xff] %vm827, %v954
    %1019 = vst.msk [vmem:[%s2 + $0x1e0] sm:$0xff] %vm827, %v955
    %1020 = vst.msk [vmem:[%s2 + $0x1e8] sm:$0xff] %vm827, %v956
    %1021 = vst.msk [vmem:[%s2 + $0x1f0] sm:$0xff] %vm827, %v957
    %1022 = vst.msk [vmem:[%s2 + $0x1f8] sm:$0xff] %vm827, %v958
  $region17: #{_lambda_.17} parent=0 // pred_fallthru
    _
  // Predicated region
  $region18: #{_lambda_.17} parent=0 // pred_check
    _
  $region19: #{_lambda_.17} parent=0 // pred_check_branch
    %1024 = sbr.rel (0) target = $region21
  $region20: #{_lambda_.17} parent=0 // pred_region
    _
  $region21: #{_lambda_.17} parent=0 // pred_fallthru
    _
  // Predicated region
  $region22: #{_lambda_.17} parent=0 // pred_check
    _
  $region23: #{_lambda_.17} parent=0 // pred_check_branch
    %1026 = sbr.rel (0) target = $region25
  $region24: #{_lambda_.17} parent=0 // pred_region
    _
  $region25: #{_lambda_.17} parent=0 // pred_fallthru
    _

// kernel: _lambda_.19
$region0: #{_lambda_.19}
  #allocation0 [shape = 'u32[]', space=smem, size = 0x4, offset = 0x4, fixed_abs, tag = 'smem constant byte address 0x4 - core index']
  #allocation1 [shape = 'u32[144,128]{1,0:T(1,128)}', space=vmem, size = 0x12000, scoped, tag = 'internal scratch']
  %s0 = inlined_call_operand.vmem [shape: f32[128,16], index: 0, kind: input, shape index: {}]
  %s1 = inlined_call_operand.vmem [shape: f32[1,16], index: 1, kind: input, shape index: {}]
  %s2 = inlined_call_operand.vmem [shape: f32[1,16], index: 2, kind: input, shape index: {}]
  %s3 = inlined_call_operand.vmem [shape: f32[128,16], index: 3, kind: output, shape index: {}]
  %s4 = sld [smem:[#allocation0]]
  $region22: #{_lambda_.19} parent=0
    _
  %s6 = ssub.s32 1, %s4
  %s7 = scalar_select 0, %s6, %s4
  // Predicated region
  $region2: #{_lambda_.19} parent=0 // pred_check
    _
  $region3: #{_lambda_.19} parent=0 // pred_check_branch
    %9 = sbr.rel (0) target = $region5
  $region4: #{_lambda_.19} parent=0 // pred_region
    _
  $region5: #{_lambda_.19} parent=0 // pred_fallthru
    _
  // Predicated region
  $region6: #{_lambda_.19} parent=0 // pred_check
    _
  $region7: #{_lambda_.19} parent=0 // pred_check_branch
    %11 = sbr.rel (0) target = $region9
  $region8: #{_lambda_.19} parent=0 // pred_region
    _
  $region9: #{_lambda_.19} parent=0 // pred_fallthru
    _
  // Predicated region
  $region10: #{_lambda_.19} parent=0 // pred_check
    _
  $region11: #{_lambda_.19} parent=0 // pred_check_branch
    %13 = sbr.rel (0) target = $region13
  $region12: #{_lambda_.19} parent=0 // pred_region
    _
  $region13: #{_lambda_.19} parent=0 // pred_fallthru
    _
  %v14 = vld [vmem:[%s0] sm:$0xff]
  %v15 = vld [vmem:[%s0 + $0x8] sm:$0xff]
  %v16 = vld [vmem:[%s0 + $0x10] sm:$0xff]
  %v17 = vld [vmem:[%s0 + $0x18] sm:$0xff]
  %v18 = vld [vmem:[%s0 + $0x20] sm:$0xff]
  %v19 = vld [vmem:[%s0 + $0x28] sm:$0xff]
  %v20 = vld [vmem:[%s0 + $0x30] sm:$0xff]
  %v21 = vld [vmem:[%s0 + $0x38] sm:$0xff]
  %v22 = vld [vmem:[%s0 + $0x40] sm:$0xff]
  %v23 = vld [vmem:[%s0 + $0x48] sm:$0xff]
  %v24 = vld [vmem:[%s0 + $0x50] sm:$0xff]
  %v25 = vld [vmem:[%s0 + $0x58] sm:$0xff]
  %v26 = vld [vmem:[%s0 + $0x60] sm:$0xff]
  %v27 = vld [vmem:[%s0 + $0x68] sm:$0xff]
  %v28 = vld [vmem:[%s0 + $0x70] sm:$0xff]
  %v29 = vld [vmem:[%s0 + $0x78] sm:$0xff]
  %v30 = vld [vmem:[%s1] sm:$0x1]
  %v32 = vlaneseq
  %v33 = vshrl.u32 %v32, 7
  %v34 = vsub.s32 0, %v33
  %v35 = vrot.slane %v30, %v34
  %v37 = vmul.f32 %v14, %v35
  %v38 = vmul.f32 %v15, %v35
  %v39 = vmul.f32 %v16, %v35
  %v40 = vmul.f32 %v17, %v35
  %v41 = vmul.f32 %v18, %v35
  %v42 = vmul.f32 %v19, %v35
  %v43 = vmul.f32 %v20, %v35
  %v44 = vmul.f32 %v21, %v35
  %v45 = vmul.f32 %v22, %v35
  %v46 = vmul.f32 %v23, %v35
  %v47 = vmul.f32 %v24, %v35
  %v48 = vmul.f32 %v25, %v35
  %v49 = vmul.f32 %v26, %v35
  %v50 = vmul.f32 %v27, %v35
  %v51 = vmul.f32 %v28, %v35
  %v52 = vmul.f32 %v29, %v35
  %v53 = vld [vmem:[%s2] sm:$0x1]
  %v55 = vlaneseq
  %v56 = vshrl.u32 %v55, 7
  %v57 = vsub.s32 0, %v56
  %v58 = vrot.slane %v53, %v57
  %v60 = vadd.f32 %v37, %v58
  %v61 = vadd.f32 %v38, %v58
  %v62 = vadd.f32 %v39, %v58
  %v63 = vadd.f32 %v40, %v58
  %v64 = vadd.f32 %v41, %v58
  %v65 = vadd.f32 %v42, %v58
  %v66 = vadd.f32 %v43, %v58
  %v67 = vadd.f32 %v44, %v58
  %v68 = vadd.f32 %v45, %v58
  %v69 = vadd.f32 %v46, %v58
  %v70 = vadd.f32 %v47, %v58
  %v71 = vadd.f32 %v48, %v58
  %v72 = vadd.f32 %v49, %v58
  %v73 = vadd.f32 %v50, %v58
  %v74 = vadd.f32 %v51, %v58
  %v75 = vadd.f32 %v52, %v58
  %vm76 = vcmask 130048
  %77 = vst.msk [vmem:[%s3] sm:$0xff] %vm76, %v60
  %78 = vst.msk [vmem:[%s3 + $0x8] sm:$0xff] %vm76, %v61
  %79 = vst.msk [vmem:[%s3 + $0x10] sm:$0xff] %vm76, %v62
  %80 = vst.msk [vmem:[%s3 + $0x18] sm:$0xff] %vm76, %v63
  %81 = vst.msk [vmem:[%s3 + $0x20] sm:$0xff] %vm76, %v64
  %82 = vst.msk [vmem:[%s3 + $0x28] sm:$0xff] %vm76, %v65
  %83 = vst.msk [vmem:[%s3 + $0x30] sm:$0xff] %vm76, %v66
  %84 = vst.msk [vmem:[%s3 + $0x38] sm:$0xff] %vm76, %v67
  %85 = vst.msk [vmem:[%s3 + $0x40] sm:$0xff] %vm76, %v68
  %86 = vst.msk [vmem:[%s3 + $0x48] sm:$0xff] %vm76, %v69
  %87 = vst.msk [vmem:[%s3 + $0x50] sm:$0xff] %vm76, %v70
  %88 = vst.msk [vmem:[%s3 + $0x58] sm:$0xff] %vm76, %v71
  %89 = vst.msk [vmem:[%s3 + $0x60] sm:$0xff] %vm76, %v72
  %90 = vst.msk [vmem:[%s3 + $0x68] sm:$0xff] %vm76, %v73
  %91 = vst.msk [vmem:[%s3 + $0x70] sm:$0xff] %vm76, %v74
  %92 = vst.msk [vmem:[%s3 + $0x78] sm:$0xff] %vm76, %v75
  // Predicated region
  $region14: #{_lambda_.19} parent=0 // pred_check
    _
  $region15: #{_lambda_.19} parent=0 // pred_check_branch
    %94 = sbr.rel (0) target = $region17
  $region16: #{_lambda_.19} parent=0 // pred_region
    _
  $region17: #{_lambda_.19} parent=0 // pred_fallthru
    _
  // Predicated region
  $region18: #{_lambda_.19} parent=0 // pred_check
    _
  $region19: #{_lambda_.19} parent=0 // pred_check_branch
    %96 = sbr.rel (0) target = $region21
  $region20: #{_lambda_.19} parent=0 // pred_region
    _
  $region21: #{_lambda_.19} parent=0 // pred_fallthru
    _

// kernel: _lambda_.18
$region0: #{_lambda_.18}
  #allocation0 [shape = 'u32[]', space=smem, size = 0x4, offset = 0x4, fixed_abs, tag = 'smem constant byte address 0x4 - core index']
  #allocation1 [shape = 'u32[144,128]{1,0:T(1,128)}', space=vmem, size = 0x12000, scoped, tag = 'internal scratch']
  #allocation2 [shape = 'f32[128,16]{1,0:T(8,128)}', space=vmem, size = 0x10000, scoped, tag = 'scratch operand']
  %s0 = inlined_call_operand.vmem [shape: bf16[1,128,128], index: 0, kind: input, shape index: {}]
  %s1 = inlined_call_operand.vmem [shape: bf16[1,128,16], index: 1, kind: input, shape index: {}]
  %s2 = inlined_call_operand.vmem [shape: f32[1,128,16], index: 2, kind: output, shape index: {0}]
  %s3 = inlined_call_operand.vmem [shape: f32[1,16], index: 3, kind: output, shape index: {1}]
  %s4 = inlined_call_operand.vmem [shape: f32[1,16], index: 4, kind: output, shape index: {2}]
  %5 = xla_tuple %s2, %s3, %s4
  %s6 = sld [smem:[#allocation0]]
  $region46: #{_lambda_.18} parent=0
    _
  %s8 = ssub.s32 1, %s6
  %s9 = scalar_select 0, %s8, %s6
  // Predicated region
  $region2: #{_lambda_.18} parent=0 // pred_check
    _
  $region3: #{_lambda_.18} parent=0 // pred_check_branch
    %11 = sbr.rel (0) target = $region5
  $region4: #{_lambda_.18} parent=0 // pred_region
    _
  $region5: #{_lambda_.18} parent=0 // pred_fallthru
    _
  // Predicated region
  $region6: #{_lambda_.18} parent=0 // pred_check
    _
  $region7: #{_lambda_.18} parent=0 // pred_check_branch
    %13 = sbr.rel (0) target = $region9
  $region8: #{_lambda_.18} parent=0 // pred_region
    _
  $region9: #{_lambda_.18} parent=0 // pred_fallthru
    _
  %p16 = scmp.eq.s32.totalorder 0, 0
  // Predicated region
  $region10: #{_lambda_.18} parent=0 // pred_check
    %p17 = pneg %p16
  $region11: #{_lambda_.18} parent=0 // pred_check_branch
    %19 = sbr.rel (%p17) target = $region13
  $region12: #{_lambda_.18} parent=0 // pred_region
    %vm20 = vcmask 130048
    %21 = vst.msk [vmem:[#allocation2] sm:$0xff] %vm20, 0.0
    %22 = vst.msk [vmem:[#allocation2 + $0x8] sm:$0xff] %vm20, 0.0
    %23 = vst.msk [vmem:[#allocation2 + $0x10] sm:$0xff] %vm20, 0.0
    %24 = vst.msk [vmem:[#allocation2 + $0x18] sm:$0xff] %vm20, 0.0
    %25 = vst.msk [vmem:[#allocation2 + $0x20] sm:$0xff] %vm20, 0.0
    %26 = vst.msk [vmem:[#allocation2 + $0x28] sm:$0xff] %vm20, 0.0
    %27 = vst.msk [vmem:[#allocation2 + $0x30] sm:$0xff] %vm20, 0.0
    %28 = vst.msk [vmem:[#allocation2 + $0x38] sm:$0xff] %vm20, 0.0
    %29 = vst.msk [vmem:[#allocation2 + $0x40] sm:$0xff] %vm20, 0.0
    %30 = vst.msk [vmem:[#allocation2 + $0x48] sm:$0xff] %vm20, 0.0
    %31 = vst.msk [vmem:[#allocation2 + $0x50] sm:$0xff] %vm20, 0.0
    %32 = vst.msk [vmem:[#allocation2 + $0x58] sm:$0xff] %vm20, 0.0
    %33 = vst.msk [vmem:[#allocation2 + $0x60] sm:$0xff] %vm20, 0.0
    %34 = vst.msk [vmem:[#allocation2 + $0x68] sm:$0xff] %vm20, 0.0
    %35 = vst.msk [vmem:[#allocation2 + $0x70] sm:$0xff] %vm20, 0.0
    %36 = vst.msk [vmem:[#allocation2 + $0x78] sm:$0xff] %vm20, 0.0
  $region13: #{_lambda_.18} parent=0 // pred_fallthru
    _
  %p37 = scmp.eq.s32.totalorder 0, 0
  %p38 = scmp.eq.s32.totalorder 0, 0
  %p39 = pnand %p37, %p38
  %p40 = pneg %p39
  %p41 = pnand %p40, %p16
  %p42 = pneg %p41
  // Predicated region
  $region14: #{_lambda_.18} parent=0 // pred_check
    _
  $region15: #{_lambda_.18} parent=0 // pred_check_branch
    %44 = sbr.rel (%p41) target = $region17
  $region16: #{_lambda_.18} parent=0 // pred_region
    %vm45 = vcmask 122880
    %46 = vst.msk [vmem:[%s3] sm:$0x1] %vm45, 0.0
    %47 = vst.msk [vmem:[%s4] sm:$0x1] %vm45, 0.0
  $region17: #{_lambda_.18} parent=0 // pred_fallthru
    _
  %v48 = vld [vmem:[%s0] sm:$0xf]
  %v49 = vld [vmem:[%s0 + $0x4] sm:$0xf]
  %v50 = vld [vmem:[%s0 + $0x8] sm:$0xf]
  %v51 = vld [vmem:[%s0 + $0xc] sm:$0xf]
  %v52 = vld [vmem:[%s0 + $0x10] sm:$0xf]
  %v53 = vld [vmem:[%s0 + $0x14] sm:$0xf]
  %v54 = vld [vmem:[%s0 + $0x18] sm:$0xf]
  %v55 = vld [vmem:[%s0 + $0x1c] sm:$0xf]
  %v56 = vld [vmem:[%s0 + $0x20] sm:$0xf]
  %v57 = vld [vmem:[%s0 + $0x24] sm:$0xf]
  %v58 = vld [vmem:[%s0 + $0x28] sm:$0xf]
  %v59 = vld [vmem:[%s0 + $0x2c] sm:$0xf]
  %v60 = vld [vmem:[%s0 + $0x30] sm:$0xf]
  %v61 = vld [vmem:[%s0 + $0x34] sm:$0xf]
  %v62 = vld [vmem:[%s0 + $0x38] sm:$0xf]
  %v63 = vld [vmem:[%s0 + $0x3c] sm:$0xf]
  %vm64 = vcmp.ge.bf16.partialorder %v48, 0
  %vm65 = vcmp.ge.bf16.partialorder %v49, 0
  %vm66 = vcmp.ge.bf16.partialorder %v50, 0
  %vm67 = vcmp.ge.bf16.partialorder %v51, 0
  %vm68 = vcmp.ge.bf16.partialorder %v52, 0
  %vm69 = vcmp.ge.bf16.partialorder %v53, 0
  %vm70 = vcmp.ge.bf16.partialorder %v54, 0
  %vm71 = vcmp.ge.bf16.partialorder %v55, 0
  %vm72 = vcmp.ge.bf16.partialorder %v56, 0
  %vm73 = vcmp.ge.bf16.partialorder %v57, 0
  %vm74 = vcmp.ge.bf16.partialorder %v58, 0
  %vm75 = vcmp.ge.bf16.partialorder %v59, 0
  %vm76 = vcmp.ge.bf16.partialorder %v60, 0
  %vm77 = vcmp.ge.bf16.partialorder %v61, 0
  %vm78 = vcmp.ge.bf16.partialorder %v62, 0
  %vm79 = vcmp.ge.bf16.partialorder %v63, 0
  %v80 = vmul.bf16 %v48, 1045249613
  %v81 = vmul.bf16 %v49, 1045249613
  %v82 = vmul.bf16 %v50, 1045249613
  %v83 = vmul.bf16 %v51, 1045249613
  %v84 = vmul.bf16 %v52, 1045249613
  %v85 = vmul.bf16 %v53, 1045249613
  %v86 = vmul.bf16 %v54, 1045249613
  %v87 = vmul.bf16 %v55, 1045249613
  %v88 = vmul.bf16 %v56, 1045249613
  %v89 = vmul.bf16 %v57, 1045249613
  %v90 = vmul.bf16 %v58, 1045249613
  %v91 = vmul.bf16 %v59, 1045249613
  %v92 = vmul.bf16 %v60, 1045249613
  %v93 = vmul.bf16 %v61, 1045249613
  %v94 = vmul.bf16 %v62, 1045249613
  %v95 = vmul.bf16 %v63, 1045249613
  %v96 = vsel %vm64, %v48, %v80
  %v97 = vsel %vm65, %v49, %v81
  %v98 = vsel %vm66, %v50, %v82
  %v99 = vsel %vm67, %v51, %v83
  %v100 = vsel %vm68, %v52, %v84
  %v101 = vsel %vm69, %v53, %v85
  %v102 = vsel %vm70, %v54, %v86
  %v103 = vsel %vm71, %v55, %v87
  %v104 = vsel %vm72, %v56, %v88
  %v105 = vsel %vm73, %v57, %v89
  %v106 = vsel %vm74, %v58, %v90
  %v107 = vsel %vm75, %v59, %v91
  %v108 = vsel %vm76, %v60, %v92
  %v109 = vsel %vm77, %v61, %v93
  %v110 = vsel %vm78, %v62, %v94
  %v111 = vsel %vm79, %v63, %v95
  %v112 = vld [vmem:[#allocation2] sm:$0xff]
  %v113 = vld [vmem:[#allocation2 + $0x8] sm:$0xff]
  %v114 = vld [vmem:[#allocation2 + $0x10] sm:$0xff]
  %v115 = vld [vmem:[#allocation2 + $0x18] sm:$0xff]
  %v116 = vld [vmem:[#allocation2 + $0x20] sm:$0xff]
  %v117 = vld [vmem:[#allocation2 + $0x28] sm:$0xff]
  %v118 = vld [vmem:[#allocation2 + $0x30] sm:$0xff]
  %v119 = vld [vmem:[#allocation2 + $0x38] sm:$0xff]
  %v120 = vld [vmem:[#allocation2 + $0x40] sm:$0xff]
  %v121 = vld [vmem:[#allocation2 + $0x48] sm:$0xff]
  %v122 = vld [vmem:[#allocation2 + $0x50] sm:$0xff]
  %v123 = vld [vmem:[#allocation2 + $0x58] sm:$0xff]
  %v124 = vld [vmem:[#allocation2 + $0x60] sm:$0xff]
  %v125 = vld [vmem:[#allocation2 + $0x68] sm:$0xff]
  %v126 = vld [vmem:[#allocation2 + $0x70] sm:$0xff]
  %v127 = vld [vmem:[#allocation2 + $0x78] sm:$0xff]
  %v128 = vld [vmem:[%s1] sm:$0xf]
  %v129 = vld [vmem:[%s1 + $0x4] sm:$0xf]
  %v130 = vld [vmem:[%s1 + $0x8] sm:$0xf]
  %v131 = vld [vmem:[%s1 + $0xc] sm:$0xf]
  %v132 = vld [vmem:[%s1 + $0x10] sm:$0xf]
  %v133 = vld [vmem:[%s1 + $0x14] sm:$0xf]
  %v134 = vld [vmem:[%s1 + $0x18] sm:$0xf]
  %v135 = vld [vmem:[%s1 + $0x1c] sm:$0xf]
  %v136 = vld [vmem:[%s1 + $0x20] sm:$0xf]
  %v137 = vld [vmem:[%s1 + $0x24] sm:$0xf]
  %v138 = vld [vmem:[%s1 + $0x28] sm:$0xf]
  %v139 = vld [vmem:[%s1 + $0x2c] sm:$0xf]
  %v140 = vld [vmem:[%s1 + $0x30] sm:$0xf]
  %v141 = vld [vmem:[%s1 + $0x34] sm:$0xf]
  %v142 = vld [vmem:[%s1 + $0x38] sm:$0xf]
  %v143 = vld [vmem:[%s1 + $0x3c] sm:$0xf]
  %v160 = vunpack.c.l.b16 %v96
  %v161 = vunpack.c.l.b16 %v97
  %v162 = vunpack.c.l.b16 %v98
  %v163 = vunpack.c.l.b16 %v99
  %v164 = vunpack.c.l.b16 %v100
  %v165 = vunpack.c.l.b16 %v101
  %v166 = vunpack.c.l.b16 %v102
  %v167 = vunpack.c.l.b16 %v103
  %v168 = vunpack.c.l.b16 %v104
  %v169 = vunpack.c.l.b16 %v105
  %v170 = vunpack.c.l.b16 %v106
  %v171 = vunpack.c.l.b16 %v107
  %v172 = vunpack.c.l.b16 %v108
  %v173 = vunpack.c.l.b16 %v109
  %v174 = vunpack.c.l.b16 %v110
  %v175 = vunpack.c.l.b16 %v111
  %v176 = vpack.c.b16 %v161, %v160
  %v177 = vpack.c.b16 %v163, %v162
  %v178 = vpack.c.b16 %v165, %v164
  %v179 = vpack.c.b16 %v167, %v166
  %v180 = vpack.c.b16 %v169, %v168
  %v181 = vpack.c.b16 %v171, %v170
  %v182 = vpack.c.b16 %v173, %v172
  %v183 = vpack.c.b16 %v175, %v174
  %v208 = vunpack.c.l.b16 %v128
  %v209 = vunpack.c.l.b16 %v129
  %v210 = vunpack.c.l.b16 %v130
  %v211 = vunpack.c.l.b16 %v131
  %v212 = vunpack.c.l.b16 %v132
  %v213 = vunpack.c.l.b16 %v133
  %v214 = vunpack.c.l.b16 %v134
  %v215 = vunpack.c.l.b16 %v135
  %v216 = vunpack.c.l.b16 %v136
  %v217 = vunpack.c.l.b16 %v137
  %v218 = vunpack.c.l.b16 %v138
  %v219 = vunpack.c.l.b16 %v139
  %v220 = vunpack.c.l.b16 %v140
  %v221 = vunpack.c.l.b16 %v141
  %v222 = vunpack.c.l.b16 %v142
  %v223 = vunpack.c.l.b16 %v143
  %v224 = vpack.c.b16 %v209, %v208
  %v225 = vpack.c.b16 %v211, %v210
  %v226 = vpack.c.b16 %v213, %v212
  %v227 = vpack.c.b16 %v215, %v214
  %v228 = vpack.c.b16 %v217, %v216
  %v229 = vpack.c.b16 %v219, %v218
  %v230 = vpack.c.b16 %v221, %v220
  %v231 = vpack.c.b16 %v223, %v222
  %240 = vmatprep.subr.bf16.mxu0 0
  %241 = vmatpush1.bf16.msra.mxu0 %v224
  %242 = vmatprep.subr.bf16.mxu0 0
  %243 = vmatpush1.bf16.msra.mxu0 %v225
  %244 = vmatprep.subr.bf16.mxu0 0
  %245 = vmatpush1.bf16.msra.mxu0 %v226
  %246 = vmatprep.subr.bf16.mxu0 0
  %247 = vmatpush1.bf16.msra.mxu0 %v227
  %248 = vmatprep.subr.bf16.mxu0 0
  %249 = vmatpush1.bf16.msra.mxu0 %v228
  %250 = vmatprep.subr.bf16.mxu0 0
  %251 = vmatpush1.bf16.msra.mxu0 %v229
  %252 = vmatprep.subr.bf16.mxu0 0
  %253 = vmatpush1.bf16.msra.mxu0 %v230
  %254 = vmatprep.subr.bf16.mxu0 0
  %255 = vmatpush1.bf16.msra.mxu0 %v231
  %256 = vmatprep.subr.bf16.mxu0 0
  %257 = vmatpush1.bf16.msra.mxu0 0
  %258 = vmatprep.subr.bf16.mxu0 0
  %259 = vmatpush1.bf16.msra.mxu0 0
  %260 = vmatprep.subr.bf16.mxu0 0
  %261 = vmatpush1.bf16.msra.mxu0 0
  %262 = vmatprep.subr.bf16.mxu0 0
  %263 = vmatpush1.bf16.msra.mxu0 0
  %264 = vmatprep.subr.bf16.mxu0 0
  %265 = vmatpush1.bf16.msra.mxu0 0
  %266 = vmatprep.subr.bf16.mxu0 0
  %267 = vmatpush1.bf16.msra.mxu0 0
  %268 = vmatprep.subr.bf16.mxu0 0
  %269 = vmatpush1.bf16.msra.mxu0 0
  %270 = vmatprep.subr.bf16.mxu0 0
  %271 = vmatpush1.bf16.msra.mxu0 0
  %272 = vmatprep.mubr.bf16.mxu0 0
  %273 = vmatmul.mubr.bf16.gmra.mrb[0].mxu0 %v176
  %v274 = vpop.f32.mrb[0].mxu0
  %v275 = vadd.f32 0.0, %v274
  %v276 = vpop.f32.mrb[0].mxu0
  %v277 = vpop.f32.mrb[0].mxu0
  %v278 = vadd.f32 0.0, %v277
  %v279 = vpop.f32.mrb[0].mxu0
  %280 = vmatprep.mubr.bf16.mxu0 0
  %281 = vmatmul.mubr.bf16.gmra.mrb[0].mxu0 %v177
  %v282 = vpop.f32.mrb[0].mxu0
  %v283 = vadd.f32 0.0, %v282
  %v284 = vpop.f32.mrb[0].mxu0
  %v285 = vpop.f32.mrb[0].mxu0
  %v286 = vadd.f32 0.0, %v285
  %v287 = vpop.f32.mrb[0].mxu0
  %288 = vmatprep.mubr.bf16.mxu0 0
  %289 = vmatmul.mubr.bf16.gmra.mrb[0].mxu0 %v178
  %v290 = vpop.f32.mrb[0].mxu0
  %v291 = vadd.f32 0.0, %v290
  %v292 = vpop.f32.mrb[0].mxu0
  %v293 = vpop.f32.mrb[0].mxu0
  %v294 = vadd.f32 0.0, %v293
  %v295 = vpop.f32.mrb[0].mxu0
  %296 = vmatprep.mubr.bf16.mxu0 0
  %297 = vmatmul.mubr.bf16.gmra.mrb[0].mxu0 %v179
  %v298 = vpop.f32.mrb[0].mxu0
  %v299 = vadd.f32 0.0, %v298
  %v300 = vpop.f32.mrb[0].mxu0
  %v301 = vpop.f32.mrb[0].mxu0
  %v302 = vadd.f32 0.0, %v301
  %v303 = vpop.f32.mrb[0].mxu0
  %304 = vmatprep.mubr.bf16.mxu0 0
  %305 = vmatmul.mubr.bf16.gmra.mrb[0].mxu0 %v180
  %v306 = vpop.f32.mrb[0].mxu0
  %v307 = vadd.f32 0.0, %v306
  %v308 = vpop.f32.mrb[0].mxu0
  %v309 = vpop.f32.mrb[0].mxu0
  %v310 = vadd.f32 0.0, %v309
  %v311 = vpop.f32.mrb[0].mxu0
  %312 = vmatprep.mubr.bf16.mxu0 0
  %313 = vmatmul.mubr.bf16.gmra.mrb[0].mxu0 %v181
  %v314 = vpop.f32.mrb[0].mxu0
  %v315 = vadd.f32 0.0, %v314
  %v316 = vpop.f32.mrb[0].mxu0
  %v317 = vpop.f32.mrb[0].mxu0
  %v318 = vadd.f32 0.0, %v317
  %v319 = vpop.f32.mrb[0].mxu0
  %320 = vmatprep.mubr.bf16.mxu0 0
  %321 = vmatmul.mubr.bf16.gmra.mrb[0].mxu0 %v182
  %v322 = vpop.f32.mrb[0].mxu0
  %v323 = vadd.f32 0.0, %v322
  %v324 = vpop.f32.mrb[0].mxu0
  %v325 = vpop.f32.mrb[0].mxu0
  %v326 = vadd.f32 0.0, %v325
  %v327 = vpop.f32.mrb[0].mxu0
  %328 = vmatprep.mubr.bf16.mxu0 0
  %329 = vmatmul.mubr.bf16.gmra.mrb[0].mxu0 %v183
  %v330 = vpop.f32.mrb[0].mxu0
  %v331 = vadd.f32 0.0, %v330
  %v332 = vpop.f32.mrb[0].mxu0
  %v333 = vpop.f32.mrb[0].mxu0
  %v334 = vadd.f32 0.0, %v333
  %v335 = vpop.f32.mrb[0].mxu0
  %336 = vdwg.mxu0
  %v337 = vadd.f32 %v112, %v275
  %v338 = vadd.f32 %v113, %v278
  %v339 = vadd.f32 %v114, %v283
  %v340 = vadd.f32 %v115, %v286
  %v341 = vadd.f32 %v116, %v291
  %v342 = vadd.f32 %v117, %v294
  %v343 = vadd.f32 %v118, %v299
  %v344 = vadd.f32 %v119, %v302
  %v345 = vadd.f32 %v120, %v307
  %v346 = vadd.f32 %v121, %v310
  %v347 = vadd.f32 %v122, %v315
  %v348 = vadd.f32 %v123, %v318
  %v349 = vadd.f32 %v124, %v323
  %v350 = vadd.f32 %v125, %v326
  %v351 = vadd.f32 %v126, %v331
  %v352 = vadd.f32 %v127, %v334
  %vm353 = vcmask 130048
  %354 = vst.msk [vmem:[#allocation2] sm:$0xff] %vm353, %v337
  %355 = vst.msk [vmem:[#allocation2 + $0x8] sm:$0xff] %vm353, %v338
  %356 = vst.msk [vmem:[#allocation2 + $0x10] sm:$0xff] %vm353, %v339
  %357 = vst.msk [vmem:[#allocation2 + $0x18] sm:$0xff] %vm353, %v340
  %358 = vst.msk [vmem:[#allocation2 + $0x20] sm:$0xff] %vm353, %v341
  %359 = vst.msk [vmem:[#allocation2 + $0x28] sm:$0xff] %vm353, %v342
  %360 = vst.msk [vmem:[#allocation2 + $0x30] sm:$0xff] %vm353, %v343
  %361 = vst.msk [vmem:[#allocation2 + $0x38] sm:$0xff] %vm353, %v344
  %362 = vst.msk [vmem:[#allocation2 + $0x40] sm:$0xff] %vm353, %v345
  %363 = vst.msk [vmem:[#allocation2 + $0x48] sm:$0xff] %vm353, %v346
  %364 = vst.msk [vmem:[#allocation2 + $0x50] sm:$0xff] %vm353, %v347
  %365 = vst.msk [vmem:[#allocation2 + $0x58] sm:$0xff] %vm353, %v348
  %366 = vst.msk [vmem:[#allocation2 + $0x60] sm:$0xff] %vm353, %v349
  %367 = vst.msk [vmem:[#allocation2 + $0x68] sm:$0xff] %vm353, %v350
  %368 = vst.msk [vmem:[#allocation2 + $0x70] sm:$0xff] %vm353, %v351
  %369 = vst.msk [vmem:[#allocation2 + $0x78] sm:$0xff] %vm353, %v352
  // Predicated region
  $region18: #{_lambda_.18} parent=0 // pred_check
    %p370 = pneg %p16
  $region19: #{_lambda_.18} parent=0 // pred_check_branch
    %372 = sbr.rel (%p370) target = $region21
  $region20: #{_lambda_.18} parent=0 // pred_region
    %v373 = vld [vmem:[#allocation2] sm:$0xff]
    %v374 = vld [vmem:[#allocation2 + $0x8] sm:$0xff]
    %v375 = vld [vmem:[#allocation2 + $0x10] sm:$0xff]
    %v376 = vld [vmem:[#allocation2 + $0x18] sm:$0xff]
    %v377 = vld [vmem:[#allocation2 + $0x20] sm:$0xff]
    %v378 = vld [vmem:[#allocation2 + $0x28] sm:$0xff]
    %v379 = vld [vmem:[#allocation2 + $0x30] sm:$0xff]
    %v380 = vld [vmem:[#allocation2 + $0x38] sm:$0xff]
    %v381 = vld [vmem:[#allocation2 + $0x40] sm:$0xff]
    %v382 = vld [vmem:[#allocation2 + $0x48] sm:$0xff]
    %v383 = vld [vmem:[#allocation2 + $0x50] sm:$0xff]
    %v384 = vld [vmem:[#allocation2 + $0x58] sm:$0xff]
    %v385 = vld [vmem:[#allocation2 + $0x60] sm:$0xff]
    %v386 = vld [vmem:[#allocation2 + $0x68] sm:$0xff]
    %v387 = vld [vmem:[#allocation2 + $0x70] sm:$0xff]
    %v388 = vld [vmem:[#allocation2 + $0x78] sm:$0xff]
    %389 = vst.msk [vmem:[%s2] sm:$0xff] %vm353, %v373
    %390 = vst.msk [vmem:[%s2 + $0x8] sm:$0xff] %vm353, %v374
    %391 = vst.msk [vmem:[%s2 + $0x10] sm:$0xff] %vm353, %v375
    %392 = vst.msk [vmem:[%s2 + $0x18] sm:$0xff] %vm353, %v376
    %393 = vst.msk [vmem:[%s2 + $0x20] sm:$0xff] %vm353, %v377
    %394 = vst.msk [vmem:[%s2 + $0x28] sm:$0xff] %vm353, %v378
    %395 = vst.msk [vmem:[%s2 + $0x30] sm:$0xff] %vm353, %v379
    %396 = vst.msk [vmem:[%s2 + $0x38] sm:$0xff] %vm353, %v380
    %397 = vst.msk [vmem:[%s2 + $0x40] sm:$0xff] %vm353, %v381
    %398 = vst.msk [vmem:[%s2 + $0x48] sm:$0xff] %vm353, %v382
    %399 = vst.msk [vmem:[%s2 + $0x50] sm:$0xff] %vm353, %v383
    %400 = vst.msk [vmem:[%s2 + $0x58] sm:$0xff] %vm353, %v384
    %401 = vst.msk [vmem:[%s2 + $0x60] sm:$0xff] %vm353, %v385
    %402 = vst.msk [vmem:[%s2 + $0x68] sm:$0xff] %vm353, %v386
    %403 = vst.msk [vmem:[%s2 + $0x70] sm:$0xff] %vm353, %v387
    %404 = vst.msk [vmem:[%s2 + $0x78] sm:$0xff] %vm353, %v388
    %v405 = vld [vmem:[%s3] sm:$0x1]
    %v406 = vsel %vm353, %v373, 0.0
    %v407 = vsel %vm353, %v374, 0.0
    %v408 = vadd.f32 %v406, %v407
    %v409 = vsel %vm353, %v375, 0.0
    %v410 = vadd.f32 %v408, %v409
    %v411 = vsel %vm353, %v376, 0.0
    %v412 = vadd.f32 %v410, %v411
    %v413 = vsel %vm353, %v377, 0.0
    %v414 = vadd.f32 %v412, %v413
    %v415 = vsel %vm353, %v378, 0.0
    %v416 = vadd.f32 %v414, %v415
    %v417 = vsel %vm353, %v379, 0.0
    %v418 = vadd.f32 %v416, %v417
    %v419 = vsel %vm353, %v380, 0.0
    %v420 = vadd.f32 %v418, %v419
    %v421 = vsel %vm353, %v381, 0.0
    %v422 = vadd.f32 %v420, %v421
    %v423 = vsel %vm353, %v382, 0.0
    %v424 = vadd.f32 %v422, %v423
    %v425 = vsel %vm353, %v383, 0.0
    %v426 = vadd.f32 %v424, %v425
    %v427 = vsel %vm353, %v384, 0.0
    %v428 = vadd.f32 %v426, %v427
    %v429 = vsel %vm353, %v385, 0.0
    %v430 = vadd.f32 %v428, %v429
    %v431 = vsel %vm353, %v386, 0.0
    %v432 = vadd.f32 %v430, %v431
    %v433 = vsel %vm353, %v387, 0.0
    %v434 = vadd.f32 %v432, %v433
    %v435 = vsel %vm353, %v388, 0.0
    %v436 = vadd.f32 %v434, %v435
    %v437 = vrot.slane %v436, 4
    %v438 = vadd.f32 %v436, %v437
    %v439 = vrot.slane %v438, 2
    %v440 = vadd.f32 %v438, %v439
    %v441 = vrot.slane %v440, 1
    %v442 = vadd.f32 %v440, %v441
    %v443 = vadd.f32 %v405, %v442
    %vm444 = vcmask 122880
    %445 = vst.msk [vmem:[%s3] sm:$0x1] %vm444, %v443
    %v446 = vld [vmem:[%s4] sm:$0x1]
    %v447 = vmul.f32 %v373, %v373
    %v448 = vmul.f32 %v374, %v374
    %v449 = vmul.f32 %v375, %v375
    %v450 = vmul.f32 %v376, %v376
    %v451 = vmul.f32 %v377, %v377
    %v452 = vmul.f32 %v378, %v378
    %v453 = vmul.f32 %v379, %v379
    %v454 = vmul.f32 %v380, %v380
    %v455 = vmul.f32 %v381, %v381
    %v456 = vmul.f32 %v382, %v382
    %v457 = vmul.f32 %v383, %v383
    %v458 = vmul.f32 %v384, %v384
    %v459 = vmul.f32 %v385, %v385
    %v460 = vmul.f32 %v386, %v386
    %v461 = vmul.f32 %v387, %v387
    %v462 = vmul.f32 %v388, %v388
    %v463 = vsel %vm353, %v447, 0.0
    %v464 = vsel %vm353, %v448, 0.0
    %v465 = vadd.f32 %v463, %v464
    %v466 = vsel %vm353, %v449, 0.0
    %v467 = vadd.f32 %v465, %v466
    %v468 = vsel %vm353, %v450, 0.0
    %v469 = vadd.f32 %v467, %v468
    %v470 = vsel %vm353, %v451, 0.0
    %v471 = vadd.f32 %v469, %v470
    %v472 = vsel %vm353, %v452, 0.0
    %v473 = vadd.f32 %v471, %v472
    %v474 = vsel %vm353, %v453, 0.0
    %v475 = vadd.f32 %v473, %v474
    %v476 = vsel %vm353, %v454, 0.0
    %v477 = vadd.f32 %v475, %v476
    %v478 = vsel %vm353, %v455, 0.0
    %v479 = vadd.f32 %v477, %v478
    %v480 = vsel %vm353, %v456, 0.0
    %v481 = vadd.f32 %v479, %v480
    %v482 = vsel %vm353, %v457, 0.0
    %v483 = vadd.f32 %v481, %v482
    %v484 = vsel %vm353, %v458, 0.0
    %v485 = vadd.f32 %v483, %v484
    %v486 = vsel %vm353, %v459, 0.0
    %v487 = vadd.f32 %v485, %v486
    %v488 = vsel %vm353, %v460, 0.0
    %v489 = vadd.f32 %v487, %v488
    %v490 = vsel %vm353, %v461, 0.0
    %v491 = vadd.f32 %v489, %v490
    %v492 = vsel %vm353, %v462, 0.0
    %v493 = vadd.f32 %v491, %v492
    %v494 = vrot.slane %v493, 4
    %v495 = vadd.f32 %v493, %v494
    %v496 = vrot.slane %v495, 2
    %v497 = vadd.f32 %v495, %v496
    %v498 = vrot.slane %v497, 1
    %v499 = vadd.f32 %v497, %v498
    %v500 = vadd.f32 %v446, %v499
    %501 = vst.msk [vmem:[%s4] sm:$0x1] %vm444, %v500
  $region21: #{_lambda_.18} parent=0 // pred_fallthru
    _
  // Predicated region
  $region22: #{_lambda_.18} parent=0 // pred_check
    _
  $region23: #{_lambda_.18} parent=0 // pred_check_branch
    %503 = sbr.rel (0) target = $region25
  $region24: #{_lambda_.18} parent=0 // pred_region
    _
  $region25: #{_lambda_.18} parent=0 // pred_fallthru
    _
  // Predicated region
  $region26: #{_lambda_.18} parent=0 // pred_check
    _
  $region27: #{_lambda_.18} parent=0 // pred_check_branch
    %505 = sbr.rel (0) target = $region29
  $region28: #{_lambda_.18} parent=0 // pred_region
    _
  $region29: #{_lambda_.18} parent=0 // pred_fallthru
    _
  // Predicated region
  $region30: #{_lambda_.18} parent=0 // pred_check
    _
  $region31: #{_lambda_.18} parent=0 // pred_check_branch
    %507 = sbr.rel (0) target = $region33
  $region32: #{_lambda_.18} parent=0 // pred_region
    _
  $region33: #{_lambda_.18} parent=0 // pred_fallthru
    _
  // Predicated region
  $region34: #{_lambda_.18} parent=0 // pred_check
    _
  $region35: #{_lambda_.18} parent=0 // pred_check_branch
    %509 = sbr.rel (0) target = $region37
  $region36: #{_lambda_.18} parent=0 // pred_region
    _
  $region37: #{_lambda_.18} parent=0 // pred_fallthru
    _
  // Predicated region
  $region38: #{_lambda_.18} parent=0 // pred_check
    _
  $region39: #{_lambda_.18} parent=0 // pred_check_branch
    %511 = sbr.rel (0) target = $region41
  $region40: #{_lambda_.18} parent=0 // pred_region
    _
  $region41: #{_lambda_.18} parent=0 // pred_fallthru
    _
  // Predicated region
  $region42: #{_lambda_.18} parent=0 // pred_check
    _
  $region43: #{_lambda_.18} parent=0 // pred_check_branch
    %513 = sbr.rel (0) target = $region45
  $region44: #{_lambda_.18} parent=0 // pred_region
    _
  $region45: #{_lambda_.18} parent=0 // pred_fallthru
    _

// kernel: _lambda_.20
$region0: #{_lambda_.20}
  #allocation0 [shape = 'u32[]', space=smem, size = 0x4, offset = 0x4, fixed_abs, tag = 'smem constant byte address 0x4 - core index']
  #allocation1 [shape = 'u32[144,128]{1,0:T(1,128)}', space=vmem, size = 0x12000, scoped, tag = 'internal scratch']
  #allocation2 [shape = 'f32[32,32]{1,0:T(8,128)}', space=vmem, size = 0x4000, scoped, tag = 'scratch operand']
  %s0 = inlined_call_operand.vmem [shape: bf16[1,32,256], index: 0, kind: input, shape index: {}]
  %s1 = inlined_call_operand.vmem [shape: bf16[1,256,32], index: 1, kind: input, shape index: {}]
  %s2 = inlined_call_operand.vmem [shape: f32[1,32,32], index: 2, kind: output, shape index: {0}]
  %s3 = inlined_call_operand.vmem [shape: f32[1,32], index: 3, kind: output, shape index: {1}]
  %s4 = inlined_call_operand.vmem [shape: f32[1,32], index: 4, kind: output, shape index: {2}]
  %5 = xla_tuple %s2, %s3, %s4
  %s6 = sld [smem:[#allocation0]]
  $region46: #{_lambda_.20} parent=0
    _
  %s8 = ssub.s32 1, %s6
  %s9 = scalar_select 0, %s8, %s6
  // Predicated region
  $region2: #{_lambda_.20} parent=0 // pred_check
    _
  $region3: #{_lambda_.20} parent=0 // pred_check_branch
    %11 = sbr.rel (0) target = $region5
  $region4: #{_lambda_.20} parent=0 // pred_region
    _
  $region5: #{_lambda_.20} parent=0 // pred_fallthru
    _
  // Predicated region
  $region6: #{_lambda_.20} parent=0 // pred_check
    _
  $region7: #{_lambda_.20} parent=0 // pred_check_branch
    %13 = sbr.rel (0) target = $region9
  $region8: #{_lambda_.20} parent=0 // pred_region
    _
  $region9: #{_lambda_.20} parent=0 // pred_fallthru
    _
  %p16 = scmp.eq.s32.totalorder 0, 0
  // Predicated region
  $region10: #{_lambda_.20} parent=0 // pred_check
    %p17 = pneg %p16
  $region11: #{_lambda_.20} parent=0 // pred_check_branch
    %19 = sbr.rel (%p17) target = $region13
  $region12: #{_lambda_.20} parent=0 // pred_region
    %vm20 = vcmask 261120
    %21 = vst.msk [vmem:[#allocation2] sm:$0xff] %vm20, 0.0
    %22 = vst.msk [vmem:[#allocation2 + $0x8] sm:$0xff] %vm20, 0.0
    %23 = vst.msk [vmem:[#allocation2 + $0x10] sm:$0xff] %vm20, 0.0
    %24 = vst.msk [vmem:[#allocation2 + $0x18] sm:$0xff] %vm20, 0.0
  $region13: #{_lambda_.20} parent=0 // pred_fallthru
    _
  %p25 = scmp.eq.s32.totalorder 0, 0
  %p26 = scmp.eq.s32.totalorder 0, 0
  %p27 = pnand %p25, %p26
  %p28 = pneg %p27
  %p29 = pnand %p28, %p16
  %p30 = pneg %p29
  // Predicated region
  $region14: #{_lambda_.20} parent=0 // pred_check
    _
  $region15: #{_lambda_.20} parent=0 // pred_check_branch
    %32 = sbr.rel (%p29) target = $region17
  $region16: #{_lambda_.20} parent=0 // pred_region
    %vm33 = vcmask 253952
    %34 = vst.msk [vmem:[%s3] sm:$0x1] %vm33, 0.0
    %35 = vst.msk [vmem:[%s4] sm:$0x1] %vm33, 0.0
  $region17: #{_lambda_.20} parent=0 // pred_fallthru
    _
  %v36 = vld [vmem:[%s0] sm:$0xff]
  %v37 = vld [vmem:[%s0 + $0x8] sm:$0xff]
  %v38 = vld [vmem:[%s0 + $0x10] sm:$0xff]
  %v39 = vld [vmem:[%s0 + $0x18] sm:$0xff]
  %vm40 = vcmp.ge.bf16.partialorder %v36, 0
  %vm41 = vcmp.ge.bf16.partialorder %v37, 0
  %vm42 = vcmp.ge.bf16.partialorder %v38, 0
  %vm43 = vcmp.ge.bf16.partialorder %v39, 0
  %v44 = vmul.bf16 %v36, 1045249613
  %v45 = vmul.bf16 %v37, 1045249613
  %v46 = vmul.bf16 %v38, 1045249613
  %v47 = vmul.bf16 %v39, 1045249613
  %v48 = vsel %vm40, %v36, %v44
  %v49 = vsel %vm41, %v37, %v45
  %v50 = vsel %vm42, %v38, %v46
  %v51 = vsel %vm43, %v39, %v47
  %v52 = vld [vmem:[#allocation2] sm:$0xff]
  %v53 = vld [vmem:[#allocation2 + $0x8] sm:$0xff]
  %v54 = vld [vmem:[#allocation2 + $0x10] sm:$0xff]
  %v55 = vld [vmem:[#allocation2 + $0x18] sm:$0xff]
  %v56 = vld [vmem:[%s1] sm:$0xf]
  %v57 = vld [vmem:[%s1 + $0x4] sm:$0xf]
  %v58 = vld [vmem:[%s1 + $0x8] sm:$0xf]
  %v59 = vld [vmem:[%s1 + $0xc] sm:$0xf]
  %v60 = vld [vmem:[%s1 + $0x10] sm:$0xf]
  %v61 = vld [vmem:[%s1 + $0x14] sm:$0xf]
  %v62 = vld [vmem:[%s1 + $0x18] sm:$0xf]
  %v63 = vld [vmem:[%s1 + $0x1c] sm:$0xf]
  %v64 = vld [vmem:[%s1 + $0x20] sm:$0xf]
  %v65 = vld [vmem:[%s1 + $0x24] sm:$0xf]
  %v66 = vld [vmem:[%s1 + $0x28] sm:$0xf]
  %v67 = vld [vmem:[%s1 + $0x2c] sm:$0xf]
  %v68 = vld [vmem:[%s1 + $0x30] sm:$0xf]
  %v69 = vld [vmem:[%s1 + $0x34] sm:$0xf]
  %v70 = vld [vmem:[%s1 + $0x38] sm:$0xf]
  %v71 = vld [vmem:[%s1 + $0x3c] sm:$0xf]
  %v72 = vld [vmem:[%s1 + $0x40] sm:$0xf]
  %v73 = vld [vmem:[%s1 + $0x44] sm:$0xf]
  %v74 = vld [vmem:[%s1 + $0x48] sm:$0xf]
  %v75 = vld [vmem:[%s1 + $0x4c] sm:$0xf]
  %v76 = vld [vmem:[%s1 + $0x50] sm:$0xf]
  %v77 = vld [vmem:[%s1 + $0x54] sm:$0xf]
  %v78 = vld [vmem:[%s1 + $0x58] sm:$0xf]
  %v79 = vld [vmem:[%s1 + $0x5c] sm:$0xf]
  %v80 = vld [vmem:[%s1 + $0x60] sm:$0xf]
  %v81 = vld [vmem:[%s1 + $0x64] sm:$0xf]
  %v82 = vld [vmem:[%s1 + $0x68] sm:$0xf]
  %v83 = vld [vmem:[%s1 + $0x6c] sm:$0xf]
  %v84 = vld [vmem:[%s1 + $0x70] sm:$0xf]
  %v85 = vld [vmem:[%s1 + $0x74] sm:$0xf]
  %v86 = vld [vmem:[%s1 + $0x78] sm:$0xf]
  %v87 = vld [vmem:[%s1 + $0x7c] sm:$0xf]
  %v92 = vunpack.c.l.b16 %v48
  %v93 = vunpack.c.h.b16 %v48
  %v94 = vunpack.c.l.b16 %v49
  %v95 = vunpack.c.h.b16 %v49
  %v96 = vunpack.c.l.b16 %v50
  %v97 = vunpack.c.h.b16 %v50
  %v98 = vunpack.c.l.b16 %v51
  %v99 = vunpack.c.h.b16 %v51
  %v100 = vpack.c.b16 %v94, %v92
  %v101 = vpack.c.b16 %v95, %v93
  %v102 = vpack.c.b16 %v98, %v96
  %v103 = vpack.c.b16 %v99, %v97
  %v140 = vunpack.c.l.b16 %v56
  %v141 = vunpack.c.l.b16 %v57
  %v142 = vunpack.c.l.b16 %v58
  %v143 = vunpack.c.l.b16 %v59
  %v144 = vunpack.c.l.b16 %v60
  %v145 = vunpack.c.l.b16 %v61
  %v146 = vunpack.c.l.b16 %v62
  %v147 = vunpack.c.l.b16 %v63
  %v148 = vunpack.c.l.b16 %v64
  %v149 = vunpack.c.l.b16 %v65
  %v150 = vunpack.c.l.b16 %v66
  %v151 = vunpack.c.l.b16 %v67
  %v152 = vunpack.c.l.b16 %v68
  %v153 = vunpack.c.l.b16 %v69
  %v154 = vunpack.c.l.b16 %v70
  %v155 = vunpack.c.l.b16 %v71
  %v156 = vunpack.c.l.b16 %v72
  %v157 = vunpack.c.l.b16 %v73
  %v158 = vunpack.c.l.b16 %v74
  %v159 = vunpack.c.l.b16 %v75
  %v160 = vunpack.c.l.b16 %v76
  %v161 = vunpack.c.l.b16 %v77
  %v162 = vunpack.c.l.b16 %v78
  %v163 = vunpack.c.l.b16 %v79
  %v164 = vunpack.c.l.b16 %v80
  %v165 = vunpack.c.l.b16 %v81
  %v166 = vunpack.c.l.b16 %v82
  %v167 = vunpack.c.l.b16 %v83
  %v168 = vunpack.c.l.b16 %v84
  %v169 = vunpack.c.l.b16 %v85
  %v170 = vunpack.c.l.b16 %v86
  %v171 = vunpack.c.l.b16 %v87
  %v172 = vpack.c.b16 %v141, %v140
  %v173 = vpack.c.b16 %v143, %v142
  %v174 = vpack.c.b16 %v145, %v144
  %v175 = vpack.c.b16 %v147, %v146
  %v176 = vpack.c.b16 %v149, %v148
  %v177 = vpack.c.b16 %v151, %v150
  %v178 = vpack.c.b16 %v153, %v152
  %v179 = vpack.c.b16 %v155, %v154
  %v180 = vpack.c.b16 %v157, %v156
  %v181 = vpack.c.b16 %v159, %v158
  %v182 = vpack.c.b16 %v161, %v160
  %v183 = vpack.c.b16 %v163, %v162
  %v184 = vpack.c.b16 %v165, %v164
  %v185 = vpack.c.b16 %v167, %v166
  %v186 = vpack.c.b16 %v169, %v168
  %v187 = vpack.c.b16 %v171, %v170
  %204 = vmatprep.subr.bf16.mxu0 0
  %205 = vmatpush1.bf16.msra.mxu0 %v172
  %206 = vmatprep.subr.bf16.mxu0 0
  %207 = vmatpush1.bf16.msra.mxu0 %v173
  %208 = vmatprep.subr.bf16.mxu0 0
  %209 = vmatpush1.bf16.msra.mxu0 %v174
  %210 = vmatprep.subr.bf16.mxu0 0
  %211 = vmatpush1.bf16.msra.mxu0 %v175
  %212 = vmatprep.subr.bf16.mxu0 0
  %213 = vmatpush1.bf16.msra.mxu0 %v176
  %214 = vmatprep.subr.bf16.mxu0 0
  %215 = vmatpush1.bf16.msra.mxu0 %v177
  %216 = vmatprep.subr.bf16.mxu0 0
  %217 = vmatpush1.bf16.msra.mxu0 %v178
  %218 = vmatprep.subr.bf16.mxu0 0
  %219 = vmatpush1.bf16.msra.mxu0 %v179
  %220 = vmatprep.subr.bf16.mxu0 0
  %221 = vmatpush1.bf16.msra.mxu0 %v180
  %222 = vmatprep.subr.bf16.mxu0 0
  %223 = vmatpush1.bf16.msra.mxu0 %v181
  %224 = vmatprep.subr.bf16.mxu0 0
  %225 = vmatpush1.bf16.msra.mxu0 %v182
  %226 = vmatprep.subr.bf16.mxu0 0
  %227 = vmatpush1.bf16.msra.mxu0 %v183
  %228 = vmatprep.subr.bf16.mxu0 0
  %229 = vmatpush1.bf16.msra.mxu0 %v184
  %230 = vmatprep.subr.bf16.mxu0 0
  %231 = vmatpush1.bf16.msra.mxu0 %v185
  %232 = vmatprep.subr.bf16.mxu0 0
  %233 = vmatpush1.bf16.msra.mxu0 %v186
  %234 = vmatprep.subr.bf16.mxu0 0
  %235 = vmatpush1.bf16.msra.mxu0 %v187
  %236 = vmatprep.mubr.bf16.mxu0 %v101
  %237 = vmatmul.mubr.bf16.gmra.mrb[0].mxu0 %v100
  %v238 = vpop.f32.mrb[0].mxu0
  %v239 = vadd.f32 0.0, %v238
  %v240 = vpop.f32.mrb[0].mxu0
  %v241 = vpop.f32.mrb[0].mxu0
  %v242 = vadd.f32 0.0, %v241
  %v243 = vpop.f32.mrb[0].mxu0
  %244 = vmatprep.mubr.bf16.mxu0 %v103
  %245 = vmatmul.mubr.bf16.gmra.mrb[0].mxu0 %v102
  %v246 = vpop.f32.mrb[0].mxu0
  %v247 = vadd.f32 0.0, %v246
  %v248 = vpop.f32.mrb[0].mxu0
  %v249 = vpop.f32.mrb[0].mxu0
  %v250 = vadd.f32 0.0, %v249
  %v251 = vpop.f32.mrb[0].mxu0
  %252 = vdwg.mxu0
  %v253 = vadd.f32 %v52, %v239
  %v254 = vadd.f32 %v53, %v242
  %v255 = vadd.f32 %v54, %v247
  %v256 = vadd.f32 %v55, %v250
  %vm257 = vcmask 261120
  %258 = vst.msk [vmem:[#allocation2] sm:$0xff] %vm257, %v253
  %259 = vst.msk [vmem:[#allocation2 + $0x8] sm:$0xff] %vm257, %v254
  %260 = vst.msk [vmem:[#allocation2 + $0x10] sm:$0xff] %vm257, %v255
  %261 = vst.msk [vmem:[#allocation2 + $0x18] sm:$0xff] %vm257, %v256
  // Predicated region
  $region18: #{_lambda_.20} parent=0 // pred_check
    %p262 = pneg %p16
  $region19: #{_lambda_.20} parent=0 // pred_check_branch
    %264 = sbr.rel (%p262) target = $region21
  $region20: #{_lambda_.20} parent=0 // pred_region
    %v265 = vld [vmem:[#allocation2] sm:$0xff]
    %v266 = vld [vmem:[#allocation2 + $0x8] sm:$0xff]
    %v267 = vld [vmem:[#allocation2 + $0x10] sm:$0xff]
    %v268 = vld [vmem:[#allocation2 + $0x18] sm:$0xff]
    %269 = vst.msk [vmem:[%s2] sm:$0xff] %vm257, %v265
    %270 = vst.msk [vmem:[%s2 + $0x8] sm:$0xff] %vm257, %v266
    %271 = vst.msk [vmem:[%s2 + $0x10] sm:$0xff] %vm257, %v267
    %272 = vst.msk [vmem:[%s2 + $0x18] sm:$0xff] %vm257, %v268
    %v273 = vld [vmem:[%s3] sm:$0x1]
    %v274 = vsel %vm257, %v265, 0.0
    %v275 = vsel %vm257, %v266, 0.0
    %v276 = vadd.f32 %v274, %v275
    %v277 = vsel %vm257, %v267, 0.0
    %v278 = vadd.f32 %v276, %v277
    %v279 = vsel %vm257, %v268, 0.0
    %v280 = vadd.f32 %v278, %v279
    %v281 = vrot.slane %v280, 4
    %v282 = vadd.f32 %v280, %v281
    %v283 = vrot.slane %v282, 2
    %v284 = vadd.f32 %v282, %v283
    %v285 = vrot.slane %v284, 1
    %v286 = vadd.f32 %v284, %v285
    %v287 = vadd.f32 %v273, %v286
    %vm288 = vcmask 253952
    %289 = vst.msk [vmem:[%s3] sm:$0x1] %vm288, %v287
    %v290 = vld [vmem:[%s4] sm:$0x1]
    %v291 = vmul.f32 %v265, %v265
    %v292 = vmul.f32 %v266, %v266
    %v293 = vmul.f32 %v267, %v267
    %v294 = vmul.f32 %v268, %v268
    %v295 = vsel %vm257, %v291, 0.0
    %v296 = vsel %vm257, %v292, 0.0
    %v297 = vadd.f32 %v295, %v296
    %v298 = vsel %vm257, %v293, 0.0
    %v299 = vadd.f32 %v297, %v298
    %v300 = vsel %vm257, %v294, 0.0
    %v301 = vadd.f32 %v299, %v300
    %v302 = vrot.slane %v301, 4
    %v303 = vadd.f32 %v301, %v302
    %v304 = vrot.slane %v303, 2
    %v305 = vadd.f32 %v303, %v304
    %v306 = vrot.slane %v305, 1
    %v307 = vadd.f32 %v305, %v306
    %v308 = vadd.f32 %v290, %v307
    %309 = vst.msk [vmem:[%s4] sm:$0x1] %vm288, %v308
  $region21: #{_lambda_.20} parent=0 // pred_fallthru
    _
  // Predicated region
  $region22: #{_lambda_.20} parent=0 // pred_check
    _
  $region23: #{_lambda_.20} parent=0 // pred_check_branch
    %311 = sbr.rel (0) target = $region25
  $region24: #{_lambda_.20} parent=0 // pred_region
    _
  $region25: #{_lambda_.20} parent=0 // pred_fallthru
    _
  // Predicated region
  $region26: #{_lambda_.20} parent=0 // pred_check
    _
  $region27: #{_lambda_.20} parent=0 // pred_check_branch
    %313 = sbr.rel (0) target = $region29
  $region28: #{_lambda_.20} parent=0 // pred_region
    _
  $region29: #{_lambda_.20} parent=0 // pred_fallthru
    _
  // Predicated region
  $region30: #{_lambda_.20} parent=0 // pred_check
    _
  $region31: #{_lambda_.20} parent=0 // pred_check_branch
    %315 = sbr.rel (0) target = $region33
  $region32: #{_lambda_.20} parent=0 // pred_region
    _
  $region33: #{_lambda_.20} parent=0 // pred_fallthru
    _
  // Predicated region
  $region34: #{_lambda_.20} parent=0 // pred_check
    _
  $region35: #{_lambda_.20} parent=0 // pred_check_branch
    %317 = sbr.rel (0) target = $region37
  $region36: #{_lambda_.20} parent=0 // pred_region
    _
  $region37: #{_lambda_.20} parent=0 // pred_fallthru
    _
  // Predicated region
  $region38: #{_lambda_.20} parent=0 // pred_check
    _
  $region39: #{_lambda_.20} parent=0 // pred_check_branch
    %319 = sbr.rel (0) target = $region41
  $region40: #{_lambda_.20} parent=0 // pred_region
    _
  $region41: #{_lambda_.20} parent=0 // pred_fallthru
    _
  // Predicated region
  $region42: #{_lambda_.20} parent=0 // pred_check
    _
  $region43: #{_lambda_.20} parent=0 // pred_check_branch
    %321 = sbr.rel (0) target = $region45
  $region44: #{_lambda_.20} parent=0 // pred_region
    _
  $region45: #{_lambda_.20} parent=0 // pred_fallthru
    _

// kernel: _lambda_.21
$region0: #{_lambda_.21}
  #allocation0 [shape = 'u32[]', space=smem, size = 0x4, offset = 0x4, fixed_abs, tag = 'smem constant byte address 0x4 - core index']
  #allocation1 [shape = 'u32[144,128]{1,0:T(1,128)}', space=vmem, size = 0x12000, scoped, tag = 'internal scratch']
  %s0 = inlined_call_operand.vmem [shape: f32[32,32], index: 0, kind: input, shape index: {}]
  %s1 = inlined_call_operand.vmem [shape: f32[1,32], index: 1, kind: input, shape index: {}]
  %s2 = inlined_call_operand.vmem [shape: f32[1,32], index: 2, kind: input, shape index: {}]
  %s3 = inlined_call_operand.vmem [shape: f32[32,32], index: 3, kind: output, shape index: {}]
  %s4 = sld [smem:[#allocation0]]
  $region22: #{_lambda_.21} parent=0
    _
  %s6 = ssub.s32 1, %s4
  %s7 = scalar_select 0, %s6, %s4
  // Predicated region
  $region2: #{_lambda_.21} parent=0 // pred_check
    _
  $region3: #{_lambda_.21} parent=0 // pred_check_branch
    %9 = sbr.rel (0) target = $region5
  $region4: #{_lambda_.21} parent=0 // pred_region
    _
  $region5: #{_lambda_.21} parent=0 // pred_fallthru
    _
  // Predicated region
  $region6: #{_lambda_.21} parent=0 // pred_check
    _
  $region7: #{_lambda_.21} parent=0 // pred_check_branch
    %11 = sbr.rel (0) target = $region9
  $region8: #{_lambda_.21} parent=0 // pred_region
    _
  $region9: #{_lambda_.21} parent=0 // pred_fallthru
    _
  // Predicated region
  $region10: #{_lambda_.21} parent=0 // pred_check
    _
  $region11: #{_lambda_.21} parent=0 // pred_check_branch
    %13 = sbr.rel (0) target = $region13
  $region12: #{_lambda_.21} parent=0 // pred_region
    _
  $region13: #{_lambda_.21} parent=0 // pred_fallthru
    _
  %v14 = vld [vmem:[%s0] sm:$0xff]
  %v15 = vld [vmem:[%s0 + $0x8] sm:$0xff]
  %v16 = vld [vmem:[%s0 + $0x10] sm:$0xff]
  %v17 = vld [vmem:[%s0 + $0x18] sm:$0xff]
  %v18 = vld [vmem:[%s1] sm:$0x1]
  %v20 = vlaneseq
  %v21 = vshrl.u32 %v20, 7
  %v22 = vsub.s32 0, %v21
  %v23 = vrot.slane %v18, %v22
  %v25 = vmul.f32 %v14, %v23
  %v26 = vmul.f32 %v15, %v23
  %v27 = vmul.f32 %v16, %v23
  %v28 = vmul.f32 %v17, %v23
  %v29 = vld [vmem:[%s2] sm:$0x1]
  %v31 = vlaneseq
  %v32 = vshrl.u32 %v31, 7
  %v33 = vsub.s32 0, %v32
  %v34 = vrot.slane %v29, %v33
  %v36 = vadd.f32 %v25, %v34
  %v37 = vadd.f32 %v26, %v34
  %v38 = vadd.f32 %v27, %v34
  %v39 = vadd.f32 %v28, %v34
  %vm40 = vcmask 261120
  %41 = vst.msk [vmem:[%s3] sm:$0xff] %vm40, %v36
  %42 = vst.msk [vmem:[%s3 + $0x8] sm:$0xff] %vm40, %v37
  %43 = vst.msk [vmem:[%s3 + $0x10] sm:$0xff] %vm40, %v38
  %44 = vst.msk [vmem:[%s3 + $0x18] sm:$0xff] %vm40, %v39
  // Predicated region
  $region14: #{_lambda_.21} parent=0 // pred_check
    _
  $region15: #{_lambda_.21} parent=0 // pred_check_branch
    %46 = sbr.rel (0) target = $region17
  $region16: #{_lambda_.21} parent=0 // pred_region
    _
  $region17: #{_lambda_.21} parent=0 // pred_fallthru
    _
  // Predicated region
  $region18: #{_lambda_.21} parent=0 // pred_check
    _
  $region19: #{_lambda_.21} parent=0 // pred_check_branch
    %48 = sbr.rel (0) target = $region21
  $region20: #{_lambda_.21} parent=0 // pred_region
    _
  $region21: #{_lambda_.21} parent=0 // pred_fallthru
    _

// kernel: _lambda_.23
$region0: #{_lambda_.23}
  #allocation0 [shape = 'u32[]', space=smem, size = 0x4, offset = 0x4, fixed_abs, tag = 'smem constant byte address 0x4 - core index']
  #allocation1 [shape = 'u32[144,128]{1,0:T(1,128)}', space=vmem, size = 0x12000, scoped, tag = 'internal scratch']
  %s0 = inlined_call_operand.vmem [shape: f32[8,64], index: 0, kind: input, shape index: {}]
  %s1 = inlined_call_operand.vmem [shape: f32[1,64], index: 1, kind: input, shape index: {}]
  %s2 = inlined_call_operand.vmem [shape: f32[1,64], index: 2, kind: input, shape index: {}]
  %s3 = inlined_call_operand.vmem [shape: f32[8,64], index: 3, kind: output, shape index: {}]
  %s4 = sld [smem:[#allocation0]]
  $region22: #{_lambda_.23} parent=0
    _
  %s6 = ssub.s32 1, %s4
  %s7 = scalar_select 0, %s6, %s4
  // Predicated region
  $region2: #{_lambda_.23} parent=0 // pred_check
    _
  $region3: #{_lambda_.23} parent=0 // pred_check_branch
    %9 = sbr.rel (0) target = $region5
  $region4: #{_lambda_.23} parent=0 // pred_region
    _
  $region5: #{_lambda_.23} parent=0 // pred_fallthru
    _
  // Predicated region
  $region6: #{_lambda_.23} parent=0 // pred_check
    _
  $region7: #{_lambda_.23} parent=0 // pred_check_branch
    %11 = sbr.rel (0) target = $region9
  $region8: #{_lambda_.23} parent=0 // pred_region
    _
  $region9: #{_lambda_.23} parent=0 // pred_fallthru
    _
  // Predicated region
  $region10: #{_lambda_.23} parent=0 // pred_check
    _
  $region11: #{_lambda_.23} parent=0 // pred_check_branch
    %13 = sbr.rel (0) target = $region13
  $region12: #{_lambda_.23} parent=0 // pred_region
    _
  $region13: #{_lambda_.23} parent=0 // pred_fallthru
    _
  %v14 = vld [vmem:[%s0] sm:$0xff]
  %v15 = vld [vmem:[%s1] sm:$0x1]
  %v17 = vlaneseq
  %v18 = vshrl.u32 %v17, 7
  %v19 = vsub.s32 0, %v18
  %v20 = vrot.slane %v15, %v19
  %v22 = vmul.f32 %v14, %v20
  %v23 = vld [vmem:[%s2] sm:$0x1]
  %v25 = vlaneseq
  %v26 = vshrl.u32 %v25, 7
  %v27 = vsub.s32 0, %v26
  %v28 = vrot.slane %v23, %v27
  %v30 = vadd.f32 %v22, %v28
  %vm31 = vcmask 523264
  %32 = vst.msk [vmem:[%s3] sm:$0xff] %vm31, %v30
  // Predicated region
  $region14: #{_lambda_.23} parent=0 // pred_check
    _
  $region15: #{_lambda_.23} parent=0 // pred_check_branch
    %34 = sbr.rel (0) target = $region17
  $region16: #{_lambda_.23} parent=0 // pred_region
    _
  $region17: #{_lambda_.23} parent=0 // pred_fallthru
    _
  // Predicated region
  $region18: #{_lambda_.23} parent=0 // pred_check
    _
  $region19: #{_lambda_.23} parent=0 // pred_check_branch
    %36 = sbr.rel (0) target = $region21
  $region20: #{_lambda_.23} parent=0 // pred_region
    _
  $region21: #{_lambda_.23} parent=0 // pred_fallthru
    _

// kernel: _lambda_.22
$region0: #{_lambda_.22}
  #allocation0 [shape = 'u32[]', space=smem, size = 0x4, offset = 0x4, fixed_abs, tag = 'smem constant byte address 0x4 - core index']
  #allocation1 [shape = 'u32[144,128]{1,0:T(1,128)}', space=vmem, size = 0x12000, scoped, tag = 'internal scratch']
  #allocation2 [shape = 'f32[8,64]{1,0:T(8,128)}', space=vmem, size = 0x1000, scoped, tag = 'scratch operand']
  %s0 = inlined_call_operand.vmem [shape: bf16[1,8,512], index: 0, kind: input, shape index: {}]
  %s1 = inlined_call_operand.vmem [shape: bf16[1,512,64], index: 1, kind: input, shape index: {}]
  %s2 = inlined_call_operand.vmem [shape: f32[1,8,64], index: 2, kind: output, shape index: {0}]
  %s3 = inlined_call_operand.vmem [shape: f32[1,64], index: 3, kind: output, shape index: {1}]
  %s4 = inlined_call_operand.vmem [shape: f32[1,64], index: 4, kind: output, shape index: {2}]
  %5 = xla_tuple %s2, %s3, %s4
  %s6 = sld [smem:[#allocation0]]
  $region46: #{_lambda_.22} parent=0
    _
  %s8 = ssub.s32 1, %s6
  %s9 = scalar_select 0, %s8, %s6
  // Predicated region
  $region2: #{_lambda_.22} parent=0 // pred_check
    _
  $region3: #{_lambda_.22} parent=0 // pred_check_branch
    %11 = sbr.rel (0) target = $region5
  $region4: #{_lambda_.22} parent=0 // pred_region
    _
  $region5: #{_lambda_.22} parent=0 // pred_fallthru
    _
  // Predicated region
  $region6: #{_lambda_.22} parent=0 // pred_check
    _
  $region7: #{_lambda_.22} parent=0 // pred_check_branch
    %13 = sbr.rel (0) target = $region9
  $region8: #{_lambda_.22} parent=0 // pred_region
    _
  $region9: #{_lambda_.22} parent=0 // pred_fallthru
    _
  %p16 = scmp.eq.s32.totalorder 0, 0
  // Predicated region
  $region10: #{_lambda_.22} parent=0 // pred_check
    %p17 = pneg %p16
  $region11: #{_lambda_.22} parent=0 // pred_check_branch
    %19 = sbr.rel (%p17) target = $region13
  $region12: #{_lambda_.22} parent=0 // pred_region
    %vm20 = vcmask 523264
    %21 = vst.msk [vmem:[#allocation2] sm:$0xff] %vm20, 0.0
  $region13: #{_lambda_.22} parent=0 // pred_fallthru
    _
  %p22 = scmp.eq.s32.totalorder 0, 0
  %p23 = scmp.eq.s32.totalorder 0, 0
  %p24 = pnand %p22, %p23
  %p25 = pneg %p24
  %p26 = pnand %p25, %p16
  %p27 = pneg %p26
  // Predicated region
  $region14: #{_lambda_.22} parent=0 // pred_check
    _
  $region15: #{_lambda_.22} parent=0 // pred_check_branch
    %29 = sbr.rel (%p26) target = $region17
  $region16: #{_lambda_.22} parent=0 // pred_region
    %vm30 = vcmask 516096
    %31 = vst.msk [vmem:[%s3] sm:$0x1] %vm30, 0.0
    %32 = vst.msk [vmem:[%s4] sm:$0x1] %vm30, 0.0
  $region17: #{_lambda_.22} parent=0 // pred_fallthru
    _
  %v33 = vld [vmem:[%s0] sm:$0xff]
  %v34 = vld [vmem:[%s0 + $0x8] sm:$0xff]
  %vm35 = vcmp.ge.bf16.partialorder %v33, 0
  %vm36 = vcmp.ge.bf16.partialorder %v34, 0
  %v37 = vmul.bf16 %v33, 1045249613
  %v38 = vmul.bf16 %v34, 1045249613
  %v39 = vsel %vm35, %v33, %v37
  %v40 = vsel %vm36, %v34, %v38
  %v41 = vld [vmem:[#allocation2] sm:$0xff]
  %v42 = vld [vmem:[%s1] sm:$0xf]
  %v43 = vld [vmem:[%s1 + $0x4] sm:$0xf]
  %v44 = vld [vmem:[%s1 + $0x8] sm:$0xf]
  %v45 = vld [vmem:[%s1 + $0xc] sm:$0xf]
  %v46 = vld [vmem:[%s1 + $0x10] sm:$0xf]
  %v47 = vld [vmem:[%s1 + $0x14] sm:$0xf]
  %v48 = vld [vmem:[%s1 + $0x18] sm:$0xf]
  %v49 = vld [vmem:[%s1 + $0x1c] sm:$0xf]
  %v50 = vld [vmem:[%s1 + $0x20] sm:$0xf]
  %v51 = vld [vmem:[%s1 + $0x24] sm:$0xf]
  %v52 = vld [vmem:[%s1 + $0x28] sm:$0xf]
  %v53 = vld [vmem:[%s1 + $0x2c] sm:$0xf]
  %v54 = vld [vmem:[%s1 + $0x30] sm:$0xf]
  %v55 = vld [vmem:[%s1 + $0x34] sm:$0xf]
  %v56 = vld [vmem:[%s1 + $0x38] sm:$0xf]
  %v57 = vld [vmem:[%s1 + $0x3c] sm:$0xf]
  %v58 = vld [vmem:[%s1 + $0x40] sm:$0xf]
  %v59 = vld [vmem:[%s1 + $0x44] sm:$0xf]
  %v60 = vld [vmem:[%s1 + $0x48] sm:$0xf]
  %v61 = vld [vmem:[%s1 + $0x4c] sm:$0xf]
  %v62 = vld [vmem:[%s1 + $0x50] sm:$0xf]
  %v63 = vld [vmem:[%s1 + $0x54] sm:$0xf]
  %v64 = vld [vmem:[%s1 + $0x58] sm:$0xf]
  %v65 = vld [vmem:[%s1 + $0x5c] sm:$0xf]
  %v66 = vld [vmem:[%s1 + $0x60] sm:$0xf]
  %v67 = vld [vmem:[%s1 + $0x64] sm:$0xf]
  %v68 = vld [vmem:[%s1 + $0x68] sm:$0xf]
  %v69 = vld [vmem:[%s1 + $0x6c] sm:$0xf]
  %v70 = vld [vmem:[%s1 + $0x70] sm:$0xf]
  %v71 = vld [vmem:[%s1 + $0x74] sm:$0xf]
  %v72 = vld [vmem:[%s1 + $0x78] sm:$0xf]
  %v73 = vld [vmem:[%s1 + $0x7c] sm:$0xf]
  %v74 = vld [vmem:[%s1 + $0x80] sm:$0xf]
  %v75 = vld [vmem:[%s1 + $0x84] sm:$0xf]
  %v76 = vld [vmem:[%s1 + $0x88] sm:$0xf]
  %v77 = vld [vmem:[%s1 + $0x8c] sm:$0xf]
  %v78 = vld [vmem:[%s1 + $0x90] sm:$0xf]
  %v79 = vld [vmem:[%s1 + $0x94] sm:$0xf]
  %v80 = vld [vmem:[%s1 + $0x98] sm:$0xf]
  %v81 = vld [vmem:[%s1 + $0x9c] sm:$0xf]
  %v82 = vld [vmem:[%s1 + $0xa0] sm:$0xf]
  %v83 = vld [vmem:[%s1 + $0xa4] sm:$0xf]
  %v84 = vld [vmem:[%s1 + $0xa8] sm:$0xf]
  %v85 = vld [vmem:[%s1 + $0xac] sm:$0xf]
  %v86 = vld [vmem:[%s1 + $0xb0] sm:$0xf]
  %v87 = vld [vmem:[%s1 + $0xb4] sm:$0xf]
  %v88 = vld [vmem:[%s1 + $0xb8] sm:$0xf]
  %v89 = vld [vmem:[%s1 + $0xbc] sm:$0xf]
  %v90 = vld [vmem:[%s1 + $0xc0] sm:$0xf]
  %v91 = vld [vmem:[%s1 + $0xc4] sm:$0xf]
  %v92 = vld [vmem:[%s1 + $0xc8] sm:$0xf]
  %v93 = vld [vmem:[%s1 + $0xcc] sm:$0xf]
  %v94 = vld [vmem:[%s1 + $0xd0] sm:$0xf]
  %v95 = vld [vmem:[%s1 + $0xd4] sm:$0xf]
  %v96 = vld [vmem:[%s1 + $0xd8] sm:$0xf]
  %v97 = vld [vmem:[%s1 + $0xdc] sm:$0xf]
  %v98 = vld [vmem:[%s1 + $0xe0] sm:$0xf]
  %v99 = vld [vmem:[%s1 + $0xe4] sm:$0xf]
  %v100 = vld [vmem:[%s1 + $0xe8] sm:$0xf]
  %v101 = vld [vmem:[%s1 + $0xec] sm:$0xf]
  %v102 = vld [vmem:[%s1 + $0xf0] sm:$0xf]
  %v103 = vld [vmem:[%s1 + $0xf4] sm:$0xf]
  %v104 = vld [vmem:[%s1 + $0xf8] sm:$0xf]
  %v105 = vld [vmem:[%s1 + $0xfc] sm:$0xf]
  %v108 = vunpack.c.l.b16 %v39
  %v109 = vunpack.c.h.b16 %v39
  %v110 = vunpack.c.l.b16 %v40
  %v111 = vunpack.c.h.b16 %v40
  %v112 = vpack.c.b16 %v108, %v108
  %v113 = vpack.c.b16 %v109, %v109
  %v114 = vpack.c.b16 %v110, %v110
  %v115 = vpack.c.b16 %v111, %v111
  %v184 = vunpack.c.l.b16 %v42
  %v185 = vunpack.c.l.b16 %v43
  %v186 = vunpack.c.l.b16 %v44
  %v187 = vunpack.c.l.b16 %v45
  %v188 = vunpack.c.l.b16 %v46
  %v189 = vunpack.c.l.b16 %v47
  %v190 = vunpack.c.l.b16 %v48
  %v191 = vunpack.c.l.b16 %v49
  %v192 = vunpack.c.l.b16 %v50
  %v193 = vunpack.c.l.b16 %v51
  %v194 = vunpack.c.l.b16 %v52
  %v195 = vunpack.c.l.b16 %v53
  %v196 = vunpack.c.l.b16 %v54
  %v197 = vunpack.c.l.b16 %v55
  %v198 = vunpack.c.l.b16 %v56
  %v199 = vunpack.c.l.b16 %v57
  %v200 = vunpack.c.l.b16 %v58
  %v201 = vunpack.c.l.b16 %v59
  %v202 = vunpack.c.l.b16 %v60
  %v203 = vunpack.c.l.b16 %v61
  %v204 = vunpack.c.l.b16 %v62
  %v205 = vunpack.c.l.b16 %v63
  %v206 = vunpack.c.l.b16 %v64
  %v207 = vunpack.c.l.b16 %v65
  %v208 = vunpack.c.l.b16 %v66
  %v209 = vunpack.c.l.b16 %v67
  %v210 = vunpack.c.l.b16 %v68
  %v211 = vunpack.c.l.b16 %v69
  %v212 = vunpack.c.l.b16 %v70
  %v213 = vunpack.c.l.b16 %v71
  %v214 = vunpack.c.l.b16 %v72
  %v215 = vunpack.c.l.b16 %v73
  %v216 = vunpack.c.l.b16 %v74
  %v217 = vunpack.c.l.b16 %v75
  %v218 = vunpack.c.l.b16 %v76
  %v219 = vunpack.c.l.b16 %v77
  %v220 = vunpack.c.l.b16 %v78
  %v221 = vunpack.c.l.b16 %v79
  %v222 = vunpack.c.l.b16 %v80
  %v223 = vunpack.c.l.b16 %v81
  %v224 = vunpack.c.l.b16 %v82
  %v225 = vunpack.c.l.b16 %v83
  %v226 = vunpack.c.l.b16 %v84
  %v227 = vunpack.c.l.b16 %v85
  %v228 = vunpack.c.l.b16 %v86
  %v229 = vunpack.c.l.b16 %v87
  %v230 = vunpack.c.l.b16 %v88
  %v231 = vunpack.c.l.b16 %v89
  %v232 = vunpack.c.l.b16 %v90
  %v233 = vunpack.c.l.b16 %v91
  %v234 = vunpack.c.l.b16 %v92
  %v235 = vunpack.c.l.b16 %v93
  %v236 = vunpack.c.l.b16 %v94
  %v237 = vunpack.c.l.b16 %v95
  %v238 = vunpack.c.l.b16 %v96
  %v239 = vunpack.c.l.b16 %v97
  %v240 = vunpack.c.l.b16 %v98
  %v241 = vunpack.c.l.b16 %v99
  %v242 = vunpack.c.l.b16 %v100
  %v243 = vunpack.c.l.b16 %v101
  %v244 = vunpack.c.l.b16 %v102
  %v245 = vunpack.c.l.b16 %v103
  %v246 = vunpack.c.l.b16 %v104
  %v247 = vunpack.c.l.b16 %v105
  %v248 = vpack.c.b16 %v185, %v184
  %v249 = vpack.c.b16 %v187, %v186
  %v250 = vpack.c.b16 %v189, %v188
  %v251 = vpack.c.b16 %v191, %v190
  %v252 = vpack.c.b16 %v193, %v192
  %v253 = vpack.c.b16 %v195, %v194
  %v254 = vpack.c.b16 %v197, %v196
  %v255 = vpack.c.b16 %v199, %v198
  %v256 = vpack.c.b16 %v201, %v200
  %v257 = vpack.c.b16 %v203, %v202
  %v258 = vpack.c.b16 %v205, %v204
  %v259 = vpack.c.b16 %v207, %v206
  %v260 = vpack.c.b16 %v209, %v208
  %v261 = vpack.c.b16 %v211, %v210
  %v262 = vpack.c.b16 %v213, %v212
  %v263 = vpack.c.b16 %v215, %v214
  %v264 = vpack.c.b16 %v217, %v216
  %v265 = vpack.c.b16 %v219, %v218
  %v266 = vpack.c.b16 %v221, %v220
  %v267 = vpack.c.b16 %v223, %v222
  %v268 = vpack.c.b16 %v225, %v224
  %v269 = vpack.c.b16 %v227, %v226
  %v270 = vpack.c.b16 %v229, %v228
  %v271 = vpack.c.b16 %v231, %v230
  %v272 = vpack.c.b16 %v233, %v232
  %v273 = vpack.c.b16 %v235, %v234
  %v274 = vpack.c.b16 %v237, %v236
  %v275 = vpack.c.b16 %v239, %v238
  %v276 = vpack.c.b16 %v241, %v240
  %v277 = vpack.c.b16 %v243, %v242
  %v278 = vpack.c.b16 %v245, %v244
  %v279 = vpack.c.b16 %v247, %v246
  %312 = vmatprep.subr.bf16.mxu0 0
  %313 = vmatpush1.bf16.msra.mxu0 %v248
  %314 = vmatprep.subr.bf16.mxu0 0
  %315 = vmatpush1.bf16.msra.mxu0 %v249
  %316 = vmatprep.subr.bf16.mxu0 0
  %317 = vmatpush1.bf16.msra.mxu0 %v250
  %318 = vmatprep.subr.bf16.mxu0 0
  %319 = vmatpush1.bf16.msra.mxu0 %v251
  %320 = vmatprep.subr.bf16.mxu0 0
  %321 = vmatpush1.bf16.msra.mxu0 %v252
  %322 = vmatprep.subr.bf16.mxu0 0
  %323 = vmatpush1.bf16.msra.mxu0 %v253
  %324 = vmatprep.subr.bf16.mxu0 0
  %325 = vmatpush1.bf16.msra.mxu0 %v254
  %326 = vmatprep.subr.bf16.mxu0 0
  %327 = vmatpush1.bf16.msra.mxu0 %v255
  %328 = vmatprep.subr.bf16.mxu0 0
  %329 = vmatpush1.bf16.msra.mxu0 %v256
  %330 = vmatprep.subr.bf16.mxu0 0
  %331 = vmatpush1.bf16.msra.mxu0 %v257
  %332 = vmatprep.subr.bf16.mxu0 0
  %333 = vmatpush1.bf16.msra.mxu0 %v258
  %334 = vmatprep.subr.bf16.mxu0 0
  %335 = vmatpush1.bf16.msra.mxu0 %v259
  %336 = vmatprep.subr.bf16.mxu0 0
  %337 = vmatpush1.bf16.msra.mxu0 %v260
  %338 = vmatprep.subr.bf16.mxu0 0
  %339 = vmatpush1.bf16.msra.mxu0 %v261
  %340 = vmatprep.subr.bf16.mxu0 0
  %341 = vmatpush1.bf16.msra.mxu0 %v262
  %342 = vmatprep.subr.bf16.mxu0 0
  %343 = vmatpush1.bf16.msra.mxu0 %v263
  %344 = vmatprep.mubr.bf16.mxu0 %v113
  %345 = vmatmul.mubr.bf16.gmra.mrb[0].mxu0 %v112
  %v346 = vpop.f32.mrb[0].mxu0
  %v347 = vadd.f32 0.0, %v346
  %v348 = vpop.f32.mrb[0].mxu0
  %v349 = vpop.f32.mrb[0].mxu0
  %v350 = vpop.f32.mrb[0].mxu0
  %351 = vdwg.mxu0
  %352 = vmatprep.subr.bf16.mxu0 0
  %353 = vmatpush1.bf16.msra.mxu0 %v264
  %354 = vmatprep.subr.bf16.mxu0 0
  %355 = vmatpush1.bf16.msra.mxu0 %v265
  %356 = vmatprep.subr.bf16.mxu0 0
  %357 = vmatpush1.bf16.msra.mxu0 %v266
  %358 = vmatprep.subr.bf16.mxu0 0
  %359 = vmatpush1.bf16.msra.mxu0 %v267
  %360 = vmatprep.subr.bf16.mxu0 0
  %361 = vmatpush1.bf16.msra.mxu0 %v268
  %362 = vmatprep.subr.bf16.mxu0 0
  %363 = vmatpush1.bf16.msra.mxu0 %v269
  %364 = vmatprep.subr.bf16.mxu0 0
  %365 = vmatpush1.bf16.msra.mxu0 %v270
  %366 = vmatprep.subr.bf16.mxu0 0
  %367 = vmatpush1.bf16.msra.mxu0 %v271
  %368 = vmatprep.subr.bf16.mxu0 0
  %369 = vmatpush1.bf16.msra.mxu0 %v272
  %370 = vmatprep.subr.bf16.mxu0 0
  %371 = vmatpush1.bf16.msra.mxu0 %v273
  %372 = vmatprep.subr.bf16.mxu0 0
  %373 = vmatpush1.bf16.msra.mxu0 %v274
  %374 = vmatprep.subr.bf16.mxu0 0
  %375 = vmatpush1.bf16.msra.mxu0 %v275
  %376 = vmatprep.subr.bf16.mxu0 0
  %377 = vmatpush1.bf16.msra.mxu0 %v276
  %378 = vmatprep.subr.bf16.mxu0 0
  %379 = vmatpush1.bf16.msra.mxu0 %v277
  %380 = vmatprep.subr.bf16.mxu0 0
  %381 = vmatpush1.bf16.msra.mxu0 %v278
  %382 = vmatprep.subr.bf16.mxu0 0
  %383 = vmatpush1.bf16.msra.mxu0 %v279
  %384 = vmatprep.mubr.bf16.mxu0 %v115
  %385 = vmatmul.mubr.bf16.gmra.mrb[0].mxu0 %v114
  %v386 = vpop.f32.mrb[0].mxu0
  %v387 = vadd.f32 %v347, %v386
  %v388 = vpop.f32.mrb[0].mxu0
  %v389 = vpop.f32.mrb[0].mxu0
  %v390 = vpop.f32.mrb[0].mxu0
  %391 = vdwg.mxu0
  %v392 = vadd.f32 %v41, %v387
  %vm393 = vcmask 523264
  %394 = vst.msk [vmem:[#allocation2] sm:$0xff] %vm393, %v392
  // Predicated region
  $region18: #{_lambda_.22} parent=0 // pred_check
    %p395 = pneg %p16
  $region19: #{_lambda_.22} parent=0 // pred_check_branch
    %397 = sbr.rel (%p395) target = $region21
  $region20: #{_lambda_.22} parent=0 // pred_region
    %v398 = vld [vmem:[#allocation2] sm:$0xff]
    %399 = vst.msk [vmem:[%s2] sm:$0xff] %vm393, %v398
    %v400 = vld [vmem:[%s3] sm:$0x1]
    %v401 = vsel %vm393, %v398, 0.0
    %v402 = vrot.slane %v401, 4
    %v403 = vadd.f32 %v401, %v402
    %v404 = vrot.slane %v403, 2
    %v405 = vadd.f32 %v403, %v404
    %v406 = vrot.slane %v405, 1
    %v407 = vadd.f32 %v405, %v406
    %v408 = vadd.f32 %v400, %v407
    %vm409 = vcmask 516096
    %410 = vst.msk [vmem:[%s3] sm:$0x1] %vm409, %v408
    %v411 = vld [vmem:[%s4] sm:$0x1]
    %v412 = vmul.f32 %v398, %v398
    %v413 = vsel %vm393, %v412, 0.0
    %v414 = vrot.slane %v413, 4
    %v415 = vadd.f32 %v413, %v414
    %v416 = vrot.slane %v415, 2
    %v417 = vadd.f32 %v415, %v416
    %v418 = vrot.slane %v417, 1
    %v419 = vadd.f32 %v417, %v418
    %v420 = vadd.f32 %v411, %v419
    %421 = vst.msk [vmem:[%s4] sm:$0x1] %vm409, %v420
  $region21: #{_lambda_.22} parent=0 // pred_fallthru
    _
  // Predicated region
  $region22: #{_lambda_.22} parent=0 // pred_check
    _
  $region23: #{_lambda_.22} parent=0 // pred_check_branch
    %423 = sbr.rel (0) target = $region25
  $region24: #{_lambda_.22} parent=0 // pred_region
    _
  $region25: #{_lambda_.22} parent=0 // pred_fallthru
    _
  // Predicated region
  $region26: #{_lambda_.22} parent=0 // pred_check
    _
  $region27: #{_lambda_.22} parent=0 // pred_check_branch
    %425 = sbr.rel (0) target = $region29
  $region28: #{_lambda_.22} parent=0 // pred_region
    _
  $region29: #{_lambda_.22} parent=0 // pred_fallthru
    _
  // Predicated region
  $region30: #{_lambda_.22} parent=0 // pred_check
    _
  $region31: #{_lambda_.22} parent=0 // pred_check_branch
    %427 = sbr.rel (0) target = $region33
  $region32: #{_lambda_.22} parent=0 // pred_region
    _
  $region33: #{_lambda_.22} parent=0 // pred_fallthru
    _
  // Predicated region
  $region34: #{_lambda_.22} parent=0 // pred_check
    _
  $region35: #{_lambda_.22} parent=0 // pred_check_branch
    %429 = sbr.rel (0) target = $region37
  $region36: #{_lambda_.22} parent=0 // pred_region
    _
  $region37: #{_lambda_.22} parent=0 // pred_fallthru
    _
  // Predicated region
  $region38: #{_lambda_.22} parent=0 // pred_check
    _
  $region39: #{_lambda_.22} parent=0 // pred_check_branch
    %431 = sbr.rel (0) target = $region41
  $region40: #{_lambda_.22} parent=0 // pred_region
    _
  $region41: #{_lambda_.22} parent=0 // pred_fallthru
    _
  // Predicated region
  $region42: #{_lambda_.22} parent=0 // pred_check
    _
  $region43: #{_lambda_.22} parent=0 // pred_check_branch
    %433 = sbr.rel (0) target = $region45
  $region44: #{_lambda_.22} parent=0 // pred_region
    _
  $region45: #{_lambda_.22} parent=0 // pred_fallthru
    _

// kernel: _lambda_.24
$region0: #{_lambda_.24}
  #allocation0 [shape = 'u32[]', space=smem, size = 0x4, offset = 0x4, fixed_abs, tag = 'smem constant byte address 0x4 - core index']
  #allocation1 [shape = 'u32[144,128]{1,0:T(1,128)}', space=vmem, size = 0x12000, scoped, tag = 'internal scratch']
  #allocation2 [shape = 'f32[2,64]{1,0:T(2,128)}', space=vmem, size = 0x400, scoped, tag = 'scratch operand']
  %s0 = inlined_call_operand.vmem [shape: bf16[1,2,1024], index: 0, kind: input, shape index: {}]
  %s1 = inlined_call_operand.vmem [shape: bf16[1,1024,64], index: 1, kind: input, shape index: {}]
  %s2 = inlined_call_operand.vmem [shape: f32[1,2,64], index: 2, kind: output, shape index: {}]
  %s3 = sld [smem:[#allocation0]]
  $region49: #{_lambda_.24} parent=0
    _
  %s5 = ssub.s32 1, %s3
  %s6 = scalar_select 0, %s5, %s3
  loop: start=0, step=1, limit=4
  $region2: #{_lambda_.24} parent=0 // loop_pre_header
    _
  $region3: #{_lambda_.24} parent=0 // loop_header
    %s8 = sphi 0, %s12
    %p9 = scmp.ge.s32.totalorder %s8, 4
    %s15 = sphi 0, %s34
    %s16 = sphi 0, %s30
    %s17 = sphi 0, %s26
    %s18 = sphi 0, %s15
    %s19 = sphi 0, %s16
    %s20 = sphi 0, %s17
    %s21 = sphi 0, %s18
    %s22 = sphi 0, %s19
    %s23 = sphi 0, %s20
    %s41 = sphi 0, %s43
    %s44 = sphi 0, %s41
    %s45 = sphi 0, %s44
    %s61 = sphi 0, %s45
    %s69 = sphi 0, %s71
    %s72 = sphi 0, %s69
    %s73 = sphi 0, %s72
    %s89 = sphi 0, %s73
    %s97 = sphi 0, %s99
    %s100 = sphi 0, %s97
    %s101 = sphi 0, %s100
    %s117 = sphi 0, %s101
  $region4: #{_lambda_.24} parent=0 // loop_header_branch
    %11 = sbr.rel (%p9) target = $region8
  $region5: #{_lambda_.24} parent=0 // loop_body
    %s13 = ssub.s32 %s8, 1
    %s14 = ssub.s32 %s8, 2
    %s24 = sadd.s32 1, %s17
    %p25 = scmp.ge.s32.totalorder %s24, 2
    %s26 = scalar_select %p25, 0, %s24
    %s27 = sadd.s32 1, %s16
    %s28 = scalar_select %p25, %s27, %s16
    %p29 = scmp.ge.s32.totalorder %s28, 1
    %s30 = scalar_select %p29, 0, %s28
    %s31 = sadd.s32 1, %s15
    %s32 = scalar_select %p29, %s31, %s15
    %p33 = scmp.ge.s32.totalorder %s32, 1
    %s34 = scalar_select %p33, 0, %s32
    %s35 = ssub.s32 %s15, %s34
    %s36 = ssub.s32 %s16, %s30
    %s37 = sor.u32 %s35, %s36
    %s38 = ssub.s32 %s17, %s26
    %s39 = sor.u32 %s37, %s38
    %p40 = scmp.eq.s32.totalorder %s39, 0
    %s42 = sadd.s32 %s41, 1
    %s43 = scalar_select %p40, %s41, %s42
    %p46 = pneg %p40
    %p47 = scmp.eq.s32.totalorder %s8, 1
    %p48 = por %p46, %p47
    %p49 = scmp.ne.s32.totalorder %s41, %s44
    %p50 = scmp.eq.s32.totalorder %s8, 0
    %p51 = por %p49, %p50
    %p52 = scmp.ne.s32.totalorder %s41, %s44
    %p53 = scmp.eq.s32.totalorder %s13, 1
    %p54 = por %p52, %p53
    %p55 = scmp.ne.s32.totalorder %s44, %s45
    %p56 = scmp.eq.s32.totalorder %s13, 0
    %p57 = por %p55, %p56
    %p58 = scmp.ne.s32.totalorder %s44, %s45
    %p59 = scmp.eq.s32.totalorder %s14, 1
    %p60 = por %p58, %p59
    %p62 = scmp.ne.s32.totalorder %s45, %s61
    %p63 = scmp.eq.s32.totalorder %s14, 0
    %p64 = por %p62, %p63
    %s65 = ssub.s32 %s15, %s34
    %s66 = ssub.s32 %s17, %s26
    %s67 = sor.u32 %s65, %s66
    %p68 = scmp.eq.s32.totalorder %s67, 0
    %s70 = sadd.s32 %s69, 1
    %s71 = scalar_select %p68, %s69, %s70
    %p74 = pneg %p68
    %p75 = scmp.eq.s32.totalorder %s8, 1
    %p76 = por %p74, %p75
    %p77 = scmp.ne.s32.totalorder %s69, %s72
    %p78 = scmp.eq.s32.totalorder %s8, 0
    %p79 = por %p77, %p78
    %p80 = scmp.ne.s32.totalorder %s69, %s72
    %p81 = scmp.eq.s32.totalorder %s13, 1
    %p82 = por %p80, %p81
    %p83 = scmp.ne.s32.totalorder %s72, %s73
    %p84 = scmp.eq.s32.totalorder %s13, 0
    %p85 = por %p83, %p84
    %p86 = scmp.ne.s32.totalorder %s72, %s73
    %p87 = scmp.eq.s32.totalorder %s14, 1
    %p88 = por %p86, %p87
    %p90 = scmp.ne.s32.totalorder %s73, %s89
    %p91 = scmp.eq.s32.totalorder %s14, 0
    %p92 = por %p90, %p91
    %s93 = ssub.s32 %s15, %s34
    %s94 = ssub.s32 %s16, %s30
    %s95 = sor.u32 %s93, %s94
    %p96 = scmp.eq.s32.totalorder %s95, 0
    %s98 = sadd.s32 %s97, 1
    %s99 = scalar_select %p96, %s97, %s98
    %p102 = pneg %p96
    %p103 = scmp.eq.s32.totalorder %s8, 1
    %p104 = por %p102, %p103
    %p105 = scmp.ne.s32.totalorder %s97, %s100
    %p106 = scmp.eq.s32.totalorder %s8, 0
    %p107 = por %p105, %p106
    %p108 = scmp.ne.s32.totalorder %s97, %s100
    %p109 = scmp.eq.s32.totalorder %s13, 1
    %p110 = por %p108, %p109
    %p111 = scmp.ne.s32.totalorder %s100, %s101
    %p112 = scmp.eq.s32.totalorder %s13, 0
    %p113 = por %p111, %p112
    %p114 = scmp.ne.s32.totalorder %s100, %s101
    %p115 = scmp.eq.s32.totalorder %s14, 1
    %p116 = por %p114, %p115
    %p118 = scmp.ne.s32.totalorder %s101, %s117
    %p119 = scmp.eq.s32.totalorder %s14, 0
    %p120 = por %p118, %p119
    %p121 = scmp.le.s32.totalorder 1, %s8
    %p122 = scmp.lt.s32.totalorder %s8, 3
    %p123 = pnand %p121, %p122
    %p124 = pneg %p123
    // Predicated region
    $region9: #{_lambda_.24} parent=5 // pred_check
      _
    $region10: #{_lambda_.24} parent=5 // pred_check_branch
      %126 = sbr.rel (%p123) target = $region12
    $region11: #{_lambda_.24} parent=5 // pred_region
      %s127 = ssub.s32 %s8, 1
    $region12: #{_lambda_.24} parent=5 // pred_fallthru
      _
    %p128 = scmp.lt.s32.totalorder %s8, 2
    // Predicated region
    $region13: #{_lambda_.24} parent=5 // pred_check
      %p129 = pneg %p128
    $region14: #{_lambda_.24} parent=5 // pred_check_branch
      %131 = sbr.rel (%p129) target = $region16
    $region15: #{_lambda_.24} parent=5 // pred_region
      // Predicated region
      $region17: #{_lambda_.24} parent=15 // pred_check
        %p132 = pneg %p51
      $region18: #{_lambda_.24} parent=15 // pred_check_branch
        %134 = sbr.rel (%p132) target = $region20
      $region19: #{_lambda_.24} parent=15 // pred_region
        %s135 = smul.u32 4, %s17
        %p136 = scmp.lt.s32.totalorder %s15, 0
        %s137 = scalar_select %p136, %s15, 0
        %p138 = scmp.lt.s32.totalorder %s16, 0
        %s139 = scalar_select %p138, %s16, 0
        %p140 = scmp.lt.s32.totalorder %s135, 7
        %s141 = scalar_select %p140, %s135, 7
        %s142 = smul.addr %s139, 8
        %s143 = sadd.s32 %s141, %s142
        %s144 = smul.addr %s137, 8
        %s145 = sadd.s32 %s143, %s144
        %s146 = scalar_lea.vmem %s0, %s145
        %s147 = smul.u32 4, %s17
      $region20: #{_lambda_.24} parent=15 // pred_fallthru
        _
      // Predicated region
      $region21: #{_lambda_.24} parent=15 // pred_check
        %p148 = pneg %p79
      $region22: #{_lambda_.24} parent=15 // pred_check_branch
        %150 = sbr.rel (%p148) target = $region24
      $region23: #{_lambda_.24} parent=15 // pred_region
        %s151 = smul.u32 64, %s17
        %p152 = scmp.lt.s32.totalorder %s15, 0
        %s153 = scalar_select %p152, %s15, 0
        %p154 = scmp.lt.s32.totalorder %s151, 127
        %s155 = scalar_select %p154, %s151, 127
        %s156 = smul.addr %s153, 128
        %s157 = sadd.s32 %s155, %s156
        %s158 = smul.addr %s157, 4
        %s159 = scalar_lea.vmem %s1, %s158
        %s160 = smul.u32 64, %s17
      $region24: #{_lambda_.24} parent=15 // pred_fallthru
        _
    $region16: #{_lambda_.24} parent=5 // pred_fallthru
      _
    %p161 = scmp.le.s32.totalorder 1, %s8
    %p162 = scmp.lt.s32.totalorder %s8, 3
    %p163 = pnand %p161, %p162
    %p164 = pneg %p163
    // Predicated region
    $region25: #{_lambda_.24} parent=5 // pred_check
      _
    $region26: #{_lambda_.24} parent=5 // pred_check_branch
      %166 = sbr.rel (%p163) target = $region28
    $region27: #{_lambda_.24} parent=5 // pred_region
      %s167 = ssub.s32 %s8, 1
      %s168 = smul.u32 4, %s20
      %p169 = scmp.lt.s32.totalorder %s18, 0
      %s170 = scalar_select %p169, %s18, 0
      %p171 = scmp.lt.s32.totalorder %s19, 0
      %s172 = scalar_select %p171, %s19, 0
      %p173 = scmp.lt.s32.totalorder %s168, 7
      %s174 = scalar_select %p173, %s168, 7
      %s175 = smul.addr %s172, 8
      %s176 = sadd.s32 %s174, %s175
      %s177 = smul.addr %s170, 8
      %s178 = sadd.s32 %s176, %s177
      %s179 = scalar_lea.vmem %s0, %s178
      %p180 = pneg %p57
      %p181 = pneg %p54
      %s182 = smul.u32 64, %s20
      %p183 = scmp.lt.s32.totalorder %s18, 0
      %s184 = scalar_select %p183, %s18, 0
      %p185 = scmp.lt.s32.totalorder %s182, 127
      %s186 = scalar_select %p185, %s182, 127
      %s187 = smul.addr %s184, 128
      %s188 = sadd.s32 %s186, %s187
      %s189 = smul.addr %s188, 4
      %s190 = scalar_lea.vmem %s1, %s189
      %p191 = pneg %p85
      %p192 = pneg %p82
      %p193 = pneg %p113
      %p194 = pneg %p110
      %p195 = scmp.lt.s32.totalorder %s18, 0
      %s196 = scalar_select %p195, %s18, 0
      %p197 = scmp.lt.s32.totalorder %s19, 0
      %s198 = scalar_select %p197, %s19, 0
      %s199 = sadd.s32 %s198, %s196
      %s200 = smul.addr %s199, 2
      %s201 = scalar_lea.vmem %s2, %s200
      %s202 = smul.u32 4, %s20
      %p203 = scmp.lt.s32.totalorder %s18, 0
      %s204 = scalar_select %p203, %s18, 0
      %p205 = scmp.lt.s32.totalorder %s19, 0
      %s206 = scalar_select %p205, %s19, 0
      %p207 = scmp.lt.s32.totalorder %s202, 7
      %s208 = scalar_select %p207, %s202, 7
      %s209 = smul.addr %s206, 8
      %s210 = sadd.s32 %s208, %s209
      %s211 = smul.addr %s204, 8
      %s212 = sadd.s32 %s210, %s211
      %s213 = scalar_lea.vmem %s0, %s212
      %s214 = smul.u32 4, %s20
      %s215 = smul.u32 64, %s20
      %p216 = scmp.lt.s32.totalorder %s18, 0
      %s217 = scalar_select %p216, %s18, 0
      %p218 = scmp.lt.s32.totalorder %s215, 127
      %s219 = scalar_select %p218, %s215, 127
      %s220 = smul.addr %s217, 128
      %s221 = sadd.s32 %s219, %s220
      %s222 = smul.addr %s221, 4
      %s223 = scalar_lea.vmem %s1, %s222
      %s224 = smul.u32 64, %s20
      %p225 = scmp.lt.s32.totalorder %s18, 0
      %s226 = scalar_select %p225, %s18, 0
      %p227 = scmp.lt.s32.totalorder %s19, 0
      %s228 = scalar_select %p227, %s19, 0
      %s229 = sadd.s32 %s228, %s226
      %s230 = smul.addr %s229, 2
      %s231 = scalar_lea.vmem %s2, %s230
      %p234 = scmp.eq.s32.totalorder %s20, 0
      // Predicated region
      $region29: #{_lambda_.24} parent=27 // pred_check
        %p235 = pneg %p234
      $region30: #{_lambda_.24} parent=27 // pred_check_branch
        %237 = sbr.rel (%p235) target = $region32
      $region31: #{_lambda_.24} parent=27 // pred_region
        %vm238 = vcmask 517120
        %239 = vst.msk [vmem:[#allocation2] sm:$0x3] %vm238, 0.0
      $region32: #{_lambda_.24} parent=27 // pred_fallthru
        _
      %v240 = vld [vmem:[%s213] sm:$0xf]
      %vm241 = vcmp.ge.bf16.partialorder %v240, 0
      %v242 = vmul.bf16 %v240, 1045249613
      %v243 = vsel %vm241, %v240, %v242
      %v244 = vld [vmem:[#allocation2] sm:$0x3]
      %v245 = vld [vmem:[%s223] sm:$0xf]
      %v246 = vld [vmem:[%s223 + $0x4] sm:$0xf]
      %v247 = vld [vmem:[%s223 + $0x8] sm:$0xf]
      %v248 = vld [vmem:[%s223 + $0xc] sm:$0xf]
      %v249 = vld [vmem:[%s223 + $0x10] sm:$0xf]
      %v250 = vld [vmem:[%s223 + $0x14] sm:$0xf]
      %v251 = vld [vmem:[%s223 + $0x18] sm:$0xf]
      %v252 = vld [vmem:[%s223 + $0x1c] sm:$0xf]
      %v253 = vld [vmem:[%s223 + $0x20] sm:$0xf]
      %v254 = vld [vmem:[%s223 + $0x24] sm:$0xf]
      %v255 = vld [vmem:[%s223 + $0x28] sm:$0xf]
      %v256 = vld [vmem:[%s223 + $0x2c] sm:$0xf]
      %v257 = vld [vmem:[%s223 + $0x30] sm:$0xf]
      %v258 = vld [vmem:[%s223 + $0x34] sm:$0xf]
      %v259 = vld [vmem:[%s223 + $0x38] sm:$0xf]
      %v260 = vld [vmem:[%s223 + $0x3c] sm:$0xf]
      %v261 = vld [vmem:[%s223 + $0x40] sm:$0xf]
      %v262 = vld [vmem:[%s223 + $0x44] sm:$0xf]
      %v263 = vld [vmem:[%s223 + $0x48] sm:$0xf]
      %v264 = vld [vmem:[%s223 + $0x4c] sm:$0xf]
      %v265 = vld [vmem:[%s223 + $0x50] sm:$0xf]
      %v266 = vld [vmem:[%s223 + $0x54] sm:$0xf]
      %v267 = vld [vmem:[%s223 + $0x58] sm:$0xf]
      %v268 = vld [vmem:[%s223 + $0x5c] sm:$0xf]
      %v269 = vld [vmem:[%s223 + $0x60] sm:$0xf]
      %v270 = vld [vmem:[%s223 + $0x64] sm:$0xf]
      %v271 = vld [vmem:[%s223 + $0x68] sm:$0xf]
      %v272 = vld [vmem:[%s223 + $0x6c] sm:$0xf]
      %v273 = vld [vmem:[%s223 + $0x70] sm:$0xf]
      %v274 = vld [vmem:[%s223 + $0x74] sm:$0xf]
      %v275 = vld [vmem:[%s223 + $0x78] sm:$0xf]
      %v276 = vld [vmem:[%s223 + $0x7c] sm:$0xf]
      %v277 = vld [vmem:[%s223 + $0x80] sm:$0xf]
      %v278 = vld [vmem:[%s223 + $0x84] sm:$0xf]
      %v279 = vld [vmem:[%s223 + $0x88] sm:$0xf]
      %v280 = vld [vmem:[%s223 + $0x8c] sm:$0xf]
      %v281 = vld [vmem:[%s223 + $0x90] sm:$0xf]
      %v282 = vld [vmem:[%s223 + $0x94] sm:$0xf]
      %v283 = vld [vmem:[%s223 + $0x98] sm:$0xf]
      %v284 = vld [vmem:[%s223 + $0x9c] sm:$0xf]
      %v285 = vld [vmem:[%s223 + $0xa0] sm:$0xf]
      %v286 = vld [vmem:[%s223 + $0xa4] sm:$0xf]
      %v287 = vld [vmem:[%s223 + $0xa8] sm:$0xf]
      %v288 = vld [vmem:[%s223 + $0xac] sm:$0xf]
      %v289 = vld [vmem:[%s223 + $0xb0] sm:$0xf]
      %v290 = vld [vmem:[%s223 + $0xb4] sm:$0xf]
      %v291 = vld [vmem:[%s223 + $0xb8] sm:$0xf]
      %v292 = vld [vmem:[%s223 + $0xbc] sm:$0xf]
      %v293 = vld [vmem:[%s223 + $0xc0] sm:$0xf]
      %v294 = vld [vmem:[%s223 + $0xc4] sm:$0xf]
      %v295 = vld [vmem:[%s223 + $0xc8] sm:$0xf]
      %v296 = vld [vmem:[%s223 + $0xcc] sm:$0xf]
      %v297 = vld [vmem:[%s223 + $0xd0] sm:$0xf]
      %v298 = vld [vmem:[%s223 + $0xd4] sm:$0xf]
      %v299 = vld [vmem:[%s223 + $0xd8] sm:$0xf]
      %v300 = vld [vmem:[%s223 + $0xdc] sm:$0xf]
      %v301 = vld [vmem:[%s223 + $0xe0] sm:$0xf]
      %v302 = vld [vmem:[%s223 + $0xe4] sm:$0xf]
      %v303 = vld [vmem:[%s223 + $0xe8] sm:$0xf]
      %v304 = vld [vmem:[%s223 + $0xec] sm:$0xf]
      %v305 = vld [vmem:[%s223 + $0xf0] sm:$0xf]
      %v306 = vld [vmem:[%s223 + $0xf4] sm:$0xf]
      %v307 = vld [vmem:[%s223 + $0xf8] sm:$0xf]
      %v308 = vld [vmem:[%s223 + $0xfc] sm:$0xf]
      %v311 = vunpack.c.l.s4 1966171168
      %v312 = vunpack.c.0.s8 %v311
      %v313 = vlaneseq
      %v314 = vshrl.u32 %v313, 7
      %v315 = vsub.s32 %v312, %v314
      %v316 = vrot.slane %v243, %v315
      %v317 = vcombine.high %v316, %v316
      %v319 = vunpack.c.l.s4 1966171168
      %v320 = vunpack.c.0.s8 %v319
      %v321 = vlaneseq
      %v322 = vshrl.u32 %v321, 7
      %v323 = vsub.s32 %v320, %v322
      %v324 = vrot.slane %v316, %v323
      %v326 = vunpack.c.l.s4 1966171168
      %v327 = vunpack.c.0.s8 %v326
      %v328 = vlaneseq
      %v329 = vshrl.u32 %v328, 7
      %v330 = vsub.s32 %v327, %v329
      %v331 = vrot.slane %v317, %v330
      %v332 = vcombine.high %v324, %v324
      %v333 = vcombine.high %v331, %v331
      %v402 = vunpack.c.l.b16 %v245
      %v403 = vunpack.c.l.b16 %v246
      %v404 = vunpack.c.l.b16 %v247
      %v405 = vunpack.c.l.b16 %v248
      %v406 = vunpack.c.l.b16 %v249
      %v407 = vunpack.c.l.b16 %v250
      %v408 = vunpack.c.l.b16 %v251
      %v409 = vunpack.c.l.b16 %v252
      %v410 = vunpack.c.l.b16 %v253
      %v411 = vunpack.c.l.b16 %v254
      %v412 = vunpack.c.l.b16 %v255
      %v413 = vunpack.c.l.b16 %v256
      %v414 = vunpack.c.l.b16 %v257
      %v415 = vunpack.c.l.b16 %v258
      %v416 = vunpack.c.l.b16 %v259
      %v417 = vunpack.c.l.b16 %v260
      %v418 = vunpack.c.l.b16 %v261
      %v419 = vunpack.c.l.b16 %v262
      %v420 = vunpack.c.l.b16 %v263
      %v421 = vunpack.c.l.b16 %v264
      %v422 = vunpack.c.l.b16 %v265
      %v423 = vunpack.c.l.b16 %v266
      %v424 = vunpack.c.l.b16 %v267
      %v425 = vunpack.c.l.b16 %v268
      %v426 = vunpack.c.l.b16 %v269
      %v427 = vunpack.c.l.b16 %v270
      %v428 = vunpack.c.l.b16 %v271
      %v429 = vunpack.c.l.b16 %v272
      %v430 = vunpack.c.l.b16 %v273
      %v431 = vunpack.c.l.b16 %v274
      %v432 = vunpack.c.l.b16 %v275
      %v433 = vunpack.c.l.b16 %v276
      %v434 = vunpack.c.l.b16 %v277
      %v435 = vunpack.c.l.b16 %v278
      %v436 = vunpack.c.l.b16 %v279
      %v437 = vunpack.c.l.b16 %v280
      %v438 = vunpack.c.l.b16 %v281
      %v439 = vunpack.c.l.b16 %v282
      %v440 = vunpack.c.l.b16 %v283
      %v441 = vunpack.c.l.b16 %v284
      %v442 = vunpack.c.l.b16 %v285
      %v443 = vunpack.c.l.b16 %v286
      %v444 = vunpack.c.l.b16 %v287
      %v445 = vunpack.c.l.b16 %v288
      %v446 = vunpack.c.l.b16 %v289
      %v447 = vunpack.c.l.b16 %v290
      %v448 = vunpack.c.l.b16 %v291
      %v449 = vunpack.c.l.b16 %v292
      %v450 = vunpack.c.l.b16 %v293
      %v451 = vunpack.c.l.b16 %v294
      %v452 = vunpack.c.l.b16 %v295
      %v453 = vunpack.c.l.b16 %v296
      %v454 = vunpack.c.l.b16 %v297
      %v455 = vunpack.c.l.b16 %v298
      %v456 = vunpack.c.l.b16 %v299
      %v457 = vunpack.c.l.b16 %v300
      %v458 = vunpack.c.l.b16 %v301
      %v459 = vunpack.c.l.b16 %v302
      %v460 = vunpack.c.l.b16 %v303
      %v461 = vunpack.c.l.b16 %v304
      %v462 = vunpack.c.l.b16 %v305
      %v463 = vunpack.c.l.b16 %v306
      %v464 = vunpack.c.l.b16 %v307
      %v465 = vunpack.c.l.b16 %v308
      %v466 = vpack.c.b16 %v403, %v402
      %v467 = vpack.c.b16 %v405, %v404
      %v468 = vpack.c.b16 %v407, %v406
      %v469 = vpack.c.b16 %v409, %v408
      %v470 = vpack.c.b16 %v411, %v410
      %v471 = vpack.c.b16 %v413, %v412
      %v472 = vpack.c.b16 %v415, %v414
      %v473 = vpack.c.b16 %v417, %v416
      %v474 = vpack.c.b16 %v419, %v418
      %v475 = vpack.c.b16 %v421, %v420
      %v476 = vpack.c.b16 %v423, %v422
      %v477 = vpack.c.b16 %v425, %v424
      %v478 = vpack.c.b16 %v427, %v426
      %v479 = vpack.c.b16 %v429, %v428
      %v480 = vpack.c.b16 %v431, %v430
      %v481 = vpack.c.b16 %v433, %v432
      %v482 = vpack.c.b16 %v435, %v434
      %v483 = vpack.c.b16 %v437, %v436
      %v484 = vpack.c.b16 %v439, %v438
      %v485 = vpack.c.b16 %v441, %v440
      %v486 = vpack.c.b16 %v443, %v442
      %v487 = vpack.c.b16 %v445, %v444
      %v488 = vpack.c.b16 %v447, %v446
      %v489 = vpack.c.b16 %v449, %v448
      %v490 = vpack.c.b16 %v451, %v450
      %v491 = vpack.c.b16 %v453, %v452
      %v492 = vpack.c.b16 %v455, %v454
      %v493 = vpack.c.b16 %v457, %v456
      %v494 = vpack.c.b16 %v459, %v458
      %v495 = vpack.c.b16 %v461, %v460
      %v496 = vpack.c.b16 %v463, %v462
      %v497 = vpack.c.b16 %v465, %v464
      %530 = vmatprep.subr.bf16.mxu0 0
      %531 = vmatpush1.bf16.msra.mxu0 %v466
      %532 = vmatprep.subr.bf16.mxu0 0
      %533 = vmatpush1.bf16.msra.mxu0 %v467
      %534 = vmatprep.subr.bf16.mxu0 0
      %535 = vmatpush1.bf16.msra.mxu0 %v468
      %536 = vmatprep.subr.bf16.mxu0 0
      %537 = vmatpush1.bf16.msra.mxu0 %v469
      %538 = vmatprep.subr.bf16.mxu0 0
      %539 = vmatpush1.bf16.msra.mxu0 %v470
      %540 = vmatprep.subr.bf16.mxu0 0
      %541 = vmatpush1.bf16.msra.mxu0 %v471
      %542 = vmatprep.subr.bf16.mxu0 0
      %543 = vmatpush1.bf16.msra.mxu0 %v472
      %544 = vmatprep.subr.bf16.mxu0 0
      %545 = vmatpush1.bf16.msra.mxu0 %v473
      %546 = vmatprep.subr.bf16.mxu0 0
      %547 = vmatpush1.bf16.msra.mxu0 %v474
      %548 = vmatprep.subr.bf16.mxu0 0
      %549 = vmatpush1.bf16.msra.mxu0 %v475
      %550 = vmatprep.subr.bf16.mxu0 0
      %551 = vmatpush1.bf16.msra.mxu0 %v476
      %552 = vmatprep.subr.bf16.mxu0 0
      %553 = vmatpush1.bf16.msra.mxu0 %v477
      %554 = vmatprep.subr.bf16.mxu0 0
      %555 = vmatpush1.bf16.msra.mxu0 %v478
      %556 = vmatprep.subr.bf16.mxu0 0
      %557 = vmatpush1.bf16.msra.mxu0 %v479
      %558 = vmatprep.subr.bf16.mxu0 0
      %559 = vmatpush1.bf16.msra.mxu0 %v480
      %560 = vmatprep.subr.bf16.mxu0 0
      %561 = vmatpush1.bf16.msra.mxu0 %v481
      %562 = vmatprep.mubr.bf16.mxu0 %v331
      %563 = vmatmul.mubr.bf16.gmra.mrb[0].mxu0 %v324
      %v564 = vpop.f32.mrb[0].mxu0
      %v565 = vadd.f32 0.0, %v564
      %v566 = vpop.f32.mrb[0].mxu0
      %v567 = vpop.f32.mrb[0].mxu0
      %v568 = vpop.f32.mrb[0].mxu0
      %569 = vdwg.mxu0
      %570 = vmatprep.subr.bf16.mxu0 0
      %571 = vmatpush1.bf16.msra.mxu0 %v482
      %572 = vmatprep.subr.bf16.mxu0 0
      %573 = vmatpush1.bf16.msra.mxu0 %v483
      %574 = vmatprep.subr.bf16.mxu0 0
      %575 = vmatpush1.bf16.msra.mxu0 %v484
      %576 = vmatprep.subr.bf16.mxu0 0
      %577 = vmatpush1.bf16.msra.mxu0 %v485
      %578 = vmatprep.subr.bf16.mxu0 0
      %579 = vmatpush1.bf16.msra.mxu0 %v486
      %580 = vmatprep.subr.bf16.mxu0 0
      %581 = vmatpush1.bf16.msra.mxu0 %v487
      %582 = vmatprep.subr.bf16.mxu0 0
      %583 = vmatpush1.bf16.msra.mxu0 %v488
      %584 = vmatprep.subr.bf16.mxu0 0
      %585 = vmatpush1.bf16.msra.mxu0 %v489
      %586 = vmatprep.subr.bf16.mxu0 0
      %587 = vmatpush1.bf16.msra.mxu0 %v490
      %588 = vmatprep.subr.bf16.mxu0 0
      %589 = vmatpush1.bf16.msra.mxu0 %v491
      %590 = vmatprep.subr.bf16.mxu0 0
      %591 = vmatpush1.bf16.msra.mxu0 %v492
      %592 = vmatprep.subr.bf16.mxu0 0
      %593 = vmatpush1.bf16.msra.mxu0 %v493
      %594 = vmatprep.subr.bf16.mxu0 0
      %595 = vmatpush1.bf16.msra.mxu0 %v494
      %596 = vmatprep.subr.bf16.mxu0 0
      %597 = vmatpush1.bf16.msra.mxu0 %v495
      %598 = vmatprep.subr.bf16.mxu0 0
      %599 = vmatpush1.bf16.msra.mxu0 %v496
      %600 = vmatprep.subr.bf16.mxu0 0
      %601 = vmatpush1.bf16.msra.mxu0 %v497
      %602 = vmatprep.mubr.bf16.mxu0 %v333
      %603 = vmatmul.mubr.bf16.gmra.mrb[0].mxu0 %v332
      %v604 = vpop.f32.mrb[0].mxu0
      %v605 = vadd.f32 %v565, %v604
      %v606 = vpop.f32.mrb[0].mxu0
      %v607 = vpop.f32.mrb[0].mxu0
      %v608 = vpop.f32.mrb[0].mxu0
      %609 = vdwg.mxu0
      %v610 = vadd.f32 %v244, %v605
      %vm611 = vcmask 517120
      %612 = vst.msk [vmem:[#allocation2] sm:$0x3] %vm611, %v610
      %p613 = scmp.eq.s32.totalorder %s20, 1
      // Predicated region
      $region33: #{_lambda_.24} parent=27 // pred_check
        %p614 = pneg %p613
      $region34: #{_lambda_.24} parent=27 // pred_check_branch
        %616 = sbr.rel (%p614) target = $region36
      $region35: #{_lambda_.24} parent=27 // pred_region
        %v617 = vld [vmem:[#allocation2] sm:$0x3]
        %618 = vst.msk [vmem:[%s231] sm:$0x3] %vm611, %v617
      $region36: #{_lambda_.24} parent=27 // pred_fallthru
        _
      %p619 = scmp.lt.s32.totalorder %s18, 0
      %s620 = scalar_select %p619, %s18, 0
      %p621 = scmp.lt.s32.totalorder %s19, 0
      %s622 = scalar_select %p621, %s19, 0
      %s623 = sadd.s32 %s622, %s620
      %s624 = smul.addr %s623, 2
      %s625 = scalar_lea.vmem %s2, %s624
      // Predicated region
      $region37: #{_lambda_.24} parent=27 // pred_check
        %p626 = pneg %p110
      $region38: #{_lambda_.24} parent=27 // pred_check_branch
        %628 = sbr.rel (%p626) target = $region40
      $region39: #{_lambda_.24} parent=27 // pred_region
        _
      $region40: #{_lambda_.24} parent=27 // pred_fallthru
        _
      // Predicated region
      $region41: #{_lambda_.24} parent=27 // pred_check
        %p629 = pneg %p110
      $region42: #{_lambda_.24} parent=27 // pred_check_branch
        %631 = sbr.rel (%p629) target = $region44
      $region43: #{_lambda_.24} parent=27 // pred_region
        %p632 = scmp.lt.s32.totalorder %s18, 0
        %s633 = scalar_select %p632, %s18, 0
        %p634 = scmp.lt.s32.totalorder %s19, 0
        %s635 = scalar_select %p634, %s19, 0
        %s636 = sadd.s32 %s635, %s633
        %s637 = smul.addr %s636, 2
        %s638 = scalar_lea.vmem %s2, %s637
      $region44: #{_lambda_.24} parent=27 // pred_fallthru
        _
    $region28: #{_lambda_.24} parent=5 // pred_fallthru
      _
    %p639 = scmp.le.s32.totalorder 2, %s8
    // Predicated region
    $region45: #{_lambda_.24} parent=5 // pred_check
      %p640 = pneg %p639
    $region46: #{_lambda_.24} parent=5 // pred_check_branch
      %642 = sbr.rel (%p640) target = $region48
    $region47: #{_lambda_.24} parent=5 // pred_region
      %s643 = ssub.s32 %s8, 2
    $region48: #{_lambda_.24} parent=5 // pred_fallthru
      _
  $region6: #{_lambda_.24} parent=0 // loop_footer
    %s12 = sadd.s32 1, %s8
  $region7: #{_lambda_.24} parent=0 // loop_footer_branch
    %7 = sbr.rel target = $region3
  $region8: #{_lambda_.24} parent=0 // loop_exit
    _

// kernel: _lambda_.26
$region0: #{_lambda_.26}
  #allocation0 [shape = 'u32[]', space=smem, size = 0x4, offset = 0x4, fixed_abs, tag = 'smem constant byte address 0x4 - core index']
  #allocation1 [shape = 'u32[144,128]{1,0:T(1,128)}', space=vmem, size = 0x12000, scoped, tag = 'internal scratch']
  %s0 = inlined_call_operand.vmem [shape: f32[8,64], index: 0, kind: input, shape index: {}]
  %s1 = inlined_call_operand.vmem [shape: f32[8,64], index: 1, kind: input, shape index: {}]
  %s2 = inlined_call_operand.vmem [shape: f32[1,64], index: 2, kind: input, shape index: {}]
  %s3 = inlined_call_operand.vmem [shape: f32[1,64], index: 3, kind: input, shape index: {}]
  %s4 = inlined_call_operand.vmem [shape: f32[8,128], index: 4, kind: output, shape index: {}]
  %s5 = sld [smem:[#allocation0]]
  $region26: #{_lambda_.26} parent=0
    _
  %s7 = ssub.s32 1, %s5
  %s8 = scalar_select 0, %s7, %s5
  // Predicated region
  $region2: #{_lambda_.26} parent=0 // pred_check
    _
  $region3: #{_lambda_.26} parent=0 // pred_check_branch
    %10 = sbr.rel (0) target = $region5
  $region4: #{_lambda_.26} parent=0 // pred_region
    _
  $region5: #{_lambda_.26} parent=0 // pred_fallthru
    _
  // Predicated region
  $region6: #{_lambda_.26} parent=0 // pred_check
    _
  $region7: #{_lambda_.26} parent=0 // pred_check_branch
    %12 = sbr.rel (0) target = $region9
  $region8: #{_lambda_.26} parent=0 // pred_region
    _
  $region9: #{_lambda_.26} parent=0 // pred_fallthru
    _
  // Predicated region
  $region10: #{_lambda_.26} parent=0 // pred_check
    _
  $region11: #{_lambda_.26} parent=0 // pred_check_branch
    %14 = sbr.rel (0) target = $region13
  $region12: #{_lambda_.26} parent=0 // pred_region
    _
  $region13: #{_lambda_.26} parent=0 // pred_fallthru
    _
  // Predicated region
  $region14: #{_lambda_.26} parent=0 // pred_check
    _
  $region15: #{_lambda_.26} parent=0 // pred_check_branch
    %16 = sbr.rel (0) target = $region17
  $region16: #{_lambda_.26} parent=0 // pred_region
    _
  $region17: #{_lambda_.26} parent=0 // pred_fallthru
    _
  %v17 = vld [vmem:[%s1] sm:$0xff]
  %v18 = vld [vmem:[%s2] sm:$0x1]
  %v20 = vlaneseq
  %v21 = vshrl.u32 %v20, 7
  %v22 = vsub.s32 0, %v21
  %v23 = vrot.slane %v18, %v22
  %v25 = vmul.f32 %v17, %v23
  %v26 = vld [vmem:[%s3] sm:$0x1]
  %v28 = vlaneseq
  %v29 = vshrl.u32 %v28, 7
  %v30 = vsub.s32 0, %v29
  %v31 = vrot.slane %v26, %v30
  %v33 = vadd.f32 %v25, %v31
  %v34 = vld [vmem:[%s0] sm:$0xff]
  %36 = vrot.lane.b32.xlu0 %v33, 64
  %v37 = vpop.permute.xlu0 %36
  %vm39 = vcmask 523264
  %v40 = vsel %vm39, %v34, %v37
  %41 = vst [vmem:[%s4] sm:$0xff] %v40
  // Predicated region
  $region18: #{_lambda_.26} parent=0 // pred_check
    _
  $region19: #{_lambda_.26} parent=0 // pred_check_branch
    %43 = sbr.rel (0) target = $region21
  $region20: #{_lambda_.26} parent=0 // pred_region
    _
  $region21: #{_lambda_.26} parent=0 // pred_fallthru
    _
  // Predicated region
  $region22: #{_lambda_.26} parent=0 // pred_check
    _
  $region23: #{_lambda_.26} parent=0 // pred_check_branch
    %45 = sbr.rel (0) target = $region25
  $region24: #{_lambda_.26} parent=0 // pred_region
    _
  $region25: #{_lambda_.26} parent=0 // pred_fallthru
    _

// kernel: _lambda_.25
$region0: #{_lambda_.25}
  #allocation0 [shape = 'u32[]', space=smem, size = 0x4, offset = 0x4, fixed_abs, tag = 'smem constant byte address 0x4 - core index']
  #allocation1 [shape = 'u32[144,128]{1,0:T(1,128)}', space=vmem, size = 0x12000, scoped, tag = 'internal scratch']
  #allocation2 [shape = 'f32[2,64]{1,0:T(2,128)}', space=vmem, size = 0x400, scoped, tag = 'scratch operand']
  %s0 = inlined_call_operand.vmem [shape: bf16[4,2,256], index: 0, kind: input, shape index: {}]
  %s1 = inlined_call_operand.vmem [shape: bf16[4,256,64], index: 1, kind: input, shape index: {}]
  %s2 = inlined_call_operand.vmem [shape: f32[4,2,64], index: 2, kind: output, shape index: {0}]
  %s3 = inlined_call_operand.vmem [shape: f32[1,64], index: 3, kind: output, shape index: {1}]
  %s4 = inlined_call_operand.vmem [shape: f32[1,64], index: 4, kind: output, shape index: {2}]
  %5 = xla_tuple %s2, %s3, %s4
  %s6 = sld [smem:[#allocation0]]
  $region69: #{_lambda_.25} parent=0
    _
  %s8 = ssub.s32 1, %s6
  %s9 = scalar_select 0, %s8, %s6
  loop: start=0, step=1, limit=6
  $region2: #{_lambda_.25} parent=0 // loop_pre_header
    _
  $region3: #{_lambda_.25} parent=0 // loop_header
    %s11 = sphi 0, %s15
    %p12 = scmp.ge.s32.totalorder %s11, 6
    %s18 = sphi 0, %s37
    %s19 = sphi 0, %s33
    %s20 = sphi 0, %s29
    %s21 = sphi 0, %s18
    %s22 = sphi 0, %s19
    %s23 = sphi 0, %s20
    %s24 = sphi 0, %s21
    %s25 = sphi 0, %s22
    %s26 = sphi 0, %s23
    %s44 = sphi 0, %s46
    %s47 = sphi 0, %s44
    %s48 = sphi 0, %s47
    %s64 = sphi 0, %s48
    %s72 = sphi 0, %s74
    %s75 = sphi 0, %s72
    %s76 = sphi 0, %s75
    %s92 = sphi 0, %s76
    %s100 = sphi 0, %s102
    %s103 = sphi 0, %s100
    %s104 = sphi 0, %s103
    %s120 = sphi 0, %s104
    %s124 = sphi 0, %s124
    %s126 = sphi 0, %s124
    %s127 = sphi 0, %s126
    %s141 = sphi 0, %s127
    %s145 = sphi 0, %s145
    %s147 = sphi 0, %s145
    %s148 = sphi 0, %s147
    %s162 = sphi 0, %s148
  $region4: #{_lambda_.25} parent=0 // loop_header_branch
    %14 = sbr.rel (%p12) target = $region8
  $region5: #{_lambda_.25} parent=0 // loop_body
    %s16 = ssub.s32 %s11, 1
    %s17 = ssub.s32 %s11, 2
    %s27 = sadd.s32 1, %s20
    %p28 = scmp.ge.s32.totalorder %s27, 1
    %s29 = scalar_select %p28, 0, %s27
    %s30 = sadd.s32 1, %s19
    %s31 = scalar_select %p28, %s30, %s19
    %p32 = scmp.ge.s32.totalorder %s31, 1
    %s33 = scalar_select %p32, 0, %s31
    %s34 = sadd.s32 1, %s18
    %s35 = scalar_select %p32, %s34, %s18
    %p36 = scmp.ge.s32.totalorder %s35, 4
    %s37 = scalar_select %p36, 0, %s35
    %s38 = ssub.s32 %s18, %s37
    %s39 = ssub.s32 %s19, %s33
    %s40 = sor.u32 %s38, %s39
    %s41 = ssub.s32 %s20, %s29
    %s42 = sor.u32 %s40, %s41
    %p43 = scmp.eq.s32.totalorder %s42, 0
    %s45 = sadd.s32 %s44, 1
    %s46 = scalar_select %p43, %s44, %s45
    %p49 = pneg %p43
    %p50 = scmp.eq.s32.totalorder %s11, 3
    %p51 = por %p49, %p50
    %p52 = scmp.ne.s32.totalorder %s44, %s47
    %p53 = scmp.eq.s32.totalorder %s11, 0
    %p54 = por %p52, %p53
    %p55 = scmp.ne.s32.totalorder %s44, %s47
    %p56 = scmp.eq.s32.totalorder %s16, 3
    %p57 = por %p55, %p56
    %p58 = scmp.ne.s32.totalorder %s47, %s48
    %p59 = scmp.eq.s32.totalorder %s16, 0
    %p60 = por %p58, %p59
    %p61 = scmp.ne.s32.totalorder %s47, %s48
    %p62 = scmp.eq.s32.totalorder %s17, 3
    %p63 = por %p61, %p62
    %p65 = scmp.ne.s32.totalorder %s48, %s64
    %p66 = scmp.eq.s32.totalorder %s17, 0
    %p67 = por %p65, %p66
    %s68 = ssub.s32 %s18, %s37
    %s69 = ssub.s32 %s20, %s29
    %s70 = sor.u32 %s68, %s69
    %p71 = scmp.eq.s32.totalorder %s70, 0
    %s73 = sadd.s32 %s72, 1
    %s74 = scalar_select %p71, %s72, %s73
    %p77 = pneg %p71
    %p78 = scmp.eq.s32.totalorder %s11, 3
    %p79 = por %p77, %p78
    %p80 = scmp.ne.s32.totalorder %s72, %s75
    %p81 = scmp.eq.s32.totalorder %s11, 0
    %p82 = por %p80, %p81
    %p83 = scmp.ne.s32.totalorder %s72, %s75
    %p84 = scmp.eq.s32.totalorder %s16, 3
    %p85 = por %p83, %p84
    %p86 = scmp.ne.s32.totalorder %s75, %s76
    %p87 = scmp.eq.s32.totalorder %s16, 0
    %p88 = por %p86, %p87
    %p89 = scmp.ne.s32.totalorder %s75, %s76
    %p90 = scmp.eq.s32.totalorder %s17, 3
    %p91 = por %p89, %p90
    %p93 = scmp.ne.s32.totalorder %s76, %s92
    %p94 = scmp.eq.s32.totalorder %s17, 0
    %p95 = por %p93, %p94
    %s96 = ssub.s32 %s18, %s37
    %s97 = ssub.s32 %s19, %s33
    %s98 = sor.u32 %s96, %s97
    %p99 = scmp.eq.s32.totalorder %s98, 0
    %s101 = sadd.s32 %s100, 1
    %s102 = scalar_select %p99, %s100, %s101
    %p105 = pneg %p99
    %p106 = scmp.eq.s32.totalorder %s11, 3
    %p107 = por %p105, %p106
    %p108 = scmp.ne.s32.totalorder %s100, %s103
    %p109 = scmp.eq.s32.totalorder %s11, 0
    %p110 = por %p108, %p109
    %p111 = scmp.ne.s32.totalorder %s100, %s103
    %p112 = scmp.eq.s32.totalorder %s16, 3
    %p113 = por %p111, %p112
    %p114 = scmp.ne.s32.totalorder %s103, %s104
    %p115 = scmp.eq.s32.totalorder %s16, 0
    %p116 = por %p114, %p115
    %p117 = scmp.ne.s32.totalorder %s103, %s104
    %p118 = scmp.eq.s32.totalorder %s17, 3
    %p119 = por %p117, %p118
    %p121 = scmp.ne.s32.totalorder %s104, %s120
    %p122 = scmp.eq.s32.totalorder %s17, 0
    %p123 = por %p121, %p122
    %s125 = sadd.s32 %s124, 1
    %p128 = scmp.eq.s32.totalorder %s11, 3
    %p129 = scmp.ne.s32.totalorder %s124, %s126
    %p130 = scmp.eq.s32.totalorder %s11, 0
    %p131 = por %p129, %p130
    %p132 = scmp.ne.s32.totalorder %s124, %s126
    %p133 = scmp.eq.s32.totalorder %s16, 3
    %p134 = por %p132, %p133
    %p135 = scmp.ne.s32.totalorder %s126, %s127
    %p136 = scmp.eq.s32.totalorder %s16, 0
    %p137 = por %p135, %p136
    %p138 = scmp.ne.s32.totalorder %s126, %s127
    %p139 = scmp.eq.s32.totalorder %s17, 3
    %p140 = por %p138, %p139
    %p142 = scmp.ne.s32.totalorder %s127, %s141
    %p143 = scmp.eq.s32.totalorder %s17, 0
    %p144 = por %p142, %p143
    %s146 = sadd.s32 %s145, 1
    %p149 = scmp.eq.s32.totalorder %s11, 3
    %p150 = scmp.ne.s32.totalorder %s145, %s147
    %p151 = scmp.eq.s32.totalorder %s11, 0
    %p152 = por %p150, %p151
    %p153 = scmp.ne.s32.totalorder %s145, %s147
    %p154 = scmp.eq.s32.totalorder %s16, 3
    %p155 = por %p153, %p154
    %p156 = scmp.ne.s32.totalorder %s147, %s148
    %p157 = scmp.eq.s32.totalorder %s16, 0
    %p158 = por %p156, %p157
    %p159 = scmp.ne.s32.totalorder %s147, %s148
    %p160 = scmp.eq.s32.totalorder %s17, 3
    %p161 = por %p159, %p160
    %p163 = scmp.ne.s32.totalorder %s148, %s162
    %p164 = scmp.eq.s32.totalorder %s17, 0
    %p165 = por %p163, %p164
    %p166 = scmp.le.s32.totalorder 1, %s11
    %p167 = scmp.lt.s32.totalorder %s11, 5
    %p168 = pnand %p166, %p167
    %p169 = pneg %p168
    // Predicated region
    $region9: #{_lambda_.25} parent=5 // pred_check
      _
    $region10: #{_lambda_.25} parent=5 // pred_check_branch
      %171 = sbr.rel (%p168) target = $region12
    $region11: #{_lambda_.25} parent=5 // pred_region
      %s172 = ssub.s32 %s11, 1
    $region12: #{_lambda_.25} parent=5 // pred_fallthru
      _
    %p173 = scmp.lt.s32.totalorder %s11, 4
    // Predicated region
    $region13: #{_lambda_.25} parent=5 // pred_check
      %p174 = pneg %p173
    $region14: #{_lambda_.25} parent=5 // pred_check_branch
      %176 = sbr.rel (%p174) target = $region16
    $region15: #{_lambda_.25} parent=5 // pred_region
      // Predicated region
      $region17: #{_lambda_.25} parent=15 // pred_check
        %p177 = pneg %p54
      $region18: #{_lambda_.25} parent=15 // pred_check_branch
        %179 = sbr.rel (%p177) target = $region20
      $region19: #{_lambda_.25} parent=15 // pred_region
        %s180 = smul.u32 2, %s20
        %p181 = scmp.lt.s32.totalorder %s18, 3
        %s182 = scalar_select %p181, %s18, 3
        %p183 = scmp.lt.s32.totalorder %s19, 0
        %s184 = scalar_select %p183, %s19, 0
        %p185 = scmp.lt.s32.totalorder %s180, 1
        %s186 = scalar_select %p185, %s180, 1
        %s187 = smul.addr %s184, 2
        %s188 = sadd.s32 %s186, %s187
        %s189 = smul.addr %s182, 2
        %s190 = sadd.s32 %s188, %s189
        %s191 = scalar_lea.vmem %s0, %s190
        %s192 = smul.u32 2, %s20
      $region20: #{_lambda_.25} parent=15 // pred_fallthru
        _
      // Predicated region
      $region21: #{_lambda_.25} parent=15 // pred_check
        %p193 = pneg %p82
      $region22: #{_lambda_.25} parent=15 // pred_check_branch
        %195 = sbr.rel (%p193) target = $region24
      $region23: #{_lambda_.25} parent=15 // pred_region
        %s196 = smul.u32 32, %s20
        %p197 = scmp.lt.s32.totalorder %s18, 3
        %s198 = scalar_select %p197, %s18, 3
        %p199 = scmp.lt.s32.totalorder %s196, 31
        %s200 = scalar_select %p199, %s196, 31
        %s201 = smul.addr %s198, 32
        %s202 = sadd.s32 %s200, %s201
        %s203 = smul.addr %s202, 4
        %s204 = scalar_lea.vmem %s1, %s203
        %s205 = smul.u32 32, %s20
      $region24: #{_lambda_.25} parent=15 // pred_fallthru
        _
    $region16: #{_lambda_.25} parent=5 // pred_fallthru
      _
    %p206 = scmp.le.s32.totalorder 1, %s11
    %p207 = scmp.lt.s32.totalorder %s11, 5
    %p208 = pnand %p206, %p207
    %p209 = pneg %p208
    // Predicated region
    $region25: #{_lambda_.25} parent=5 // pred_check
      _
    $region26: #{_lambda_.25} parent=5 // pred_check_branch
      %211 = sbr.rel (%p208) target = $region28
    $region27: #{_lambda_.25} parent=5 // pred_region
      %s212 = ssub.s32 %s11, 1
      %s213 = smul.u32 2, %s23
      %p214 = scmp.lt.s32.totalorder %s21, 3
      %s215 = scalar_select %p214, %s21, 3
      %p216 = scmp.lt.s32.totalorder %s22, 0
      %s217 = scalar_select %p216, %s22, 0
      %p218 = scmp.lt.s32.totalorder %s213, 1
      %s219 = scalar_select %p218, %s213, 1
      %s220 = smul.addr %s217, 2
      %s221 = sadd.s32 %s219, %s220
      %s222 = smul.addr %s215, 2
      %s223 = sadd.s32 %s221, %s222
      %s224 = scalar_lea.vmem %s0, %s223
      %p225 = pneg %p60
      %p226 = pneg %p57
      %s227 = smul.u32 32, %s23
      %p228 = scmp.lt.s32.totalorder %s21, 3
      %s229 = scalar_select %p228, %s21, 3
      %p230 = scmp.lt.s32.totalorder %s227, 31
      %s231 = scalar_select %p230, %s227, 31
      %s232 = smul.addr %s229, 32
      %s233 = sadd.s32 %s231, %s232
      %s234 = smul.addr %s233, 4
      %s235 = scalar_lea.vmem %s1, %s234
      %p236 = pneg %p88
      %p237 = pneg %p85
      %p238 = pneg %p116
      %p239 = pneg %p113
      %p240 = scmp.lt.s32.totalorder %s21, 3
      %s241 = scalar_select %p240, %s21, 3
      %p242 = scmp.lt.s32.totalorder %s22, 0
      %s243 = scalar_select %p242, %s22, 0
      %s244 = sadd.s32 %s243, %s241
      %s245 = smul.addr %s244, 2
      %s246 = scalar_lea.vmem %s2, %s245
      %p247 = pneg %p137
      %p248 = pneg %p134
      %p249 = pneg %p158
      %p250 = pneg %p155
      %s251 = smul.u32 2, %s23
      %p252 = scmp.lt.s32.totalorder %s21, 3
      %s253 = scalar_select %p252, %s21, 3
      %p254 = scmp.lt.s32.totalorder %s22, 0
      %s255 = scalar_select %p254, %s22, 0
      %p256 = scmp.lt.s32.totalorder %s251, 1
      %s257 = scalar_select %p256, %s251, 1
      %s258 = smul.addr %s255, 2
      %s259 = sadd.s32 %s257, %s258
      %s260 = smul.addr %s253, 2
      %s261 = sadd.s32 %s259, %s260
      %s262 = scalar_lea.vmem %s0, %s261
      %s263 = smul.u32 2, %s23
      %s264 = smul.u32 32, %s23
      %p265 = scmp.lt.s32.totalorder %s21, 3
      %s266 = scalar_select %p265, %s21, 3
      %p267 = scmp.lt.s32.totalorder %s264, 31
      %s268 = scalar_select %p267, %s264, 31
      %s269 = smul.addr %s266, 32
      %s270 = sadd.s32 %s268, %s269
      %s271 = smul.addr %s270, 4
      %s272 = scalar_lea.vmem %s1, %s271
      %s273 = smul.u32 32, %s23
      %p274 = scmp.lt.s32.totalorder %s21, 3
      %s275 = scalar_select %p274, %s21, 3
      %p276 = scmp.lt.s32.totalorder %s22, 0
      %s277 = scalar_select %p276, %s22, 0
      %s278 = sadd.s32 %s277, %s275
      %s279 = smul.addr %s278, 2
      %s280 = scalar_lea.vmem %s2, %s279
      %p282 = scmp.eq.s32.totalorder %s23, 0
      // Predicated region
      $region29: #{_lambda_.25} parent=27 // pred_check
        %p283 = pneg %p282
      $region30: #{_lambda_.25} parent=27 // pred_check_branch
        %285 = sbr.rel (%p283) target = $region32
      $region31: #{_lambda_.25} parent=27 // pred_region
        %vm286 = vcmask 517120
        %287 = vst.msk [vmem:[#allocation2] sm:$0x3] %vm286, 0.0
      $region32: #{_lambda_.25} parent=27 // pred_fallthru
        _
      %p288 = scmp.eq.s32.totalorder %s21, 0
      %p289 = scmp.eq.s32.totalorder %s22, 0
      %p290 = pnand %p288, %p289
      %p291 = pneg %p290
      %p292 = pnand %p291, %p282
      %p293 = pneg %p292
      // Predicated region
      $region33: #{_lambda_.25} parent=27 // pred_check
        _
      $region34: #{_lambda_.25} parent=27 // pred_check_branch
        %295 = sbr.rel (%p292) target = $region36
      $region35: #{_lambda_.25} parent=27 // pred_region
        %vm296 = vcmask 516096
        %297 = vst.msk [vmem:[%s3] sm:$0x1] %vm296, 0.0
        %298 = vst.msk [vmem:[%s4] sm:$0x1] %vm296, 0.0
      $region36: #{_lambda_.25} parent=27 // pred_fallthru
        _
      %v299 = vld [vmem:[%s262] sm:$0x3]
      %v300 = vmax.bf16 %v299, 0
      %v301 = vld [vmem:[#allocation2] sm:$0x3]
      %v302 = vld [vmem:[%s272] sm:$0xf]
      %v303 = vld [vmem:[%s272 + $0x4] sm:$0xf]
      %v304 = vld [vmem:[%s272 + $0x8] sm:$0xf]
      %v305 = vld [vmem:[%s272 + $0xc] sm:$0xf]
      %v306 = vld [vmem:[%s272 + $0x10] sm:$0xf]
      %v307 = vld [vmem:[%s272 + $0x14] sm:$0xf]
      %v308 = vld [vmem:[%s272 + $0x18] sm:$0xf]
      %v309 = vld [vmem:[%s272 + $0x1c] sm:$0xf]
      %v310 = vld [vmem:[%s272 + $0x20] sm:$0xf]
      %v311 = vld [vmem:[%s272 + $0x24] sm:$0xf]
      %v312 = vld [vmem:[%s272 + $0x28] sm:$0xf]
      %v313 = vld [vmem:[%s272 + $0x2c] sm:$0xf]
      %v314 = vld [vmem:[%s272 + $0x30] sm:$0xf]
      %v315 = vld [vmem:[%s272 + $0x34] sm:$0xf]
      %v316 = vld [vmem:[%s272 + $0x38] sm:$0xf]
      %v317 = vld [vmem:[%s272 + $0x3c] sm:$0xf]
      %v318 = vld [vmem:[%s272 + $0x40] sm:$0xf]
      %v319 = vld [vmem:[%s272 + $0x44] sm:$0xf]
      %v320 = vld [vmem:[%s272 + $0x48] sm:$0xf]
      %v321 = vld [vmem:[%s272 + $0x4c] sm:$0xf]
      %v322 = vld [vmem:[%s272 + $0x50] sm:$0xf]
      %v323 = vld [vmem:[%s272 + $0x54] sm:$0xf]
      %v324 = vld [vmem:[%s272 + $0x58] sm:$0xf]
      %v325 = vld [vmem:[%s272 + $0x5c] sm:$0xf]
      %v326 = vld [vmem:[%s272 + $0x60] sm:$0xf]
      %v327 = vld [vmem:[%s272 + $0x64] sm:$0xf]
      %v328 = vld [vmem:[%s272 + $0x68] sm:$0xf]
      %v329 = vld [vmem:[%s272 + $0x6c] sm:$0xf]
      %v330 = vld [vmem:[%s272 + $0x70] sm:$0xf]
      %v331 = vld [vmem:[%s272 + $0x74] sm:$0xf]
      %v332 = vld [vmem:[%s272 + $0x78] sm:$0xf]
      %v333 = vld [vmem:[%s272 + $0x7c] sm:$0xf]
      %v336 = vunpack.c.l.s4 1966171168
      %v337 = vunpack.c.0.s8 %v336
      %v338 = vlaneseq
      %v339 = vshrl.u32 %v338, 7
      %v340 = vsub.s32 %v337, %v339
      %v341 = vrot.slane %v300, %v340
      %v342 = vcombine.high %v341, %v341
      %v344 = vunpack.c.l.s4 1966171168
      %v345 = vunpack.c.0.s8 %v344
      %v346 = vlaneseq
      %v347 = vshrl.u32 %v346, 7
      %v348 = vsub.s32 %v345, %v347
      %v349 = vrot.slane %v341, %v348
      %v351 = vunpack.c.l.s4 1966171168
      %v352 = vunpack.c.0.s8 %v351
      %v353 = vlaneseq
      %v354 = vshrl.u32 %v353, 7
      %v355 = vsub.s32 %v352, %v354
      %v356 = vrot.slane %v342, %v355
      %v391 = vunpack.c.l.b16 %v302
      %v392 = vunpack.c.l.b16 %v303
      %v393 = vunpack.c.l.b16 %v304
      %v394 = vunpack.c.l.b16 %v305
      %v395 = vunpack.c.l.b16 %v306
      %v396 = vunpack.c.l.b16 %v307
      %v397 = vunpack.c.l.b16 %v308
      %v398 = vunpack.c.l.b16 %v309
      %v399 = vunpack.c.l.b16 %v310
      %v400 = vunpack.c.l.b16 %v311
      %v401 = vunpack.c.l.b16 %v312
      %v402 = vunpack.c.l.b16 %v313
      %v403 = vunpack.c.l.b16 %v314
      %v404 = vunpack.c.l.b16 %v315
      %v405 = vunpack.c.l.b16 %v316
      %v406 = vunpack.c.l.b16 %v317
      %v407 = vunpack.c.l.b16 %v318
      %v408 = vunpack.c.l.b16 %v319
      %v409 = vunpack.c.l.b16 %v320
      %v410 = vunpack.c.l.b16 %v321
      %v411 = vunpack.c.l.b16 %v322
      %v412 = vunpack.c.l.b16 %v323
      %v413 = vunpack.c.l.b16 %v324
      %v414 = vunpack.c.l.b16 %v325
      %v415 = vunpack.c.l.b16 %v326
      %v416 = vunpack.c.l.b16 %v327
      %v417 = vunpack.c.l.b16 %v328
      %v418 = vunpack.c.l.b16 %v329
      %v419 = vunpack.c.l.b16 %v330
      %v420 = vunpack.c.l.b16 %v331
      %v421 = vunpack.c.l.b16 %v332
      %v422 = vunpack.c.l.b16 %v333
      %v423 = vpack.c.b16 %v392, %v391
      %v424 = vpack.c.b16 %v394, %v393
      %v425 = vpack.c.b16 %v396, %v395
      %v426 = vpack.c.b16 %v398, %v397
      %v427 = vpack.c.b16 %v400, %v399
      %v428 = vpack.c.b16 %v402, %v401
      %v429 = vpack.c.b16 %v404, %v403
      %v430 = vpack.c.b16 %v406, %v405
      %v431 = vpack.c.b16 %v408, %v407
      %v432 = vpack.c.b16 %v410, %v409
      %v433 = vpack.c.b16 %v412, %v411
      %v434 = vpack.c.b16 %v414, %v413
      %v435 = vpack.c.b16 %v416, %v415
      %v436 = vpack.c.b16 %v418, %v417
      %v437 = vpack.c.b16 %v420, %v419
      %v438 = vpack.c.b16 %v422, %v421
      %455 = vmatprep.subr.bf16.mxu0 0
      %456 = vmatpush1.bf16.msra.mxu0 %v423
      %457 = vmatprep.subr.bf16.mxu0 0
      %458 = vmatpush1.bf16.msra.mxu0 %v424
      %459 = vmatprep.subr.bf16.mxu0 0
      %460 = vmatpush1.bf16.msra.mxu0 %v425
      %461 = vmatprep.subr.bf16.mxu0 0
      %462 = vmatpush1.bf16.msra.mxu0 %v426
      %463 = vmatprep.subr.bf16.mxu0 0
      %464 = vmatpush1.bf16.msra.mxu0 %v427
      %465 = vmatprep.subr.bf16.mxu0 0
      %466 = vmatpush1.bf16.msra.mxu0 %v428
      %467 = vmatprep.subr.bf16.mxu0 0
      %468 = vmatpush1.bf16.msra.mxu0 %v429
      %469 = vmatprep.subr.bf16.mxu0 0
      %470 = vmatpush1.bf16.msra.mxu0 %v430
      %471 = vmatprep.subr.bf16.mxu0 0
      %472 = vmatpush1.bf16.msra.mxu0 %v431
      %473 = vmatprep.subr.bf16.mxu0 0
      %474 = vmatpush1.bf16.msra.mxu0 %v432
      %475 = vmatprep.subr.bf16.mxu0 0
      %476 = vmatpush1.bf16.msra.mxu0 %v433
      %477 = vmatprep.subr.bf16.mxu0 0
      %478 = vmatpush1.bf16.msra.mxu0 %v434
      %479 = vmatprep.subr.bf16.mxu0 0
      %480 = vmatpush1.bf16.msra.mxu0 %v435
      %481 = vmatprep.subr.bf16.mxu0 0
      %482 = vmatpush1.bf16.msra.mxu0 %v436
      %483 = vmatprep.subr.bf16.mxu0 0
      %484 = vmatpush1.bf16.msra.mxu0 %v437
      %485 = vmatprep.subr.bf16.mxu0 0
      %486 = vmatpush1.bf16.msra.mxu0 %v438
      %487 = vmatprep.mubr.bf16.mxu0 %v356
      %488 = vmatmul.mubr.bf16.gmra.mrb[0].mxu0 %v349
      %v489 = vpop.f32.mrb[0].mxu0
      %v490 = vadd.f32 0.0, %v489
      %v491 = vpop.f32.mrb[0].mxu0
      %v492 = vpop.f32.mrb[0].mxu0
      %v493 = vpop.f32.mrb[0].mxu0
      %494 = vdwg.mxu0
      %v495 = vadd.f32 %v301, %v490
      %vm496 = vcmask 517120
      %497 = vst.msk [vmem:[#allocation2] sm:$0x3] %vm496, %v495
      // Predicated region
      $region37: #{_lambda_.25} parent=27 // pred_check
        %p498 = pneg %p282
      $region38: #{_lambda_.25} parent=27 // pred_check_branch
        %500 = sbr.rel (%p498) target = $region40
      $region39: #{_lambda_.25} parent=27 // pred_region
        %v501 = vld [vmem:[#allocation2] sm:$0x3]
        %502 = vst.msk [vmem:[%s280] sm:$0x3] %vm496, %v501
        %v503 = vld [vmem:[%s3] sm:$0x1]
        %v504 = vsel %vm496, %v501, 0.0
        %v505 = vrot.slane %v504, 4
        %v506 = vadd.f32 %v504, %v505
        %v507 = vrot.slane %v506, 2
        %v508 = vadd.f32 %v506, %v507
        %v509 = vrot.slane %v508, 1
        %v510 = vadd.f32 %v508, %v509
        %v511 = vadd.f32 %v503, %v510
        %vm512 = vcmask 516096
        %513 = vst.msk [vmem:[%s3] sm:$0x1] %vm512, %v511
        %v514 = vld [vmem:[%s4] sm:$0x1]
        %v515 = vmul.f32 %v501, %v501
        %v516 = vsel %vm496, %v515, 0.0
        %v517 = vrot.slane %v516, 4
        %v518 = vadd.f32 %v516, %v517
        %v519 = vrot.slane %v518, 2
        %v520 = vadd.f32 %v518, %v519
        %v521 = vrot.slane %v520, 1
        %v522 = vadd.f32 %v520, %v521
        %v523 = vadd.f32 %v514, %v522
        %524 = vst.msk [vmem:[%s4] sm:$0x1] %vm512, %v523
      $region40: #{_lambda_.25} parent=27 // pred_fallthru
        _
      %p525 = scmp.lt.s32.totalorder %s21, 3
      %s526 = scalar_select %p525, %s21, 3
      %p527 = scmp.lt.s32.totalorder %s22, 0
      %s528 = scalar_select %p527, %s22, 0
      %s529 = sadd.s32 %s528, %s526
      %s530 = smul.addr %s529, 2
      %s531 = scalar_lea.vmem %s2, %s530
      // Predicated region
      $region41: #{_lambda_.25} parent=27 // pred_check
        %p532 = pneg %p113
      $region42: #{_lambda_.25} parent=27 // pred_check_branch
        %534 = sbr.rel (%p532) target = $region44
      $region43: #{_lambda_.25} parent=27 // pred_region
        _
      $region44: #{_lambda_.25} parent=27 // pred_fallthru
        _
      // Predicated region
      $region45: #{_lambda_.25} parent=27 // pred_check
        %p535 = pneg %p134
      $region46: #{_lambda_.25} parent=27 // pred_check_branch
        %537 = sbr.rel (%p535) target = $region48
      $region47: #{_lambda_.25} parent=27 // pred_region
        _
      $region48: #{_lambda_.25} parent=27 // pred_fallthru
        _
      // Predicated region
      $region49: #{_lambda_.25} parent=27 // pred_check
        %p538 = pneg %p155
      $region50: #{_lambda_.25} parent=27 // pred_check_branch
        %540 = sbr.rel (%p538) target = $region52
      $region51: #{_lambda_.25} parent=27 // pred_region
        _
      $region52: #{_lambda_.25} parent=27 // pred_fallthru
        _
      // Predicated region
      $region53: #{_lambda_.25} parent=27 // pred_check
        %p541 = pneg %p134
      $region54: #{_lambda_.25} parent=27 // pred_check_branch
        %543 = sbr.rel (%p541) target = $region56
      $region55: #{_lambda_.25} parent=27 // pred_region
        _
      $region56: #{_lambda_.25} parent=27 // pred_fallthru
        _
      // Predicated region
      $region57: #{_lambda_.25} parent=27 // pred_check
        %p544 = pneg %p155
      $region58: #{_lambda_.25} parent=27 // pred_check_branch
        %546 = sbr.rel (%p544) target = $region60
      $region59: #{_lambda_.25} parent=27 // pred_region
        _
      $region60: #{_lambda_.25} parent=27 // pred_fallthru
        _
    $region28: #{_lambda_.25} parent=5 // pred_fallthru
      _
    %p547 = scmp.le.s32.totalorder 2, %s11
    // Predicated region
    $region61: #{_lambda_.25} parent=5 // pred_check
      %p548 = pneg %p547
    $region62: #{_lambda_.25} parent=5 // pred_check_branch
      %550 = sbr.rel (%p548) target = $region64
    $region63: #{_lambda_.25} parent=5 // pred_region
      %s551 = ssub.s32 %s11, 2
      // Predicated region
      $region65: #{_lambda_.25} parent=63 // pred_check
        %p552 = pneg %p119
      $region66: #{_lambda_.25} parent=63 // pred_check_branch
        %554 = sbr.rel (%p552) target = $region68
      $region67: #{_lambda_.25} parent=63 // pred_region
        %p555 = scmp.lt.s32.totalorder %s24, 3
        %s556 = scalar_select %p555, %s24, 3
        %p557 = scmp.lt.s32.totalorder %s25, 0
        %s558 = scalar_select %p557, %s25, 0
        %s559 = sadd.s32 %s558, %s556
        %s560 = smul.addr %s559, 2
        %s561 = scalar_lea.vmem %s2, %s560
      $region68: #{_lambda_.25} parent=63 // pred_fallthru
        _
    $region64: #{_lambda_.25} parent=5 // pred_fallthru
      _
  $region6: #{_lambda_.25} parent=0 // loop_footer
    %s15 = sadd.s32 1, %s11
  $region7: #{_lambda_.25} parent=0 // loop_footer_branch
    %10 = sbr.rel target = $region3
  $region8: #{_lambda_.25} parent=0 // loop_exit
    _

// kernel: _lambda_.27
$region0: #{_lambda_.27}
  #allocation0 [shape = 'u32[]', space=smem, size = 0x4, offset = 0x4, fixed_abs, tag = 'smem constant byte address 0x4 - core index']
  #allocation1 [shape = 'u32[144,128]{1,0:T(1,128)}', space=vmem, size = 0x12000, scoped, tag = 'internal scratch']
  #allocation2 [shape = 'f32[8,32]{1,0:T(8,128)}', space=vmem, size = 0x1000, scoped, tag = 'scratch operand']
  %s0 = inlined_call_operand.vmem [shape: bf16[4,8,512], index: 0, kind: input, shape index: {}]
  %s1 = inlined_call_operand.vmem [shape: bf16[4,512,32], index: 1, kind: input, shape index: {}]
  %s2 = inlined_call_operand.vmem [shape: f32[4,8,32], index: 2, kind: output, shape index: {0}]
  %s3 = inlined_call_operand.vmem [shape: f32[1,32], index: 3, kind: output, shape index: {1}]
  %s4 = inlined_call_operand.vmem [shape: f32[1,32], index: 4, kind: output, shape index: {2}]
  %5 = xla_tuple %s2, %s3, %s4
  %s6 = sld [smem:[#allocation0]]
  $region69: #{_lambda_.27} parent=0
    _
  %s8 = ssub.s32 1, %s6
  %s9 = scalar_select 0, %s8, %s6
  loop: start=0, step=1, limit=6
  $region2: #{_lambda_.27} parent=0 // loop_pre_header
    _
  $region3: #{_lambda_.27} parent=0 // loop_header
    %s11 = sphi 0, %s15
    %p12 = scmp.ge.s32.totalorder %s11, 6
    %s18 = sphi 0, %s37
    %s19 = sphi 0, %s33
    %s20 = sphi 0, %s29
    %s21 = sphi 0, %s18
    %s22 = sphi 0, %s19
    %s23 = sphi 0, %s20
    %s24 = sphi 0, %s21
    %s25 = sphi 0, %s22
    %s26 = sphi 0, %s23
    %s44 = sphi 0, %s46
    %s47 = sphi 0, %s44
    %s48 = sphi 0, %s47
    %s64 = sphi 0, %s48
    %s72 = sphi 0, %s74
    %s75 = sphi 0, %s72
    %s76 = sphi 0, %s75
    %s92 = sphi 0, %s76
    %s100 = sphi 0, %s102
    %s103 = sphi 0, %s100
    %s104 = sphi 0, %s103
    %s120 = sphi 0, %s104
    %s124 = sphi 0, %s124
    %s126 = sphi 0, %s124
    %s127 = sphi 0, %s126
    %s141 = sphi 0, %s127
    %s145 = sphi 0, %s145
    %s147 = sphi 0, %s145
    %s148 = sphi 0, %s147
    %s162 = sphi 0, %s148
  $region4: #{_lambda_.27} parent=0 // loop_header_branch
    %14 = sbr.rel (%p12) target = $region8
  $region5: #{_lambda_.27} parent=0 // loop_body
    %s16 = ssub.s32 %s11, 1
    %s17 = ssub.s32 %s11, 2
    %s27 = sadd.s32 1, %s20
    %p28 = scmp.ge.s32.totalorder %s27, 1
    %s29 = scalar_select %p28, 0, %s27
    %s30 = sadd.s32 1, %s19
    %s31 = scalar_select %p28, %s30, %s19
    %p32 = scmp.ge.s32.totalorder %s31, 1
    %s33 = scalar_select %p32, 0, %s31
    %s34 = sadd.s32 1, %s18
    %s35 = scalar_select %p32, %s34, %s18
    %p36 = scmp.ge.s32.totalorder %s35, 4
    %s37 = scalar_select %p36, 0, %s35
    %s38 = ssub.s32 %s18, %s37
    %s39 = ssub.s32 %s19, %s33
    %s40 = sor.u32 %s38, %s39
    %s41 = ssub.s32 %s20, %s29
    %s42 = sor.u32 %s40, %s41
    %p43 = scmp.eq.s32.totalorder %s42, 0
    %s45 = sadd.s32 %s44, 1
    %s46 = scalar_select %p43, %s44, %s45
    %p49 = pneg %p43
    %p50 = scmp.eq.s32.totalorder %s11, 3
    %p51 = por %p49, %p50
    %p52 = scmp.ne.s32.totalorder %s44, %s47
    %p53 = scmp.eq.s32.totalorder %s11, 0
    %p54 = por %p52, %p53
    %p55 = scmp.ne.s32.totalorder %s44, %s47
    %p56 = scmp.eq.s32.totalorder %s16, 3
    %p57 = por %p55, %p56
    %p58 = scmp.ne.s32.totalorder %s47, %s48
    %p59 = scmp.eq.s32.totalorder %s16, 0
    %p60 = por %p58, %p59
    %p61 = scmp.ne.s32.totalorder %s47, %s48
    %p62 = scmp.eq.s32.totalorder %s17, 3
    %p63 = por %p61, %p62
    %p65 = scmp.ne.s32.totalorder %s48, %s64
    %p66 = scmp.eq.s32.totalorder %s17, 0
    %p67 = por %p65, %p66
    %s68 = ssub.s32 %s18, %s37
    %s69 = ssub.s32 %s20, %s29
    %s70 = sor.u32 %s68, %s69
    %p71 = scmp.eq.s32.totalorder %s70, 0
    %s73 = sadd.s32 %s72, 1
    %s74 = scalar_select %p71, %s72, %s73
    %p77 = pneg %p71
    %p78 = scmp.eq.s32.totalorder %s11, 3
    %p79 = por %p77, %p78
    %p80 = scmp.ne.s32.totalorder %s72, %s75
    %p81 = scmp.eq.s32.totalorder %s11, 0
    %p82 = por %p80, %p81
    %p83 = scmp.ne.s32.totalorder %s72, %s75
    %p84 = scmp.eq.s32.totalorder %s16, 3
    %p85 = por %p83, %p84
    %p86 = scmp.ne.s32.totalorder %s75, %s76
    %p87 = scmp.eq.s32.totalorder %s16, 0
    %p88 = por %p86, %p87
    %p89 = scmp.ne.s32.totalorder %s75, %s76
    %p90 = scmp.eq.s32.totalorder %s17, 3
    %p91 = por %p89, %p90
    %p93 = scmp.ne.s32.totalorder %s76, %s92
    %p94 = scmp.eq.s32.totalorder %s17, 0
    %p95 = por %p93, %p94
    %s96 = ssub.s32 %s18, %s37
    %s97 = ssub.s32 %s19, %s33
    %s98 = sor.u32 %s96, %s97
    %p99 = scmp.eq.s32.totalorder %s98, 0
    %s101 = sadd.s32 %s100, 1
    %s102 = scalar_select %p99, %s100, %s101
    %p105 = pneg %p99
    %p106 = scmp.eq.s32.totalorder %s11, 3
    %p107 = por %p105, %p106
    %p108 = scmp.ne.s32.totalorder %s100, %s103
    %p109 = scmp.eq.s32.totalorder %s11, 0
    %p110 = por %p108, %p109
    %p111 = scmp.ne.s32.totalorder %s100, %s103
    %p112 = scmp.eq.s32.totalorder %s16, 3
    %p113 = por %p111, %p112
    %p114 = scmp.ne.s32.totalorder %s103, %s104
    %p115 = scmp.eq.s32.totalorder %s16, 0
    %p116 = por %p114, %p115
    %p117 = scmp.ne.s32.totalorder %s103, %s104
    %p118 = scmp.eq.s32.totalorder %s17, 3
    %p119 = por %p117, %p118
    %p121 = scmp.ne.s32.totalorder %s104, %s120
    %p122 = scmp.eq.s32.totalorder %s17, 0
    %p123 = por %p121, %p122
    %s125 = sadd.s32 %s124, 1
    %p128 = scmp.eq.s32.totalorder %s11, 3
    %p129 = scmp.ne.s32.totalorder %s124, %s126
    %p130 = scmp.eq.s32.totalorder %s11, 0
    %p131 = por %p129, %p130
    %p132 = scmp.ne.s32.totalorder %s124, %s126
    %p133 = scmp.eq.s32.totalorder %s16, 3
    %p134 = por %p132, %p133
    %p135 = scmp.ne.s32.totalorder %s126, %s127
    %p136 = scmp.eq.s32.totalorder %s16, 0
    %p137 = por %p135, %p136
    %p138 = scmp.ne.s32.totalorder %s126, %s127
    %p139 = scmp.eq.s32.totalorder %s17, 3
    %p140 = por %p138, %p139
    %p142 = scmp.ne.s32.totalorder %s127, %s141
    %p143 = scmp.eq.s32.totalorder %s17, 0
    %p144 = por %p142, %p143
    %s146 = sadd.s32 %s145, 1
    %p149 = scmp.eq.s32.totalorder %s11, 3
    %p150 = scmp.ne.s32.totalorder %s145, %s147
    %p151 = scmp.eq.s32.totalorder %s11, 0
    %p152 = por %p150, %p151
    %p153 = scmp.ne.s32.totalorder %s145, %s147
    %p154 = scmp.eq.s32.totalorder %s16, 3
    %p155 = por %p153, %p154
    %p156 = scmp.ne.s32.totalorder %s147, %s148
    %p157 = scmp.eq.s32.totalorder %s16, 0
    %p158 = por %p156, %p157
    %p159 = scmp.ne.s32.totalorder %s147, %s148
    %p160 = scmp.eq.s32.totalorder %s17, 3
    %p161 = por %p159, %p160
    %p163 = scmp.ne.s32.totalorder %s148, %s162
    %p164 = scmp.eq.s32.totalorder %s17, 0
    %p165 = por %p163, %p164
    %p166 = scmp.le.s32.totalorder 1, %s11
    %p167 = scmp.lt.s32.totalorder %s11, 5
    %p168 = pnand %p166, %p167
    %p169 = pneg %p168
    // Predicated region
    $region9: #{_lambda_.27} parent=5 // pred_check
      _
    $region10: #{_lambda_.27} parent=5 // pred_check_branch
      %171 = sbr.rel (%p168) target = $region12
    $region11: #{_lambda_.27} parent=5 // pred_region
      %s172 = ssub.s32 %s11, 1
    $region12: #{_lambda_.27} parent=5 // pred_fallthru
      _
    %p173 = scmp.lt.s32.totalorder %s11, 4
    // Predicated region
    $region13: #{_lambda_.27} parent=5 // pred_check
      %p174 = pneg %p173
    $region14: #{_lambda_.27} parent=5 // pred_check_branch
      %176 = sbr.rel (%p174) target = $region16
    $region15: #{_lambda_.27} parent=5 // pred_region
      // Predicated region
      $region17: #{_lambda_.27} parent=15 // pred_check
        %p177 = pneg %p54
      $region18: #{_lambda_.27} parent=15 // pred_check_branch
        %179 = sbr.rel (%p177) target = $region20
      $region19: #{_lambda_.27} parent=15 // pred_region
        %s180 = smul.u32 4, %s20
        %p181 = scmp.lt.s32.totalorder %s18, 3
        %s182 = scalar_select %p181, %s18, 3
        %p183 = scmp.lt.s32.totalorder %s19, 0
        %s184 = scalar_select %p183, %s19, 0
        %p185 = scmp.lt.s32.totalorder %s180, 3
        %s186 = scalar_select %p185, %s180, 3
        %s187 = smul.addr %s184, 4
        %s188 = sadd.s32 %s186, %s187
        %s189 = smul.addr %s182, 4
        %s190 = sadd.s32 %s188, %s189
        %s191 = smul.addr %s190, 4
        %s192 = scalar_lea.vmem %s0, %s191
        %s193 = smul.u32 4, %s20
      $region20: #{_lambda_.27} parent=15 // pred_fallthru
        _
      // Predicated region
      $region21: #{_lambda_.27} parent=15 // pred_check
        %p194 = pneg %p82
      $region22: #{_lambda_.27} parent=15 // pred_check_branch
        %196 = sbr.rel (%p194) target = $region24
      $region23: #{_lambda_.27} parent=15 // pred_region
        %s197 = smul.u32 64, %s20
        %p198 = scmp.lt.s32.totalorder %s18, 3
        %s199 = scalar_select %p198, %s18, 3
        %p200 = scmp.lt.s32.totalorder %s197, 63
        %s201 = scalar_select %p200, %s197, 63
        %s202 = smul.addr %s199, 64
        %s203 = sadd.s32 %s201, %s202
        %s204 = smul.addr %s203, 4
        %s205 = scalar_lea.vmem %s1, %s204
        %s206 = smul.u32 64, %s20
      $region24: #{_lambda_.27} parent=15 // pred_fallthru
        _
    $region16: #{_lambda_.27} parent=5 // pred_fallthru
      _
    %p207 = scmp.le.s32.totalorder 1, %s11
    %p208 = scmp.lt.s32.totalorder %s11, 5
    %p209 = pnand %p207, %p208
    %p210 = pneg %p209
    // Predicated region
    $region25: #{_lambda_.27} parent=5 // pred_check
      _
    $region26: #{_lambda_.27} parent=5 // pred_check_branch
      %212 = sbr.rel (%p209) target = $region28
    $region27: #{_lambda_.27} parent=5 // pred_region
      %s213 = ssub.s32 %s11, 1
      %s214 = smul.u32 4, %s23
      %p215 = scmp.lt.s32.totalorder %s21, 3
      %s216 = scalar_select %p215, %s21, 3
      %p217 = scmp.lt.s32.totalorder %s22, 0
      %s218 = scalar_select %p217, %s22, 0
      %p219 = scmp.lt.s32.totalorder %s214, 3
      %s220 = scalar_select %p219, %s214, 3
      %s221 = smul.addr %s218, 4
      %s222 = sadd.s32 %s220, %s221
      %s223 = smul.addr %s216, 4
      %s224 = sadd.s32 %s222, %s223
      %s225 = smul.addr %s224, 4
      %s226 = scalar_lea.vmem %s0, %s225
      %p227 = pneg %p60
      %p228 = pneg %p57
      %s229 = smul.u32 64, %s23
      %p230 = scmp.lt.s32.totalorder %s21, 3
      %s231 = scalar_select %p230, %s21, 3
      %p232 = scmp.lt.s32.totalorder %s229, 63
      %s233 = scalar_select %p232, %s229, 63
      %s234 = smul.addr %s231, 64
      %s235 = sadd.s32 %s233, %s234
      %s236 = smul.addr %s235, 4
      %s237 = scalar_lea.vmem %s1, %s236
      %p238 = pneg %p88
      %p239 = pneg %p85
      %p240 = pneg %p116
      %p241 = pneg %p113
      %p242 = scmp.lt.s32.totalorder %s21, 3
      %s243 = scalar_select %p242, %s21, 3
      %p244 = scmp.lt.s32.totalorder %s22, 0
      %s245 = scalar_select %p244, %s22, 0
      %s246 = sadd.s32 %s245, %s243
      %s247 = smul.addr %s246, 8
      %s248 = scalar_lea.vmem %s2, %s247
      %p249 = pneg %p137
      %p250 = pneg %p134
      %p251 = pneg %p158
      %p252 = pneg %p155
      %s253 = smul.u32 4, %s23
      %p254 = scmp.lt.s32.totalorder %s21, 3
      %s255 = scalar_select %p254, %s21, 3
      %p256 = scmp.lt.s32.totalorder %s22, 0
      %s257 = scalar_select %p256, %s22, 0
      %p258 = scmp.lt.s32.totalorder %s253, 3
      %s259 = scalar_select %p258, %s253, 3
      %s260 = smul.addr %s257, 4
      %s261 = sadd.s32 %s259, %s260
      %s262 = smul.addr %s255, 4
      %s263 = sadd.s32 %s261, %s262
      %s264 = smul.addr %s263, 4
      %s265 = scalar_lea.vmem %s0, %s264
      %s266 = smul.u32 4, %s23
      %s267 = smul.u32 64, %s23
      %p268 = scmp.lt.s32.totalorder %s21, 3
      %s269 = scalar_select %p268, %s21, 3
      %p270 = scmp.lt.s32.totalorder %s267, 63
      %s271 = scalar_select %p270, %s267, 63
      %s272 = smul.addr %s269, 64
      %s273 = sadd.s32 %s271, %s272
      %s274 = smul.addr %s273, 4
      %s275 = scalar_lea.vmem %s1, %s274
      %s276 = smul.u32 64, %s23
      %p277 = scmp.lt.s32.totalorder %s21, 3
      %s278 = scalar_select %p277, %s21, 3
      %p279 = scmp.lt.s32.totalorder %s22, 0
      %s280 = scalar_select %p279, %s22, 0
      %s281 = sadd.s32 %s280, %s278
      %s282 = smul.addr %s281, 8
      %s283 = scalar_lea.vmem %s2, %s282
      %p285 = scmp.eq.s32.totalorder %s23, 0
      // Predicated region
      $region29: #{_lambda_.27} parent=27 // pred_check
        %p286 = pneg %p285
      $region30: #{_lambda_.27} parent=27 // pred_check_branch
        %288 = sbr.rel (%p286) target = $region32
      $region31: #{_lambda_.27} parent=27 // pred_region
        %vm289 = vcmask 261120
        %290 = vst.msk [vmem:[#allocation2] sm:$0xff] %vm289, 0.0
      $region32: #{_lambda_.27} parent=27 // pred_fallthru
        _
      %p291 = scmp.eq.s32.totalorder %s21, 0
      %p292 = scmp.eq.s32.totalorder %s22, 0
      %p293 = pnand %p291, %p292
      %p294 = pneg %p293
      %p295 = pnand %p294, %p285
      %p296 = pneg %p295
      // Predicated region
      $region33: #{_lambda_.27} parent=27 // pred_check
        _
      $region34: #{_lambda_.27} parent=27 // pred_check_branch
        %298 = sbr.rel (%p295) target = $region36
      $region35: #{_lambda_.27} parent=27 // pred_region
        %vm299 = vcmask 253952
        %300 = vst.msk [vmem:[%s3] sm:$0x1] %vm299, 0.0
        %301 = vst.msk [vmem:[%s4] sm:$0x1] %vm299, 0.0
      $region36: #{_lambda_.27} parent=27 // pred_fallthru
        _
      %v302 = vld [vmem:[%s265] sm:$0xff]
      %v303 = vld [vmem:[%s265 + $0x8] sm:$0xff]
      %v304 = vmax.bf16 %v302, 0
      %v305 = vmax.bf16 %v303, 0
      %v306 = vld [vmem:[#allocation2] sm:$0xff]
      %v307 = vld [vmem:[%s275] sm:$0xf]
      %v308 = vld [vmem:[%s275 + $0x4] sm:$0xf]
      %v309 = vld [vmem:[%s275 + $0x8] sm:$0xf]
      %v310 = vld [vmem:[%s275 + $0xc] sm:$0xf]
      %v311 = vld [vmem:[%s275 + $0x10] sm:$0xf]
      %v312 = vld [vmem:[%s275 + $0x14] sm:$0xf]
      %v313 = vld [vmem:[%s275 + $0x18] sm:$0xf]
      %v314 = vld [vmem:[%s275 + $0x1c] sm:$0xf]
      %v315 = vld [vmem:[%s275 + $0x20] sm:$0xf]
      %v316 = vld [vmem:[%s275 + $0x24] sm:$0xf]
      %v317 = vld [vmem:[%s275 + $0x28] sm:$0xf]
      %v318 = vld [vmem:[%s275 + $0x2c] sm:$0xf]
      %v319 = vld [vmem:[%s275 + $0x30] sm:$0xf]
      %v320 = vld [vmem:[%s275 + $0x34] sm:$0xf]
      %v321 = vld [vmem:[%s275 + $0x38] sm:$0xf]
      %v322 = vld [vmem:[%s275 + $0x3c] sm:$0xf]
      %v323 = vld [vmem:[%s275 + $0x40] sm:$0xf]
      %v324 = vld [vmem:[%s275 + $0x44] sm:$0xf]
      %v325 = vld [vmem:[%s275 + $0x48] sm:$0xf]
      %v326 = vld [vmem:[%s275 + $0x4c] sm:$0xf]
      %v327 = vld [vmem:[%s275 + $0x50] sm:$0xf]
      %v328 = vld [vmem:[%s275 + $0x54] sm:$0xf]
      %v329 = vld [vmem:[%s275 + $0x58] sm:$0xf]
      %v330 = vld [vmem:[%s275 + $0x5c] sm:$0xf]
      %v331 = vld [vmem:[%s275 + $0x60] sm:$0xf]
      %v332 = vld [vmem:[%s275 + $0x64] sm:$0xf]
      %v333 = vld [vmem:[%s275 + $0x68] sm:$0xf]
      %v334 = vld [vmem:[%s275 + $0x6c] sm:$0xf]
      %v335 = vld [vmem:[%s275 + $0x70] sm:$0xf]
      %v336 = vld [vmem:[%s275 + $0x74] sm:$0xf]
      %v337 = vld [vmem:[%s275 + $0x78] sm:$0xf]
      %v338 = vld [vmem:[%s275 + $0x7c] sm:$0xf]
      %v339 = vld [vmem:[%s275 + $0x80] sm:$0xf]
      %v340 = vld [vmem:[%s275 + $0x84] sm:$0xf]
      %v341 = vld [vmem:[%s275 + $0x88] sm:$0xf]
      %v342 = vld [vmem:[%s275 + $0x8c] sm:$0xf]
      %v343 = vld [vmem:[%s275 + $0x90] sm:$0xf]
      %v344 = vld [vmem:[%s275 + $0x94] sm:$0xf]
      %v345 = vld [vmem:[%s275 + $0x98] sm:$0xf]
      %v346 = vld [vmem:[%s275 + $0x9c] sm:$0xf]
      %v347 = vld [vmem:[%s275 + $0xa0] sm:$0xf]
      %v348 = vld [vmem:[%s275 + $0xa4] sm:$0xf]
      %v349 = vld [vmem:[%s275 + $0xa8] sm:$0xf]
      %v350 = vld [vmem:[%s275 + $0xac] sm:$0xf]
      %v351 = vld [vmem:[%s275 + $0xb0] sm:$0xf]
      %v352 = vld [vmem:[%s275 + $0xb4] sm:$0xf]
      %v353 = vld [vmem:[%s275 + $0xb8] sm:$0xf]
      %v354 = vld [vmem:[%s275 + $0xbc] sm:$0xf]
      %v355 = vld [vmem:[%s275 + $0xc0] sm:$0xf]
      %v356 = vld [vmem:[%s275 + $0xc4] sm:$0xf]
      %v357 = vld [vmem:[%s275 + $0xc8] sm:$0xf]
      %v358 = vld [vmem:[%s275 + $0xcc] sm:$0xf]
      %v359 = vld [vmem:[%s275 + $0xd0] sm:$0xf]
      %v360 = vld [vmem:[%s275 + $0xd4] sm:$0xf]
      %v361 = vld [vmem:[%s275 + $0xd8] sm:$0xf]
      %v362 = vld [vmem:[%s275 + $0xdc] sm:$0xf]
      %v363 = vld [vmem:[%s275 + $0xe0] sm:$0xf]
      %v364 = vld [vmem:[%s275 + $0xe4] sm:$0xf]
      %v365 = vld [vmem:[%s275 + $0xe8] sm:$0xf]
      %v366 = vld [vmem:[%s275 + $0xec] sm:$0xf]
      %v367 = vld [vmem:[%s275 + $0xf0] sm:$0xf]
      %v368 = vld [vmem:[%s275 + $0xf4] sm:$0xf]
      %v369 = vld [vmem:[%s275 + $0xf8] sm:$0xf]
      %v370 = vld [vmem:[%s275 + $0xfc] sm:$0xf]
      %v373 = vunpack.c.l.b16 %v304
      %v374 = vunpack.c.h.b16 %v304
      %v375 = vunpack.c.l.b16 %v305
      %v376 = vunpack.c.h.b16 %v305
      %v377 = vpack.c.b16 %v373, %v373
      %v378 = vpack.c.b16 %v374, %v374
      %v379 = vpack.c.b16 %v375, %v375
      %v380 = vpack.c.b16 %v376, %v376
      %v449 = vunpack.c.l.b16 %v307
      %v450 = vunpack.c.l.b16 %v308
      %v451 = vunpack.c.l.b16 %v309
      %v452 = vunpack.c.l.b16 %v310
      %v453 = vunpack.c.l.b16 %v311
      %v454 = vunpack.c.l.b16 %v312
      %v455 = vunpack.c.l.b16 %v313
      %v456 = vunpack.c.l.b16 %v314
      %v457 = vunpack.c.l.b16 %v315
      %v458 = vunpack.c.l.b16 %v316
      %v459 = vunpack.c.l.b16 %v317
      %v460 = vunpack.c.l.b16 %v318
      %v461 = vunpack.c.l.b16 %v319
      %v462 = vunpack.c.l.b16 %v320
      %v463 = vunpack.c.l.b16 %v321
      %v464 = vunpack.c.l.b16 %v322
      %v465 = vunpack.c.l.b16 %v323
      %v466 = vunpack.c.l.b16 %v324
      %v467 = vunpack.c.l.b16 %v325
      %v468 = vunpack.c.l.b16 %v326
      %v469 = vunpack.c.l.b16 %v327
      %v470 = vunpack.c.l.b16 %v328
      %v471 = vunpack.c.l.b16 %v329
      %v472 = vunpack.c.l.b16 %v330
      %v473 = vunpack.c.l.b16 %v331
      %v474 = vunpack.c.l.b16 %v332
      %v475 = vunpack.c.l.b16 %v333
      %v476 = vunpack.c.l.b16 %v334
      %v477 = vunpack.c.l.b16 %v335
      %v478 = vunpack.c.l.b16 %v336
      %v479 = vunpack.c.l.b16 %v337
      %v480 = vunpack.c.l.b16 %v338
      %v481 = vunpack.c.l.b16 %v339
      %v482 = vunpack.c.l.b16 %v340
      %v483 = vunpack.c.l.b16 %v341
      %v484 = vunpack.c.l.b16 %v342
      %v485 = vunpack.c.l.b16 %v343
      %v486 = vunpack.c.l.b16 %v344
      %v487 = vunpack.c.l.b16 %v345
      %v488 = vunpack.c.l.b16 %v346
      %v489 = vunpack.c.l.b16 %v347
      %v490 = vunpack.c.l.b16 %v348
      %v491 = vunpack.c.l.b16 %v349
      %v492 = vunpack.c.l.b16 %v350
      %v493 = vunpack.c.l.b16 %v351
      %v494 = vunpack.c.l.b16 %v352
      %v495 = vunpack.c.l.b16 %v353
      %v496 = vunpack.c.l.b16 %v354
      %v497 = vunpack.c.l.b16 %v355
      %v498 = vunpack.c.l.b16 %v356
      %v499 = vunpack.c.l.b16 %v357
      %v500 = vunpack.c.l.b16 %v358
      %v501 = vunpack.c.l.b16 %v359
      %v502 = vunpack.c.l.b16 %v360
      %v503 = vunpack.c.l.b16 %v361
      %v504 = vunpack.c.l.b16 %v362
      %v505 = vunpack.c.l.b16 %v363
      %v506 = vunpack.c.l.b16 %v364
      %v507 = vunpack.c.l.b16 %v365
      %v508 = vunpack.c.l.b16 %v366
      %v509 = vunpack.c.l.b16 %v367
      %v510 = vunpack.c.l.b16 %v368
      %v511 = vunpack.c.l.b16 %v369
      %v512 = vunpack.c.l.b16 %v370
      %v513 = vpack.c.b16 %v450, %v449
      %v514 = vpack.c.b16 %v452, %v451
      %v515 = vpack.c.b16 %v454, %v453
      %v516 = vpack.c.b16 %v456, %v455
      %v517 = vpack.c.b16 %v458, %v457
      %v518 = vpack.c.b16 %v460, %v459
      %v519 = vpack.c.b16 %v462, %v461
      %v520 = vpack.c.b16 %v464, %v463
      %v521 = vpack.c.b16 %v466, %v465
      %v522 = vpack.c.b16 %v468, %v467
      %v523 = vpack.c.b16 %v470, %v469
      %v524 = vpack.c.b16 %v472, %v471
      %v525 = vpack.c.b16 %v474, %v473
      %v526 = vpack.c.b16 %v476, %v475
      %v527 = vpack.c.b16 %v478, %v477
      %v528 = vpack.c.b16 %v480, %v479
      %v529 = vpack.c.b16 %v482, %v481
      %v530 = vpack.c.b16 %v484, %v483
      %v531 = vpack.c.b16 %v486, %v485
      %v532 = vpack.c.b16 %v488, %v487
      %v533 = vpack.c.b16 %v490, %v489
      %v534 = vpack.c.b16 %v492, %v491
      %v535 = vpack.c.b16 %v494, %v493
      %v536 = vpack.c.b16 %v496, %v495
      %v537 = vpack.c.b16 %v498, %v497
      %v538 = vpack.c.b16 %v500, %v499
      %v539 = vpack.c.b16 %v502, %v501
      %v540 = vpack.c.b16 %v504, %v503
      %v541 = vpack.c.b16 %v506, %v505
      %v542 = vpack.c.b16 %v508, %v507
      %v543 = vpack.c.b16 %v510, %v509
      %v544 = vpack.c.b16 %v512, %v511
      %577 = vmatprep.subr.bf16.mxu0 0
      %578 = vmatpush1.bf16.msra.mxu0 %v513
      %579 = vmatprep.subr.bf16.mxu0 0
      %580 = vmatpush1.bf16.msra.mxu0 %v514
      %581 = vmatprep.subr.bf16.mxu0 0
      %582 = vmatpush1.bf16.msra.mxu0 %v515
      %583 = vmatprep.subr.bf16.mxu0 0
      %584 = vmatpush1.bf16.msra.mxu0 %v516
      %585 = vmatprep.subr.bf16.mxu0 0
      %586 = vmatpush1.bf16.msra.mxu0 %v517
      %587 = vmatprep.subr.bf16.mxu0 0
      %588 = vmatpush1.bf16.msra.mxu0 %v518
      %589 = vmatprep.subr.bf16.mxu0 0
      %590 = vmatpush1.bf16.msra.mxu0 %v519
      %591 = vmatprep.subr.bf16.mxu0 0
      %592 = vmatpush1.bf16.msra.mxu0 %v520
      %593 = vmatprep.subr.bf16.mxu0 0
      %594 = vmatpush1.bf16.msra.mxu0 %v521
      %595 = vmatprep.subr.bf16.mxu0 0
      %596 = vmatpush1.bf16.msra.mxu0 %v522
      %597 = vmatprep.subr.bf16.mxu0 0
      %598 = vmatpush1.bf16.msra.mxu0 %v523
      %599 = vmatprep.subr.bf16.mxu0 0
      %600 = vmatpush1.bf16.msra.mxu0 %v524
      %601 = vmatprep.subr.bf16.mxu0 0
      %602 = vmatpush1.bf16.msra.mxu0 %v525
      %603 = vmatprep.subr.bf16.mxu0 0
      %604 = vmatpush1.bf16.msra.mxu0 %v526
      %605 = vmatprep.subr.bf16.mxu0 0
      %606 = vmatpush1.bf16.msra.mxu0 %v527
      %607 = vmatprep.subr.bf16.mxu0 0
      %608 = vmatpush1.bf16.msra.mxu0 %v528
      %609 = vmatprep.mubr.bf16.mxu0 %v378
      %610 = vmatmul.mubr.bf16.gmra.mrb[0].mxu0 %v377
      %v611 = vpop.f32.mrb[0].mxu0
      %v612 = vadd.f32 0.0, %v611
      %v613 = vpop.f32.mrb[0].mxu0
      %v614 = vpop.f32.mrb[0].mxu0
      %v615 = vpop.f32.mrb[0].mxu0
      %616 = vdwg.mxu0
      %617 = vmatprep.subr.bf16.mxu0 0
      %618 = vmatpush1.bf16.msra.mxu0 %v529
      %619 = vmatprep.subr.bf16.mxu0 0
      %620 = vmatpush1.bf16.msra.mxu0 %v530
      %621 = vmatprep.subr.bf16.mxu0 0
      %622 = vmatpush1.bf16.msra.mxu0 %v531
      %623 = vmatprep.subr.bf16.mxu0 0
      %624 = vmatpush1.bf16.msra.mxu0 %v532
      %625 = vmatprep.subr.bf16.mxu0 0
      %626 = vmatpush1.bf16.msra.mxu0 %v533
      %627 = vmatprep.subr.bf16.mxu0 0
      %628 = vmatpush1.bf16.msra.mxu0 %v534
      %629 = vmatprep.subr.bf16.mxu0 0
      %630 = vmatpush1.bf16.msra.mxu0 %v535
      %631 = vmatprep.subr.bf16.mxu0 0
      %632 = vmatpush1.bf16.msra.mxu0 %v536
      %633 = vmatprep.subr.bf16.mxu0 0
      %634 = vmatpush1.bf16.msra.mxu0 %v537
      %635 = vmatprep.subr.bf16.mxu0 0
      %636 = vmatpush1.bf16.msra.mxu0 %v538
      %637 = vmatprep.subr.bf16.mxu0 0
      %638 = vmatpush1.bf16.msra.mxu0 %v539
      %639 = vmatprep.subr.bf16.mxu0 0
      %640 = vmatpush1.bf16.msra.mxu0 %v540
      %641 = vmatprep.subr.bf16.mxu0 0
      %642 = vmatpush1.bf16.msra.mxu0 %v541
      %643 = vmatprep.subr.bf16.mxu0 0
      %644 = vmatpush1.bf16.msra.mxu0 %v542
      %645 = vmatprep.subr.bf16.mxu0 0
      %646 = vmatpush1.bf16.msra.mxu0 %v543
      %647 = vmatprep.subr.bf16.mxu0 0
      %648 = vmatpush1.bf16.msra.mxu0 %v544
      %649 = vmatprep.mubr.bf16.mxu0 %v380
      %650 = vmatmul.mubr.bf16.gmra.mrb[0].mxu0 %v379
      %v651 = vpop.f32.mrb[0].mxu0
      %v652 = vadd.f32 %v612, %v651
      %v653 = vpop.f32.mrb[0].mxu0
      %v654 = vpop.f32.mrb[0].mxu0
      %v655 = vpop.f32.mrb[0].mxu0
      %656 = vdwg.mxu0
      %v657 = vadd.f32 %v306, %v652
      %vm658 = vcmask 261120
      %659 = vst.msk [vmem:[#allocation2] sm:$0xff] %vm658, %v657
      // Predicated region
      $region37: #{_lambda_.27} parent=27 // pred_check
        %p660 = pneg %p285
      $region38: #{_lambda_.27} parent=27 // pred_check_branch
        %662 = sbr.rel (%p660) target = $region40
      $region39: #{_lambda_.27} parent=27 // pred_region
        %v663 = vld [vmem:[#allocation2] sm:$0xff]
        %664 = vst.msk [vmem:[%s283] sm:$0xff] %vm658, %v663
        %v665 = vld [vmem:[%s3] sm:$0x1]
        %v666 = vsel %vm658, %v663, 0.0
        %v667 = vrot.slane %v666, 4
        %v668 = vadd.f32 %v666, %v667
        %v669 = vrot.slane %v668, 2
        %v670 = vadd.f32 %v668, %v669
        %v671 = vrot.slane %v670, 1
        %v672 = vadd.f32 %v670, %v671
        %v673 = vadd.f32 %v665, %v672
        %vm674 = vcmask 253952
        %675 = vst.msk [vmem:[%s3] sm:$0x1] %vm674, %v673
        %v676 = vld [vmem:[%s4] sm:$0x1]
        %v677 = vmul.f32 %v663, %v663
        %v678 = vsel %vm658, %v677, 0.0
        %v679 = vrot.slane %v678, 4
        %v680 = vadd.f32 %v678, %v679
        %v681 = vrot.slane %v680, 2
        %v682 = vadd.f32 %v680, %v681
        %v683 = vrot.slane %v682, 1
        %v684 = vadd.f32 %v682, %v683
        %v685 = vadd.f32 %v676, %v684
        %686 = vst.msk [vmem:[%s4] sm:$0x1] %vm674, %v685
      $region40: #{_lambda_.27} parent=27 // pred_fallthru
        _
      %p687 = scmp.lt.s32.totalorder %s21, 3
      %s688 = scalar_select %p687, %s21, 3
      %p689 = scmp.lt.s32.totalorder %s22, 0
      %s690 = scalar_select %p689, %s22, 0
      %s691 = sadd.s32 %s690, %s688
      %s692 = smul.addr %s691, 8
      %s693 = scalar_lea.vmem %s2, %s692
      // Predicated region
      $region41: #{_lambda_.27} parent=27 // pred_check
        %p694 = pneg %p113
      $region42: #{_lambda_.27} parent=27 // pred_check_branch
        %696 = sbr.rel (%p694) target = $region44
      $region43: #{_lambda_.27} parent=27 // pred_region
        _
      $region44: #{_lambda_.27} parent=27 // pred_fallthru
        _
      // Predicated region
      $region45: #{_lambda_.27} parent=27 // pred_check
        %p697 = pneg %p134
      $region46: #{_lambda_.27} parent=27 // pred_check_branch
        %699 = sbr.rel (%p697) target = $region48
      $region47: #{_lambda_.27} parent=27 // pred_region
        _
      $region48: #{_lambda_.27} parent=27 // pred_fallthru
        _
      // Predicated region
      $region49: #{_lambda_.27} parent=27 // pred_check
        %p700 = pneg %p155
      $region50: #{_lambda_.27} parent=27 // pred_check_branch
        %702 = sbr.rel (%p700) target = $region52
      $region51: #{_lambda_.27} parent=27 // pred_region
        _
      $region52: #{_lambda_.27} parent=27 // pred_fallthru
        _
      // Predicated region
      $region53: #{_lambda_.27} parent=27 // pred_check
        %p703 = pneg %p134
      $region54: #{_lambda_.27} parent=27 // pred_check_branch
        %705 = sbr.rel (%p703) target = $region56
      $region55: #{_lambda_.27} parent=27 // pred_region
        _
      $region56: #{_lambda_.27} parent=27 // pred_fallthru
        _
      // Predicated region
      $region57: #{_lambda_.27} parent=27 // pred_check
        %p706 = pneg %p155
      $region58: #{_lambda_.27} parent=27 // pred_check_branch
        %708 = sbr.rel (%p706) target = $region60
      $region59: #{_lambda_.27} parent=27 // pred_region
        _
      $region60: #{_lambda_.27} parent=27 // pred_fallthru
        _
    $region28: #{_lambda_.27} parent=5 // pred_fallthru
      _
    %p709 = scmp.le.s32.totalorder 2, %s11
    // Predicated region
    $region61: #{_lambda_.27} parent=5 // pred_check
      %p710 = pneg %p709
    $region62: #{_lambda_.27} parent=5 // pred_check_branch
      %712 = sbr.rel (%p710) target = $region64
    $region63: #{_lambda_.27} parent=5 // pred_region
      %s713 = ssub.s32 %s11, 2
      // Predicated region
      $region65: #{_lambda_.27} parent=63 // pred_check
        %p714 = pneg %p119
      $region66: #{_lambda_.27} parent=63 // pred_check_branch
        %716 = sbr.rel (%p714) target = $region68
      $region67: #{_lambda_.27} parent=63 // pred_region
        %p717 = scmp.lt.s32.totalorder %s24, 3
        %s718 = scalar_select %p717, %s24, 3
        %p719 = scmp.lt.s32.totalorder %s25, 0
        %s720 = scalar_select %p719, %s25, 0
        %s721 = sadd.s32 %s720, %s718
        %s722 = smul.addr %s721, 8
        %s723 = scalar_lea.vmem %s2, %s722
      $region68: #{_lambda_.27} parent=63 // pred_fallthru
        _
    $region64: #{_lambda_.27} parent=5 // pred_fallthru
      _
  $region6: #{_lambda_.27} parent=0 // loop_footer
    %s15 = sadd.s32 1, %s11
  $region7: #{_lambda_.27} parent=0 // loop_footer_branch
    %10 = sbr.rel target = $region3
  $region8: #{_lambda_.27} parent=0 // loop_exit
    _

// kernel: _lambda_.28
$region0: #{_lambda_.28}
  #allocation0 [shape = 'u32[]', space=smem, size = 0x4, offset = 0x4, fixed_abs, tag = 'smem constant byte address 0x4 - core index']
  #allocation1 [shape = 'u32[144,128]{1,0:T(1,128)}', space=vmem, size = 0x12000, scoped, tag = 'internal scratch']
  %s0 = inlined_call_operand.vmem [shape: f32[32,32], index: 0, kind: input, shape index: {}]
  %s1 = inlined_call_operand.vmem [shape: f32[32,32], index: 1, kind: input, shape index: {}]
  %s2 = inlined_call_operand.vmem [shape: f32[1,32], index: 2, kind: input, shape index: {}]
  %s3 = inlined_call_operand.vmem [shape: f32[1,32], index: 3, kind: input, shape index: {}]
  %s4 = inlined_call_operand.vmem [shape: f32[32,64], index: 4, kind: output, shape index: {}]
  %s5 = sld [smem:[#allocation0]]
  $region26: #{_lambda_.28} parent=0
    _
  %s7 = ssub.s32 1, %s5
  %s8 = scalar_select 0, %s7, %s5
  // Predicated region
  $region2: #{_lambda_.28} parent=0 // pred_check
    _
  $region3: #{_lambda_.28} parent=0 // pred_check_branch
    %10 = sbr.rel (0) target = $region5
  $region4: #{_lambda_.28} parent=0 // pred_region
    _
  $region5: #{_lambda_.28} parent=0 // pred_fallthru
    _
  // Predicated region
  $region6: #{_lambda_.28} parent=0 // pred_check
    _
  $region7: #{_lambda_.28} parent=0 // pred_check_branch
    %12 = sbr.rel (0) target = $region9
  $region8: #{_lambda_.28} parent=0 // pred_region
    _
  $region9: #{_lambda_.28} parent=0 // pred_fallthru
    _
  // Predicated region
  $region10: #{_lambda_.28} parent=0 // pred_check
    _
  $region11: #{_lambda_.28} parent=0 // pred_check_branch
    %14 = sbr.rel (0) target = $region13
  $region12: #{_lambda_.28} parent=0 // pred_region
    _
  $region13: #{_lambda_.28} parent=0 // pred_fallthru
    _
  // Predicated region
  $region14: #{_lambda_.28} parent=0 // pred_check
    _
  $region15: #{_lambda_.28} parent=0 // pred_check_branch
    %16 = sbr.rel (0) target = $region17
  $region16: #{_lambda_.28} parent=0 // pred_region
    _
  $region17: #{_lambda_.28} parent=0 // pred_fallthru
    _
  %v17 = vld [vmem:[%s1] sm:$0xff]
  %v18 = vld [vmem:[%s1 + $0x8] sm:$0xff]
  %v19 = vld [vmem:[%s1 + $0x10] sm:$0xff]
  %v20 = vld [vmem:[%s1 + $0x18] sm:$0xff]
  %v21 = vld [vmem:[%s2] sm:$0x1]
  %v23 = vlaneseq
  %v24 = vshrl.u32 %v23, 7
  %v25 = vsub.s32 0, %v24
  %v26 = vrot.slane %v21, %v25
  %v28 = vmul.f32 %v17, %v26
  %v29 = vmul.f32 %v18, %v26
  %v30 = vmul.f32 %v19, %v26
  %v31 = vmul.f32 %v20, %v26
  %v32 = vld [vmem:[%s3] sm:$0x1]
  %v34 = vlaneseq
  %v35 = vshrl.u32 %v34, 7
  %v36 = vsub.s32 0, %v35
  %v37 = vrot.slane %v32, %v36
  %v39 = vadd.f32 %v28, %v37
  %v40 = vadd.f32 %v29, %v37
  %v41 = vadd.f32 %v30, %v37
  %v42 = vadd.f32 %v31, %v37
  %v43 = vld [vmem:[%s0] sm:$0xff]
  %v44 = vld [vmem:[%s0 + $0x8] sm:$0xff]
  %v45 = vld [vmem:[%s0 + $0x10] sm:$0xff]
  %v46 = vld [vmem:[%s0 + $0x18] sm:$0xff]
  %51 = vrot.lane.b32.xlu0 %v39, 32
  %v52 = vpop.permute.xlu0 %51
  %53 = vrot.lane.b32.xlu0 %v40, 32
  %v54 = vpop.permute.xlu0 %53
  %55 = vrot.lane.b32.xlu0 %v41, 32
  %v56 = vpop.permute.xlu0 %55
  %57 = vrot.lane.b32.xlu0 %v42, 32
  %v58 = vpop.permute.xlu0 %57
  %vm63 = vcmask 261120
  %v64 = vsel %vm63, %v43, %v52
  %v65 = vsel %vm63, %v44, %v54
  %v66 = vsel %vm63, %v45, %v56
  %v67 = vsel %vm63, %v46, %v58
  %vm68 = vcmask 523264
  %69 = vst.msk [vmem:[%s4] sm:$0xff] %vm68, %v64
  %70 = vst.msk [vmem:[%s4 + $0x8] sm:$0xff] %vm68, %v65
  %71 = vst.msk [vmem:[%s4 + $0x10] sm:$0xff] %vm68, %v66
  %72 = vst.msk [vmem:[%s4 + $0x18] sm:$0xff] %vm68, %v67
  // Predicated region
  $region18: #{_lambda_.28} parent=0 // pred_check
    _
  $region19: #{_lambda_.28} parent=0 // pred_check_branch
    %74 = sbr.rel (0) target = $region21
  $region20: #{_lambda_.28} parent=0 // pred_region
    _
  $region21: #{_lambda_.28} parent=0 // pred_fallthru
    _
  // Predicated region
  $region22: #{_lambda_.28} parent=0 // pred_check
    _
  $region23: #{_lambda_.28} parent=0 // pred_check_branch
    %76 = sbr.rel (0) target = $region25
  $region24: #{_lambda_.28} parent=0 // pred_region
    _
  $region25: #{_lambda_.28} parent=0 // pred_fallthru
    _

// kernel: _lambda_.29
$region0: #{_lambda_.29}
  #allocation0 [shape = 'u32[]', space=smem, size = 0x4, offset = 0x4, fixed_abs, tag = 'smem constant byte address 0x4 - core index']
  #allocation1 [shape = 'u32[144,128]{1,0:T(1,128)}', space=vmem, size = 0x12000, scoped, tag = 'internal scratch']
  #allocation2 [shape = 'f32[32,16]{1,0:T(8,128)}', space=vmem, size = 0x4000, scoped, tag = 'scratch operand']
  %s0 = inlined_call_operand.vmem [shape: bf16[4,32,256], index: 0, kind: input, shape index: {}]
  %s1 = inlined_call_operand.vmem [shape: bf16[4,256,16], index: 1, kind: input, shape index: {}]
  %s2 = inlined_call_operand.vmem [shape: f32[4,32,16], index: 2, kind: output, shape index: {0}]
  %s3 = inlined_call_operand.vmem [shape: f32[1,16], index: 3, kind: output, shape index: {1}]
  %s4 = inlined_call_operand.vmem [shape: f32[1,16], index: 4, kind: output, shape index: {2}]
  %5 = xla_tuple %s2, %s3, %s4
  %s6 = sld [smem:[#allocation0]]
  $region69: #{_lambda_.29} parent=0
    _
  %s8 = ssub.s32 1, %s6
  %s9 = scalar_select 0, %s8, %s6
  loop: start=0, step=1, limit=6
  $region2: #{_lambda_.29} parent=0 // loop_pre_header
    _
  $region3: #{_lambda_.29} parent=0 // loop_header
    %s11 = sphi 0, %s15
    %p12 = scmp.ge.s32.totalorder %s11, 6
    %s18 = sphi 0, %s37
    %s19 = sphi 0, %s33
    %s20 = sphi 0, %s29
    %s21 = sphi 0, %s18
    %s22 = sphi 0, %s19
    %s23 = sphi 0, %s20
    %s24 = sphi 0, %s21
    %s25 = sphi 0, %s22
    %s26 = sphi 0, %s23
    %s44 = sphi 0, %s46
    %s47 = sphi 0, %s44
    %s48 = sphi 0, %s47
    %s64 = sphi 0, %s48
    %s72 = sphi 0, %s74
    %s75 = sphi 0, %s72
    %s76 = sphi 0, %s75
    %s92 = sphi 0, %s76
    %s100 = sphi 0, %s102
    %s103 = sphi 0, %s100
    %s104 = sphi 0, %s103
    %s120 = sphi 0, %s104
    %s124 = sphi 0, %s124
    %s126 = sphi 0, %s124
    %s127 = sphi 0, %s126
    %s141 = sphi 0, %s127
    %s145 = sphi 0, %s145
    %s147 = sphi 0, %s145
    %s148 = sphi 0, %s147
    %s162 = sphi 0, %s148
  $region4: #{_lambda_.29} parent=0 // loop_header_branch
    %14 = sbr.rel (%p12) target = $region8
  $region5: #{_lambda_.29} parent=0 // loop_body
    %s16 = ssub.s32 %s11, 1
    %s17 = ssub.s32 %s11, 2
    %s27 = sadd.s32 1, %s20
    %p28 = scmp.ge.s32.totalorder %s27, 1
    %s29 = scalar_select %p28, 0, %s27
    %s30 = sadd.s32 1, %s19
    %s31 = scalar_select %p28, %s30, %s19
    %p32 = scmp.ge.s32.totalorder %s31, 1
    %s33 = scalar_select %p32, 0, %s31
    %s34 = sadd.s32 1, %s18
    %s35 = scalar_select %p32, %s34, %s18
    %p36 = scmp.ge.s32.totalorder %s35, 4
    %s37 = scalar_select %p36, 0, %s35
    %s38 = ssub.s32 %s18, %s37
    %s39 = ssub.s32 %s19, %s33
    %s40 = sor.u32 %s38, %s39
    %s41 = ssub.s32 %s20, %s29
    %s42 = sor.u32 %s40, %s41
    %p43 = scmp.eq.s32.totalorder %s42, 0
    %s45 = sadd.s32 %s44, 1
    %s46 = scalar_select %p43, %s44, %s45
    %p49 = pneg %p43
    %p50 = scmp.eq.s32.totalorder %s11, 3
    %p51 = por %p49, %p50
    %p52 = scmp.ne.s32.totalorder %s44, %s47
    %p53 = scmp.eq.s32.totalorder %s11, 0
    %p54 = por %p52, %p53
    %p55 = scmp.ne.s32.totalorder %s44, %s47
    %p56 = scmp.eq.s32.totalorder %s16, 3
    %p57 = por %p55, %p56
    %p58 = scmp.ne.s32.totalorder %s47, %s48
    %p59 = scmp.eq.s32.totalorder %s16, 0
    %p60 = por %p58, %p59
    %p61 = scmp.ne.s32.totalorder %s47, %s48
    %p62 = scmp.eq.s32.totalorder %s17, 3
    %p63 = por %p61, %p62
    %p65 = scmp.ne.s32.totalorder %s48, %s64
    %p66 = scmp.eq.s32.totalorder %s17, 0
    %p67 = por %p65, %p66
    %s68 = ssub.s32 %s18, %s37
    %s69 = ssub.s32 %s20, %s29
    %s70 = sor.u32 %s68, %s69
    %p71 = scmp.eq.s32.totalorder %s70, 0
    %s73 = sadd.s32 %s72, 1
    %s74 = scalar_select %p71, %s72, %s73
    %p77 = pneg %p71
    %p78 = scmp.eq.s32.totalorder %s11, 3
    %p79 = por %p77, %p78
    %p80 = scmp.ne.s32.totalorder %s72, %s75
    %p81 = scmp.eq.s32.totalorder %s11, 0
    %p82 = por %p80, %p81
    %p83 = scmp.ne.s32.totalorder %s72, %s75
    %p84 = scmp.eq.s32.totalorder %s16, 3
    %p85 = por %p83, %p84
    %p86 = scmp.ne.s32.totalorder %s75, %s76
    %p87 = scmp.eq.s32.totalorder %s16, 0
    %p88 = por %p86, %p87
    %p89 = scmp.ne.s32.totalorder %s75, %s76
    %p90 = scmp.eq.s32.totalorder %s17, 3
    %p91 = por %p89, %p90
    %p93 = scmp.ne.s32.totalorder %s76, %s92
    %p94 = scmp.eq.s32.totalorder %s17, 0
    %p95 = por %p93, %p94
    %s96 = ssub.s32 %s18, %s37
    %s97 = ssub.s32 %s19, %s33
    %s98 = sor.u32 %s96, %s97
    %p99 = scmp.eq.s32.totalorder %s98, 0
    %s101 = sadd.s32 %s100, 1
    %s102 = scalar_select %p99, %s100, %s101
    %p105 = pneg %p99
    %p106 = scmp.eq.s32.totalorder %s11, 3
    %p107 = por %p105, %p106
    %p108 = scmp.ne.s32.totalorder %s100, %s103
    %p109 = scmp.eq.s32.totalorder %s11, 0
    %p110 = por %p108, %p109
    %p111 = scmp.ne.s32.totalorder %s100, %s103
    %p112 = scmp.eq.s32.totalorder %s16, 3
    %p113 = por %p111, %p112
    %p114 = scmp.ne.s32.totalorder %s103, %s104
    %p115 = scmp.eq.s32.totalorder %s16, 0
    %p116 = por %p114, %p115
    %p117 = scmp.ne.s32.totalorder %s103, %s104
    %p118 = scmp.eq.s32.totalorder %s17, 3
    %p119 = por %p117, %p118
    %p121 = scmp.ne.s32.totalorder %s104, %s120
    %p122 = scmp.eq.s32.totalorder %s17, 0
    %p123 = por %p121, %p122
    %s125 = sadd.s32 %s124, 1
    %p128 = scmp.eq.s32.totalorder %s11, 3
    %p129 = scmp.ne.s32.totalorder %s124, %s126
    %p130 = scmp.eq.s32.totalorder %s11, 0
    %p131 = por %p129, %p130
    %p132 = scmp.ne.s32.totalorder %s124, %s126
    %p133 = scmp.eq.s32.totalorder %s16, 3
    %p134 = por %p132, %p133
    %p135 = scmp.ne.s32.totalorder %s126, %s127
    %p136 = scmp.eq.s32.totalorder %s16, 0
    %p137 = por %p135, %p136
    %p138 = scmp.ne.s32.totalorder %s126, %s127
    %p139 = scmp.eq.s32.totalorder %s17, 3
    %p140 = por %p138, %p139
    %p142 = scmp.ne.s32.totalorder %s127, %s141
    %p143 = scmp.eq.s32.totalorder %s17, 0
    %p144 = por %p142, %p143
    %s146 = sadd.s32 %s145, 1
    %p149 = scmp.eq.s32.totalorder %s11, 3
    %p150 = scmp.ne.s32.totalorder %s145, %s147
    %p151 = scmp.eq.s32.totalorder %s11, 0
    %p152 = por %p150, %p151
    %p153 = scmp.ne.s32.totalorder %s145, %s147
    %p154 = scmp.eq.s32.totalorder %s16, 3
    %p155 = por %p153, %p154
    %p156 = scmp.ne.s32.totalorder %s147, %s148
    %p157 = scmp.eq.s32.totalorder %s16, 0
    %p158 = por %p156, %p157
    %p159 = scmp.ne.s32.totalorder %s147, %s148
    %p160 = scmp.eq.s32.totalorder %s17, 3
    %p161 = por %p159, %p160
    %p163 = scmp.ne.s32.totalorder %s148, %s162
    %p164 = scmp.eq.s32.totalorder %s17, 0
    %p165 = por %p163, %p164
    %p166 = scmp.le.s32.totalorder 1, %s11
    %p167 = scmp.lt.s32.totalorder %s11, 5
    %p168 = pnand %p166, %p167
    %p169 = pneg %p168
    // Predicated region
    $region9: #{_lambda_.29} parent=5 // pred_check
      _
    $region10: #{_lambda_.29} parent=5 // pred_check_branch
      %171 = sbr.rel (%p168) target = $region12
    $region11: #{_lambda_.29} parent=5 // pred_region
      %s172 = ssub.s32 %s11, 1
    $region12: #{_lambda_.29} parent=5 // pred_fallthru
      _
    %p173 = scmp.lt.s32.totalorder %s11, 4
    // Predicated region
    $region13: #{_lambda_.29} parent=5 // pred_check
      %p174 = pneg %p173
    $region14: #{_lambda_.29} parent=5 // pred_check_branch
      %176 = sbr.rel (%p174) target = $region16
    $region15: #{_lambda_.29} parent=5 // pred_region
      // Predicated region
      $region17: #{_lambda_.29} parent=15 // pred_check
        %p177 = pneg %p54
      $region18: #{_lambda_.29} parent=15 // pred_check_branch
        %179 = sbr.rel (%p177) target = $region20
      $region19: #{_lambda_.29} parent=15 // pred_region
        %s180 = smul.u32 4, %s19
        %s181 = smul.u32 2, %s20
        %p182 = scmp.lt.s32.totalorder %s18, 3
        %s183 = scalar_select %p182, %s18, 3
        %p184 = scmp.lt.s32.totalorder %s180, 3
        %s185 = scalar_select %p184, %s180, 3
        %p186 = scmp.lt.s32.totalorder %s181, 1
        %s187 = scalar_select %p186, %s181, 1
        %s188 = smul.addr %s185, 2
        %s189 = sadd.s32 %s187, %s188
        %s190 = smul.addr %s183, 8
        %s191 = sadd.s32 %s189, %s190
        %s192 = smul.addr %s191, 4
        %s193 = scalar_lea.vmem %s0, %s192
        %s194 = smul.u32 4, %s19
        %s195 = smul.u32 2, %s20
      $region20: #{_lambda_.29} parent=15 // pred_fallthru
        _
      // Predicated region
      $region21: #{_lambda_.29} parent=15 // pred_check
        %p196 = pneg %p82
      $region22: #{_lambda_.29} parent=15 // pred_check_branch
        %198 = sbr.rel (%p196) target = $region24
      $region23: #{_lambda_.29} parent=15 // pred_region
        %s199 = smul.u32 32, %s20
        %p200 = scmp.lt.s32.totalorder %s18, 3
        %s201 = scalar_select %p200, %s18, 3
        %p202 = scmp.lt.s32.totalorder %s199, 31
        %s203 = scalar_select %p202, %s199, 31
        %s204 = smul.addr %s201, 32
        %s205 = sadd.s32 %s203, %s204
        %s206 = smul.addr %s205, 4
        %s207 = scalar_lea.vmem %s1, %s206
        %s208 = smul.u32 32, %s20
      $region24: #{_lambda_.29} parent=15 // pred_fallthru
        _
    $region16: #{_lambda_.29} parent=5 // pred_fallthru
      _
    %p209 = scmp.le.s32.totalorder 1, %s11
    %p210 = scmp.lt.s32.totalorder %s11, 5
    %p211 = pnand %p209, %p210
    %p212 = pneg %p211
    // Predicated region
    $region25: #{_lambda_.29} parent=5 // pred_check
      _
    $region26: #{_lambda_.29} parent=5 // pred_check_branch
      %214 = sbr.rel (%p211) target = $region28
    $region27: #{_lambda_.29} parent=5 // pred_region
      %s215 = ssub.s32 %s11, 1
      %s216 = smul.u32 4, %s22
      %s217 = smul.u32 2, %s23
      %p218 = scmp.lt.s32.totalorder %s21, 3
      %s219 = scalar_select %p218, %s21, 3
      %p220 = scmp.lt.s32.totalorder %s216, 3
      %s221 = scalar_select %p220, %s216, 3
      %p222 = scmp.lt.s32.totalorder %s217, 1
      %s223 = scalar_select %p222, %s217, 1
      %s224 = smul.addr %s221, 2
      %s225 = sadd.s32 %s223, %s224
      %s226 = smul.addr %s219, 8
      %s227 = sadd.s32 %s225, %s226
      %s228 = smul.addr %s227, 4
      %s229 = scalar_lea.vmem %s0, %s228
      %p230 = pneg %p60
      %p231 = pneg %p57
      %s232 = smul.u32 32, %s23
      %p233 = scmp.lt.s32.totalorder %s21, 3
      %s234 = scalar_select %p233, %s21, 3
      %p235 = scmp.lt.s32.totalorder %s232, 31
      %s236 = scalar_select %p235, %s232, 31
      %s237 = smul.addr %s234, 32
      %s238 = sadd.s32 %s236, %s237
      %s239 = smul.addr %s238, 4
      %s240 = scalar_lea.vmem %s1, %s239
      %p241 = pneg %p88
      %p242 = pneg %p85
      %p243 = pneg %p116
      %p244 = pneg %p113
      %s245 = smul.u32 4, %s22
      %p246 = scmp.lt.s32.totalorder %s21, 3
      %s247 = scalar_select %p246, %s21, 3
      %p248 = scmp.lt.s32.totalorder %s245, 3
      %s249 = scalar_select %p248, %s245, 3
      %s250 = smul.addr %s247, 4
      %s251 = sadd.s32 %s249, %s250
      %s252 = smul.addr %s251, 8
      %s253 = scalar_lea.vmem %s2, %s252
      %p254 = pneg %p137
      %p255 = pneg %p134
      %p256 = pneg %p158
      %p257 = pneg %p155
      %s258 = smul.u32 4, %s22
      %s259 = smul.u32 2, %s23
      %p260 = scmp.lt.s32.totalorder %s21, 3
      %s261 = scalar_select %p260, %s21, 3
      %p262 = scmp.lt.s32.totalorder %s258, 3
      %s263 = scalar_select %p262, %s258, 3
      %p264 = scmp.lt.s32.totalorder %s259, 1
      %s265 = scalar_select %p264, %s259, 1
      %s266 = smul.addr %s263, 2
      %s267 = sadd.s32 %s265, %s266
      %s268 = smul.addr %s261, 8
      %s269 = sadd.s32 %s267, %s268
      %s270 = smul.addr %s269, 4
      %s271 = scalar_lea.vmem %s0, %s270
      %s272 = smul.u32 4, %s22
      %s273 = smul.u32 2, %s23
      %s274 = smul.u32 32, %s23
      %p275 = scmp.lt.s32.totalorder %s21, 3
      %s276 = scalar_select %p275, %s21, 3
      %p277 = scmp.lt.s32.totalorder %s274, 31
      %s278 = scalar_select %p277, %s274, 31
      %s279 = smul.addr %s276, 32
      %s280 = sadd.s32 %s278, %s279
      %s281 = smul.addr %s280, 4
      %s282 = scalar_lea.vmem %s1, %s281
      %s283 = smul.u32 32, %s23
      %s284 = smul.u32 4, %s22
      %p285 = scmp.lt.s32.totalorder %s21, 3
      %s286 = scalar_select %p285, %s21, 3
      %p287 = scmp.lt.s32.totalorder %s284, 3
      %s288 = scalar_select %p287, %s284, 3
      %s289 = smul.addr %s286, 4
      %s290 = sadd.s32 %s288, %s289
      %s291 = smul.addr %s290, 8
      %s292 = scalar_lea.vmem %s2, %s291
      %s293 = smul.u32 4, %s22
      %p295 = scmp.eq.s32.totalorder %s23, 0
      // Predicated region
      $region29: #{_lambda_.29} parent=27 // pred_check
        %p296 = pneg %p295
      $region30: #{_lambda_.29} parent=27 // pred_check_branch
        %298 = sbr.rel (%p296) target = $region32
      $region31: #{_lambda_.29} parent=27 // pred_region
        %vm299 = vcmask 130048
        %300 = vst.msk [vmem:[#allocation2] sm:$0xff] %vm299, 0.0
        %301 = vst.msk [vmem:[#allocation2 + $0x8] sm:$0xff] %vm299, 0.0
        %302 = vst.msk [vmem:[#allocation2 + $0x10] sm:$0xff] %vm299, 0.0
        %303 = vst.msk [vmem:[#allocation2 + $0x18] sm:$0xff] %vm299, 0.0
      $region32: #{_lambda_.29} parent=27 // pred_fallthru
        _
      %p304 = scmp.eq.s32.totalorder %s21, 0
      %p305 = scmp.eq.s32.totalorder %s22, 0
      %p306 = pnand %p304, %p305
      %p307 = pneg %p306
      %p308 = pnand %p307, %p295
      %p309 = pneg %p308
      // Predicated region
      $region33: #{_lambda_.29} parent=27 // pred_check
        _
      $region34: #{_lambda_.29} parent=27 // pred_check_branch
        %311 = sbr.rel (%p308) target = $region36
      $region35: #{_lambda_.29} parent=27 // pred_region
        %vm312 = vcmask 122880
        %313 = vst.msk [vmem:[%s3] sm:$0x1] %vm312, 0.0
        %314 = vst.msk [vmem:[%s4] sm:$0x1] %vm312, 0.0
      $region36: #{_lambda_.29} parent=27 // pred_fallthru
        _
      %v315 = vld [vmem:[%s271] sm:$0xff]
      %v316 = vld [vmem:[%s271 + $0x8] sm:$0xff]
      %v317 = vld [vmem:[%s271 + $0x10] sm:$0xff]
      %v318 = vld [vmem:[%s271 + $0x18] sm:$0xff]
      %v319 = vmax.bf16 %v315, 0
      %v320 = vmax.bf16 %v316, 0
      %v321 = vmax.bf16 %v317, 0
      %v322 = vmax.bf16 %v318, 0
      %v323 = vld [vmem:[#allocation2] sm:$0xff]
      %v324 = vld [vmem:[#allocation2 + $0x8] sm:$0xff]
      %v325 = vld [vmem:[#allocation2 + $0x10] sm:$0xff]
      %v326 = vld [vmem:[#allocation2 + $0x18] sm:$0xff]
      %v327 = vld [vmem:[%s282] sm:$0xf]
      %v328 = vld [vmem:[%s282 + $0x4] sm:$0xf]
      %v329 = vld [vmem:[%s282 + $0x8] sm:$0xf]
      %v330 = vld [vmem:[%s282 + $0xc] sm:$0xf]
      %v331 = vld [vmem:[%s282 + $0x10] sm:$0xf]
      %v332 = vld [vmem:[%s282 + $0x14] sm:$0xf]
      %v333 = vld [vmem:[%s282 + $0x18] sm:$0xf]
      %v334 = vld [vmem:[%s282 + $0x1c] sm:$0xf]
      %v335 = vld [vmem:[%s282 + $0x20] sm:$0xf]
      %v336 = vld [vmem:[%s282 + $0x24] sm:$0xf]
      %v337 = vld [vmem:[%s282 + $0x28] sm:$0xf]
      %v338 = vld [vmem:[%s282 + $0x2c] sm:$0xf]
      %v339 = vld [vmem:[%s282 + $0x30] sm:$0xf]
      %v340 = vld [vmem:[%s282 + $0x34] sm:$0xf]
      %v341 = vld [vmem:[%s282 + $0x38] sm:$0xf]
      %v342 = vld [vmem:[%s282 + $0x3c] sm:$0xf]
      %v343 = vld [vmem:[%s282 + $0x40] sm:$0xf]
      %v344 = vld [vmem:[%s282 + $0x44] sm:$0xf]
      %v345 = vld [vmem:[%s282 + $0x48] sm:$0xf]
      %v346 = vld [vmem:[%s282 + $0x4c] sm:$0xf]
      %v347 = vld [vmem:[%s282 + $0x50] sm:$0xf]
      %v348 = vld [vmem:[%s282 + $0x54] sm:$0xf]
      %v349 = vld [vmem:[%s282 + $0x58] sm:$0xf]
      %v350 = vld [vmem:[%s282 + $0x5c] sm:$0xf]
      %v351 = vld [vmem:[%s282 + $0x60] sm:$0xf]
      %v352 = vld [vmem:[%s282 + $0x64] sm:$0xf]
      %v353 = vld [vmem:[%s282 + $0x68] sm:$0xf]
      %v354 = vld [vmem:[%s282 + $0x6c] sm:$0xf]
      %v355 = vld [vmem:[%s282 + $0x70] sm:$0xf]
      %v356 = vld [vmem:[%s282 + $0x74] sm:$0xf]
      %v357 = vld [vmem:[%s282 + $0x78] sm:$0xf]
      %v358 = vld [vmem:[%s282 + $0x7c] sm:$0xf]
      %v363 = vunpack.c.l.b16 %v319
      %v364 = vunpack.c.h.b16 %v319
      %v365 = vunpack.c.l.b16 %v320
      %v366 = vunpack.c.h.b16 %v320
      %v367 = vunpack.c.l.b16 %v321
      %v368 = vunpack.c.h.b16 %v321
      %v369 = vunpack.c.l.b16 %v322
      %v370 = vunpack.c.h.b16 %v322
      %v371 = vpack.c.b16 %v365, %v363
      %v372 = vpack.c.b16 %v366, %v364
      %v373 = vpack.c.b16 %v369, %v367
      %v374 = vpack.c.b16 %v370, %v368
      %v411 = vunpack.c.l.b16 %v327
      %v412 = vunpack.c.l.b16 %v328
      %v413 = vunpack.c.l.b16 %v329
      %v414 = vunpack.c.l.b16 %v330
      %v415 = vunpack.c.l.b16 %v331
      %v416 = vunpack.c.l.b16 %v332
      %v417 = vunpack.c.l.b16 %v333
      %v418 = vunpack.c.l.b16 %v334
      %v419 = vunpack.c.l.b16 %v335
      %v420 = vunpack.c.l.b16 %v336
      %v421 = vunpack.c.l.b16 %v337
      %v422 = vunpack.c.l.b16 %v338
      %v423 = vunpack.c.l.b16 %v339
      %v424 = vunpack.c.l.b16 %v340
      %v425 = vunpack.c.l.b16 %v341
      %v426 = vunpack.c.l.b16 %v342
      %v427 = vunpack.c.l.b16 %v343
      %v428 = vunpack.c.l.b16 %v344
      %v429 = vunpack.c.l.b16 %v345
      %v430 = vunpack.c.l.b16 %v346
      %v431 = vunpack.c.l.b16 %v347
      %v432 = vunpack.c.l.b16 %v348
      %v433 = vunpack.c.l.b16 %v349
      %v434 = vunpack.c.l.b16 %v350
      %v435 = vunpack.c.l.b16 %v351
      %v436 = vunpack.c.l.b16 %v352
      %v437 = vunpack.c.l.b16 %v353
      %v438 = vunpack.c.l.b16 %v354
      %v439 = vunpack.c.l.b16 %v355
      %v440 = vunpack.c.l.b16 %v356
      %v441 = vunpack.c.l.b16 %v357
      %v442 = vunpack.c.l.b16 %v358
      %v443 = vpack.c.b16 %v412, %v411
      %v444 = vpack.c.b16 %v414, %v413
      %v445 = vpack.c.b16 %v416, %v415
      %v446 = vpack.c.b16 %v418, %v417
      %v447 = vpack.c.b16 %v420, %v419
      %v448 = vpack.c.b16 %v422, %v421
      %v449 = vpack.c.b16 %v424, %v423
      %v450 = vpack.c.b16 %v426, %v425
      %v451 = vpack.c.b16 %v428, %v427
      %v452 = vpack.c.b16 %v430, %v429
      %v453 = vpack.c.b16 %v432, %v431
      %v454 = vpack.c.b16 %v434, %v433
      %v455 = vpack.c.b16 %v436, %v435
      %v456 = vpack.c.b16 %v438, %v437
      %v457 = vpack.c.b16 %v440, %v439
      %v458 = vpack.c.b16 %v442, %v441
      %475 = vmatprep.subr.bf16.mxu0 0
      %476 = vmatpush1.bf16.msra.mxu0 %v443
      %477 = vmatprep.subr.bf16.mxu0 0
      %478 = vmatpush1.bf16.msra.mxu0 %v444
      %479 = vmatprep.subr.bf16.mxu0 0
      %480 = vmatpush1.bf16.msra.mxu0 %v445
      %481 = vmatprep.subr.bf16.mxu0 0
      %482 = vmatpush1.bf16.msra.mxu0 %v446
      %483 = vmatprep.subr.bf16.mxu0 0
      %484 = vmatpush1.bf16.msra.mxu0 %v447
      %485 = vmatprep.subr.bf16.mxu0 0
      %486 = vmatpush1.bf16.msra.mxu0 %v448
      %487 = vmatprep.subr.bf16.mxu0 0
      %488 = vmatpush1.bf16.msra.mxu0 %v449
      %489 = vmatprep.subr.bf16.mxu0 0
      %490 = vmatpush1.bf16.msra.mxu0 %v450
      %491 = vmatprep.subr.bf16.mxu0 0
      %492 = vmatpush1.bf16.msra.mxu0 %v451
      %493 = vmatprep.subr.bf16.mxu0 0
      %494 = vmatpush1.bf16.msra.mxu0 %v452
      %495 = vmatprep.subr.bf16.mxu0 0
      %496 = vmatpush1.bf16.msra.mxu0 %v453
      %497 = vmatprep.subr.bf16.mxu0 0
      %498 = vmatpush1.bf16.msra.mxu0 %v454
      %499 = vmatprep.subr.bf16.mxu0 0
      %500 = vmatpush1.bf16.msra.mxu0 %v455
      %501 = vmatprep.subr.bf16.mxu0 0
      %502 = vmatpush1.bf16.msra.mxu0 %v456
      %503 = vmatprep.subr.bf16.mxu0 0
      %504 = vmatpush1.bf16.msra.mxu0 %v457
      %505 = vmatprep.subr.bf16.mxu0 0
      %506 = vmatpush1.bf16.msra.mxu0 %v458
      %507 = vmatprep.mubr.bf16.mxu0 %v372
      %508 = vmatmul.mubr.bf16.gmra.mrb[0].mxu0 %v371
      %v509 = vpop.f32.mrb[0].mxu0
      %v510 = vadd.f32 0.0, %v509
      %v511 = vpop.f32.mrb[0].mxu0
      %v512 = vpop.f32.mrb[0].mxu0
      %v513 = vadd.f32 0.0, %v512
      %v514 = vpop.f32.mrb[0].mxu0
      %515 = vmatprep.mubr.bf16.mxu0 %v374
      %516 = vmatmul.mubr.bf16.gmra.mrb[0].mxu0 %v373
      %v517 = vpop.f32.mrb[0].mxu0
      %v518 = vadd.f32 0.0, %v517
      %v519 = vpop.f32.mrb[0].mxu0
      %v520 = vpop.f32.mrb[0].mxu0
      %v521 = vadd.f32 0.0, %v520
      %v522 = vpop.f32.mrb[0].mxu0
      %523 = vdwg.mxu0
      %v524 = vadd.f32 %v323, %v510
      %v525 = vadd.f32 %v324, %v513
      %v526 = vadd.f32 %v325, %v518
      %v527 = vadd.f32 %v326, %v521
      %vm528 = vcmask 130048
      %529 = vst.msk [vmem:[#allocation2] sm:$0xff] %vm528, %v524
      %530 = vst.msk [vmem:[#allocation2 + $0x8] sm:$0xff] %vm528, %v525
      %531 = vst.msk [vmem:[#allocation2 + $0x10] sm:$0xff] %vm528, %v526
      %532 = vst.msk [vmem:[#allocation2 + $0x18] sm:$0xff] %vm528, %v527
      // Predicated region
      $region37: #{_lambda_.29} parent=27 // pred_check
        %p533 = pneg %p295
      $region38: #{_lambda_.29} parent=27 // pred_check_branch
        %535 = sbr.rel (%p533) target = $region40
      $region39: #{_lambda_.29} parent=27 // pred_region
        %v536 = vld [vmem:[#allocation2] sm:$0xff]
        %v537 = vld [vmem:[#allocation2 + $0x8] sm:$0xff]
        %v538 = vld [vmem:[#allocation2 + $0x10] sm:$0xff]
        %v539 = vld [vmem:[#allocation2 + $0x18] sm:$0xff]
        %540 = vst.msk [vmem:[%s292] sm:$0xff] %vm528, %v536
        %541 = vst.msk [vmem:[%s292 + $0x8] sm:$0xff] %vm528, %v537
        %542 = vst.msk [vmem:[%s292 + $0x10] sm:$0xff] %vm528, %v538
        %543 = vst.msk [vmem:[%s292 + $0x18] sm:$0xff] %vm528, %v539
        %v544 = vld [vmem:[%s3] sm:$0x1]
        %v545 = vsel %vm528, %v536, 0.0
        %v546 = vsel %vm528, %v537, 0.0
        %v547 = vadd.f32 %v545, %v546
        %v548 = vsel %vm528, %v538, 0.0
        %v549 = vadd.f32 %v547, %v548
        %v550 = vsel %vm528, %v539, 0.0
        %v551 = vadd.f32 %v549, %v550
        %v552 = vrot.slane %v551, 4
        %v553 = vadd.f32 %v551, %v552
        %v554 = vrot.slane %v553, 2
        %v555 = vadd.f32 %v553, %v554
        %v556 = vrot.slane %v555, 1
        %v557 = vadd.f32 %v555, %v556
        %v558 = vadd.f32 %v544, %v557
        %vm559 = vcmask 122880
        %560 = vst.msk [vmem:[%s3] sm:$0x1] %vm559, %v558
        %v561 = vld [vmem:[%s4] sm:$0x1]
        %v562 = vmul.f32 %v536, %v536
        %v563 = vmul.f32 %v537, %v537
        %v564 = vmul.f32 %v538, %v538
        %v565 = vmul.f32 %v539, %v539
        %v566 = vsel %vm528, %v562, 0.0
        %v567 = vsel %vm528, %v563, 0.0
        %v568 = vadd.f32 %v566, %v567
        %v569 = vsel %vm528, %v564, 0.0
        %v570 = vadd.f32 %v568, %v569
        %v571 = vsel %vm528, %v565, 0.0
        %v572 = vadd.f32 %v570, %v571
        %v573 = vrot.slane %v572, 4
        %v574 = vadd.f32 %v572, %v573
        %v575 = vrot.slane %v574, 2
        %v576 = vadd.f32 %v574, %v575
        %v577 = vrot.slane %v576, 1
        %v578 = vadd.f32 %v576, %v577
        %v579 = vadd.f32 %v561, %v578
        %580 = vst.msk [vmem:[%s4] sm:$0x1] %vm559, %v579
      $region40: #{_lambda_.29} parent=27 // pred_fallthru
        _
      %s581 = smul.u32 4, %s22
      %p582 = scmp.lt.s32.totalorder %s21, 3
      %s583 = scalar_select %p582, %s21, 3
      %p584 = scmp.lt.s32.totalorder %s581, 3
      %s585 = scalar_select %p584, %s581, 3
      %s586 = smul.addr %s583, 4
      %s587 = sadd.s32 %s585, %s586
      %s588 = smul.addr %s587, 8
      %s589 = scalar_lea.vmem %s2, %s588
      // Predicated region
      $region41: #{_lambda_.29} parent=27 // pred_check
        %p590 = pneg %p113
      $region42: #{_lambda_.29} parent=27 // pred_check_branch
        %592 = sbr.rel (%p590) target = $region44
      $region43: #{_lambda_.29} parent=27 // pred_region
        %s593 = smul.u32 4, %s22
      $region44: #{_lambda_.29} parent=27 // pred_fallthru
        _
      // Predicated region
      $region45: #{_lambda_.29} parent=27 // pred_check
        %p594 = pneg %p134
      $region46: #{_lambda_.29} parent=27 // pred_check_branch
        %596 = sbr.rel (%p594) target = $region48
      $region47: #{_lambda_.29} parent=27 // pred_region
        _
      $region48: #{_lambda_.29} parent=27 // pred_fallthru
        _
      // Predicated region
      $region49: #{_lambda_.29} parent=27 // pred_check
        %p597 = pneg %p155
      $region50: #{_lambda_.29} parent=27 // pred_check_branch
        %599 = sbr.rel (%p597) target = $region52
      $region51: #{_lambda_.29} parent=27 // pred_region
        _
      $region52: #{_lambda_.29} parent=27 // pred_fallthru
        _
      // Predicated region
      $region53: #{_lambda_.29} parent=27 // pred_check
        %p600 = pneg %p134
      $region54: #{_lambda_.29} parent=27 // pred_check_branch
        %602 = sbr.rel (%p600) target = $region56
      $region55: #{_lambda_.29} parent=27 // pred_region
        _
      $region56: #{_lambda_.29} parent=27 // pred_fallthru
        _
      // Predicated region
      $region57: #{_lambda_.29} parent=27 // pred_check
        %p603 = pneg %p155
      $region58: #{_lambda_.29} parent=27 // pred_check_branch
        %605 = sbr.rel (%p603) target = $region60
      $region59: #{_lambda_.29} parent=27 // pred_region
        _
      $region60: #{_lambda_.29} parent=27 // pred_fallthru
        _
    $region28: #{_lambda_.29} parent=5 // pred_fallthru
      _
    %p606 = scmp.le.s32.totalorder 2, %s11
    // Predicated region
    $region61: #{_lambda_.29} parent=5 // pred_check
      %p607 = pneg %p606
    $region62: #{_lambda_.29} parent=5 // pred_check_branch
      %609 = sbr.rel (%p607) target = $region64
    $region63: #{_lambda_.29} parent=5 // pred_region
      %s610 = ssub.s32 %s11, 2
      // Predicated region
      $region65: #{_lambda_.29} parent=63 // pred_check
        %p611 = pneg %p119
      $region66: #{_lambda_.29} parent=63 // pred_check_branch
        %613 = sbr.rel (%p611) target = $region68
      $region67: #{_lambda_.29} parent=63 // pred_region
        %s614 = smul.u32 4, %s25
        %p615 = scmp.lt.s32.totalorder %s24, 3
        %s616 = scalar_select %p615, %s24, 3
        %p617 = scmp.lt.s32.totalorder %s614, 3
        %s618 = scalar_select %p617, %s614, 3
        %s619 = smul.addr %s616, 4
        %s620 = sadd.s32 %s618, %s619
        %s621 = smul.addr %s620, 8
        %s622 = scalar_lea.vmem %s2, %s621
      $region68: #{_lambda_.29} parent=63 // pred_fallthru
        _
    $region64: #{_lambda_.29} parent=5 // pred_fallthru
      _
  $region6: #{_lambda_.29} parent=0 // loop_footer
    %s15 = sadd.s32 1, %s11
  $region7: #{_lambda_.29} parent=0 // loop_footer_branch
    %10 = sbr.rel target = $region3
  $region8: #{_lambda_.29} parent=0 // loop_exit
    _

// kernel: _lambda_.30
$region0: #{_lambda_.30}
  #allocation0 [shape = 'u32[]', space=smem, size = 0x4, offset = 0x4, fixed_abs, tag = 'smem constant byte address 0x4 - core index']
  #allocation1 [shape = 'u32[144,128]{1,0:T(1,128)}', space=vmem, size = 0x12000, scoped, tag = 'internal scratch']
  %s0 = inlined_call_operand.vmem [shape: f32[128,16], index: 0, kind: input, shape index: {}]
  %s1 = inlined_call_operand.vmem [shape: f32[128,16], index: 1, kind: input, shape index: {}]
  %s2 = inlined_call_operand.vmem [shape: f32[1,16], index: 2, kind: input, shape index: {}]
  %s3 = inlined_call_operand.vmem [shape: f32[1,16], index: 3, kind: input, shape index: {}]
  %s4 = inlined_call_operand.vmem [shape: f32[128,32], index: 4, kind: output, shape index: {}]
  %s5 = sld [smem:[#allocation0]]
  $region26: #{_lambda_.30} parent=0
    _
  %s7 = ssub.s32 1, %s5
  %s8 = scalar_select 0, %s7, %s5
  // Predicated region
  $region2: #{_lambda_.30} parent=0 // pred_check
    _
  $region3: #{_lambda_.30} parent=0 // pred_check_branch
    %10 = sbr.rel (0) target = $region5
  $region4: #{_lambda_.30} parent=0 // pred_region
    _
  $region5: #{_lambda_.30} parent=0 // pred_fallthru
    _
  // Predicated region
  $region6: #{_lambda_.30} parent=0 // pred_check
    _
  $region7: #{_lambda_.30} parent=0 // pred_check_branch
    %12 = sbr.rel (0) target = $region9
  $region8: #{_lambda_.30} parent=0 // pred_region
    _
  $region9: #{_lambda_.30} parent=0 // pred_fallthru
    _
  // Predicated region
  $region10: #{_lambda_.30} parent=0 // pred_check
    _
  $region11: #{_lambda_.30} parent=0 // pred_check_branch
    %14 = sbr.rel (0) target = $region13
  $region12: #{_lambda_.30} parent=0 // pred_region
    _
  $region13: #{_lambda_.30} parent=0 // pred_fallthru
    _
  // Predicated region
  $region14: #{_lambda_.30} parent=0 // pred_check
    _
  $region15: #{_lambda_.30} parent=0 // pred_check_branch
    %16 = sbr.rel (0) target = $region17
  $region16: #{_lambda_.30} parent=0 // pred_region
    _
  $region17: #{_lambda_.30} parent=0 // pred_fallthru
    _
  %v17 = vld [vmem:[%s1] sm:$0xff]
  %v18 = vld [vmem:[%s1 + $0x8] sm:$0xff]
  %v19 = vld [vmem:[%s1 + $0x10] sm:$0xff]
  %v20 = vld [vmem:[%s1 + $0x18] sm:$0xff]
  %v21 = vld [vmem:[%s1 + $0x20] sm:$0xff]
  %v22 = vld [vmem:[%s1 + $0x28] sm:$0xff]
  %v23 = vld [vmem:[%s1 + $0x30] sm:$0xff]
  %v24 = vld [vmem:[%s1 + $0x38] sm:$0xff]
  %v25 = vld [vmem:[%s1 + $0x40] sm:$0xff]
  %v26 = vld [vmem:[%s1 + $0x48] sm:$0xff]
  %v27 = vld [vmem:[%s1 + $0x50] sm:$0xff]
  %v28 = vld [vmem:[%s1 + $0x58] sm:$0xff]
  %v29 = vld [vmem:[%s1 + $0x60] sm:$0xff]
  %v30 = vld [vmem:[%s1 + $0x68] sm:$0xff]
  %v31 = vld [vmem:[%s1 + $0x70] sm:$0xff]
  %v32 = vld [vmem:[%s1 + $0x78] sm:$0xff]
  %v33 = vld [vmem:[%s2] sm:$0x1]
  %v35 = vlaneseq
  %v36 = vshrl.u32 %v35, 7
  %v37 = vsub.s32 0, %v36
  %v38 = vrot.slane %v33, %v37
  %v40 = vmul.f32 %v17, %v38
  %v41 = vmul.f32 %v18, %v38
  %v42 = vmul.f32 %v19, %v38
  %v43 = vmul.f32 %v20, %v38
  %v44 = vmul.f32 %v21, %v38
  %v45 = vmul.f32 %v22, %v38
  %v46 = vmul.f32 %v23, %v38
  %v47 = vmul.f32 %v24, %v38
  %v48 = vmul.f32 %v25, %v38
  %v49 = vmul.f32 %v26, %v38
  %v50 = vmul.f32 %v27, %v38
  %v51 = vmul.f32 %v28, %v38
  %v52 = vmul.f32 %v29, %v38
  %v53 = vmul.f32 %v30, %v38
  %v54 = vmul.f32 %v31, %v38
  %v55 = vmul.f32 %v32, %v38
  %v56 = vld [vmem:[%s3] sm:$0x1]
  %v58 = vlaneseq
  %v59 = vshrl.u32 %v58, 7
  %v60 = vsub.s32 0, %v59
  %v61 = vrot.slane %v56, %v60
  %v63 = vadd.f32 %v40, %v61
  %v64 = vadd.f32 %v41, %v61
  %v65 = vadd.f32 %v42, %v61
  %v66 = vadd.f32 %v43, %v61
  %v67 = vadd.f32 %v44, %v61
  %v68 = vadd.f32 %v45, %v61
  %v69 = vadd.f32 %v46, %v61
  %v70 = vadd.f32 %v47, %v61
  %v71 = vadd.f32 %v48, %v61
  %v72 = vadd.f32 %v49, %v61
  %v73 = vadd.f32 %v50, %v61
  %v74 = vadd.f32 %v51, %v61
  %v75 = vadd.f32 %v52, %v61
  %v76 = vadd.f32 %v53, %v61
  %v77 = vadd.f32 %v54, %v61
  %v78 = vadd.f32 %v55, %v61
  %v79 = vld [vmem:[%s0] sm:$0xff]
  %v80 = vld [vmem:[%s0 + $0x8] sm:$0xff]
  %v81 = vld [vmem:[%s0 + $0x10] sm:$0xff]
  %v82 = vld [vmem:[%s0 + $0x18] sm:$0xff]
  %v83 = vld [vmem:[%s0 + $0x20] sm:$0xff]
  %v84 = vld [vmem:[%s0 + $0x28] sm:$0xff]
  %v85 = vld [vmem:[%s0 + $0x30] sm:$0xff]
  %v86 = vld [vmem:[%s0 + $0x38] sm:$0xff]
  %v87 = vld [vmem:[%s0 + $0x40] sm:$0xff]
  %v88 = vld [vmem:[%s0 + $0x48] sm:$0xff]
  %v89 = vld [vmem:[%s0 + $0x50] sm:$0xff]
  %v90 = vld [vmem:[%s0 + $0x58] sm:$0xff]
  %v91 = vld [vmem:[%s0 + $0x60] sm:$0xff]
  %v92 = vld [vmem:[%s0 + $0x68] sm:$0xff]
  %v93 = vld [vmem:[%s0 + $0x70] sm:$0xff]
  %v94 = vld [vmem:[%s0 + $0x78] sm:$0xff]
  %111 = vrot.lane.b32.xlu0 %v63, 16
  %v112 = vpop.permute.xlu0 %111
  %113 = vrot.lane.b32.xlu0 %v64, 16
  %v114 = vpop.permute.xlu0 %113
  %115 = vrot.lane.b32.xlu0 %v65, 16
  %v116 = vpop.permute.xlu0 %115
  %117 = vrot.lane.b32.xlu0 %v66, 16
  %v118 = vpop.permute.xlu0 %117
  %119 = vrot.lane.b32.xlu0 %v67, 16
  %v120 = vpop.permute.xlu0 %119
  %121 = vrot.lane.b32.xlu0 %v68, 16
  %v122 = vpop.permute.xlu0 %121
  %123 = vrot.lane.b32.xlu0 %v69, 16
  %v124 = vpop.permute.xlu0 %123
  %125 = vrot.lane.b32.xlu0 %v70, 16
  %v126 = vpop.permute.xlu0 %125
  %127 = vrot.lane.b32.xlu0 %v71, 16
  %v128 = vpop.permute.xlu0 %127
  %129 = vrot.lane.b32.xlu0 %v72, 16
  %v130 = vpop.permute.xlu0 %129
  %131 = vrot.lane.b32.xlu0 %v73, 16
  %v132 = vpop.permute.xlu0 %131
  %133 = vrot.lane.b32.xlu0 %v74, 16
  %v134 = vpop.permute.xlu0 %133
  %135 = vrot.lane.b32.xlu0 %v75, 16
  %v136 = vpop.permute.xlu0 %135
  %137 = vrot.lane.b32.xlu0 %v76, 16
  %v138 = vpop.permute.xlu0 %137
  %139 = vrot.lane.b32.xlu0 %v77, 16
  %v140 = vpop.permute.xlu0 %139
  %141 = vrot.lane.b32.xlu0 %v78, 16
  %v142 = vpop.permute.xlu0 %141
  %vm159 = vcmask 130048
  %v160 = vsel %vm159, %v79, %v112
  %v161 = vsel %vm159, %v80, %v114
  %v162 = vsel %vm159, %v81, %v116
  %v163 = vsel %vm159, %v82, %v118
  %v164 = vsel %vm159, %v83, %v120
  %v165 = vsel %vm159, %v84, %v122
  %v166 = vsel %vm159, %v85, %v124
  %v167 = vsel %vm159, %v86, %v126
  %v168 = vsel %vm159, %v87, %v128
  %v169 = vsel %vm159, %v88, %v130
  %v170 = vsel %vm159, %v89, %v132
  %v171 = vsel %vm159, %v90, %v134
  %v172 = vsel %vm159, %v91, %v136
  %v173 = vsel %vm159, %v92, %v138
  %v174 = vsel %vm159, %v93, %v140
  %v175 = vsel %vm159, %v94, %v142
  %vm176 = vcmask 261120
  %177 = vst.msk [vmem:[%s4] sm:$0xff] %vm176, %v160
  %178 = vst.msk [vmem:[%s4 + $0x8] sm:$0xff] %vm176, %v161
  %179 = vst.msk [vmem:[%s4 + $0x10] sm:$0xff] %vm176, %v162
  %180 = vst.msk [vmem:[%s4 + $0x18] sm:$0xff] %vm176, %v163
  %181 = vst.msk [vmem:[%s4 + $0x20] sm:$0xff] %vm176, %v164
  %182 = vst.msk [vmem:[%s4 + $0x28] sm:$0xff] %vm176, %v165
  %183 = vst.msk [vmem:[%s4 + $0x30] sm:$0xff] %vm176, %v166
  %184 = vst.msk [vmem:[%s4 + $0x38] sm:$0xff] %vm176, %v167
  %185 = vst.msk [vmem:[%s4 + $0x40] sm:$0xff] %vm176, %v168
  %186 = vst.msk [vmem:[%s4 + $0x48] sm:$0xff] %vm176, %v169
  %187 = vst.msk [vmem:[%s4 + $0x50] sm:$0xff] %vm176, %v170
  %188 = vst.msk [vmem:[%s4 + $0x58] sm:$0xff] %vm176, %v171
  %189 = vst.msk [vmem:[%s4 + $0x60] sm:$0xff] %vm176, %v172
  %190 = vst.msk [vmem:[%s4 + $0x68] sm:$0xff] %vm176, %v173
  %191 = vst.msk [vmem:[%s4 + $0x70] sm:$0xff] %vm176, %v174
  %192 = vst.msk [vmem:[%s4 + $0x78] sm:$0xff] %vm176, %v175
  // Predicated region
  $region18: #{_lambda_.30} parent=0 // pred_check
    _
  $region19: #{_lambda_.30} parent=0 // pred_check_branch
    %194 = sbr.rel (0) target = $region21
  $region20: #{_lambda_.30} parent=0 // pred_region
    _
  $region21: #{_lambda_.30} parent=0 // pred_fallthru
    _
  // Predicated region
  $region22: #{_lambda_.30} parent=0 // pred_check
    _
  $region23: #{_lambda_.30} parent=0 // pred_check_branch
    %196 = sbr.rel (0) target = $region25
  $region24: #{_lambda_.30} parent=0 // pred_region
    _
  $region25: #{_lambda_.30} parent=0 // pred_fallthru
    _

// kernel: _lambda_.31
$region0: #{_lambda_.31}
  #allocation0 [shape = 'u32[]', space=smem, size = 0x4, offset = 0x4, fixed_abs, tag = 'smem constant byte address 0x4 - core index']
  #allocation1 [shape = 'u32[144,128]{1,0:T(1,128)}', space=vmem, size = 0x12000, scoped, tag = 'internal scratch']
  #allocation2 [shape = 'f32[128,8]{1,0:T(8,128)}', space=vmem, size = 0x10000, scoped, tag = 'scratch operand']
  %s0 = inlined_call_operand.vmem [shape: bf16[4,128,128], index: 0, kind: input, shape index: {}]
  %s1 = inlined_call_operand.vmem [shape: bf16[4,128,8], index: 1, kind: input, shape index: {}]
  %s2 = inlined_call_operand.vmem [shape: f32[4,128,8], index: 2, kind: output, shape index: {0}]
  %s3 = inlined_call_operand.vmem [shape: f32[1,8], index: 3, kind: output, shape index: {1}]
  %s4 = inlined_call_operand.vmem [shape: f32[1,8], index: 4, kind: output, shape index: {2}]
  %5 = xla_tuple %s2, %s3, %s4
  %s6 = sld [smem:[#allocation0]]
  $region69: #{_lambda_.31} parent=0
    _
  %s8 = ssub.s32 1, %s6
  %s9 = scalar_select 0, %s8, %s6
  loop: start=0, step=1, limit=6
  $region2: #{_lambda_.31} parent=0 // loop_pre_header
    _
  $region3: #{_lambda_.31} parent=0 // loop_header
    %s11 = sphi 0, %s15
    %p12 = scmp.ge.s32.totalorder %s11, 6
    %s18 = sphi 0, %s37
    %s19 = sphi 0, %s33
    %s20 = sphi 0, %s29
    %s21 = sphi 0, %s18
    %s22 = sphi 0, %s19
    %s23 = sphi 0, %s20
    %s24 = sphi 0, %s21
    %s25 = sphi 0, %s22
    %s26 = sphi 0, %s23
    %s44 = sphi 0, %s46
    %s47 = sphi 0, %s44
    %s48 = sphi 0, %s47
    %s64 = sphi 0, %s48
    %s72 = sphi 0, %s74
    %s75 = sphi 0, %s72
    %s76 = sphi 0, %s75
    %s92 = sphi 0, %s76
    %s100 = sphi 0, %s102
    %s103 = sphi 0, %s100
    %s104 = sphi 0, %s103
    %s120 = sphi 0, %s104
    %s124 = sphi 0, %s124
    %s126 = sphi 0, %s124
    %s127 = sphi 0, %s126
    %s141 = sphi 0, %s127
    %s145 = sphi 0, %s145
    %s147 = sphi 0, %s145
    %s148 = sphi 0, %s147
    %s162 = sphi 0, %s148
  $region4: #{_lambda_.31} parent=0 // loop_header_branch
    %14 = sbr.rel (%p12) target = $region8
  $region5: #{_lambda_.31} parent=0 // loop_body
    %s16 = ssub.s32 %s11, 1
    %s17 = ssub.s32 %s11, 2
    %s27 = sadd.s32 1, %s20
    %p28 = scmp.ge.s32.totalorder %s27, 1
    %s29 = scalar_select %p28, 0, %s27
    %s30 = sadd.s32 1, %s19
    %s31 = scalar_select %p28, %s30, %s19
    %p32 = scmp.ge.s32.totalorder %s31, 1
    %s33 = scalar_select %p32, 0, %s31
    %s34 = sadd.s32 1, %s18
    %s35 = scalar_select %p32, %s34, %s18
    %p36 = scmp.ge.s32.totalorder %s35, 4
    %s37 = scalar_select %p36, 0, %s35
    %s38 = ssub.s32 %s18, %s37
    %s39 = ssub.s32 %s19, %s33
    %s40 = sor.u32 %s38, %s39
    %s41 = ssub.s32 %s20, %s29
    %s42 = sor.u32 %s40, %s41
    %p43 = scmp.eq.s32.totalorder %s42, 0
    %s45 = sadd.s32 %s44, 1
    %s46 = scalar_select %p43, %s44, %s45
    %p49 = pneg %p43
    %p50 = scmp.eq.s32.totalorder %s11, 3
    %p51 = por %p49, %p50
    %p52 = scmp.ne.s32.totalorder %s44, %s47
    %p53 = scmp.eq.s32.totalorder %s11, 0
    %p54 = por %p52, %p53
    %p55 = scmp.ne.s32.totalorder %s44, %s47
    %p56 = scmp.eq.s32.totalorder %s16, 3
    %p57 = por %p55, %p56
    %p58 = scmp.ne.s32.totalorder %s47, %s48
    %p59 = scmp.eq.s32.totalorder %s16, 0
    %p60 = por %p58, %p59
    %p61 = scmp.ne.s32.totalorder %s47, %s48
    %p62 = scmp.eq.s32.totalorder %s17, 3
    %p63 = por %p61, %p62
    %p65 = scmp.ne.s32.totalorder %s48, %s64
    %p66 = scmp.eq.s32.totalorder %s17, 0
    %p67 = por %p65, %p66
    %s68 = ssub.s32 %s18, %s37
    %s69 = ssub.s32 %s20, %s29
    %s70 = sor.u32 %s68, %s69
    %p71 = scmp.eq.s32.totalorder %s70, 0
    %s73 = sadd.s32 %s72, 1
    %s74 = scalar_select %p71, %s72, %s73
    %p77 = pneg %p71
    %p78 = scmp.eq.s32.totalorder %s11, 3
    %p79 = por %p77, %p78
    %p80 = scmp.ne.s32.totalorder %s72, %s75
    %p81 = scmp.eq.s32.totalorder %s11, 0
    %p82 = por %p80, %p81
    %p83 = scmp.ne.s32.totalorder %s72, %s75
    %p84 = scmp.eq.s32.totalorder %s16, 3
    %p85 = por %p83, %p84
    %p86 = scmp.ne.s32.totalorder %s75, %s76
    %p87 = scmp.eq.s32.totalorder %s16, 0
    %p88 = por %p86, %p87
    %p89 = scmp.ne.s32.totalorder %s75, %s76
    %p90 = scmp.eq.s32.totalorder %s17, 3
    %p91 = por %p89, %p90
    %p93 = scmp.ne.s32.totalorder %s76, %s92
    %p94 = scmp.eq.s32.totalorder %s17, 0
    %p95 = por %p93, %p94
    %s96 = ssub.s32 %s18, %s37
    %s97 = ssub.s32 %s19, %s33
    %s98 = sor.u32 %s96, %s97
    %p99 = scmp.eq.s32.totalorder %s98, 0
    %s101 = sadd.s32 %s100, 1
    %s102 = scalar_select %p99, %s100, %s101
    %p105 = pneg %p99
    %p106 = scmp.eq.s32.totalorder %s11, 3
    %p107 = por %p105, %p106
    %p108 = scmp.ne.s32.totalorder %s100, %s103
    %p109 = scmp.eq.s32.totalorder %s11, 0
    %p110 = por %p108, %p109
    %p111 = scmp.ne.s32.totalorder %s100, %s103
    %p112 = scmp.eq.s32.totalorder %s16, 3
    %p113 = por %p111, %p112
    %p114 = scmp.ne.s32.totalorder %s103, %s104
    %p115 = scmp.eq.s32.totalorder %s16, 0
    %p116 = por %p114, %p115
    %p117 = scmp.ne.s32.totalorder %s103, %s104
    %p118 = scmp.eq.s32.totalorder %s17, 3
    %p119 = por %p117, %p118
    %p121 = scmp.ne.s32.totalorder %s104, %s120
    %p122 = scmp.eq.s32.totalorder %s17, 0
    %p123 = por %p121, %p122
    %s125 = sadd.s32 %s124, 1
    %p128 = scmp.eq.s32.totalorder %s11, 3
    %p129 = scmp.ne.s32.totalorder %s124, %s126
    %p130 = scmp.eq.s32.totalorder %s11, 0
    %p131 = por %p129, %p130
    %p132 = scmp.ne.s32.totalorder %s124, %s126
    %p133 = scmp.eq.s32.totalorder %s16, 3
    %p134 = por %p132, %p133
    %p135 = scmp.ne.s32.totalorder %s126, %s127
    %p136 = scmp.eq.s32.totalorder %s16, 0
    %p137 = por %p135, %p136
    %p138 = scmp.ne.s32.totalorder %s126, %s127
    %p139 = scmp.eq.s32.totalorder %s17, 3
    %p140 = por %p138, %p139
    %p142 = scmp.ne.s32.totalorder %s127, %s141
    %p143 = scmp.eq.s32.totalorder %s17, 0
    %p144 = por %p142, %p143
    %s146 = sadd.s32 %s145, 1
    %p149 = scmp.eq.s32.totalorder %s11, 3
    %p150 = scmp.ne.s32.totalorder %s145, %s147
    %p151 = scmp.eq.s32.totalorder %s11, 0
    %p152 = por %p150, %p151
    %p153 = scmp.ne.s32.totalorder %s145, %s147
    %p154 = scmp.eq.s32.totalorder %s16, 3
    %p155 = por %p153, %p154
    %p156 = scmp.ne.s32.totalorder %s147, %s148
    %p157 = scmp.eq.s32.totalorder %s16, 0
    %p158 = por %p156, %p157
    %p159 = scmp.ne.s32.totalorder %s147, %s148
    %p160 = scmp.eq.s32.totalorder %s17, 3
    %p161 = por %p159, %p160
    %p163 = scmp.ne.s32.totalorder %s148, %s162
    %p164 = scmp.eq.s32.totalorder %s17, 0
    %p165 = por %p163, %p164
    %p166 = scmp.le.s32.totalorder 1, %s11
    %p167 = scmp.lt.s32.totalorder %s11, 5
    %p168 = pnand %p166, %p167
    %p169 = pneg %p168
    // Predicated region
    $region9: #{_lambda_.31} parent=5 // pred_check
      _
    $region10: #{_lambda_.31} parent=5 // pred_check_branch
      %171 = sbr.rel (%p168) target = $region12
    $region11: #{_lambda_.31} parent=5 // pred_region
      %s172 = ssub.s32 %s11, 1
    $region12: #{_lambda_.31} parent=5 // pred_fallthru
      _
    %p173 = scmp.lt.s32.totalorder %s11, 4
    // Predicated region
    $region13: #{_lambda_.31} parent=5 // pred_check
      %p174 = pneg %p173
    $region14: #{_lambda_.31} parent=5 // pred_check_branch
      %176 = sbr.rel (%p174) target = $region16
    $region15: #{_lambda_.31} parent=5 // pred_region
      // Predicated region
      $region17: #{_lambda_.31} parent=15 // pred_check
        %p177 = pneg %p54
      $region18: #{_lambda_.31} parent=15 // pred_check_branch
        %179 = sbr.rel (%p177) target = $region20
      $region19: #{_lambda_.31} parent=15 // pred_region
        %s180 = smul.u32 16, %s19
        %p181 = scmp.lt.s32.totalorder %s18, 3
        %s182 = scalar_select %p181, %s18, 3
        %p183 = scmp.lt.s32.totalorder %s180, 15
        %s184 = scalar_select %p183, %s180, 15
        %p185 = scmp.lt.s32.totalorder %s20, 0
        %s186 = scalar_select %p185, %s20, 0
        %s187 = sadd.s32 %s186, %s184
        %s188 = smul.addr %s182, 16
        %s189 = sadd.s32 %s187, %s188
        %s190 = smul.addr %s189, 4
        %s191 = scalar_lea.vmem %s0, %s190
        %s192 = smul.u32 16, %s19
      $region20: #{_lambda_.31} parent=15 // pred_fallthru
        _
      // Predicated region
      $region21: #{_lambda_.31} parent=15 // pred_check
        %p193 = pneg %p82
      $region22: #{_lambda_.31} parent=15 // pred_check_branch
        %195 = sbr.rel (%p193) target = $region24
      $region23: #{_lambda_.31} parent=15 // pred_region
        %s196 = smul.u32 16, %s20
        %p197 = scmp.lt.s32.totalorder %s18, 3
        %s198 = scalar_select %p197, %s18, 3
        %p199 = scmp.lt.s32.totalorder %s196, 15
        %s200 = scalar_select %p199, %s196, 15
        %s201 = smul.addr %s198, 16
        %s202 = sadd.s32 %s200, %s201
        %s203 = smul.addr %s202, 4
        %s204 = scalar_lea.vmem %s1, %s203
        %s205 = smul.u32 16, %s20
      $region24: #{_lambda_.31} parent=15 // pred_fallthru
        _
    $region16: #{_lambda_.31} parent=5 // pred_fallthru
      _
    %p206 = scmp.le.s32.totalorder 1, %s11
    %p207 = scmp.lt.s32.totalorder %s11, 5
    %p208 = pnand %p206, %p207
    %p209 = pneg %p208
    // Predicated region
    $region25: #{_lambda_.31} parent=5 // pred_check
      _
    $region26: #{_lambda_.31} parent=5 // pred_check_branch
      %211 = sbr.rel (%p208) target = $region28
    $region27: #{_lambda_.31} parent=5 // pred_region
      %s212 = ssub.s32 %s11, 1
      %s213 = smul.u32 16, %s22
      %p214 = scmp.lt.s32.totalorder %s21, 3
      %s215 = scalar_select %p214, %s21, 3
      %p216 = scmp.lt.s32.totalorder %s213, 15
      %s217 = scalar_select %p216, %s213, 15
      %p218 = scmp.lt.s32.totalorder %s23, 0
      %s219 = scalar_select %p218, %s23, 0
      %s220 = sadd.s32 %s219, %s217
      %s221 = smul.addr %s215, 16
      %s222 = sadd.s32 %s220, %s221
      %s223 = smul.addr %s222, 4
      %s224 = scalar_lea.vmem %s0, %s223
      %p225 = pneg %p60
      %p226 = pneg %p57
      %s227 = smul.u32 16, %s23
      %p228 = scmp.lt.s32.totalorder %s21, 3
      %s229 = scalar_select %p228, %s21, 3
      %p230 = scmp.lt.s32.totalorder %s227, 15
      %s231 = scalar_select %p230, %s227, 15
      %s232 = smul.addr %s229, 16
      %s233 = sadd.s32 %s231, %s232
      %s234 = smul.addr %s233, 4
      %s235 = scalar_lea.vmem %s1, %s234
      %p236 = pneg %p88
      %p237 = pneg %p85
      %p238 = pneg %p116
      %p239 = pneg %p113
      %s240 = smul.u32 16, %s22
      %p241 = scmp.lt.s32.totalorder %s21, 3
      %s242 = scalar_select %p241, %s21, 3
      %p243 = scmp.lt.s32.totalorder %s240, 15
      %s244 = scalar_select %p243, %s240, 15
      %s245 = smul.addr %s242, 16
      %s246 = sadd.s32 %s244, %s245
      %s247 = smul.addr %s246, 8
      %s248 = scalar_lea.vmem %s2, %s247
      %p249 = pneg %p137
      %p250 = pneg %p134
      %p251 = pneg %p158
      %p252 = pneg %p155
      %s253 = smul.u32 16, %s22
      %p254 = scmp.lt.s32.totalorder %s21, 3
      %s255 = scalar_select %p254, %s21, 3
      %p256 = scmp.lt.s32.totalorder %s253, 15
      %s257 = scalar_select %p256, %s253, 15
      %p258 = scmp.lt.s32.totalorder %s23, 0
      %s259 = scalar_select %p258, %s23, 0
      %s260 = sadd.s32 %s259, %s257
      %s261 = smul.addr %s255, 16
      %s262 = sadd.s32 %s260, %s261
      %s263 = smul.addr %s262, 4
      %s264 = scalar_lea.vmem %s0, %s263
      %s265 = smul.u32 16, %s22
      %s266 = smul.u32 16, %s23
      %p267 = scmp.lt.s32.totalorder %s21, 3
      %s268 = scalar_select %p267, %s21, 3
      %p269 = scmp.lt.s32.totalorder %s266, 15
      %s270 = scalar_select %p269, %s266, 15
      %s271 = smul.addr %s268, 16
      %s272 = sadd.s32 %s270, %s271
      %s273 = smul.addr %s272, 4
      %s274 = scalar_lea.vmem %s1, %s273
      %s275 = smul.u32 16, %s23
      %s276 = smul.u32 16, %s22
      %p277 = scmp.lt.s32.totalorder %s21, 3
      %s278 = scalar_select %p277, %s21, 3
      %p279 = scmp.lt.s32.totalorder %s276, 15
      %s280 = scalar_select %p279, %s276, 15
      %s281 = smul.addr %s278, 16
      %s282 = sadd.s32 %s280, %s281
      %s283 = smul.addr %s282, 8
      %s284 = scalar_lea.vmem %s2, %s283
      %s285 = smul.u32 16, %s22
      %p287 = scmp.eq.s32.totalorder %s23, 0
      // Predicated region
      $region29: #{_lambda_.31} parent=27 // pred_check
        %p288 = pneg %p287
      $region30: #{_lambda_.31} parent=27 // pred_check_branch
        %290 = sbr.rel (%p288) target = $region32
      $region31: #{_lambda_.31} parent=27 // pred_region
        %vm291 = vcmask 64512
        %292 = vst.msk [vmem:[#allocation2] sm:$0xff] %vm291, 0.0
        %293 = vst.msk [vmem:[#allocation2 + $0x8] sm:$0xff] %vm291, 0.0
        %294 = vst.msk [vmem:[#allocation2 + $0x10] sm:$0xff] %vm291, 0.0
        %295 = vst.msk [vmem:[#allocation2 + $0x18] sm:$0xff] %vm291, 0.0
        %296 = vst.msk [vmem:[#allocation2 + $0x20] sm:$0xff] %vm291, 0.0
        %297 = vst.msk [vmem:[#allocation2 + $0x28] sm:$0xff] %vm291, 0.0
        %298 = vst.msk [vmem:[#allocation2 + $0x30] sm:$0xff] %vm291, 0.0
        %299 = vst.msk [vmem:[#allocation2 + $0x38] sm:$0xff] %vm291, 0.0
        %300 = vst.msk [vmem:[#allocation2 + $0x40] sm:$0xff] %vm291, 0.0
        %301 = vst.msk [vmem:[#allocation2 + $0x48] sm:$0xff] %vm291, 0.0
        %302 = vst.msk [vmem:[#allocation2 + $0x50] sm:$0xff] %vm291, 0.0
        %303 = vst.msk [vmem:[#allocation2 + $0x58] sm:$0xff] %vm291, 0.0
        %304 = vst.msk [vmem:[#allocation2 + $0x60] sm:$0xff] %vm291, 0.0
        %305 = vst.msk [vmem:[#allocation2 + $0x68] sm:$0xff] %vm291, 0.0
        %306 = vst.msk [vmem:[#allocation2 + $0x70] sm:$0xff] %vm291, 0.0
        %307 = vst.msk [vmem:[#allocation2 + $0x78] sm:$0xff] %vm291, 0.0
      $region32: #{_lambda_.31} parent=27 // pred_fallthru
        _
      %p308 = scmp.eq.s32.totalorder %s21, 0
      %p309 = scmp.eq.s32.totalorder %s22, 0
      %p310 = pnand %p308, %p309
      %p311 = pneg %p310
      %p312 = pnand %p311, %p287
      %p313 = pneg %p312
      // Predicated region
      $region33: #{_lambda_.31} parent=27 // pred_check
        _
      $region34: #{_lambda_.31} parent=27 // pred_check_branch
        %315 = sbr.rel (%p312) target = $region36
      $region35: #{_lambda_.31} parent=27 // pred_region
        %vm316 = vcmask 57344
        %317 = vst.msk [vmem:[%s3] sm:$0x1] %vm316, 0.0
        %318 = vst.msk [vmem:[%s4] sm:$0x1] %vm316, 0.0
      $region36: #{_lambda_.31} parent=27 // pred_fallthru
        _
      %v319 = vld [vmem:[%s264] sm:$0xf]
      %v320 = vld [vmem:[%s264 + $0x4] sm:$0xf]
      %v321 = vld [vmem:[%s264 + $0x8] sm:$0xf]
      %v322 = vld [vmem:[%s264 + $0xc] sm:$0xf]
      %v323 = vld [vmem:[%s264 + $0x10] sm:$0xf]
      %v324 = vld [vmem:[%s264 + $0x14] sm:$0xf]
      %v325 = vld [vmem:[%s264 + $0x18] sm:$0xf]
      %v326 = vld [vmem:[%s264 + $0x1c] sm:$0xf]
      %v327 = vld [vmem:[%s264 + $0x20] sm:$0xf]
      %v328 = vld [vmem:[%s264 + $0x24] sm:$0xf]
      %v329 = vld [vmem:[%s264 + $0x28] sm:$0xf]
      %v330 = vld [vmem:[%s264 + $0x2c] sm:$0xf]
      %v331 = vld [vmem:[%s264 + $0x30] sm:$0xf]
      %v332 = vld [vmem:[%s264 + $0x34] sm:$0xf]
      %v333 = vld [vmem:[%s264 + $0x38] sm:$0xf]
      %v334 = vld [vmem:[%s264 + $0x3c] sm:$0xf]
      %v335 = vmax.bf16 %v319, 0
      %v336 = vmax.bf16 %v320, 0
      %v337 = vmax.bf16 %v321, 0
      %v338 = vmax.bf16 %v322, 0
      %v339 = vmax.bf16 %v323, 0
      %v340 = vmax.bf16 %v324, 0
      %v341 = vmax.bf16 %v325, 0
      %v342 = vmax.bf16 %v326, 0
      %v343 = vmax.bf16 %v327, 0
      %v344 = vmax.bf16 %v328, 0
      %v345 = vmax.bf16 %v329, 0
      %v346 = vmax.bf16 %v330, 0
      %v347 = vmax.bf16 %v331, 0
      %v348 = vmax.bf16 %v332, 0
      %v349 = vmax.bf16 %v333, 0
      %v350 = vmax.bf16 %v334, 0
      %v351 = vld [vmem:[#allocation2] sm:$0xff]
      %v352 = vld [vmem:[#allocation2 + $0x8] sm:$0xff]
      %v353 = vld [vmem:[#allocation2 + $0x10] sm:$0xff]
      %v354 = vld [vmem:[#allocation2 + $0x18] sm:$0xff]
      %v355 = vld [vmem:[#allocation2 + $0x20] sm:$0xff]
      %v356 = vld [vmem:[#allocation2 + $0x28] sm:$0xff]
      %v357 = vld [vmem:[#allocation2 + $0x30] sm:$0xff]
      %v358 = vld [vmem:[#allocation2 + $0x38] sm:$0xff]
      %v359 = vld [vmem:[#allocation2 + $0x40] sm:$0xff]
      %v360 = vld [vmem:[#allocation2 + $0x48] sm:$0xff]
      %v361 = vld [vmem:[#allocation2 + $0x50] sm:$0xff]
      %v362 = vld [vmem:[#allocation2 + $0x58] sm:$0xff]
      %v363 = vld [vmem:[#allocation2 + $0x60] sm:$0xff]
      %v364 = vld [vmem:[#allocation2 + $0x68] sm:$0xff]
      %v365 = vld [vmem:[#allocation2 + $0x70] sm:$0xff]
      %v366 = vld [vmem:[#allocation2 + $0x78] sm:$0xff]
      %v367 = vld [vmem:[%s274] sm:$0xf]
      %v368 = vld [vmem:[%s274 + $0x4] sm:$0xf]
      %v369 = vld [vmem:[%s274 + $0x8] sm:$0xf]
      %v370 = vld [vmem:[%s274 + $0xc] sm:$0xf]
      %v371 = vld [vmem:[%s274 + $0x10] sm:$0xf]
      %v372 = vld [vmem:[%s274 + $0x14] sm:$0xf]
      %v373 = vld [vmem:[%s274 + $0x18] sm:$0xf]
      %v374 = vld [vmem:[%s274 + $0x1c] sm:$0xf]
      %v375 = vld [vmem:[%s274 + $0x20] sm:$0xf]
      %v376 = vld [vmem:[%s274 + $0x24] sm:$0xf]
      %v377 = vld [vmem:[%s274 + $0x28] sm:$0xf]
      %v378 = vld [vmem:[%s274 + $0x2c] sm:$0xf]
      %v379 = vld [vmem:[%s274 + $0x30] sm:$0xf]
      %v380 = vld [vmem:[%s274 + $0x34] sm:$0xf]
      %v381 = vld [vmem:[%s274 + $0x38] sm:$0xf]
      %v382 = vld [vmem:[%s274 + $0x3c] sm:$0xf]
      %v399 = vunpack.c.l.b16 %v335
      %v400 = vunpack.c.l.b16 %v336
      %v401 = vunpack.c.l.b16 %v337
      %v402 = vunpack.c.l.b16 %v338
      %v403 = vunpack.c.l.b16 %v339
      %v404 = vunpack.c.l.b16 %v340
      %v405 = vunpack.c.l.b16 %v341
      %v406 = vunpack.c.l.b16 %v342
      %v407 = vunpack.c.l.b16 %v343
      %v408 = vunpack.c.l.b16 %v344
      %v409 = vunpack.c.l.b16 %v345
      %v410 = vunpack.c.l.b16 %v346
      %v411 = vunpack.c.l.b16 %v347
      %v412 = vunpack.c.l.b16 %v348
      %v413 = vunpack.c.l.b16 %v349
      %v414 = vunpack.c.l.b16 %v350
      %v415 = vpack.c.b16 %v400, %v399
      %v416 = vpack.c.b16 %v402, %v401
      %v417 = vpack.c.b16 %v404, %v403
      %v418 = vpack.c.b16 %v406, %v405
      %v419 = vpack.c.b16 %v408, %v407
      %v420 = vpack.c.b16 %v410, %v409
      %v421 = vpack.c.b16 %v412, %v411
      %v422 = vpack.c.b16 %v414, %v413
      %v447 = vunpack.c.l.b16 %v367
      %v448 = vunpack.c.l.b16 %v368
      %v449 = vunpack.c.l.b16 %v369
      %v450 = vunpack.c.l.b16 %v370
      %v451 = vunpack.c.l.b16 %v371
      %v452 = vunpack.c.l.b16 %v372
      %v453 = vunpack.c.l.b16 %v373
      %v454 = vunpack.c.l.b16 %v374
      %v455 = vunpack.c.l.b16 %v375
      %v456 = vunpack.c.l.b16 %v376
      %v457 = vunpack.c.l.b16 %v377
      %v458 = vunpack.c.l.b16 %v378
      %v459 = vunpack.c.l.b16 %v379
      %v460 = vunpack.c.l.b16 %v380
      %v461 = vunpack.c.l.b16 %v381
      %v462 = vunpack.c.l.b16 %v382
      %v463 = vpack.c.b16 %v448, %v447
      %v464 = vpack.c.b16 %v450, %v449
      %v465 = vpack.c.b16 %v452, %v451
      %v466 = vpack.c.b16 %v454, %v453
      %v467 = vpack.c.b16 %v456, %v455
      %v468 = vpack.c.b16 %v458, %v457
      %v469 = vpack.c.b16 %v460, %v459
      %v470 = vpack.c.b16 %v462, %v461
      %479 = vmatprep.subr.bf16.mxu0 0
      %480 = vmatpush1.bf16.msra.mxu0 %v463
      %481 = vmatprep.subr.bf16.mxu0 0
      %482 = vmatpush1.bf16.msra.mxu0 %v464
      %483 = vmatprep.subr.bf16.mxu0 0
      %484 = vmatpush1.bf16.msra.mxu0 %v465
      %485 = vmatprep.subr.bf16.mxu0 0
      %486 = vmatpush1.bf16.msra.mxu0 %v466
      %487 = vmatprep.subr.bf16.mxu0 0
      %488 = vmatpush1.bf16.msra.mxu0 %v467
      %489 = vmatprep.subr.bf16.mxu0 0
      %490 = vmatpush1.bf16.msra.mxu0 %v468
      %491 = vmatprep.subr.bf16.mxu0 0
      %492 = vmatpush1.bf16.msra.mxu0 %v469
      %493 = vmatprep.subr.bf16.mxu0 0
      %494 = vmatpush1.bf16.msra.mxu0 %v470
      %495 = vmatprep.subr.bf16.mxu0 0
      %496 = vmatpush1.bf16.msra.mxu0 0
      %497 = vmatprep.subr.bf16.mxu0 0
      %498 = vmatpush1.bf16.msra.mxu0 0
      %499 = vmatprep.subr.bf16.mxu0 0
      %500 = vmatpush1.bf16.msra.mxu0 0
      %501 = vmatprep.subr.bf16.mxu0 0
      %502 = vmatpush1.bf16.msra.mxu0 0
      %503 = vmatprep.subr.bf16.mxu0 0
      %504 = vmatpush1.bf16.msra.mxu0 0
      %505 = vmatprep.subr.bf16.mxu0 0
      %506 = vmatpush1.bf16.msra.mxu0 0
      %507 = vmatprep.subr.bf16.mxu0 0
      %508 = vmatpush1.bf16.msra.mxu0 0
      %509 = vmatprep.subr.bf16.mxu0 0
      %510 = vmatpush1.bf16.msra.mxu0 0
      %511 = vmatprep.mubr.bf16.mxu0 0
      %512 = vmatmul.mubr.bf16.gmra.mrb[0].mxu0 %v415
      %v513 = vpop.f32.mrb[0].mxu0
      %v514 = vadd.f32 0.0, %v513
      %v515 = vpop.f32.mrb[0].mxu0
      %v516 = vpop.f32.mrb[0].mxu0
      %v517 = vadd.f32 0.0, %v516
      %v518 = vpop.f32.mrb[0].mxu0
      %519 = vmatprep.mubr.bf16.mxu0 0
      %520 = vmatmul.mubr.bf16.gmra.mrb[0].mxu0 %v416
      %v521 = vpop.f32.mrb[0].mxu0
      %v522 = vadd.f32 0.0, %v521
      %v523 = vpop.f32.mrb[0].mxu0
      %v524 = vpop.f32.mrb[0].mxu0
      %v525 = vadd.f32 0.0, %v524
      %v526 = vpop.f32.mrb[0].mxu0
      %527 = vmatprep.mubr.bf16.mxu0 0
      %528 = vmatmul.mubr.bf16.gmra.mrb[0].mxu0 %v417
      %v529 = vpop.f32.mrb[0].mxu0
      %v530 = vadd.f32 0.0, %v529
      %v531 = vpop.f32.mrb[0].mxu0
      %v532 = vpop.f32.mrb[0].mxu0
      %v533 = vadd.f32 0.0, %v532
      %v534 = vpop.f32.mrb[0].mxu0
      %535 = vmatprep.mubr.bf16.mxu0 0
      %536 = vmatmul.mubr.bf16.gmra.mrb[0].mxu0 %v418
      %v537 = vpop.f32.mrb[0].mxu0
      %v538 = vadd.f32 0.0, %v537
      %v539 = vpop.f32.mrb[0].mxu0
      %v540 = vpop.f32.mrb[0].mxu0
      %v541 = vadd.f32 0.0, %v540
      %v542 = vpop.f32.mrb[0].mxu0
      %543 = vmatprep.mubr.bf16.mxu0 0
      %544 = vmatmul.mubr.bf16.gmra.mrb[0].mxu0 %v419
      %v545 = vpop.f32.mrb[0].mxu0
      %v546 = vadd.f32 0.0, %v545
      %v547 = vpop.f32.mrb[0].mxu0
      %v548 = vpop.f32.mrb[0].mxu0
      %v549 = vadd.f32 0.0, %v548
      %v550 = vpop.f32.mrb[0].mxu0
      %551 = vmatprep.mubr.bf16.mxu0 0
      %552 = vmatmul.mubr.bf16.gmra.mrb[0].mxu0 %v420
      %v553 = vpop.f32.mrb[0].mxu0
      %v554 = vadd.f32 0.0, %v553
      %v555 = vpop.f32.mrb[0].mxu0
      %v556 = vpop.f32.mrb[0].mxu0
      %v557 = vadd.f32 0.0, %v556
      %v558 = vpop.f32.mrb[0].mxu0
      %559 = vmatprep.mubr.bf16.mxu0 0
      %560 = vmatmul.mubr.bf16.gmra.mrb[0].mxu0 %v421
      %v561 = vpop.f32.mrb[0].mxu0
      %v562 = vadd.f32 0.0, %v561
      %v563 = vpop.f32.mrb[0].mxu0
      %v564 = vpop.f32.mrb[0].mxu0
      %v565 = vadd.f32 0.0, %v564
      %v566 = vpop.f32.mrb[0].mxu0
      %567 = vmatprep.mubr.bf16.mxu0 0
      %568 = vmatmul.mubr.bf16.gmra.mrb[0].mxu0 %v422
      %v569 = vpop.f32.mrb[0].mxu0
      %v570 = vadd.f32 0.0, %v569
      %v571 = vpop.f32.mrb[0].mxu0
      %v572 = vpop.f32.mrb[0].mxu0
      %v573 = vadd.f32 0.0, %v572
      %v574 = vpop.f32.mrb[0].mxu0
      %575 = vdwg.mxu0
      %v576 = vadd.f32 %v351, %v514
      %v577 = vadd.f32 %v352, %v517
      %v578 = vadd.f32 %v353, %v522
      %v579 = vadd.f32 %v354, %v525
      %v580 = vadd.f32 %v355, %v530
      %v581 = vadd.f32 %v356, %v533
      %v582 = vadd.f32 %v357, %v538
      %v583 = vadd.f32 %v358, %v541
      %v584 = vadd.f32 %v359, %v546
      %v585 = vadd.f32 %v360, %v549
      %v586 = vadd.f32 %v361, %v554
      %v587 = vadd.f32 %v362, %v557
      %v588 = vadd.f32 %v363, %v562
      %v589 = vadd.f32 %v364, %v565
      %v590 = vadd.f32 %v365, %v570
      %v591 = vadd.f32 %v366, %v573
      %vm592 = vcmask 64512
      %593 = vst.msk [vmem:[#allocation2] sm:$0xff] %vm592, %v576
      %594 = vst.msk [vmem:[#allocation2 + $0x8] sm:$0xff] %vm592, %v577
      %595 = vst.msk [vmem:[#allocation2 + $0x10] sm:$0xff] %vm592, %v578
      %596 = vst.msk [vmem:[#allocation2 + $0x18] sm:$0xff] %vm592, %v579
      %597 = vst.msk [vmem:[#allocation2 + $0x20] sm:$0xff] %vm592, %v580
      %598 = vst.msk [vmem:[#allocation2 + $0x28] sm:$0xff] %vm592, %v581
      %599 = vst.msk [vmem:[#allocation2 + $0x30] sm:$0xff] %vm592, %v582
      %600 = vst.msk [vmem:[#allocation2 + $0x38] sm:$0xff] %vm592, %v583
      %601 = vst.msk [vmem:[#allocation2 + $0x40] sm:$0xff] %vm592, %v584
      %602 = vst.msk [vmem:[#allocation2 + $0x48] sm:$0xff] %vm592, %v585
      %603 = vst.msk [vmem:[#allocation2 + $0x50] sm:$0xff] %vm592, %v586
      %604 = vst.msk [vmem:[#allocation2 + $0x58] sm:$0xff] %vm592, %v587
      %605 = vst.msk [vmem:[#allocation2 + $0x60] sm:$0xff] %vm592, %v588
      %606 = vst.msk [vmem:[#allocation2 + $0x68] sm:$0xff] %vm592, %v589
      %607 = vst.msk [vmem:[#allocation2 + $0x70] sm:$0xff] %vm592, %v590
      %608 = vst.msk [vmem:[#allocation2 + $0x78] sm:$0xff] %vm592, %v591
      // Predicated region
      $region37: #{_lambda_.31} parent=27 // pred_check
        %p609 = pneg %p287
      $region38: #{_lambda_.31} parent=27 // pred_check_branch
        %611 = sbr.rel (%p609) target = $region40
      $region39: #{_lambda_.31} parent=27 // pred_region
        %v612 = vld [vmem:[#allocation2] sm:$0xff]
        %v613 = vld [vmem:[#allocation2 + $0x8] sm:$0xff]
        %v614 = vld [vmem:[#allocation2 + $0x10] sm:$0xff]
        %v615 = vld [vmem:[#allocation2 + $0x18] sm:$0xff]
        %v616 = vld [vmem:[#allocation2 + $0x20] sm:$0xff]
        %v617 = vld [vmem:[#allocation2 + $0x28] sm:$0xff]
        %v618 = vld [vmem:[#allocation2 + $0x30] sm:$0xff]
        %v619 = vld [vmem:[#allocation2 + $0x38] sm:$0xff]
        %v620 = vld [vmem:[#allocation2 + $0x40] sm:$0xff]
        %v621 = vld [vmem:[#allocation2 + $0x48] sm:$0xff]
        %v622 = vld [vmem:[#allocation2 + $0x50] sm:$0xff]
        %v623 = vld [vmem:[#allocation2 + $0x58] sm:$0xff]
        %v624 = vld [vmem:[#allocation2 + $0x60] sm:$0xff]
        %v625 = vld [vmem:[#allocation2 + $0x68] sm:$0xff]
        %v626 = vld [vmem:[#allocation2 + $0x70] sm:$0xff]
        %v627 = vld [vmem:[#allocation2 + $0x78] sm:$0xff]
        %628 = vst.msk [vmem:[%s284] sm:$0xff] %vm592, %v612
        %629 = vst.msk [vmem:[%s284 + $0x8] sm:$0xff] %vm592, %v613
        %630 = vst.msk [vmem:[%s284 + $0x10] sm:$0xff] %vm592, %v614
        %631 = vst.msk [vmem:[%s284 + $0x18] sm:$0xff] %vm592, %v615
        %632 = vst.msk [vmem:[%s284 + $0x20] sm:$0xff] %vm592, %v616
        %633 = vst.msk [vmem:[%s284 + $0x28] sm:$0xff] %vm592, %v617
        %634 = vst.msk [vmem:[%s284 + $0x30] sm:$0xff] %vm592, %v618
        %635 = vst.msk [vmem:[%s284 + $0x38] sm:$0xff] %vm592, %v619
        %636 = vst.msk [vmem:[%s284 + $0x40] sm:$0xff] %vm592, %v620
        %637 = vst.msk [vmem:[%s284 + $0x48] sm:$0xff] %vm592, %v621
        %638 = vst.msk [vmem:[%s284 + $0x50] sm:$0xff] %vm592, %v622
        %639 = vst.msk [vmem:[%s284 + $0x58] sm:$0xff] %vm592, %v623
        %640 = vst.msk [vmem:[%s284 + $0x60] sm:$0xff] %vm592, %v624
        %641 = vst.msk [vmem:[%s284 + $0x68] sm:$0xff] %vm592, %v625
        %642 = vst.msk [vmem:[%s284 + $0x70] sm:$0xff] %vm592, %v626
        %643 = vst.msk [vmem:[%s284 + $0x78] sm:$0xff] %vm592, %v627
        %v644 = vld [vmem:[%s3] sm:$0x1]
        %v645 = vsel %vm592, %v612, 0.0
        %v646 = vsel %vm592, %v613, 0.0
        %v647 = vadd.f32 %v645, %v646
        %v648 = vsel %vm592, %v614, 0.0
        %v649 = vadd.f32 %v647, %v648
        %v650 = vsel %vm592, %v615, 0.0
        %v651 = vadd.f32 %v649, %v650
        %v652 = vsel %vm592, %v616, 0.0
        %v653 = vadd.f32 %v651, %v652
        %v654 = vsel %vm592, %v617, 0.0
        %v655 = vadd.f32 %v653, %v654
        %v656 = vsel %vm592, %v618, 0.0
        %v657 = vadd.f32 %v655, %v656
        %v658 = vsel %vm592, %v619, 0.0
        %v659 = vadd.f32 %v657, %v658
        %v660 = vsel %vm592, %v620, 0.0
        %v661 = vadd.f32 %v659, %v660
        %v662 = vsel %vm592, %v621, 0.0
        %v663 = vadd.f32 %v661, %v662
        %v664 = vsel %vm592, %v622, 0.0
        %v665 = vadd.f32 %v663, %v664
        %v666 = vsel %vm592, %v623, 0.0
        %v667 = vadd.f32 %v665, %v666
        %v668 = vsel %vm592, %v624, 0.0
        %v669 = vadd.f32 %v667, %v668
        %v670 = vsel %vm592, %v625, 0.0
        %v671 = vadd.f32 %v669, %v670
        %v672 = vsel %vm592, %v626, 0.0
        %v673 = vadd.f32 %v671, %v672
        %v674 = vsel %vm592, %v627, 0.0
        %v675 = vadd.f32 %v673, %v674
        %v676 = vrot.slane %v675, 4
        %v677 = vadd.f32 %v675, %v676
        %v678 = vrot.slane %v677, 2
        %v679 = vadd.f32 %v677, %v678
        %v680 = vrot.slane %v679, 1
        %v681 = vadd.f32 %v679, %v680
        %v682 = vadd.f32 %v644, %v681
        %vm683 = vcmask 57344
        %684 = vst.msk [vmem:[%s3] sm:$0x1] %vm683, %v682
        %v685 = vld [vmem:[%s4] sm:$0x1]
        %v686 = vmul.f32 %v612, %v612
        %v687 = vmul.f32 %v613, %v613
        %v688 = vmul.f32 %v614, %v614
        %v689 = vmul.f32 %v615, %v615
        %v690 = vmul.f32 %v616, %v616
        %v691 = vmul.f32 %v617, %v617
        %v692 = vmul.f32 %v618, %v618
        %v693 = vmul.f32 %v619, %v619
        %v694 = vmul.f32 %v620, %v620
        %v695 = vmul.f32 %v621, %v621
        %v696 = vmul.f32 %v622, %v622
        %v697 = vmul.f32 %v623, %v623
        %v698 = vmul.f32 %v624, %v624
        %v699 = vmul.f32 %v625, %v625
        %v700 = vmul.f32 %v626, %v626
        %v701 = vmul.f32 %v627, %v627
        %v702 = vsel %vm592, %v686, 0.0
        %v703 = vsel %vm592, %v687, 0.0
        %v704 = vadd.f32 %v702, %v703
        %v705 = vsel %vm592, %v688, 0.0
        %v706 = vadd.f32 %v704, %v705
        %v707 = vsel %vm592, %v689, 0.0
        %v708 = vadd.f32 %v706, %v707
        %v709 = vsel %vm592, %v690, 0.0
        %v710 = vadd.f32 %v708, %v709
        %v711 = vsel %vm592, %v691, 0.0
        %v712 = vadd.f32 %v710, %v711
        %v713 = vsel %vm592, %v692, 0.0
        %v714 = vadd.f32 %v712, %v713
        %v715 = vsel %vm592, %v693, 0.0
        %v716 = vadd.f32 %v714, %v715
        %v717 = vsel %vm592, %v694, 0.0
        %v718 = vadd.f32 %v716, %v717
        %v719 = vsel %vm592, %v695, 0.0
        %v720 = vadd.f32 %v718, %v719
        %v721 = vsel %vm592, %v696, 0.0
        %v722 = vadd.f32 %v720, %v721
        %v723 = vsel %vm592, %v697, 0.0
        %v724 = vadd.f32 %v722, %v723
        %v725 = vsel %vm592, %v698, 0.0
        %v726 = vadd.f32 %v724, %v725
        %v727 = vsel %vm592, %v699, 0.0
        %v728 = vadd.f32 %v726, %v727
        %v729 = vsel %vm592, %v700, 0.0
        %v730 = vadd.f32 %v728, %v729
        %v731 = vsel %vm592, %v701, 0.0
        %v732 = vadd.f32 %v730, %v731
        %v733 = vrot.slane %v732, 4
        %v734 = vadd.f32 %v732, %v733
        %v735 = vrot.slane %v734, 2
        %v736 = vadd.f32 %v734, %v735
        %v737 = vrot.slane %v736, 1
        %v738 = vadd.f32 %v736, %v737
        %v739 = vadd.f32 %v685, %v738
        %740 = vst.msk [vmem:[%s4] sm:$0x1] %vm683, %v739
      $region40: #{_lambda_.31} parent=27 // pred_fallthru
        _
      %s741 = smul.u32 16, %s22
      %p742 = scmp.lt.s32.totalorder %s21, 3
      %s743 = scalar_select %p742, %s21, 3
      %p744 = scmp.lt.s32.totalorder %s741, 15
      %s745 = scalar_select %p744, %s741, 15
      %s746 = smul.addr %s743, 16
      %s747 = sadd.s32 %s745, %s746
      %s748 = smul.addr %s747, 8
      %s749 = scalar_lea.vmem %s2, %s748
      // Predicated region
      $region41: #{_lambda_.31} parent=27 // pred_check
        %p750 = pneg %p113
      $region42: #{_lambda_.31} parent=27 // pred_check_branch
        %752 = sbr.rel (%p750) target = $region44
      $region43: #{_lambda_.31} parent=27 // pred_region
        %s753 = smul.u32 16, %s22
      $region44: #{_lambda_.31} parent=27 // pred_fallthru
        _
      // Predicated region
      $region45: #{_lambda_.31} parent=27 // pred_check
        %p754 = pneg %p134
      $region46: #{_lambda_.31} parent=27 // pred_check_branch
        %756 = sbr.rel (%p754) target = $region48
      $region47: #{_lambda_.31} parent=27 // pred_region
        _
      $region48: #{_lambda_.31} parent=27 // pred_fallthru
        _
      // Predicated region
      $region49: #{_lambda_.31} parent=27 // pred_check
        %p757 = pneg %p155
      $region50: #{_lambda_.31} parent=27 // pred_check_branch
        %759 = sbr.rel (%p757) target = $region52
      $region51: #{_lambda_.31} parent=27 // pred_region
        _
      $region52: #{_lambda_.31} parent=27 // pred_fallthru
        _
      // Predicated region
      $region53: #{_lambda_.31} parent=27 // pred_check
        %p760 = pneg %p134
      $region54: #{_lambda_.31} parent=27 // pred_check_branch
        %762 = sbr.rel (%p760) target = $region56
      $region55: #{_lambda_.31} parent=27 // pred_region
        _
      $region56: #{_lambda_.31} parent=27 // pred_fallthru
        _
      // Predicated region
      $region57: #{_lambda_.31} parent=27 // pred_check
        %p763 = pneg %p155
      $region58: #{_lambda_.31} parent=27 // pred_check_branch
        %765 = sbr.rel (%p763) target = $region60
      $region59: #{_lambda_.31} parent=27 // pred_region
        _
      $region60: #{_lambda_.31} parent=27 // pred_fallthru
        _
    $region28: #{_lambda_.31} parent=5 // pred_fallthru
      _
    %p766 = scmp.le.s32.totalorder 2, %s11
    // Predicated region
    $region61: #{_lambda_.31} parent=5 // pred_check
      %p767 = pneg %p766
    $region62: #{_lambda_.31} parent=5 // pred_check_branch
      %769 = sbr.rel (%p767) target = $region64
    $region63: #{_lambda_.31} parent=5 // pred_region
      %s770 = ssub.s32 %s11, 2
      // Predicated region
      $region65: #{_lambda_.31} parent=63 // pred_check
        %p771 = pneg %p119
      $region66: #{_lambda_.31} parent=63 // pred_check_branch
        %773 = sbr.rel (%p771) target = $region68
      $region67: #{_lambda_.31} parent=63 // pred_region
        %s774 = smul.u32 16, %s25
        %p775 = scmp.lt.s32.totalorder %s24, 3
        %s776 = scalar_select %p775, %s24, 3
        %p777 = scmp.lt.s32.totalorder %s774, 15
        %s778 = scalar_select %p777, %s774, 15
        %s779 = smul.addr %s776, 16
        %s780 = sadd.s32 %s778, %s779
        %s781 = smul.addr %s780, 8
        %s782 = scalar_lea.vmem %s2, %s781
      $region68: #{_lambda_.31} parent=63 // pred_fallthru
        _
    $region64: #{_lambda_.31} parent=5 // pred_fallthru
      _
  $region6: #{_lambda_.31} parent=0 // loop_footer
    %s15 = sadd.s32 1, %s11
  $region7: #{_lambda_.31} parent=0 // loop_footer_branch
    %10 = sbr.rel target = $region3
  $region8: #{_lambda_.31} parent=0 // loop_exit
    _

// kernel: _lambda_.32
$region0: #{_lambda_.32}
  #allocation0 [shape = 'u32[]', space=smem, size = 0x4, offset = 0x4, fixed_abs, tag = 'smem constant byte address 0x4 - core index']
  #allocation1 [shape = 'u32[144,128]{1,0:T(1,128)}', space=vmem, size = 0x12000, scoped, tag = 'internal scratch']
  %s0 = inlined_call_operand.vmem [shape: f32[512,8], index: 0, kind: input, shape index: {}]
  %s1 = inlined_call_operand.vmem [shape: f32[512,8], index: 1, kind: input, shape index: {}]
  %s2 = inlined_call_operand.vmem [shape: f32[1,8], index: 2, kind: input, shape index: {}]
  %s3 = inlined_call_operand.vmem [shape: f32[1,8], index: 3, kind: input, shape index: {}]
  %s4 = inlined_call_operand.vmem [shape: f32[512,16], index: 4, kind: output, shape index: {}]
  %s5 = sld [smem:[#allocation0]]
  $region26: #{_lambda_.32} parent=0
    _
  %s7 = ssub.s32 1, %s5
  %s8 = scalar_select 0, %s7, %s5
  // Predicated region
  $region2: #{_lambda_.32} parent=0 // pred_check
    _
  $region3: #{_lambda_.32} parent=0 // pred_check_branch
    %10 = sbr.rel (0) target = $region5
  $region4: #{_lambda_.32} parent=0 // pred_region
    _
  $region5: #{_lambda_.32} parent=0 // pred_fallthru
    _
  // Predicated region
  $region6: #{_lambda_.32} parent=0 // pred_check
    _
  $region7: #{_lambda_.32} parent=0 // pred_check_branch
    %12 = sbr.rel (0) target = $region9
  $region8: #{_lambda_.32} parent=0 // pred_region
    _
  $region9: #{_lambda_.32} parent=0 // pred_fallthru
    _
  // Predicated region
  $region10: #{_lambda_.32} parent=0 // pred_check
    _
  $region11: #{_lambda_.32} parent=0 // pred_check_branch
    %14 = sbr.rel (0) target = $region13
  $region12: #{_lambda_.32} parent=0 // pred_region
    _
  $region13: #{_lambda_.32} parent=0 // pred_fallthru
    _
  // Predicated region
  $region14: #{_lambda_.32} parent=0 // pred_check
    _
  $region15: #{_lambda_.32} parent=0 // pred_check_branch
    %16 = sbr.rel (0) target = $region17
  $region16: #{_lambda_.32} parent=0 // pred_region
    _
  $region17: #{_lambda_.32} parent=0 // pred_fallthru
    _
  %v17 = vld [vmem:[%s1] sm:$0xff]
  %v18 = vld [vmem:[%s1 + $0x8] sm:$0xff]
  %v19 = vld [vmem:[%s1 + $0x10] sm:$0xff]
  %v20 = vld [vmem:[%s1 + $0x18] sm:$0xff]
  %v21 = vld [vmem:[%s1 + $0x20] sm:$0xff]
  %v22 = vld [vmem:[%s1 + $0x28] sm:$0xff]
  %v23 = vld [vmem:[%s1 + $0x30] sm:$0xff]
  %v24 = vld [vmem:[%s1 + $0x38] sm:$0xff]
  %v25 = vld [vmem:[%s1 + $0x40] sm:$0xff]
  %v26 = vld [vmem:[%s1 + $0x48] sm:$0xff]
  %v27 = vld [vmem:[%s1 + $0x50] sm:$0xff]
  %v28 = vld [vmem:[%s1 + $0x58] sm:$0xff]
  %v29 = vld [vmem:[%s1 + $0x60] sm:$0xff]
  %v30 = vld [vmem:[%s1 + $0x68] sm:$0xff]
  %v31 = vld [vmem:[%s1 + $0x70] sm:$0xff]
  %v32 = vld [vmem:[%s1 + $0x78] sm:$0xff]
  %v33 = vld [vmem:[%s1 + $0x80] sm:$0xff]
  %v34 = vld [vmem:[%s1 + $0x88] sm:$0xff]
  %v35 = vld [vmem:[%s1 + $0x90] sm:$0xff]
  %v36 = vld [vmem:[%s1 + $0x98] sm:$0xff]
  %v37 = vld [vmem:[%s1 + $0xa0] sm:$0xff]
  %v38 = vld [vmem:[%s1 + $0xa8] sm:$0xff]
  %v39 = vld [vmem:[%s1 + $0xb0] sm:$0xff]
  %v40 = vld [vmem:[%s1 + $0xb8] sm:$0xff]
  %v41 = vld [vmem:[%s1 + $0xc0] sm:$0xff]
  %v42 = vld [vmem:[%s1 + $0xc8] sm:$0xff]
  %v43 = vld [vmem:[%s1 + $0xd0] sm:$0xff]
  %v44 = vld [vmem:[%s1 + $0xd8] sm:$0xff]
  %v45 = vld [vmem:[%s1 + $0xe0] sm:$0xff]
  %v46 = vld [vmem:[%s1 + $0xe8] sm:$0xff]
  %v47 = vld [vmem:[%s1 + $0xf0] sm:$0xff]
  %v48 = vld [vmem:[%s1 + $0xf8] sm:$0xff]
  %v49 = vld [vmem:[%s1 + $0x100] sm:$0xff]
  %v50 = vld [vmem:[%s1 + $0x108] sm:$0xff]
  %v51 = vld [vmem:[%s1 + $0x110] sm:$0xff]
  %v52 = vld [vmem:[%s1 + $0x118] sm:$0xff]
  %v53 = vld [vmem:[%s1 + $0x120] sm:$0xff]
  %v54 = vld [vmem:[%s1 + $0x128] sm:$0xff]
  %v55 = vld [vmem:[%s1 + $0x130] sm:$0xff]
  %v56 = vld [vmem:[%s1 + $0x138] sm:$0xff]
  %v57 = vld [vmem:[%s1 + $0x140] sm:$0xff]
  %v58 = vld [vmem:[%s1 + $0x148] sm:$0xff]
  %v59 = vld [vmem:[%s1 + $0x150] sm:$0xff]
  %v60 = vld [vmem:[%s1 + $0x158] sm:$0xff]
  %v61 = vld [vmem:[%s1 + $0x160] sm:$0xff]
  %v62 = vld [vmem:[%s1 + $0x168] sm:$0xff]
  %v63 = vld [vmem:[%s1 + $0x170] sm:$0xff]
  %v64 = vld [vmem:[%s1 + $0x178] sm:$0xff]
  %v65 = vld [vmem:[%s1 + $0x180] sm:$0xff]
  %v66 = vld [vmem:[%s1 + $0x188] sm:$0xff]
  %v67 = vld [vmem:[%s1 + $0x190] sm:$0xff]
  %v68 = vld [vmem:[%s1 + $0x198] sm:$0xff]
  %v69 = vld [vmem:[%s1 + $0x1a0] sm:$0xff]
  %v70 = vld [vmem:[%s1 + $0x1a8] sm:$0xff]
  %v71 = vld [vmem:[%s1 + $0x1b0] sm:$0xff]
  %v72 = vld [vmem:[%s1 + $0x1b8] sm:$0xff]
  %v73 = vld [vmem:[%s1 + $0x1c0] sm:$0xff]
  %v74 = vld [vmem:[%s1 + $0x1c8] sm:$0xff]
  %v75 = vld [vmem:[%s1 + $0x1d0] sm:$0xff]
  %v76 = vld [vmem:[%s1 + $0x1d8] sm:$0xff]
  %v77 = vld [vmem:[%s1 + $0x1e0] sm:$0xff]
  %v78 = vld [vmem:[%s1 + $0x1e8] sm:$0xff]
  %v79 = vld [vmem:[%s1 + $0x1f0] sm:$0xff]
  %v80 = vld [vmem:[%s1 + $0x1f8] sm:$0xff]
  %v81 = vld [vmem:[%s2] sm:$0x1]
  %v83 = vlaneseq
  %v84 = vshrl.u32 %v83, 7
  %v85 = vsub.s32 0, %v84
  %v86 = vrot.slane %v81, %v85
  %v88 = vmul.f32 %v17, %v86
  %v89 = vmul.f32 %v18, %v86
  %v90 = vmul.f32 %v19, %v86
  %v91 = vmul.f32 %v20, %v86
  %v92 = vmul.f32 %v21, %v86
  %v93 = vmul.f32 %v22, %v86
  %v94 = vmul.f32 %v23, %v86
  %v95 = vmul.f32 %v24, %v86
  %v96 = vmul.f32 %v25, %v86
  %v97 = vmul.f32 %v26, %v86
  %v98 = vmul.f32 %v27, %v86
  %v99 = vmul.f32 %v28, %v86
  %v100 = vmul.f32 %v29, %v86
  %v101 = vmul.f32 %v30, %v86
  %v102 = vmul.f32 %v31, %v86
  %v103 = vmul.f32 %v32, %v86
  %v104 = vmul.f32 %v33, %v86
  %v105 = vmul.f32 %v34, %v86
  %v106 = vmul.f32 %v35, %v86
  %v107 = vmul.f32 %v36, %v86
  %v108 = vmul.f32 %v37, %v86
  %v109 = vmul.f32 %v38, %v86
  %v110 = vmul.f32 %v39, %v86
  %v111 = vmul.f32 %v40, %v86
  %v112 = vmul.f32 %v41, %v86
  %v113 = vmul.f32 %v42, %v86
  %v114 = vmul.f32 %v43, %v86
  %v115 = vmul.f32 %v44, %v86
  %v116 = vmul.f32 %v45, %v86
  %v117 = vmul.f32 %v46, %v86
  %v118 = vmul.f32 %v47, %v86
  %v119 = vmul.f32 %v48, %v86
  %v120 = vmul.f32 %v49, %v86
  %v121 = vmul.f32 %v50, %v86
  %v122 = vmul.f32 %v51, %v86
  %v123 = vmul.f32 %v52, %v86
  %v124 = vmul.f32 %v53, %v86
  %v125 = vmul.f32 %v54, %v86
  %v126 = vmul.f32 %v55, %v86
  %v127 = vmul.f32 %v56, %v86
  %v128 = vmul.f32 %v57, %v86
  %v129 = vmul.f32 %v58, %v86
  %v130 = vmul.f32 %v59, %v86
  %v131 = vmul.f32 %v60, %v86
  %v132 = vmul.f32 %v61, %v86
  %v133 = vmul.f32 %v62, %v86
  %v134 = vmul.f32 %v63, %v86
  %v135 = vmul.f32 %v64, %v86
  %v136 = vmul.f32 %v65, %v86
  %v137 = vmul.f32 %v66, %v86
  %v138 = vmul.f32 %v67, %v86
  %v139 = vmul.f32 %v68, %v86
  %v140 = vmul.f32 %v69, %v86
  %v141 = vmul.f32 %v70, %v86
  %v142 = vmul.f32 %v71, %v86
  %v143 = vmul.f32 %v72, %v86
  %v144 = vmul.f32 %v73, %v86
  %v145 = vmul.f32 %v74, %v86
  %v146 = vmul.f32 %v75, %v86
  %v147 = vmul.f32 %v76, %v86
  %v148 = vmul.f32 %v77, %v86
  %v149 = vmul.f32 %v78, %v86
  %v150 = vmul.f32 %v79, %v86
  %v151 = vmul.f32 %v80, %v86
  %v152 = vld [vmem:[%s3] sm:$0x1]
  %v154 = vlaneseq
  %v155 = vshrl.u32 %v154, 7
  %v156 = vsub.s32 0, %v155
  %v157 = vrot.slane %v152, %v156
  %v159 = vadd.f32 %v88, %v157
  %v160 = vadd.f32 %v89, %v157
  %v161 = vadd.f32 %v90, %v157
  %v162 = vadd.f32 %v91, %v157
  %v163 = vadd.f32 %v92, %v157
  %v164 = vadd.f32 %v93, %v157
  %v165 = vadd.f32 %v94, %v157
  %v166 = vadd.f32 %v95, %v157
  %v167 = vadd.f32 %v96, %v157
  %v168 = vadd.f32 %v97, %v157
  %v169 = vadd.f32 %v98, %v157
  %v170 = vadd.f32 %v99, %v157
  %v171 = vadd.f32 %v100, %v157
  %v172 = vadd.f32 %v101, %v157
  %v173 = vadd.f32 %v102, %v157
  %v174 = vadd.f32 %v103, %v157
  %v175 = vadd.f32 %v104, %v157
  %v176 = vadd.f32 %v105, %v157
  %v177 = vadd.f32 %v106, %v157
  %v178 = vadd.f32 %v107, %v157
  %v179 = vadd.f32 %v108, %v157
  %v180 = vadd.f32 %v109, %v157
  %v181 = vadd.f32 %v110, %v157
  %v182 = vadd.f32 %v111, %v157
  %v183 = vadd.f32 %v112, %v157
  %v184 = vadd.f32 %v113, %v157
  %v185 = vadd.f32 %v114, %v157
  %v186 = vadd.f32 %v115, %v157
  %v187 = vadd.f32 %v116, %v157
  %v188 = vadd.f32 %v117, %v157
  %v189 = vadd.f32 %v118, %v157
  %v190 = vadd.f32 %v119, %v157
  %v191 = vadd.f32 %v120, %v157
  %v192 = vadd.f32 %v121, %v157
  %v193 = vadd.f32 %v122, %v157
  %v194 = vadd.f32 %v123, %v157
  %v195 = vadd.f32 %v124, %v157
  %v196 = vadd.f32 %v125, %v157
  %v197 = vadd.f32 %v126, %v157
  %v198 = vadd.f32 %v127, %v157
  %v199 = vadd.f32 %v128, %v157
  %v200 = vadd.f32 %v129, %v157
  %v201 = vadd.f32 %v130, %v157
  %v202 = vadd.f32 %v131, %v157
  %v203 = vadd.f32 %v132, %v157
  %v204 = vadd.f32 %v133, %v157
  %v205 = vadd.f32 %v134, %v157
  %v206 = vadd.f32 %v135, %v157
  %v207 = vadd.f32 %v136, %v157
  %v208 = vadd.f32 %v137, %v157
  %v209 = vadd.f32 %v138, %v157
  %v210 = vadd.f32 %v139, %v157
  %v211 = vadd.f32 %v140, %v157
  %v212 = vadd.f32 %v141, %v157
  %v213 = vadd.f32 %v142, %v157
  %v214 = vadd.f32 %v143, %v157
  %v215 = vadd.f32 %v144, %v157
  %v216 = vadd.f32 %v145, %v157
  %v217 = vadd.f32 %v146, %v157
  %v218 = vadd.f32 %v147, %v157
  %v219 = vadd.f32 %v148, %v157
  %v220 = vadd.f32 %v149, %v157
  %v221 = vadd.f32 %v150, %v157
  %v222 = vadd.f32 %v151, %v157
  %v223 = vld [vmem:[%s0] sm:$0xff]
  %v224 = vld [vmem:[%s0 + $0x8] sm:$0xff]
  %v225 = vld [vmem:[%s0 + $0x10] sm:$0xff]
  %v226 = vld [vmem:[%s0 + $0x18] sm:$0xff]
  %v227 = vld [vmem:[%s0 + $0x20] sm:$0xff]
  %v228 = vld [vmem:[%s0 + $0x28] sm:$0xff]
  %v229 = vld [vmem:[%s0 + $0x30] sm:$0xff]
  %v230 = vld [vmem:[%s0 + $0x38] sm:$0xff]
  %v231 = vld [vmem:[%s0 + $0x40] sm:$0xff]
  %v232 = vld [vmem:[%s0 + $0x48] sm:$0xff]
  %v233 = vld [vmem:[%s0 + $0x50] sm:$0xff]
  %v234 = vld [vmem:[%s0 + $0x58] sm:$0xff]
  %v235 = vld [vmem:[%s0 + $0x60] sm:$0xff]
  %v236 = vld [vmem:[%s0 + $0x68] sm:$0xff]
  %v237 = vld [vmem:[%s0 + $0x70] sm:$0xff]
  %v238 = vld [vmem:[%s0 + $0x78] sm:$0xff]
  %v239 = vld [vmem:[%s0 + $0x80] sm:$0xff]
  %v240 = vld [vmem:[%s0 + $0x88] sm:$0xff]
  %v241 = vld [vmem:[%s0 + $0x90] sm:$0xff]
  %v242 = vld [vmem:[%s0 + $0x98] sm:$0xff]
  %v243 = vld [vmem:[%s0 + $0xa0] sm:$0xff]
  %v244 = vld [vmem:[%s0 + $0xa8] sm:$0xff]
  %v245 = vld [vmem:[%s0 + $0xb0] sm:$0xff]
  %v246 = vld [vmem:[%s0 + $0xb8] sm:$0xff]
  %v247 = vld [vmem:[%s0 + $0xc0] sm:$0xff]
  %v248 = vld [vmem:[%s0 + $0xc8] sm:$0xff]
  %v249 = vld [vmem:[%s0 + $0xd0] sm:$0xff]
  %v250 = vld [vmem:[%s0 + $0xd8] sm:$0xff]
  %v251 = vld [vmem:[%s0 + $0xe0] sm:$0xff]
  %v252 = vld [vmem:[%s0 + $0xe8] sm:$0xff]
  %v253 = vld [vmem:[%s0 + $0xf0] sm:$0xff]
  %v254 = vld [vmem:[%s0 + $0xf8] sm:$0xff]
  %v255 = vld [vmem:[%s0 + $0x100] sm:$0xff]
  %v256 = vld [vmem:[%s0 + $0x108] sm:$0xff]
  %v257 = vld [vmem:[%s0 + $0x110] sm:$0xff]
  %v258 = vld [vmem:[%s0 + $0x118] sm:$0xff]
  %v259 = vld [vmem:[%s0 + $0x120] sm:$0xff]
  %v260 = vld [vmem:[%s0 + $0x128] sm:$0xff]
  %v261 = vld [vmem:[%s0 + $0x130] sm:$0xff]
  %v262 = vld [vmem:[%s0 + $0x138] sm:$0xff]
  %v263 = vld [vmem:[%s0 + $0x140] sm:$0xff]
  %v264 = vld [vmem:[%s0 + $0x148] sm:$0xff]
  %v265 = vld [vmem:[%s0 + $0x150] sm:$0xff]
  %v266 = vld [vmem:[%s0 + $0x158] sm:$0xff]
  %v267 = vld [vmem:[%s0 + $0x160] sm:$0xff]
  %v268 = vld [vmem:[%s0 + $0x168] sm:$0xff]
  %v269 = vld [vmem:[%s0 + $0x170] sm:$0xff]
  %v270 = vld [vmem:[%s0 + $0x178] sm:$0xff]
  %v271 = vld [vmem:[%s0 + $0x180] sm:$0xff]
  %v272 = vld [vmem:[%s0 + $0x188] sm:$0xff]
  %v273 = vld [vmem:[%s0 + $0x190] sm:$0xff]
  %v274 = vld [vmem:[%s0 + $0x198] sm:$0xff]
  %v275 = vld [vmem:[%s0 + $0x1a0] sm:$0xff]
  %v276 = vld [vmem:[%s0 + $0x1a8] sm:$0xff]
  %v277 = vld [vmem:[%s0 + $0x1b0] sm:$0xff]
  %v278 = vld [vmem:[%s0 + $0x1b8] sm:$0xff]
  %v279 = vld [vmem:[%s0 + $0x1c0] sm:$0xff]
  %v280 = vld [vmem:[%s0 + $0x1c8] sm:$0xff]
  %v281 = vld [vmem:[%s0 + $0x1d0] sm:$0xff]
  %v282 = vld [vmem:[%s0 + $0x1d8] sm:$0xff]
  %v283 = vld [vmem:[%s0 + $0x1e0] sm:$0xff]
  %v284 = vld [vmem:[%s0 + $0x1e8] sm:$0xff]
  %v285 = vld [vmem:[%s0 + $0x1f0] sm:$0xff]
  %v286 = vld [vmem:[%s0 + $0x1f8] sm:$0xff]
  %351 = vrot.lane.b32.xlu0 %v159, 8
  %v352 = vpop.permute.xlu0 %351
  %353 = vrot.lane.b32.xlu0 %v160, 8
  %v354 = vpop.permute.xlu0 %353
  %355 = vrot.lane.b32.xlu0 %v161, 8
  %v356 = vpop.permute.xlu0 %355
  %357 = vrot.lane.b32.xlu0 %v162, 8
  %v358 = vpop.permute.xlu0 %357
  %359 = vrot.lane.b32.xlu0 %v163, 8
  %v360 = vpop.permute.xlu0 %359
  %361 = vrot.lane.b32.xlu0 %v164, 8
  %v362 = vpop.permute.xlu0 %361
  %363 = vrot.lane.b32.xlu0 %v165, 8
  %v364 = vpop.permute.xlu0 %363
  %365 = vrot.lane.b32.xlu0 %v166, 8
  %v366 = vpop.permute.xlu0 %365
  %367 = vrot.lane.b32.xlu0 %v167, 8
  %v368 = vpop.permute.xlu0 %367
  %369 = vrot.lane.b32.xlu0 %v168, 8
  %v370 = vpop.permute.xlu0 %369
  %371 = vrot.lane.b32.xlu0 %v169, 8
  %v372 = vpop.permute.xlu0 %371
  %373 = vrot.lane.b32.xlu0 %v170, 8
  %v374 = vpop.permute.xlu0 %373
  %375 = vrot.lane.b32.xlu0 %v171, 8
  %v376 = vpop.permute.xlu0 %375
  %377 = vrot.lane.b32.xlu0 %v172, 8
  %v378 = vpop.permute.xlu0 %377
  %379 = vrot.lane.b32.xlu0 %v173, 8
  %v380 = vpop.permute.xlu0 %379
  %381 = vrot.lane.b32.xlu0 %v174, 8
  %v382 = vpop.permute.xlu0 %381
  %383 = vrot.lane.b32.xlu0 %v175, 8
  %v384 = vpop.permute.xlu0 %383
  %385 = vrot.lane.b32.xlu0 %v176, 8
  %v386 = vpop.permute.xlu0 %385
  %387 = vrot.lane.b32.xlu0 %v177, 8
  %v388 = vpop.permute.xlu0 %387
  %389 = vrot.lane.b32.xlu0 %v178, 8
  %v390 = vpop.permute.xlu0 %389
  %391 = vrot.lane.b32.xlu0 %v179, 8
  %v392 = vpop.permute.xlu0 %391
  %393 = vrot.lane.b32.xlu0 %v180, 8
  %v394 = vpop.permute.xlu0 %393
  %395 = vrot.lane.b32.xlu0 %v181, 8
  %v396 = vpop.permute.xlu0 %395
  %397 = vrot.lane.b32.xlu0 %v182, 8
  %v398 = vpop.permute.xlu0 %397
  %399 = vrot.lane.b32.xlu0 %v183, 8
  %v400 = vpop.permute.xlu0 %399
  %401 = vrot.lane.b32.xlu0 %v184, 8
  %v402 = vpop.permute.xlu0 %401
  %403 = vrot.lane.b32.xlu0 %v185, 8
  %v404 = vpop.permute.xlu0 %403
  %405 = vrot.lane.b32.xlu0 %v186, 8
  %v406 = vpop.permute.xlu0 %405
  %407 = vrot.lane.b32.xlu0 %v187, 8
  %v408 = vpop.permute.xlu0 %407
  %409 = vrot.lane.b32.xlu0 %v188, 8
  %v410 = vpop.permute.xlu0 %409
  %411 = vrot.lane.b32.xlu0 %v189, 8
  %v412 = vpop.permute.xlu0 %411
  %413 = vrot.lane.b32.xlu0 %v190, 8
  %v414 = vpop.permute.xlu0 %413
  %415 = vrot.lane.b32.xlu0 %v191, 8
  %v416 = vpop.permute.xlu0 %415
  %417 = vrot.lane.b32.xlu0 %v192, 8
  %v418 = vpop.permute.xlu0 %417
  %419 = vrot.lane.b32.xlu0 %v193, 8
  %v420 = vpop.permute.xlu0 %419
  %421 = vrot.lane.b32.xlu0 %v194, 8
  %v422 = vpop.permute.xlu0 %421
  %423 = vrot.lane.b32.xlu0 %v195, 8
  %v424 = vpop.permute.xlu0 %423
  %425 = vrot.lane.b32.xlu0 %v196, 8
  %v426 = vpop.permute.xlu0 %425
  %427 = vrot.lane.b32.xlu0 %v197, 8
  %v428 = vpop.permute.xlu0 %427
  %429 = vrot.lane.b32.xlu0 %v198, 8
  %v430 = vpop.permute.xlu0 %429
  %431 = vrot.lane.b32.xlu0 %v199, 8
  %v432 = vpop.permute.xlu0 %431
  %433 = vrot.lane.b32.xlu0 %v200, 8
  %v434 = vpop.permute.xlu0 %433
  %435 = vrot.lane.b32.xlu0 %v201, 8
  %v436 = vpop.permute.xlu0 %435
  %437 = vrot.lane.b32.xlu0 %v202, 8
  %v438 = vpop.permute.xlu0 %437
  %439 = vrot.lane.b32.xlu0 %v203, 8
  %v440 = vpop.permute.xlu0 %439
  %441 = vrot.lane.b32.xlu0 %v204, 8
  %v442 = vpop.permute.xlu0 %441
  %443 = vrot.lane.b32.xlu0 %v205, 8
  %v444 = vpop.permute.xlu0 %443
  %445 = vrot.lane.b32.xlu0 %v206, 8
  %v446 = vpop.permute.xlu0 %445
  %447 = vrot.lane.b32.xlu0 %v207, 8
  %v448 = vpop.permute.xlu0 %447
  %449 = vrot.lane.b32.xlu0 %v208, 8
  %v450 = vpop.permute.xlu0 %449
  %451 = vrot.lane.b32.xlu0 %v209, 8
  %v452 = vpop.permute.xlu0 %451
  %453 = vrot.lane.b32.xlu0 %v210, 8
  %v454 = vpop.permute.xlu0 %453
  %455 = vrot.lane.b32.xlu0 %v211, 8
  %v456 = vpop.permute.xlu0 %455
  %457 = vrot.lane.b32.xlu0 %v212, 8
  %v458 = vpop.permute.xlu0 %457
  %459 = vrot.lane.b32.xlu0 %v213, 8
  %v460 = vpop.permute.xlu0 %459
  %461 = vrot.lane.b32.xlu0 %v214, 8
  %v462 = vpop.permute.xlu0 %461
  %463 = vrot.lane.b32.xlu0 %v215, 8
  %v464 = vpop.permute.xlu0 %463
  %465 = vrot.lane.b32.xlu0 %v216, 8
  %v466 = vpop.permute.xlu0 %465
  %467 = vrot.lane.b32.xlu0 %v217, 8
  %v468 = vpop.permute.xlu0 %467
  %469 = vrot.lane.b32.xlu0 %v218, 8
  %v470 = vpop.permute.xlu0 %469
  %471 = vrot.lane.b32.xlu0 %v219, 8
  %v472 = vpop.permute.xlu0 %471
  %473 = vrot.lane.b32.xlu0 %v220, 8
  %v474 = vpop.permute.xlu0 %473
  %475 = vrot.lane.b32.xlu0 %v221, 8
  %v476 = vpop.permute.xlu0 %475
  %477 = vrot.lane.b32.xlu0 %v222, 8
  %v478 = vpop.permute.xlu0 %477
  %vm543 = vcmask 64512
  %v544 = vsel %vm543, %v223, %v352
  %v545 = vsel %vm543, %v224, %v354
  %v546 = vsel %vm543, %v225, %v356
  %v547 = vsel %vm543, %v226, %v358
  %v548 = vsel %vm543, %v227, %v360
  %v549 = vsel %vm543, %v228, %v362
  %v550 = vsel %vm543, %v229, %v364
  %v551 = vsel %vm543, %v230, %v366
  %v552 = vsel %vm543, %v231, %v368
  %v553 = vsel %vm543, %v232, %v370
  %v554 = vsel %vm543, %v233, %v372
  %v555 = vsel %vm543, %v234, %v374
  %v556 = vsel %vm543, %v235, %v376
  %v557 = vsel %vm543, %v236, %v378
  %v558 = vsel %vm543, %v237, %v380
  %v559 = vsel %vm543, %v238, %v382
  %v560 = vsel %vm543, %v239, %v384
  %v561 = vsel %vm543, %v240, %v386
  %v562 = vsel %vm543, %v241, %v388
  %v563 = vsel %vm543, %v242, %v390
  %v564 = vsel %vm543, %v243, %v392
  %v565 = vsel %vm543, %v244, %v394
  %v566 = vsel %vm543, %v245, %v396
  %v567 = vsel %vm543, %v246, %v398
  %v568 = vsel %vm543, %v247, %v400
  %v569 = vsel %vm543, %v248, %v402
  %v570 = vsel %vm543, %v249, %v404
  %v571 = vsel %vm543, %v250, %v406
  %v572 = vsel %vm543, %v251, %v408
  %v573 = vsel %vm543, %v252, %v410
  %v574 = vsel %vm543, %v253, %v412
  %v575 = vsel %vm543, %v254, %v414
  %v576 = vsel %vm543, %v255, %v416
  %v577 = vsel %vm543, %v256, %v418
  %v578 = vsel %vm543, %v257, %v420
  %v579 = vsel %vm543, %v258, %v422
  %v580 = vsel %vm543, %v259, %v424
  %v581 = vsel %vm543, %v260, %v426
  %v582 = vsel %vm543, %v261, %v428
  %v583 = vsel %vm543, %v262, %v430
  %v584 = vsel %vm543, %v263, %v432
  %v585 = vsel %vm543, %v264, %v434
  %v586 = vsel %vm543, %v265, %v436
  %v587 = vsel %vm543, %v266, %v438
  %v588 = vsel %vm543, %v267, %v440
  %v589 = vsel %vm543, %v268, %v442
  %v590 = vsel %vm543, %v269, %v444
  %v591 = vsel %vm543, %v270, %v446
  %v592 = vsel %vm543, %v271, %v448
  %v593 = vsel %vm543, %v272, %v450
  %v594 = vsel %vm543, %v273, %v452
  %v595 = vsel %vm543, %v274, %v454
  %v596 = vsel %vm543, %v275, %v456
  %v597 = vsel %vm543, %v276, %v458
  %v598 = vsel %vm543, %v277, %v460
  %v599 = vsel %vm543, %v278, %v462
  %v600 = vsel %vm543, %v279, %v464
  %v601 = vsel %vm543, %v280, %v466
  %v602 = vsel %vm543, %v281, %v468
  %v603 = vsel %vm543, %v282, %v470
  %v604 = vsel %vm543, %v283, %v472
  %v605 = vsel %vm543, %v284, %v474
  %v606 = vsel %vm543, %v285, %v476
  %v607 = vsel %vm543, %v286, %v478
  %vm608 = vcmask 130048
  %609 = vst.msk [vmem:[%s4] sm:$0xff] %vm608, %v544
  %610 = vst.msk [vmem:[%s4 + $0x8] sm:$0xff] %vm608, %v545
  %611 = vst.msk [vmem:[%s4 + $0x10] sm:$0xff] %vm608, %v546
  %612 = vst.msk [vmem:[%s4 + $0x18] sm:$0xff] %vm608, %v547
  %613 = vst.msk [vmem:[%s4 + $0x20] sm:$0xff] %vm608, %v548
  %614 = vst.msk [vmem:[%s4 + $0x28] sm:$0xff] %vm608, %v549
  %615 = vst.msk [vmem:[%s4 + $0x30] sm:$0xff] %vm608, %v550
  %616 = vst.msk [vmem:[%s4 + $0x38] sm:$0xff] %vm608, %v551
  %617 = vst.msk [vmem:[%s4 + $0x40] sm:$0xff] %vm608, %v552
  %618 = vst.msk [vmem:[%s4 + $0x48] sm:$0xff] %vm608, %v553
  %619 = vst.msk [vmem:[%s4 + $0x50] sm:$0xff] %vm608, %v554
  %620 = vst.msk [vmem:[%s4 + $0x58] sm:$0xff] %vm608, %v555
  %621 = vst.msk [vmem:[%s4 + $0x60] sm:$0xff] %vm608, %v556
  %622 = vst.msk [vmem:[%s4 + $0x68] sm:$0xff] %vm608, %v557
  %623 = vst.msk [vmem:[%s4 + $0x70] sm:$0xff] %vm608, %v558
  %624 = vst.msk [vmem:[%s4 + $0x78] sm:$0xff] %vm608, %v559
  %625 = vst.msk [vmem:[%s4 + $0x80] sm:$0xff] %vm608, %v560
  %626 = vst.msk [vmem:[%s4 + $0x88] sm:$0xff] %vm608, %v561
  %627 = vst.msk [vmem:[%s4 + $0x90] sm:$0xff] %vm608, %v562
  %628 = vst.msk [vmem:[%s4 + $0x98] sm:$0xff] %vm608, %v563
  %629 = vst.msk [vmem:[%s4 + $0xa0] sm:$0xff] %vm608, %v564
  %630 = vst.msk [vmem:[%s4 + $0xa8] sm:$0xff] %vm608, %v565
  %631 = vst.msk [vmem:[%s4 + $0xb0] sm:$0xff] %vm608, %v566
  %632 = vst.msk [vmem:[%s4 + $0xb8] sm:$0xff] %vm608, %v567
  %633 = vst.msk [vmem:[%s4 + $0xc0] sm:$0xff] %vm608, %v568
  %634 = vst.msk [vmem:[%s4 + $0xc8] sm:$0xff] %vm608, %v569
  %635 = vst.msk [vmem:[%s4 + $0xd0] sm:$0xff] %vm608, %v570
  %636 = vst.msk [vmem:[%s4 + $0xd8] sm:$0xff] %vm608, %v571
  %637 = vst.msk [vmem:[%s4 + $0xe0] sm:$0xff] %vm608, %v572
  %638 = vst.msk [vmem:[%s4 + $0xe8] sm:$0xff] %vm608, %v573
  %639 = vst.msk [vmem:[%s4 + $0xf0] sm:$0xff] %vm608, %v574
  %640 = vst.msk [vmem:[%s4 + $0xf8] sm:$0xff] %vm608, %v575
  %641 = vst.msk [vmem:[%s4 + $0x100] sm:$0xff] %vm608, %v576
  %642 = vst.msk [vmem:[%s4 + $0x108] sm:$0xff] %vm608, %v577
  %643 = vst.msk [vmem:[%s4 + $0x110] sm:$0xff] %vm608, %v578
  %644 = vst.msk [vmem:[%s4 + $0x118] sm:$0xff] %vm608, %v579
  %645 = vst.msk [vmem:[%s4 + $0x120] sm:$0xff] %vm608, %v580
  %646 = vst.msk [vmem:[%s4 + $0x128] sm:$0xff] %vm608, %v581
  %647 = vst.msk [vmem:[%s4 + $0x130] sm:$0xff] %vm608, %v582
  %648 = vst.msk [vmem:[%s4 + $0x138] sm:$0xff] %vm608, %v583
  %649 = vst.msk [vmem:[%s4 + $0x140] sm:$0xff] %vm608, %v584
  %650 = vst.msk [vmem:[%s4 + $0x148] sm:$0xff] %vm608, %v585
  %651 = vst.msk [vmem:[%s4 + $0x150] sm:$0xff] %vm608, %v586
  %652 = vst.msk [vmem:[%s4 + $0x158] sm:$0xff] %vm608, %v587
  %653 = vst.msk [vmem:[%s4 + $0x160] sm:$0xff] %vm608, %v588
  %654 = vst.msk [vmem:[%s4 + $0x168] sm:$0xff] %vm608, %v589
  %655 = vst.msk [vmem:[%s4 + $0x170] sm:$0xff] %vm608, %v590
  %656 = vst.msk [vmem:[%s4 + $0x178] sm:$0xff] %vm608, %v591
  %657 = vst.msk [vmem:[%s4 + $0x180] sm:$0xff] %vm608, %v592
  %658 = vst.msk [vmem:[%s4 + $0x188] sm:$0xff] %vm608, %v593
  %659 = vst.msk [vmem:[%s4 + $0x190] sm:$0xff] %vm608, %v594
  %660 = vst.msk [vmem:[%s4 + $0x198] sm:$0xff] %vm608, %v595
  %661 = vst.msk [vmem:[%s4 + $0x1a0] sm:$0xff] %vm608, %v596
  %662 = vst.msk [vmem:[%s4 + $0x1a8] sm:$0xff] %vm608, %v597
  %663 = vst.msk [vmem:[%s4 + $0x1b0] sm:$0xff] %vm608, %v598
  %664 = vst.msk [vmem:[%s4 + $0x1b8] sm:$0xff] %vm608, %v599
  %665 = vst.msk [vmem:[%s4 + $0x1c0] sm:$0xff] %vm608, %v600
  %666 = vst.msk [vmem:[%s4 + $0x1c8] sm:$0xff] %vm608, %v601
  %667 = vst.msk [vmem:[%s4 + $0x1d0] sm:$0xff] %vm608, %v602
  %668 = vst.msk [vmem:[%s4 + $0x1d8] sm:$0xff] %vm608, %v603
  %669 = vst.msk [vmem:[%s4 + $0x1e0] sm:$0xff] %vm608, %v604
  %670 = vst.msk [vmem:[%s4 + $0x1e8] sm:$0xff] %vm608, %v605
  %671 = vst.msk [vmem:[%s4 + $0x1f0] sm:$0xff] %vm608, %v606
  %672 = vst.msk [vmem:[%s4 + $0x1f8] sm:$0xff] %vm608, %v607
  // Predicated region
  $region18: #{_lambda_.32} parent=0 // pred_check
    _
  $region19: #{_lambda_.32} parent=0 // pred_check_branch
    %674 = sbr.rel (0) target = $region21
  $region20: #{_lambda_.32} parent=0 // pred_region
    _
  $region21: #{_lambda_.32} parent=0 // pred_fallthru
    _
  // Predicated region
  $region22: #{_lambda_.32} parent=0 // pred_check
    _
  $region23: #{_lambda_.32} parent=0 // pred_check_branch
    %676 = sbr.rel (0) target = $region25
  $region24: #{_lambda_.32} parent=0 // pred_region
    _
  $region25: #{_lambda_.32} parent=0 // pred_fallthru
    _

// kernel: _lambda_.33
$region0: #{_lambda_.33}
  #allocation0 [shape = 'u32[]', space=smem, size = 0x4, offset = 0x4, fixed_abs, tag = 'smem constant byte address 0x4 - core index']
  #allocation1 [shape = 'u32[144,128]{1,0:T(1,128)}', space=vmem, size = 0x12000, scoped, tag = 'internal scratch']
  #allocation2 [shape = 'f32[512,2]{1,0:T(8,128)}', space=vmem, size = 0x40000, scoped, tag = 'scratch operand']
  %s0 = inlined_call_operand.vmem [shape: bf16[4,512,64], index: 0, kind: input, shape index: {}]
  %s1 = inlined_call_operand.vmem [shape: bf16[4,64,2], index: 1, kind: input, shape index: {}]
  %s2 = inlined_call_operand.vmem [shape: f32[1,2], index: 2, kind: input, shape index: {}]
  %s3 = inlined_call_operand.vmem [shape: f32[4,512,2], index: 3, kind: output, shape index: {}]
  %s4 = sld [smem:[#allocation0]]
  $region53: #{_lambda_.33} parent=0
    _
  %s6 = ssub.s32 1, %s4
  %s7 = scalar_select 0, %s6, %s4
  loop: start=0, step=1, limit=6
  $region2: #{_lambda_.33} parent=0 // loop_pre_header
    _
  $region3: #{_lambda_.33} parent=0 // loop_header
    %s9 = sphi 0, %s13
    %p10 = scmp.ge.s32.totalorder %s9, 6
    %s16 = sphi 0, %s35
    %s17 = sphi 0, %s31
    %s18 = sphi 0, %s27
    %s19 = sphi 0, %s16
    %s20 = sphi 0, %s17
    %s21 = sphi 0, %s18
    %s22 = sphi 0, %s19
    %s23 = sphi 0, %s20
    %s24 = sphi 0, %s21
    %s42 = sphi 0, %s44
    %s45 = sphi 0, %s42
    %s46 = sphi 0, %s45
    %s62 = sphi 0, %s46
    %s70 = sphi 0, %s72
    %s73 = sphi 0, %s70
    %s74 = sphi 0, %s73
    %s90 = sphi 0, %s74
    %s94 = sphi 0, %s94
    %s96 = sphi 0, %s94
    %s97 = sphi 0, %s96
    %s111 = sphi 0, %s97
    %s119 = sphi 0, %s121
    %s122 = sphi 0, %s119
    %s123 = sphi 0, %s122
    %s139 = sphi 0, %s123
  $region4: #{_lambda_.33} parent=0 // loop_header_branch
    %12 = sbr.rel (%p10) target = $region8
  $region5: #{_lambda_.33} parent=0 // loop_body
    %s14 = ssub.s32 %s9, 1
    %s15 = ssub.s32 %s9, 2
    %s25 = sadd.s32 1, %s18
    %p26 = scmp.ge.s32.totalorder %s25, 1
    %s27 = scalar_select %p26, 0, %s25
    %s28 = sadd.s32 1, %s17
    %s29 = scalar_select %p26, %s28, %s17
    %p30 = scmp.ge.s32.totalorder %s29, 1
    %s31 = scalar_select %p30, 0, %s29
    %s32 = sadd.s32 1, %s16
    %s33 = scalar_select %p30, %s32, %s16
    %p34 = scmp.ge.s32.totalorder %s33, 4
    %s35 = scalar_select %p34, 0, %s33
    %s36 = ssub.s32 %s16, %s35
    %s37 = ssub.s32 %s17, %s31
    %s38 = sor.u32 %s36, %s37
    %s39 = ssub.s32 %s18, %s27
    %s40 = sor.u32 %s38, %s39
    %p41 = scmp.eq.s32.totalorder %s40, 0
    %s43 = sadd.s32 %s42, 1
    %s44 = scalar_select %p41, %s42, %s43
    %p47 = pneg %p41
    %p48 = scmp.eq.s32.totalorder %s9, 3
    %p49 = por %p47, %p48
    %p50 = scmp.ne.s32.totalorder %s42, %s45
    %p51 = scmp.eq.s32.totalorder %s9, 0
    %p52 = por %p50, %p51
    %p53 = scmp.ne.s32.totalorder %s42, %s45
    %p54 = scmp.eq.s32.totalorder %s14, 3
    %p55 = por %p53, %p54
    %p56 = scmp.ne.s32.totalorder %s45, %s46
    %p57 = scmp.eq.s32.totalorder %s14, 0
    %p58 = por %p56, %p57
    %p59 = scmp.ne.s32.totalorder %s45, %s46
    %p60 = scmp.eq.s32.totalorder %s15, 3
    %p61 = por %p59, %p60
    %p63 = scmp.ne.s32.totalorder %s46, %s62
    %p64 = scmp.eq.s32.totalorder %s15, 0
    %p65 = por %p63, %p64
    %s66 = ssub.s32 %s16, %s35
    %s67 = ssub.s32 %s18, %s27
    %s68 = sor.u32 %s66, %s67
    %p69 = scmp.eq.s32.totalorder %s68, 0
    %s71 = sadd.s32 %s70, 1
    %s72 = scalar_select %p69, %s70, %s71
    %p75 = pneg %p69
    %p76 = scmp.eq.s32.totalorder %s9, 3
    %p77 = por %p75, %p76
    %p78 = scmp.ne.s32.totalorder %s70, %s73
    %p79 = scmp.eq.s32.totalorder %s9, 0
    %p80 = por %p78, %p79
    %p81 = scmp.ne.s32.totalorder %s70, %s73
    %p82 = scmp.eq.s32.totalorder %s14, 3
    %p83 = por %p81, %p82
    %p84 = scmp.ne.s32.totalorder %s73, %s74
    %p85 = scmp.eq.s32.totalorder %s14, 0
    %p86 = por %p84, %p85
    %p87 = scmp.ne.s32.totalorder %s73, %s74
    %p88 = scmp.eq.s32.totalorder %s15, 3
    %p89 = por %p87, %p88
    %p91 = scmp.ne.s32.totalorder %s74, %s90
    %p92 = scmp.eq.s32.totalorder %s15, 0
    %p93 = por %p91, %p92
    %s95 = sadd.s32 %s94, 1
    %p98 = scmp.eq.s32.totalorder %s9, 3
    %p99 = scmp.ne.s32.totalorder %s94, %s96
    %p100 = scmp.eq.s32.totalorder %s9, 0
    %p101 = por %p99, %p100
    %p102 = scmp.ne.s32.totalorder %s94, %s96
    %p103 = scmp.eq.s32.totalorder %s14, 3
    %p104 = por %p102, %p103
    %p105 = scmp.ne.s32.totalorder %s96, %s97
    %p106 = scmp.eq.s32.totalorder %s14, 0
    %p107 = por %p105, %p106
    %p108 = scmp.ne.s32.totalorder %s96, %s97
    %p109 = scmp.eq.s32.totalorder %s15, 3
    %p110 = por %p108, %p109
    %p112 = scmp.ne.s32.totalorder %s97, %s111
    %p113 = scmp.eq.s32.totalorder %s15, 0
    %p114 = por %p112, %p113
    %s115 = ssub.s32 %s16, %s35
    %s116 = ssub.s32 %s17, %s31
    %s117 = sor.u32 %s115, %s116
    %p118 = scmp.eq.s32.totalorder %s117, 0
    %s120 = sadd.s32 %s119, 1
    %s121 = scalar_select %p118, %s119, %s120
    %p124 = pneg %p118
    %p125 = scmp.eq.s32.totalorder %s9, 3
    %p126 = por %p124, %p125
    %p127 = scmp.ne.s32.totalorder %s119, %s122
    %p128 = scmp.eq.s32.totalorder %s9, 0
    %p129 = por %p127, %p128
    %p130 = scmp.ne.s32.totalorder %s119, %s122
    %p131 = scmp.eq.s32.totalorder %s14, 3
    %p132 = por %p130, %p131
    %p133 = scmp.ne.s32.totalorder %s122, %s123
    %p134 = scmp.eq.s32.totalorder %s14, 0
    %p135 = por %p133, %p134
    %p136 = scmp.ne.s32.totalorder %s122, %s123
    %p137 = scmp.eq.s32.totalorder %s15, 3
    %p138 = por %p136, %p137
    %p140 = scmp.ne.s32.totalorder %s123, %s139
    %p141 = scmp.eq.s32.totalorder %s15, 0
    %p142 = por %p140, %p141
    %p143 = scmp.le.s32.totalorder 1, %s9
    %p144 = scmp.lt.s32.totalorder %s9, 5
    %p145 = pnand %p143, %p144
    %p146 = pneg %p145
    // Predicated region
    $region9: #{_lambda_.33} parent=5 // pred_check
      _
    $region10: #{_lambda_.33} parent=5 // pred_check_branch
      %148 = sbr.rel (%p145) target = $region12
    $region11: #{_lambda_.33} parent=5 // pred_region
      %s149 = ssub.s32 %s9, 1
      // Predicated region
      $region13: #{_lambda_.33} parent=11 // pred_check
        %p150 = pneg %p107
      $region14: #{_lambda_.33} parent=11 // pred_check_branch
        %152 = sbr.rel (%p150) target = $region16
      $region15: #{_lambda_.33} parent=11 // pred_region
        _
      $region16: #{_lambda_.33} parent=11 // pred_fallthru
        _
    $region12: #{_lambda_.33} parent=5 // pred_fallthru
      _
    %p153 = scmp.lt.s32.totalorder %s9, 4
    // Predicated region
    $region17: #{_lambda_.33} parent=5 // pred_check
      %p154 = pneg %p153
    $region18: #{_lambda_.33} parent=5 // pred_check_branch
      %156 = sbr.rel (%p154) target = $region20
    $region19: #{_lambda_.33} parent=5 // pred_region
      // Predicated region
      $region21: #{_lambda_.33} parent=19 // pred_check
        %p157 = pneg %p52
      $region22: #{_lambda_.33} parent=19 // pred_check_branch
        %159 = sbr.rel (%p157) target = $region24
      $region23: #{_lambda_.33} parent=19 // pred_region
        %s160 = smul.u32 64, %s17
        %p161 = scmp.lt.s32.totalorder %s16, 3
        %s162 = scalar_select %p161, %s16, 3
        %p163 = scmp.lt.s32.totalorder %s160, 63
        %s164 = scalar_select %p163, %s160, 63
        %p165 = scmp.lt.s32.totalorder %s18, 0
        %s166 = scalar_select %p165, %s18, 0
        %s167 = sadd.s32 %s166, %s164
        %s168 = smul.addr %s162, 64
        %s169 = sadd.s32 %s167, %s168
        %s170 = smul.addr %s169, 4
        %s171 = scalar_lea.vmem %s0, %s170
        %s172 = smul.u32 64, %s17
      $region24: #{_lambda_.33} parent=19 // pred_fallthru
        _
      // Predicated region
      $region25: #{_lambda_.33} parent=19 // pred_check
        %p173 = pneg %p80
      $region26: #{_lambda_.33} parent=19 // pred_check_branch
        %175 = sbr.rel (%p173) target = $region28
      $region27: #{_lambda_.33} parent=19 // pred_region
        %s176 = smul.u32 8, %s18
        %p177 = scmp.lt.s32.totalorder %s16, 3
        %s178 = scalar_select %p177, %s16, 3
        %p179 = scmp.lt.s32.totalorder %s176, 7
        %s180 = scalar_select %p179, %s176, 7
        %s181 = smul.addr %s178, 8
        %s182 = sadd.s32 %s180, %s181
        %s183 = smul.addr %s182, 4
        %s184 = scalar_lea.vmem %s1, %s183
        %s185 = smul.u32 8, %s18
      $region28: #{_lambda_.33} parent=19 // pred_fallthru
        _
    $region20: #{_lambda_.33} parent=5 // pred_fallthru
      _
    %p186 = scmp.le.s32.totalorder 1, %s9
    %p187 = scmp.lt.s32.totalorder %s9, 5
    %p188 = pnand %p186, %p187
    %p189 = pneg %p188
    // Predicated region
    $region29: #{_lambda_.33} parent=5 // pred_check
      _
    $region30: #{_lambda_.33} parent=5 // pred_check_branch
      %191 = sbr.rel (%p188) target = $region32
    $region31: #{_lambda_.33} parent=5 // pred_region
      %s192 = ssub.s32 %s9, 1
      %s193 = smul.u32 64, %s20
      %p194 = scmp.lt.s32.totalorder %s19, 3
      %s195 = scalar_select %p194, %s19, 3
      %p196 = scmp.lt.s32.totalorder %s193, 63
      %s197 = scalar_select %p196, %s193, 63
      %p198 = scmp.lt.s32.totalorder %s21, 0
      %s199 = scalar_select %p198, %s21, 0
      %s200 = sadd.s32 %s199, %s197
      %s201 = smul.addr %s195, 64
      %s202 = sadd.s32 %s200, %s201
      %s203 = smul.addr %s202, 4
      %s204 = scalar_lea.vmem %s0, %s203
      %p205 = pneg %p58
      %p206 = pneg %p55
      %s207 = smul.u32 8, %s21
      %p208 = scmp.lt.s32.totalorder %s19, 3
      %s209 = scalar_select %p208, %s19, 3
      %p210 = scmp.lt.s32.totalorder %s207, 7
      %s211 = scalar_select %p210, %s207, 7
      %s212 = smul.addr %s209, 8
      %s213 = sadd.s32 %s211, %s212
      %s214 = smul.addr %s213, 4
      %s215 = scalar_lea.vmem %s1, %s214
      %p216 = pneg %p86
      %p217 = pneg %p83
      %p218 = pneg %p107
      %p219 = pneg %p104
      %p220 = pneg %p135
      %p221 = pneg %p132
      %s222 = smul.u32 64, %s20
      %p223 = scmp.lt.s32.totalorder %s19, 3
      %s224 = scalar_select %p223, %s19, 3
      %p225 = scmp.lt.s32.totalorder %s222, 63
      %s226 = scalar_select %p225, %s222, 63
      %s227 = smul.addr %s224, 64
      %s228 = sadd.s32 %s226, %s227
      %s229 = smul.addr %s228, 8
      %s230 = scalar_lea.vmem %s3, %s229
      %s231 = smul.u32 64, %s20
      %p232 = scmp.lt.s32.totalorder %s19, 3
      %s233 = scalar_select %p232, %s19, 3
      %p234 = scmp.lt.s32.totalorder %s231, 63
      %s235 = scalar_select %p234, %s231, 63
      %p236 = scmp.lt.s32.totalorder %s21, 0
      %s237 = scalar_select %p236, %s21, 0
      %s238 = sadd.s32 %s237, %s235
      %s239 = smul.addr %s233, 64
      %s240 = sadd.s32 %s238, %s239
      %s241 = smul.addr %s240, 4
      %s242 = scalar_lea.vmem %s0, %s241
      %s243 = smul.u32 64, %s20
      %s244 = smul.u32 8, %s21
      %p245 = scmp.lt.s32.totalorder %s19, 3
      %s246 = scalar_select %p245, %s19, 3
      %p247 = scmp.lt.s32.totalorder %s244, 7
      %s248 = scalar_select %p247, %s244, 7
      %s249 = smul.addr %s246, 8
      %s250 = sadd.s32 %s248, %s249
      %s251 = smul.addr %s250, 4
      %s252 = scalar_lea.vmem %s1, %s251
      %s253 = smul.u32 8, %s21
      %s254 = smul.u32 64, %s20
      %p255 = scmp.lt.s32.totalorder %s19, 3
      %s256 = scalar_select %p255, %s19, 3
      %p257 = scmp.lt.s32.totalorder %s254, 63
      %s258 = scalar_select %p257, %s254, 63
      %s259 = smul.addr %s256, 64
      %s260 = sadd.s32 %s258, %s259
      %s261 = smul.addr %s260, 8
      %s262 = scalar_lea.vmem %s3, %s261
      %s263 = smul.u32 64, %s20
      %p265 = scmp.eq.s32.totalorder %s21, 0
      // Predicated region
      $region33: #{_lambda_.33} parent=31 // pred_check
        %p266 = pneg %p265
      $region34: #{_lambda_.33} parent=31 // pred_check_branch
        %268 = sbr.rel (%p266) target = $region36
      $region35: #{_lambda_.33} parent=31 // pred_region
        %vm269 = vcmask 15360
        %270 = vst.msk [vmem:[#allocation2] sm:$0xff] %vm269, 0.0
        %271 = vst.msk [vmem:[#allocation2 + $0x8] sm:$0xff] %vm269, 0.0
        %272 = vst.msk [vmem:[#allocation2 + $0x10] sm:$0xff] %vm269, 0.0
        %273 = vst.msk [vmem:[#allocation2 + $0x18] sm:$0xff] %vm269, 0.0
        %274 = vst.msk [vmem:[#allocation2 + $0x20] sm:$0xff] %vm269, 0.0
        %275 = vst.msk [vmem:[#allocation2 + $0x28] sm:$0xff] %vm269, 0.0
        %276 = vst.msk [vmem:[#allocation2 + $0x30] sm:$0xff] %vm269, 0.0
        %277 = vst.msk [vmem:[#allocation2 + $0x38] sm:$0xff] %vm269, 0.0
        %278 = vst.msk [vmem:[#allocation2 + $0x40] sm:$0xff] %vm269, 0.0
        %279 = vst.msk [vmem:[#allocation2 + $0x48] sm:$0xff] %vm269, 0.0
        %280 = vst.msk [vmem:[#allocation2 + $0x50] sm:$0xff] %vm269, 0.0
        %281 = vst.msk [vmem:[#allocation2 + $0x58] sm:$0xff] %vm269, 0.0
        %282 = vst.msk [vmem:[#allocation2 + $0x60] sm:$0xff] %vm269, 0.0
        %283 = vst.msk [vmem:[#allocation2 + $0x68] sm:$0xff] %vm269, 0.0
        %284 = vst.msk [vmem:[#allocation2 + $0x70] sm:$0xff] %vm269, 0.0
        %285 = vst.msk [vmem:[#allocation2 + $0x78] sm:$0xff] %vm269, 0.0
        %286 = vst.msk [vmem:[#allocation2 + $0x80] sm:$0xff] %vm269, 0.0
        %287 = vst.msk [vmem:[#allocation2 + $0x88] sm:$0xff] %vm269, 0.0
        %288 = vst.msk [vmem:[#allocation2 + $0x90] sm:$0xff] %vm269, 0.0
        %289 = vst.msk [vmem:[#allocation2 + $0x98] sm:$0xff] %vm269, 0.0
        %290 = vst.msk [vmem:[#allocation2 + $0xa0] sm:$0xff] %vm269, 0.0
        %291 = vst.msk [vmem:[#allocation2 + $0xa8] sm:$0xff] %vm269, 0.0
        %292 = vst.msk [vmem:[#allocation2 + $0xb0] sm:$0xff] %vm269, 0.0
        %293 = vst.msk [vmem:[#allocation2 + $0xb8] sm:$0xff] %vm269, 0.0
        %294 = vst.msk [vmem:[#allocation2 + $0xc0] sm:$0xff] %vm269, 0.0
        %295 = vst.msk [vmem:[#allocation2 + $0xc8] sm:$0xff] %vm269, 0.0
        %296 = vst.msk [vmem:[#allocation2 + $0xd0] sm:$0xff] %vm269, 0.0
        %297 = vst.msk [vmem:[#allocation2 + $0xd8] sm:$0xff] %vm269, 0.0
        %298 = vst.msk [vmem:[#allocation2 + $0xe0] sm:$0xff] %vm269, 0.0
        %299 = vst.msk [vmem:[#allocation2 + $0xe8] sm:$0xff] %vm269, 0.0
        %300 = vst.msk [vmem:[#allocation2 + $0xf0] sm:$0xff] %vm269, 0.0
        %301 = vst.msk [vmem:[#allocation2 + $0xf8] sm:$0xff] %vm269, 0.0
        %302 = vst.msk [vmem:[#allocation2 + $0x100] sm:$0xff] %vm269, 0.0
        %303 = vst.msk [vmem:[#allocation2 + $0x108] sm:$0xff] %vm269, 0.0
        %304 = vst.msk [vmem:[#allocation2 + $0x110] sm:$0xff] %vm269, 0.0
        %305 = vst.msk [vmem:[#allocation2 + $0x118] sm:$0xff] %vm269, 0.0
        %306 = vst.msk [vmem:[#allocation2 + $0x120] sm:$0xff] %vm269, 0.0
        %307 = vst.msk [vmem:[#allocation2 + $0x128] sm:$0xff] %vm269, 0.0
        %308 = vst.msk [vmem:[#allocation2 + $0x130] sm:$0xff] %vm269, 0.0
        %309 = vst.msk [vmem:[#allocation2 + $0x138] sm:$0xff] %vm269, 0.0
        %310 = vst.msk [vmem:[#allocation2 + $0x140] sm:$0xff] %vm269, 0.0
        %311 = vst.msk [vmem:[#allocation2 + $0x148] sm:$0xff] %vm269, 0.0
        %312 = vst.msk [vmem:[#allocation2 + $0x150] sm:$0xff] %vm269, 0.0
        %313 = vst.msk [vmem:[#allocation2 + $0x158] sm:$0xff] %vm269, 0.0
        %314 = vst.msk [vmem:[#allocation2 + $0x160] sm:$0xff] %vm269, 0.0
        %315 = vst.msk [vmem:[#allocation2 + $0x168] sm:$0xff] %vm269, 0.0
        %316 = vst.msk [vmem:[#allocation2 + $0x170] sm:$0xff] %vm269, 0.0
        %317 = vst.msk [vmem:[#allocation2 + $0x178] sm:$0xff] %vm269, 0.0
        %318 = vst.msk [vmem:[#allocation2 + $0x180] sm:$0xff] %vm269, 0.0
        %319 = vst.msk [vmem:[#allocation2 + $0x188] sm:$0xff] %vm269, 0.0
        %320 = vst.msk [vmem:[#allocation2 + $0x190] sm:$0xff] %vm269, 0.0
        %321 = vst.msk [vmem:[#allocation2 + $0x198] sm:$0xff] %vm269, 0.0
        %322 = vst.msk [vmem:[#allocation2 + $0x1a0] sm:$0xff] %vm269, 0.0
        %323 = vst.msk [vmem:[#allocation2 + $0x1a8] sm:$0xff] %vm269, 0.0
        %324 = vst.msk [vmem:[#allocation2 + $0x1b0] sm:$0xff] %vm269, 0.0
        %325 = vst.msk [vmem:[#allocation2 + $0x1b8] sm:$0xff] %vm269, 0.0
        %326 = vst.msk [vmem:[#allocation2 + $0x1c0] sm:$0xff] %vm269, 0.0
        %327 = vst.msk [vmem:[#allocation2 + $0x1c8] sm:$0xff] %vm269, 0.0
        %328 = vst.msk [vmem:[#allocation2 + $0x1d0] sm:$0xff] %vm269, 0.0
        %329 = vst.msk [vmem:[#allocation2 + $0x1d8] sm:$0xff] %vm269, 0.0
        %330 = vst.msk [vmem:[#allocation2 + $0x1e0] sm:$0xff] %vm269, 0.0
        %331 = vst.msk [vmem:[#allocation2 + $0x1e8] sm:$0xff] %vm269, 0.0
        %332 = vst.msk [vmem:[#allocation2 + $0x1f0] sm:$0xff] %vm269, 0.0
        %333 = vst.msk [vmem:[#allocation2 + $0x1f8] sm:$0xff] %vm269, 0.0
      $region36: #{_lambda_.33} parent=31 // pred_fallthru
        _
      %v334 = vld [vmem:[%s242] sm:$0xf]
      %v335 = vld [vmem:[%s242 + $0x4] sm:$0xf]
      %v336 = vld [vmem:[%s242 + $0x8] sm:$0xf]
      %v337 = vld [vmem:[%s242 + $0xc] sm:$0xf]
      %v338 = vld [vmem:[%s242 + $0x10] sm:$0xf]
      %v339 = vld [vmem:[%s242 + $0x14] sm:$0xf]
      %v340 = vld [vmem:[%s242 + $0x18] sm:$0xf]
      %v341 = vld [vmem:[%s242 + $0x1c] sm:$0xf]
      %v342 = vld [vmem:[%s242 + $0x20] sm:$0xf]
      %v343 = vld [vmem:[%s242 + $0x24] sm:$0xf]
      %v344 = vld [vmem:[%s242 + $0x28] sm:$0xf]
      %v345 = vld [vmem:[%s242 + $0x2c] sm:$0xf]
      %v346 = vld [vmem:[%s242 + $0x30] sm:$0xf]
      %v347 = vld [vmem:[%s242 + $0x34] sm:$0xf]
      %v348 = vld [vmem:[%s242 + $0x38] sm:$0xf]
      %v349 = vld [vmem:[%s242 + $0x3c] sm:$0xf]
      %v350 = vld [vmem:[%s242 + $0x40] sm:$0xf]
      %v351 = vld [vmem:[%s242 + $0x44] sm:$0xf]
      %v352 = vld [vmem:[%s242 + $0x48] sm:$0xf]
      %v353 = vld [vmem:[%s242 + $0x4c] sm:$0xf]
      %v354 = vld [vmem:[%s242 + $0x50] sm:$0xf]
      %v355 = vld [vmem:[%s242 + $0x54] sm:$0xf]
      %v356 = vld [vmem:[%s242 + $0x58] sm:$0xf]
      %v357 = vld [vmem:[%s242 + $0x5c] sm:$0xf]
      %v358 = vld [vmem:[%s242 + $0x60] sm:$0xf]
      %v359 = vld [vmem:[%s242 + $0x64] sm:$0xf]
      %v360 = vld [vmem:[%s242 + $0x68] sm:$0xf]
      %v361 = vld [vmem:[%s242 + $0x6c] sm:$0xf]
      %v362 = vld [vmem:[%s242 + $0x70] sm:$0xf]
      %v363 = vld [vmem:[%s242 + $0x74] sm:$0xf]
      %v364 = vld [vmem:[%s242 + $0x78] sm:$0xf]
      %v365 = vld [vmem:[%s242 + $0x7c] sm:$0xf]
      %v366 = vld [vmem:[%s242 + $0x80] sm:$0xf]
      %v367 = vld [vmem:[%s242 + $0x84] sm:$0xf]
      %v368 = vld [vmem:[%s242 + $0x88] sm:$0xf]
      %v369 = vld [vmem:[%s242 + $0x8c] sm:$0xf]
      %v370 = vld [vmem:[%s242 + $0x90] sm:$0xf]
      %v371 = vld [vmem:[%s242 + $0x94] sm:$0xf]
      %v372 = vld [vmem:[%s242 + $0x98] sm:$0xf]
      %v373 = vld [vmem:[%s242 + $0x9c] sm:$0xf]
      %v374 = vld [vmem:[%s242 + $0xa0] sm:$0xf]
      %v375 = vld [vmem:[%s242 + $0xa4] sm:$0xf]
      %v376 = vld [vmem:[%s242 + $0xa8] sm:$0xf]
      %v377 = vld [vmem:[%s242 + $0xac] sm:$0xf]
      %v378 = vld [vmem:[%s242 + $0xb0] sm:$0xf]
      %v379 = vld [vmem:[%s242 + $0xb4] sm:$0xf]
      %v380 = vld [vmem:[%s242 + $0xb8] sm:$0xf]
      %v381 = vld [vmem:[%s242 + $0xbc] sm:$0xf]
      %v382 = vld [vmem:[%s242 + $0xc0] sm:$0xf]
      %v383 = vld [vmem:[%s242 + $0xc4] sm:$0xf]
      %v384 = vld [vmem:[%s242 + $0xc8] sm:$0xf]
      %v385 = vld [vmem:[%s242 + $0xcc] sm:$0xf]
      %v386 = vld [vmem:[%s242 + $0xd0] sm:$0xf]
      %v387 = vld [vmem:[%s242 + $0xd4] sm:$0xf]
      %v388 = vld [vmem:[%s242 + $0xd8] sm:$0xf]
      %v389 = vld [vmem:[%s242 + $0xdc] sm:$0xf]
      %v390 = vld [vmem:[%s242 + $0xe0] sm:$0xf]
      %v391 = vld [vmem:[%s242 + $0xe4] sm:$0xf]
      %v392 = vld [vmem:[%s242 + $0xe8] sm:$0xf]
      %v393 = vld [vmem:[%s242 + $0xec] sm:$0xf]
      %v394 = vld [vmem:[%s242 + $0xf0] sm:$0xf]
      %v395 = vld [vmem:[%s242 + $0xf4] sm:$0xf]
      %v396 = vld [vmem:[%s242 + $0xf8] sm:$0xf]
      %v397 = vld [vmem:[%s242 + $0xfc] sm:$0xf]
      %v398 = vmax.bf16 %v334, 0
      %v399 = vmax.bf16 %v335, 0
      %v400 = vmax.bf16 %v336, 0
      %v401 = vmax.bf16 %v337, 0
      %v402 = vmax.bf16 %v338, 0
      %v403 = vmax.bf16 %v339, 0
      %v404 = vmax.bf16 %v340, 0
      %v405 = vmax.bf16 %v341, 0
      %v406 = vmax.bf16 %v342, 0
      %v407 = vmax.bf16 %v343, 0
      %v408 = vmax.bf16 %v344, 0
      %v409 = vmax.bf16 %v345, 0
      %v410 = vmax.bf16 %v346, 0
      %v411 = vmax.bf16 %v347, 0
      %v412 = vmax.bf16 %v348, 0
      %v413 = vmax.bf16 %v349, 0
      %v414 = vmax.bf16 %v350, 0
      %v415 = vmax.bf16 %v351, 0
      %v416 = vmax.bf16 %v352, 0
      %v417 = vmax.bf16 %v353, 0
      %v418 = vmax.bf16 %v354, 0
      %v419 = vmax.bf16 %v355, 0
      %v420 = vmax.bf16 %v356, 0
      %v421 = vmax.bf16 %v357, 0
      %v422 = vmax.bf16 %v358, 0
      %v423 = vmax.bf16 %v359, 0
      %v424 = vmax.bf16 %v360, 0
      %v425 = vmax.bf16 %v361, 0
      %v426 = vmax.bf16 %v362, 0
      %v427 = vmax.bf16 %v363, 0
      %v428 = vmax.bf16 %v364, 0
      %v429 = vmax.bf16 %v365, 0
      %v430 = vmax.bf16 %v366, 0
      %v431 = vmax.bf16 %v367, 0
      %v432 = vmax.bf16 %v368, 0
      %v433 = vmax.bf16 %v369, 0
      %v434 = vmax.bf16 %v370, 0
      %v435 = vmax.bf16 %v371, 0
      %v436 = vmax.bf16 %v372, 0
      %v437 = vmax.bf16 %v373, 0
      %v438 = vmax.bf16 %v374, 0
      %v439 = vmax.bf16 %v375, 0
      %v440 = vmax.bf16 %v376, 0
      %v441 = vmax.bf16 %v377, 0
      %v442 = vmax.bf16 %v378, 0
      %v443 = vmax.bf16 %v379, 0
      %v444 = vmax.bf16 %v380, 0
      %v445 = vmax.bf16 %v381, 0
      %v446 = vmax.bf16 %v382, 0
      %v447 = vmax.bf16 %v383, 0
      %v448 = vmax.bf16 %v384, 0
      %v449 = vmax.bf16 %v385, 0
      %v450 = vmax.bf16 %v386, 0
      %v451 = vmax.bf16 %v387, 0
      %v452 = vmax.bf16 %v388, 0
      %v453 = vmax.bf16 %v389, 0
      %v454 = vmax.bf16 %v390, 0
      %v455 = vmax.bf16 %v391, 0
      %v456 = vmax.bf16 %v392, 0
      %v457 = vmax.bf16 %v393, 0
      %v458 = vmax.bf16 %v394, 0
      %v459 = vmax.bf16 %v395, 0
      %v460 = vmax.bf16 %v396, 0
      %v461 = vmax.bf16 %v397, 0
      %v462 = vld [vmem:[#allocation2] sm:$0xff]
      %v463 = vld [vmem:[#allocation2 + $0x8] sm:$0xff]
      %v464 = vld [vmem:[#allocation2 + $0x10] sm:$0xff]
      %v465 = vld [vmem:[#allocation2 + $0x18] sm:$0xff]
      %v466 = vld [vmem:[#allocation2 + $0x20] sm:$0xff]
      %v467 = vld [vmem:[#allocation2 + $0x28] sm:$0xff]
      %v468 = vld [vmem:[#allocation2 + $0x30] sm:$0xff]
      %v469 = vld [vmem:[#allocation2 + $0x38] sm:$0xff]
      %v470 = vld [vmem:[#allocation2 + $0x40] sm:$0xff]
      %v471 = vld [vmem:[#allocation2 + $0x48] sm:$0xff]
      %v472 = vld [vmem:[#allocation2 + $0x50] sm:$0xff]
      %v473 = vld [vmem:[#allocation2 + $0x58] sm:$0xff]
      %v474 = vld [vmem:[#allocation2 + $0x60] sm:$0xff]
      %v475 = vld [vmem:[#allocation2 + $0x68] sm:$0xff]
      %v476 = vld [vmem:[#allocation2 + $0x70] sm:$0xff]
      %v477 = vld [vmem:[#allocation2 + $0x78] sm:$0xff]
      %v478 = vld [vmem:[#allocation2 + $0x80] sm:$0xff]
      %v479 = vld [vmem:[#allocation2 + $0x88] sm:$0xff]
      %v480 = vld [vmem:[#allocation2 + $0x90] sm:$0xff]
      %v481 = vld [vmem:[#allocation2 + $0x98] sm:$0xff]
      %v482 = vld [vmem:[#allocation2 + $0xa0] sm:$0xff]
      %v483 = vld [vmem:[#allocation2 + $0xa8] sm:$0xff]
      %v484 = vld [vmem:[#allocation2 + $0xb0] sm:$0xff]
      %v485 = vld [vmem:[#allocation2 + $0xb8] sm:$0xff]
      %v486 = vld [vmem:[#allocation2 + $0xc0] sm:$0xff]
      %v487 = vld [vmem:[#allocation2 + $0xc8] sm:$0xff]
      %v488 = vld [vmem:[#allocation2 + $0xd0] sm:$0xff]
      %v489 = vld [vmem:[#allocation2 + $0xd8] sm:$0xff]
      %v490 = vld [vmem:[#allocation2 + $0xe0] sm:$0xff]
      %v491 = vld [vmem:[#allocation2 + $0xe8] sm:$0xff]
      %v492 = vld [vmem:[#allocation2 + $0xf0] sm:$0xff]
      %v493 = vld [vmem:[#allocation2 + $0xf8] sm:$0xff]
      %v494 = vld [vmem:[#allocation2 + $0x100] sm:$0xff]
      %v495 = vld [vmem:[#allocation2 + $0x108] sm:$0xff]
      %v496 = vld [vmem:[#allocation2 + $0x110] sm:$0xff]
      %v497 = vld [vmem:[#allocation2 + $0x118] sm:$0xff]
      %v498 = vld [vmem:[#allocation2 + $0x120] sm:$0xff]
      %v499 = vld [vmem:[#allocation2 + $0x128] sm:$0xff]
      %v500 = vld [vmem:[#allocation2 + $0x130] sm:$0xff]
      %v501 = vld [vmem:[#allocation2 + $0x138] sm:$0xff]
      %v502 = vld [vmem:[#allocation2 + $0x140] sm:$0xff]
      %v503 = vld [vmem:[#allocation2 + $0x148] sm:$0xff]
      %v504 = vld [vmem:[#allocation2 + $0x150] sm:$0xff]
      %v505 = vld [vmem:[#allocation2 + $0x158] sm:$0xff]
      %v506 = vld [vmem:[#allocation2 + $0x160] sm:$0xff]
      %v507 = vld [vmem:[#allocation2 + $0x168] sm:$0xff]
      %v508 = vld [vmem:[#allocation2 + $0x170] sm:$0xff]
      %v509 = vld [vmem:[#allocation2 + $0x178] sm:$0xff]
      %v510 = vld [vmem:[#allocation2 + $0x180] sm:$0xff]
      %v511 = vld [vmem:[#allocation2 + $0x188] sm:$0xff]
      %v512 = vld [vmem:[#allocation2 + $0x190] sm:$0xff]
      %v513 = vld [vmem:[#allocation2 + $0x198] sm:$0xff]
      %v514 = vld [vmem:[#allocation2 + $0x1a0] sm:$0xff]
      %v515 = vld [vmem:[#allocation2 + $0x1a8] sm:$0xff]
      %v516 = vld [vmem:[#allocation2 + $0x1b0] sm:$0xff]
      %v517 = vld [vmem:[#allocation2 + $0x1b8] sm:$0xff]
      %v518 = vld [vmem:[#allocation2 + $0x1c0] sm:$0xff]
      %v519 = vld [vmem:[#allocation2 + $0x1c8] sm:$0xff]
      %v520 = vld [vmem:[#allocation2 + $0x1d0] sm:$0xff]
      %v521 = vld [vmem:[#allocation2 + $0x1d8] sm:$0xff]
      %v522 = vld [vmem:[#allocation2 + $0x1e0] sm:$0xff]
      %v523 = vld [vmem:[#allocation2 + $0x1e8] sm:$0xff]
      %v524 = vld [vmem:[#allocation2 + $0x1f0] sm:$0xff]
      %v525 = vld [vmem:[#allocation2 + $0x1f8] sm:$0xff]
      %v526 = vld [vmem:[%s252] sm:$0xf]
      %v527 = vld [vmem:[%s252 + $0x4] sm:$0xf]
      %v528 = vld [vmem:[%s252 + $0x8] sm:$0xf]
      %v529 = vld [vmem:[%s252 + $0xc] sm:$0xf]
      %v530 = vld [vmem:[%s252 + $0x10] sm:$0xf]
      %v531 = vld [vmem:[%s252 + $0x14] sm:$0xf]
      %v532 = vld [vmem:[%s252 + $0x18] sm:$0xf]
      %v533 = vld [vmem:[%s252 + $0x1c] sm:$0xf]
      %v598 = vunpack.c.l.b16 %v398
      %v599 = vunpack.c.l.b16 %v399
      %v600 = vunpack.c.l.b16 %v400
      %v601 = vunpack.c.l.b16 %v401
      %v602 = vunpack.c.l.b16 %v402
      %v603 = vunpack.c.l.b16 %v403
      %v604 = vunpack.c.l.b16 %v404
      %v605 = vunpack.c.l.b16 %v405
      %v606 = vunpack.c.l.b16 %v406
      %v607 = vunpack.c.l.b16 %v407
      %v608 = vunpack.c.l.b16 %v408
      %v609 = vunpack.c.l.b16 %v409
      %v610 = vunpack.c.l.b16 %v410
      %v611 = vunpack.c.l.b16 %v411
      %v612 = vunpack.c.l.b16 %v412
      %v613 = vunpack.c.l.b16 %v413
      %v614 = vunpack.c.l.b16 %v414
      %v615 = vunpack.c.l.b16 %v415
      %v616 = vunpack.c.l.b16 %v416
      %v617 = vunpack.c.l.b16 %v417
      %v618 = vunpack.c.l.b16 %v418
      %v619 = vunpack.c.l.b16 %v419
      %v620 = vunpack.c.l.b16 %v420
      %v621 = vunpack.c.l.b16 %v421
      %v622 = vunpack.c.l.b16 %v422
      %v623 = vunpack.c.l.b16 %v423
      %v624 = vunpack.c.l.b16 %v424
      %v625 = vunpack.c.l.b16 %v425
      %v626 = vunpack.c.l.b16 %v426
      %v627 = vunpack.c.l.b16 %v427
      %v628 = vunpack.c.l.b16 %v428
      %v629 = vunpack.c.l.b16 %v429
      %v630 = vunpack.c.l.b16 %v430
      %v631 = vunpack.c.l.b16 %v431
      %v632 = vunpack.c.l.b16 %v432
      %v633 = vunpack.c.l.b16 %v433
      %v634 = vunpack.c.l.b16 %v434
      %v635 = vunpack.c.l.b16 %v435
      %v636 = vunpack.c.l.b16 %v436
      %v637 = vunpack.c.l.b16 %v437
      %v638 = vunpack.c.l.b16 %v438
      %v639 = vunpack.c.l.b16 %v439
      %v640 = vunpack.c.l.b16 %v440
      %v641 = vunpack.c.l.b16 %v441
      %v642 = vunpack.c.l.b16 %v442
      %v643 = vunpack.c.l.b16 %v443
      %v644 = vunpack.c.l.b16 %v444
      %v645 = vunpack.c.l.b16 %v445
      %v646 = vunpack.c.l.b16 %v446
      %v647 = vunpack.c.l.b16 %v447
      %v648 = vunpack.c.l.b16 %v448
      %v649 = vunpack.c.l.b16 %v449
      %v650 = vunpack.c.l.b16 %v450
      %v651 = vunpack.c.l.b16 %v451
      %v652 = vunpack.c.l.b16 %v452
      %v653 = vunpack.c.l.b16 %v453
      %v654 = vunpack.c.l.b16 %v454
      %v655 = vunpack.c.l.b16 %v455
      %v656 = vunpack.c.l.b16 %v456
      %v657 = vunpack.c.l.b16 %v457
      %v658 = vunpack.c.l.b16 %v458
      %v659 = vunpack.c.l.b16 %v459
      %v660 = vunpack.c.l.b16 %v460
      %v661 = vunpack.c.l.b16 %v461
      %v662 = vpack.c.b16 %v599, %v598
      %v663 = vpack.c.b16 %v601, %v600
      %v664 = vpack.c.b16 %v603, %v602
      %v665 = vpack.c.b16 %v605, %v604
      %v666 = vpack.c.b16 %v607, %v606
      %v667 = vpack.c.b16 %v609, %v608
      %v668 = vpack.c.b16 %v611, %v610
      %v669 = vpack.c.b16 %v613, %v612
      %v670 = vpack.c.b16 %v615, %v614
      %v671 = vpack.c.b16 %v617, %v616
      %v672 = vpack.c.b16 %v619, %v618
      %v673 = vpack.c.b16 %v621, %v620
      %v674 = vpack.c.b16 %v623, %v622
      %v675 = vpack.c.b16 %v625, %v624
      %v676 = vpack.c.b16 %v627, %v626
      %v677 = vpack.c.b16 %v629, %v628
      %v678 = vpack.c.b16 %v631, %v630
      %v679 = vpack.c.b16 %v633, %v632
      %v680 = vpack.c.b16 %v635, %v634
      %v681 = vpack.c.b16 %v637, %v636
      %v682 = vpack.c.b16 %v639, %v638
      %v683 = vpack.c.b16 %v641, %v640
      %v684 = vpack.c.b16 %v643, %v642
      %v685 = vpack.c.b16 %v645, %v644
      %v686 = vpack.c.b16 %v647, %v646
      %v687 = vpack.c.b16 %v649, %v648
      %v688 = vpack.c.b16 %v651, %v650
      %v689 = vpack.c.b16 %v653, %v652
      %v690 = vpack.c.b16 %v655, %v654
      %v691 = vpack.c.b16 %v657, %v656
      %v692 = vpack.c.b16 %v659, %v658
      %v693 = vpack.c.b16 %v661, %v660
      %v702 = vunpack.c.l.b16 %v526
      %v703 = vunpack.c.l.b16 %v527
      %v704 = vunpack.c.l.b16 %v528
      %v705 = vunpack.c.l.b16 %v529
      %v706 = vunpack.c.l.b16 %v530
      %v707 = vunpack.c.l.b16 %v531
      %v708 = vunpack.c.l.b16 %v532
      %v709 = vunpack.c.l.b16 %v533
      %v710 = vpack.c.b16 %v703, %v702
      %v711 = vpack.c.b16 %v705, %v704
      %v712 = vpack.c.b16 %v707, %v706
      %v713 = vpack.c.b16 %v709, %v708
      %vm718 = vcmask 523264
      %v720 = vsel %vm718, %v662, 0
      %v723 = vsel %vm718, %v663, 0
      %v726 = vsel %vm718, %v664, 0
      %v729 = vsel %vm718, %v665, 0
      %v732 = vsel %vm718, %v666, 0
      %v735 = vsel %vm718, %v667, 0
      %v738 = vsel %vm718, %v668, 0
      %v741 = vsel %vm718, %v669, 0
      %v744 = vsel %vm718, %v670, 0
      %v747 = vsel %vm718, %v671, 0
      %v750 = vsel %vm718, %v672, 0
      %v753 = vsel %vm718, %v673, 0
      %v756 = vsel %vm718, %v674, 0
      %v759 = vsel %vm718, %v675, 0
      %v762 = vsel %vm718, %v676, 0
      %v765 = vsel %vm718, %v677, 0
      %v768 = vsel %vm718, %v678, 0
      %v771 = vsel %vm718, %v679, 0
      %v774 = vsel %vm718, %v680, 0
      %v777 = vsel %vm718, %v681, 0
      %v780 = vsel %vm718, %v682, 0
      %v783 = vsel %vm718, %v683, 0
      %v786 = vsel %vm718, %v684, 0
      %v789 = vsel %vm718, %v685, 0
      %v792 = vsel %vm718, %v686, 0
      %v795 = vsel %vm718, %v687, 0
      %v798 = vsel %vm718, %v688, 0
      %v801 = vsel %vm718, %v689, 0
      %v804 = vsel %vm718, %v690, 0
      %v807 = vsel %vm718, %v691, 0
      %v810 = vsel %vm718, %v692, 0
      %v813 = vsel %vm718, %v693, 0
      %815 = vmatprep.subr.bf16.mxu0 0
      %816 = vmatpush1.bf16.msra.mxu0 %v710
      %817 = vmatprep.subr.bf16.mxu0 0
      %818 = vmatpush1.bf16.msra.mxu0 %v711
      %819 = vmatprep.subr.bf16.mxu0 0
      %820 = vmatpush1.bf16.msra.mxu0 %v712
      %821 = vmatprep.subr.bf16.mxu0 0
      %822 = vmatpush1.bf16.msra.mxu0 %v713
      %823 = vmatprep.subr.bf16.mxu0 0
      %824 = vmatpush1.bf16.msra.mxu0 0
      %825 = vmatprep.subr.bf16.mxu0 0
      %826 = vmatpush1.bf16.msra.mxu0 0
      %827 = vmatprep.subr.bf16.mxu0 0
      %828 = vmatpush1.bf16.msra.mxu0 0
      %829 = vmatprep.subr.bf16.mxu0 0
      %830 = vmatpush1.bf16.msra.mxu0 0
      %831 = vmatprep.subr.bf16.mxu0 0
      %832 = vmatpush1.bf16.msra.mxu0 0
      %833 = vmatprep.subr.bf16.mxu0 0
      %834 = vmatpush1.bf16.msra.mxu0 0
      %835 = vmatprep.subr.bf16.mxu0 0
      %836 = vmatpush1.bf16.msra.mxu0 0
      %837 = vmatprep.subr.bf16.mxu0 0
      %838 = vmatpush1.bf16.msra.mxu0 0
      %839 = vmatprep.subr.bf16.mxu0 0
      %840 = vmatpush1.bf16.msra.mxu0 0
      %841 = vmatprep.subr.bf16.mxu0 0
      %842 = vmatpush1.bf16.msra.mxu0 0
      %843 = vmatprep.subr.bf16.mxu0 0
      %844 = vmatpush1.bf16.msra.mxu0 0
      %845 = vmatprep.subr.bf16.mxu0 0
      %846 = vmatpush1.bf16.msra.mxu0 0
      %847 = vmatprep.mubr.bf16.mxu0 0
      %848 = vmatmul.mubr.bf16.gmra.mrb[0].mxu0 %v720
      %v849 = vpop.f32.mrb[0].mxu0
      %v850 = vadd.f32 0.0, %v849
      %v851 = vpop.f32.mrb[0].mxu0
      %v852 = vpop.f32.mrb[0].mxu0
      %v853 = vadd.f32 0.0, %v852
      %v854 = vpop.f32.mrb[0].mxu0
      %855 = vmatprep.mubr.bf16.mxu0 0
      %856 = vmatmul.mubr.bf16.gmra.mrb[0].mxu0 %v723
      %v857 = vpop.f32.mrb[0].mxu0
      %v858 = vadd.f32 0.0, %v857
      %v859 = vpop.f32.mrb[0].mxu0
      %v860 = vpop.f32.mrb[0].mxu0
      %v861 = vadd.f32 0.0, %v860
      %v862 = vpop.f32.mrb[0].mxu0
      %863 = vmatprep.mubr.bf16.mxu0 0
      %864 = vmatmul.mubr.bf16.gmra.mrb[0].mxu0 %v726
      %v865 = vpop.f32.mrb[0].mxu0
      %v866 = vadd.f32 0.0, %v865
      %v867 = vpop.f32.mrb[0].mxu0
      %v868 = vpop.f32.mrb[0].mxu0
      %v869 = vadd.f32 0.0, %v868
      %v870 = vpop.f32.mrb[0].mxu0
      %871 = vmatprep.mubr.bf16.mxu0 0
      %872 = vmatmul.mubr.bf16.gmra.mrb[0].mxu0 %v729
      %v873 = vpop.f32.mrb[0].mxu0
      %v874 = vadd.f32 0.0, %v873
      %v875 = vpop.f32.mrb[0].mxu0
      %v876 = vpop.f32.mrb[0].mxu0
      %v877 = vadd.f32 0.0, %v876
      %v878 = vpop.f32.mrb[0].mxu0
      %879 = vmatprep.mubr.bf16.mxu0 0
      %880 = vmatmul.mubr.bf16.gmra.mrb[0].mxu0 %v732
      %v881 = vpop.f32.mrb[0].mxu0
      %v882 = vadd.f32 0.0, %v881
      %v883 = vpop.f32.mrb[0].mxu0
      %v884 = vpop.f32.mrb[0].mxu0
      %v885 = vadd.f32 0.0, %v884
      %v886 = vpop.f32.mrb[0].mxu0
      %887 = vmatprep.mubr.bf16.mxu0 0
      %888 = vmatmul.mubr.bf16.gmra.mrb[0].mxu0 %v735
      %v889 = vpop.f32.mrb[0].mxu0
      %v890 = vadd.f32 0.0, %v889
      %v891 = vpop.f32.mrb[0].mxu0
      %v892 = vpop.f32.mrb[0].mxu0
      %v893 = vadd.f32 0.0, %v892
      %v894 = vpop.f32.mrb[0].mxu0
      %895 = vmatprep.mubr.bf16.mxu0 0
      %896 = vmatmul.mubr.bf16.gmra.mrb[0].mxu0 %v738
      %v897 = vpop.f32.mrb[0].mxu0
      %v898 = vadd.f32 0.0, %v897
      %v899 = vpop.f32.mrb[0].mxu0
      %v900 = vpop.f32.mrb[0].mxu0
      %v901 = vadd.f32 0.0, %v900
      %v902 = vpop.f32.mrb[0].mxu0
      %903 = vmatprep.mubr.bf16.mxu0 0
      %904 = vmatmul.mubr.bf16.gmra.mrb[0].mxu0 %v741
      %v905 = vpop.f32.mrb[0].mxu0
      %v906 = vadd.f32 0.0, %v905
      %v907 = vpop.f32.mrb[0].mxu0
      %v908 = vpop.f32.mrb[0].mxu0
      %v909 = vadd.f32 0.0, %v908
      %v910 = vpop.f32.mrb[0].mxu0
      %911 = vmatprep.mubr.bf16.mxu0 0
      %912 = vmatmul.mubr.bf16.gmra.mrb[0].mxu0 %v744
      %v913 = vpop.f32.mrb[0].mxu0
      %v914 = vadd.f32 0.0, %v913
      %v915 = vpop.f32.mrb[0].mxu0
      %v916 = vpop.f32.mrb[0].mxu0
      %v917 = vadd.f32 0.0, %v916
      %v918 = vpop.f32.mrb[0].mxu0
      %919 = vmatprep.mubr.bf16.mxu0 0
      %920 = vmatmul.mubr.bf16.gmra.mrb[0].mxu0 %v747
      %v921 = vpop.f32.mrb[0].mxu0
      %v922 = vadd.f32 0.0, %v921
      %v923 = vpop.f32.mrb[0].mxu0
      %v924 = vpop.f32.mrb[0].mxu0
      %v925 = vadd.f32 0.0, %v924
      %v926 = vpop.f32.mrb[0].mxu0
      %927 = vmatprep.mubr.bf16.mxu0 0
      %928 = vmatmul.mubr.bf16.gmra.mrb[0].mxu0 %v750
      %v929 = vpop.f32.mrb[0].mxu0
      %v930 = vadd.f32 0.0, %v929
      %v931 = vpop.f32.mrb[0].mxu0
      %v932 = vpop.f32.mrb[0].mxu0
      %v933 = vadd.f32 0.0, %v932
      %v934 = vpop.f32.mrb[0].mxu0
      %935 = vmatprep.mubr.bf16.mxu0 0
      %936 = vmatmul.mubr.bf16.gmra.mrb[0].mxu0 %v753
      %v937 = vpop.f32.mrb[0].mxu0
      %v938 = vadd.f32 0.0, %v937
      %v939 = vpop.f32.mrb[0].mxu0
      %v940 = vpop.f32.mrb[0].mxu0
      %v941 = vadd.f32 0.0, %v940
      %v942 = vpop.f32.mrb[0].mxu0
      %943 = vmatprep.mubr.bf16.mxu0 0
      %944 = vmatmul.mubr.bf16.gmra.mrb[0].mxu0 %v756
      %v945 = vpop.f32.mrb[0].mxu0
      %v946 = vadd.f32 0.0, %v945
      %v947 = vpop.f32.mrb[0].mxu0
      %v948 = vpop.f32.mrb[0].mxu0
      %v949 = vadd.f32 0.0, %v948
      %v950 = vpop.f32.mrb[0].mxu0
      %951 = vmatprep.mubr.bf16.mxu0 0
      %952 = vmatmul.mubr.bf16.gmra.mrb[0].mxu0 %v759
      %v953 = vpop.f32.mrb[0].mxu0
      %v954 = vadd.f32 0.0, %v953
      %v955 = vpop.f32.mrb[0].mxu0
      %v956 = vpop.f32.mrb[0].mxu0
      %v957 = vadd.f32 0.0, %v956
      %v958 = vpop.f32.mrb[0].mxu0
      %959 = vmatprep.mubr.bf16.mxu0 0
      %960 = vmatmul.mubr.bf16.gmra.mrb[0].mxu0 %v762
      %v961 = vpop.f32.mrb[0].mxu0
      %v962 = vadd.f32 0.0, %v961
      %v963 = vpop.f32.mrb[0].mxu0
      %v964 = vpop.f32.mrb[0].mxu0
      %v965 = vadd.f32 0.0, %v964
      %v966 = vpop.f32.mrb[0].mxu0
      %967 = vmatprep.mubr.bf16.mxu0 0
      %968 = vmatmul.mubr.bf16.gmra.mrb[0].mxu0 %v765
      %v969 = vpop.f32.mrb[0].mxu0
      %v970 = vadd.f32 0.0, %v969
      %v971 = vpop.f32.mrb[0].mxu0
      %v972 = vpop.f32.mrb[0].mxu0
      %v973 = vadd.f32 0.0, %v972
      %v974 = vpop.f32.mrb[0].mxu0
      %975 = vmatprep.mubr.bf16.mxu0 0
      %976 = vmatmul.mubr.bf16.gmra.mrb[0].mxu0 %v768
      %v977 = vpop.f32.mrb[0].mxu0
      %v978 = vadd.f32 0.0, %v977
      %v979 = vpop.f32.mrb[0].mxu0
      %v980 = vpop.f32.mrb[0].mxu0
      %v981 = vadd.f32 0.0, %v980
      %v982 = vpop.f32.mrb[0].mxu0
      %983 = vmatprep.mubr.bf16.mxu0 0
      %984 = vmatmul.mubr.bf16.gmra.mrb[0].mxu0 %v771
      %v985 = vpop.f32.mrb[0].mxu0
      %v986 = vadd.f32 0.0, %v985
      %v987 = vpop.f32.mrb[0].mxu0
      %v988 = vpop.f32.mrb[0].mxu0
      %v989 = vadd.f32 0.0, %v988
      %v990 = vpop.f32.mrb[0].mxu0
      %991 = vmatprep.mubr.bf16.mxu0 0
      %992 = vmatmul.mubr.bf16.gmra.mrb[0].mxu0 %v774
      %v993 = vpop.f32.mrb[0].mxu0
      %v994 = vadd.f32 0.0, %v993
      %v995 = vpop.f32.mrb[0].mxu0
      %v996 = vpop.f32.mrb[0].mxu0
      %v997 = vadd.f32 0.0, %v996
      %v998 = vpop.f32.mrb[0].mxu0
      %999 = vmatprep.mubr.bf16.mxu0 0
      %1000 = vmatmul.mubr.bf16.gmra.mrb[0].mxu0 %v777
      %v1001 = vpop.f32.mrb[0].mxu0
      %v1002 = vadd.f32 0.0, %v1001
      %v1003 = vpop.f32.mrb[0].mxu0
      %v1004 = vpop.f32.mrb[0].mxu0
      %v1005 = vadd.f32 0.0, %v1004
      %v1006 = vpop.f32.mrb[0].mxu0
      %1007 = vmatprep.mubr.bf16.mxu0 0
      %1008 = vmatmul.mubr.bf16.gmra.mrb[0].mxu0 %v780
      %v1009 = vpop.f32.mrb[0].mxu0
      %v1010 = vadd.f32 0.0, %v1009
      %v1011 = vpop.f32.mrb[0].mxu0
      %v1012 = vpop.f32.mrb[0].mxu0
      %v1013 = vadd.f32 0.0, %v1012
      %v1014 = vpop.f32.mrb[0].mxu0
      %1015 = vmatprep.mubr.bf16.mxu0 0
      %1016 = vmatmul.mubr.bf16.gmra.mrb[0].mxu0 %v783
      %v1017 = vpop.f32.mrb[0].mxu0
      %v1018 = vadd.f32 0.0, %v1017
      %v1019 = vpop.f32.mrb[0].mxu0
      %v1020 = vpop.f32.mrb[0].mxu0
      %v1021 = vadd.f32 0.0, %v1020
      %v1022 = vpop.f32.mrb[0].mxu0
      %1023 = vmatprep.mubr.bf16.mxu0 0
      %1024 = vmatmul.mubr.bf16.gmra.mrb[0].mxu0 %v786
      %v1025 = vpop.f32.mrb[0].mxu0
      %v1026 = vadd.f32 0.0, %v1025
      %v1027 = vpop.f32.mrb[0].mxu0
      %v1028 = vpop.f32.mrb[0].mxu0
      %v1029 = vadd.f32 0.0, %v1028
      %v1030 = vpop.f32.mrb[0].mxu0
      %1031 = vmatprep.mubr.bf16.mxu0 0
      %1032 = vmatmul.mubr.bf16.gmra.mrb[0].mxu0 %v789
      %v1033 = vpop.f32.mrb[0].mxu0
      %v1034 = vadd.f32 0.0, %v1033
      %v1035 = vpop.f32.mrb[0].mxu0
      %v1036 = vpop.f32.mrb[0].mxu0
      %v1037 = vadd.f32 0.0, %v1036
      %v1038 = vpop.f32.mrb[0].mxu0
      %1039 = vmatprep.mubr.bf16.mxu0 0
      %1040 = vmatmul.mubr.bf16.gmra.mrb[0].mxu0 %v792
      %v1041 = vpop.f32.mrb[0].mxu0
      %v1042 = vadd.f32 0.0, %v1041
      %v1043 = vpop.f32.mrb[0].mxu0
      %v1044 = vpop.f32.mrb[0].mxu0
      %v1045 = vadd.f32 0.0, %v1044
      %v1046 = vpop.f32.mrb[0].mxu0
      %1047 = vmatprep.mubr.bf16.mxu0 0
      %1048 = vmatmul.mubr.bf16.gmra.mrb[0].mxu0 %v795
      %v1049 = vpop.f32.mrb[0].mxu0
      %v1050 = vadd.f32 0.0, %v1049
      %v1051 = vpop.f32.mrb[0].mxu0
      %v1052 = vpop.f32.mrb[0].mxu0
      %v1053 = vadd.f32 0.0, %v1052
      %v1054 = vpop.f32.mrb[0].mxu0
      %1055 = vmatprep.mubr.bf16.mxu0 0
      %1056 = vmatmul.mubr.bf16.gmra.mrb[0].mxu0 %v798
      %v1057 = vpop.f32.mrb[0].mxu0
      %v1058 = vadd.f32 0.0, %v1057
      %v1059 = vpop.f32.mrb[0].mxu0
      %v1060 = vpop.f32.mrb[0].mxu0
      %v1061 = vadd.f32 0.0, %v1060
      %v1062 = vpop.f32.mrb[0].mxu0
      %1063 = vmatprep.mubr.bf16.mxu0 0
      %1064 = vmatmul.mubr.bf16.gmra.mrb[0].mxu0 %v801
      %v1065 = vpop.f32.mrb[0].mxu0
      %v1066 = vadd.f32 0.0, %v1065
      %v1067 = vpop.f32.mrb[0].mxu0
      %v1068 = vpop.f32.mrb[0].mxu0
      %v1069 = vadd.f32 0.0, %v1068
      %v1070 = vpop.f32.mrb[0].mxu0
      %1071 = vmatprep.mubr.bf16.mxu0 0
      %1072 = vmatmul.mubr.bf16.gmra.mrb[0].mxu0 %v804
      %v1073 = vpop.f32.mrb[0].mxu0
      %v1074 = vadd.f32 0.0, %v1073
      %v1075 = vpop.f32.mrb[0].mxu0
      %v1076 = vpop.f32.mrb[0].mxu0
      %v1077 = vadd.f32 0.0, %v1076
      %v1078 = vpop.f32.mrb[0].mxu0
      %1079 = vmatprep.mubr.bf16.mxu0 0
      %1080 = vmatmul.mubr.bf16.gmra.mrb[0].mxu0 %v807
      %v1081 = vpop.f32.mrb[0].mxu0
      %v1082 = vadd.f32 0.0, %v1081
      %v1083 = vpop.f32.mrb[0].mxu0
      %v1084 = vpop.f32.mrb[0].mxu0
      %v1085 = vadd.f32 0.0, %v1084
      %v1086 = vpop.f32.mrb[0].mxu0
      %1087 = vmatprep.mubr.bf16.mxu0 0
      %1088 = vmatmul.mubr.bf16.gmra.mrb[0].mxu0 %v810
      %v1089 = vpop.f32.mrb[0].mxu0
      %v1090 = vadd.f32 0.0, %v1089
      %v1091 = vpop.f32.mrb[0].mxu0
      %v1092 = vpop.f32.mrb[0].mxu0
      %v1093 = vadd.f32 0.0, %v1092
      %v1094 = vpop.f32.mrb[0].mxu0
      %1095 = vmatprep.mubr.bf16.mxu0 0
      %1096 = vmatmul.mubr.bf16.gmra.mrb[0].mxu0 %v813
      %v1097 = vpop.f32.mrb[0].mxu0
      %v1098 = vadd.f32 0.0, %v1097
      %v1099 = vpop.f32.mrb[0].mxu0
      %v1100 = vpop.f32.mrb[0].mxu0
      %v1101 = vadd.f32 0.0, %v1100
      %v1102 = vpop.f32.mrb[0].mxu0
      %1103 = vdwg.mxu0
      %v1104 = vadd.f32 %v462, %v850
      %v1105 = vadd.f32 %v463, %v853
      %v1106 = vadd.f32 %v464, %v858
      %v1107 = vadd.f32 %v465, %v861
      %v1108 = vadd.f32 %v466, %v866
      %v1109 = vadd.f32 %v467, %v869
      %v1110 = vadd.f32 %v468, %v874
      %v1111 = vadd.f32 %v469, %v877
      %v1112 = vadd.f32 %v470, %v882
      %v1113 = vadd.f32 %v471, %v885
      %v1114 = vadd.f32 %v472, %v890
      %v1115 = vadd.f32 %v473, %v893
      %v1116 = vadd.f32 %v474, %v898
      %v1117 = vadd.f32 %v475, %v901
      %v1118 = vadd.f32 %v476, %v906
      %v1119 = vadd.f32 %v477, %v909
      %v1120 = vadd.f32 %v478, %v914
      %v1121 = vadd.f32 %v479, %v917
      %v1122 = vadd.f32 %v480, %v922
      %v1123 = vadd.f32 %v481, %v925
      %v1124 = vadd.f32 %v482, %v930
      %v1125 = vadd.f32 %v483, %v933
      %v1126 = vadd.f32 %v484, %v938
      %v1127 = vadd.f32 %v485, %v941
      %v1128 = vadd.f32 %v486, %v946
      %v1129 = vadd.f32 %v487, %v949
      %v1130 = vadd.f32 %v488, %v954
      %v1131 = vadd.f32 %v489, %v957
      %v1132 = vadd.f32 %v490, %v962
      %v1133 = vadd.f32 %v491, %v965
      %v1134 = vadd.f32 %v492, %v970
      %v1135 = vadd.f32 %v493, %v973
      %v1136 = vadd.f32 %v494, %v978
      %v1137 = vadd.f32 %v495, %v981
      %v1138 = vadd.f32 %v496, %v986
      %v1139 = vadd.f32 %v497, %v989
      %v1140 = vadd.f32 %v498, %v994
      %v1141 = vadd.f32 %v499, %v997
      %v1142 = vadd.f32 %v500, %v1002
      %v1143 = vadd.f32 %v501, %v1005
      %v1144 = vadd.f32 %v502, %v1010
      %v1145 = vadd.f32 %v503, %v1013
      %v1146 = vadd.f32 %v504, %v1018
      %v1147 = vadd.f32 %v505, %v1021
      %v1148 = vadd.f32 %v506, %v1026
      %v1149 = vadd.f32 %v507, %v1029
      %v1150 = vadd.f32 %v508, %v1034
      %v1151 = vadd.f32 %v509, %v1037
      %v1152 = vadd.f32 %v510, %v1042
      %v1153 = vadd.f32 %v511, %v1045
      %v1154 = vadd.f32 %v512, %v1050
      %v1155 = vadd.f32 %v513, %v1053
      %v1156 = vadd.f32 %v514, %v1058
      %v1157 = vadd.f32 %v515, %v1061
      %v1158 = vadd.f32 %v516, %v1066
      %v1159 = vadd.f32 %v517, %v1069
      %v1160 = vadd.f32 %v518, %v1074
      %v1161 = vadd.f32 %v519, %v1077
      %v1162 = vadd.f32 %v520, %v1082
      %v1163 = vadd.f32 %v521, %v1085
      %v1164 = vadd.f32 %v522, %v1090
      %v1165 = vadd.f32 %v523, %v1093
      %v1166 = vadd.f32 %v524, %v1098
      %v1167 = vadd.f32 %v525, %v1101
      %vm1168 = vcmask 15360
      %1169 = vst.msk [vmem:[#allocation2] sm:$0xff] %vm1168, %v1104
      %1170 = vst.msk [vmem:[#allocation2 + $0x8] sm:$0xff] %vm1168, %v1105
      %1171 = vst.msk [vmem:[#allocation2 + $0x10] sm:$0xff] %vm1168, %v1106
      %1172 = vst.msk [vmem:[#allocation2 + $0x18] sm:$0xff] %vm1168, %v1107
      %1173 = vst.msk [vmem:[#allocation2 + $0x20] sm:$0xff] %vm1168, %v1108
      %1174 = vst.msk [vmem:[#allocation2 + $0x28] sm:$0xff] %vm1168, %v1109
      %1175 = vst.msk [vmem:[#allocation2 + $0x30] sm:$0xff] %vm1168, %v1110
      %1176 = vst.msk [vmem:[#allocation2 + $0x38] sm:$0xff] %vm1168, %v1111
      %1177 = vst.msk [vmem:[#allocation2 + $0x40] sm:$0xff] %vm1168, %v1112
      %1178 = vst.msk [vmem:[#allocation2 + $0x48] sm:$0xff] %vm1168, %v1113
      %1179 = vst.msk [vmem:[#allocation2 + $0x50] sm:$0xff] %vm1168, %v1114
      %1180 = vst.msk [vmem:[#allocation2 + $0x58] sm:$0xff] %vm1168, %v1115
      %1181 = vst.msk [vmem:[#allocation2 + $0x60] sm:$0xff] %vm1168, %v1116
      %1182 = vst.msk [vmem:[#allocation2 + $0x68] sm:$0xff] %vm1168, %v1117
      %1183 = vst.msk [vmem:[#allocation2 + $0x70] sm:$0xff] %vm1168, %v1118
      %1184 = vst.msk [vmem:[#allocation2 + $0x78] sm:$0xff] %vm1168, %v1119
      %1185 = vst.msk [vmem:[#allocation2 + $0x80] sm:$0xff] %vm1168, %v1120
      %1186 = vst.msk [vmem:[#allocation2 + $0x88] sm:$0xff] %vm1168, %v1121
      %1187 = vst.msk [vmem:[#allocation2 + $0x90] sm:$0xff] %vm1168, %v1122
      %1188 = vst.msk [vmem:[#allocation2 + $0x98] sm:$0xff] %vm1168, %v1123
      %1189 = vst.msk [vmem:[#allocation2 + $0xa0] sm:$0xff] %vm1168, %v1124
      %1190 = vst.msk [vmem:[#allocation2 + $0xa8] sm:$0xff] %vm1168, %v1125
      %1191 = vst.msk [vmem:[#allocation2 + $0xb0] sm:$0xff] %vm1168, %v1126
      %1192 = vst.msk [vmem:[#allocation2 + $0xb8] sm:$0xff] %vm1168, %v1127
      %1193 = vst.msk [vmem:[#allocation2 + $0xc0] sm:$0xff] %vm1168, %v1128
      %1194 = vst.msk [vmem:[#allocation2 + $0xc8] sm:$0xff] %vm1168, %v1129
      %1195 = vst.msk [vmem:[#allocation2 + $0xd0] sm:$0xff] %vm1168, %v1130
      %1196 = vst.msk [vmem:[#allocation2 + $0xd8] sm:$0xff] %vm1168, %v1131
      %1197 = vst.msk [vmem:[#allocation2 + $0xe0] sm:$0xff] %vm1168, %v1132
      %1198 = vst.msk [vmem:[#allocation2 + $0xe8] sm:$0xff] %vm1168, %v1133
      %1199 = vst.msk [vmem:[#allocation2 + $0xf0] sm:$0xff] %vm1168, %v1134
      %1200 = vst.msk [vmem:[#allocation2 + $0xf8] sm:$0xff] %vm1168, %v1135
      %1201 = vst.msk [vmem:[#allocation2 + $0x100] sm:$0xff] %vm1168, %v1136
      %1202 = vst.msk [vmem:[#allocation2 + $0x108] sm:$0xff] %vm1168, %v1137
      %1203 = vst.msk [vmem:[#allocation2 + $0x110] sm:$0xff] %vm1168, %v1138
      %1204 = vst.msk [vmem:[#allocation2 + $0x118] sm:$0xff] %vm1168, %v1139
      %1205 = vst.msk [vmem:[#allocation2 + $0x120] sm:$0xff] %vm1168, %v1140
      %1206 = vst.msk [vmem:[#allocation2 + $0x128] sm:$0xff] %vm1168, %v1141
      %1207 = vst.msk [vmem:[#allocation2 + $0x130] sm:$0xff] %vm1168, %v1142
      %1208 = vst.msk [vmem:[#allocation2 + $0x138] sm:$0xff] %vm1168, %v1143
      %1209 = vst.msk [vmem:[#allocation2 + $0x140] sm:$0xff] %vm1168, %v1144
      %1210 = vst.msk [vmem:[#allocation2 + $0x148] sm:$0xff] %vm1168, %v1145
      %1211 = vst.msk [vmem:[#allocation2 + $0x150] sm:$0xff] %vm1168, %v1146
      %1212 = vst.msk [vmem:[#allocation2 + $0x158] sm:$0xff] %vm1168, %v1147
      %1213 = vst.msk [vmem:[#allocation2 + $0x160] sm:$0xff] %vm1168, %v1148
      %1214 = vst.msk [vmem:[#allocation2 + $0x168] sm:$0xff] %vm1168, %v1149
      %1215 = vst.msk [vmem:[#allocation2 + $0x170] sm:$0xff] %vm1168, %v1150
      %1216 = vst.msk [vmem:[#allocation2 + $0x178] sm:$0xff] %vm1168, %v1151
      %1217 = vst.msk [vmem:[#allocation2 + $0x180] sm:$0xff] %vm1168, %v1152
      %1218 = vst.msk [vmem:[#allocation2 + $0x188] sm:$0xff] %vm1168, %v1153
      %1219 = vst.msk [vmem:[#allocation2 + $0x190] sm:$0xff] %vm1168, %v1154
      %1220 = vst.msk [vmem:[#allocation2 + $0x198] sm:$0xff] %vm1168, %v1155
      %1221 = vst.msk [vmem:[#allocation2 + $0x1a0] sm:$0xff] %vm1168, %v1156
      %1222 = vst.msk [vmem:[#allocation2 + $0x1a8] sm:$0xff] %vm1168, %v1157
      %1223 = vst.msk [vmem:[#allocation2 + $0x1b0] sm:$0xff] %vm1168, %v1158
      %1224 = vst.msk [vmem:[#allocation2 + $0x1b8] sm:$0xff] %vm1168, %v1159
      %1225 = vst.msk [vmem:[#allocation2 + $0x1c0] sm:$0xff] %vm1168, %v1160
      %1226 = vst.msk [vmem:[#allocation2 + $0x1c8] sm:$0xff] %vm1168, %v1161
      %1227 = vst.msk [vmem:[#allocation2 + $0x1d0] sm:$0xff] %vm1168, %v1162
      %1228 = vst.msk [vmem:[#allocation2 + $0x1d8] sm:$0xff] %vm1168, %v1163
      %1229 = vst.msk [vmem:[#allocation2 + $0x1e0] sm:$0xff] %vm1168, %v1164
      %1230 = vst.msk [vmem:[#allocation2 + $0x1e8] sm:$0xff] %vm1168, %v1165
      %1231 = vst.msk [vmem:[#allocation2 + $0x1f0] sm:$0xff] %vm1168, %v1166
      %1232 = vst.msk [vmem:[#allocation2 + $0x1f8] sm:$0xff] %vm1168, %v1167
      // Predicated region
      $region37: #{_lambda_.33} parent=31 // pred_check
        %p1233 = pneg %p265
      $region38: #{_lambda_.33} parent=31 // pred_check_branch
        %1235 = sbr.rel (%p1233) target = $region40
      $region39: #{_lambda_.33} parent=31 // pred_region
        %v1236 = vld [vmem:[#allocation2] sm:$0xff]
        %v1237 = vld [vmem:[#allocation2 + $0x8] sm:$0xff]
        %v1238 = vld [vmem:[#allocation2 + $0x10] sm:$0xff]
        %v1239 = vld [vmem:[#allocation2 + $0x18] sm:$0xff]
        %v1240 = vld [vmem:[#allocation2 + $0x20] sm:$0xff]
        %v1241 = vld [vmem:[#allocation2 + $0x28] sm:$0xff]
        %v1242 = vld [vmem:[#allocation2 + $0x30] sm:$0xff]
        %v1243 = vld [vmem:[#allocation2 + $0x38] sm:$0xff]
        %v1244 = vld [vmem:[#allocation2 + $0x40] sm:$0xff]
        %v1245 = vld [vmem:[#allocation2 + $0x48] sm:$0xff]
        %v1246 = vld [vmem:[#allocation2 + $0x50] sm:$0xff]
        %v1247 = vld [vmem:[#allocation2 + $0x58] sm:$0xff]
        %v1248 = vld [vmem:[#allocation2 + $0x60] sm:$0xff]
        %v1249 = vld [vmem:[#allocation2 + $0x68] sm:$0xff]
        %v1250 = vld [vmem:[#allocation2 + $0x70] sm:$0xff]
        %v1251 = vld [vmem:[#allocation2 + $0x78] sm:$0xff]
        %v1252 = vld [vmem:[#allocation2 + $0x80] sm:$0xff]
        %v1253 = vld [vmem:[#allocation2 + $0x88] sm:$0xff]
        %v1254 = vld [vmem:[#allocation2 + $0x90] sm:$0xff]
        %v1255 = vld [vmem:[#allocation2 + $0x98] sm:$0xff]
        %v1256 = vld [vmem:[#allocation2 + $0xa0] sm:$0xff]
        %v1257 = vld [vmem:[#allocation2 + $0xa8] sm:$0xff]
        %v1258 = vld [vmem:[#allocation2 + $0xb0] sm:$0xff]
        %v1259 = vld [vmem:[#allocation2 + $0xb8] sm:$0xff]
        %v1260 = vld [vmem:[#allocation2 + $0xc0] sm:$0xff]
        %v1261 = vld [vmem:[#allocation2 + $0xc8] sm:$0xff]
        %v1262 = vld [vmem:[#allocation2 + $0xd0] sm:$0xff]
        %v1263 = vld [vmem:[#allocation2 + $0xd8] sm:$0xff]
        %v1264 = vld [vmem:[#allocation2 + $0xe0] sm:$0xff]
        %v1265 = vld [vmem:[#allocation2 + $0xe8] sm:$0xff]
        %v1266 = vld [vmem:[#allocation2 + $0xf0] sm:$0xff]
        %v1267 = vld [vmem:[#allocation2 + $0xf8] sm:$0xff]
        %v1268 = vld [vmem:[#allocation2 + $0x100] sm:$0xff]
        %v1269 = vld [vmem:[#allocation2 + $0x108] sm:$0xff]
        %v1270 = vld [vmem:[#allocation2 + $0x110] sm:$0xff]
        %v1271 = vld [vmem:[#allocation2 + $0x118] sm:$0xff]
        %v1272 = vld [vmem:[#allocation2 + $0x120] sm:$0xff]
        %v1273 = vld [vmem:[#allocation2 + $0x128] sm:$0xff]
        %v1274 = vld [vmem:[#allocation2 + $0x130] sm:$0xff]
        %v1275 = vld [vmem:[#allocation2 + $0x138] sm:$0xff]
        %v1276 = vld [vmem:[#allocation2 + $0x140] sm:$0xff]
        %v1277 = vld [vmem:[#allocation2 + $0x148] sm:$0xff]
        %v1278 = vld [vmem:[#allocation2 + $0x150] sm:$0xff]
        %v1279 = vld [vmem:[#allocation2 + $0x158] sm:$0xff]
        %v1280 = vld [vmem:[#allocation2 + $0x160] sm:$0xff]
        %v1281 = vld [vmem:[#allocation2 + $0x168] sm:$0xff]
        %v1282 = vld [vmem:[#allocation2 + $0x170] sm:$0xff]
        %v1283 = vld [vmem:[#allocation2 + $0x178] sm:$0xff]
        %v1284 = vld [vmem:[#allocation2 + $0x180] sm:$0xff]
        %v1285 = vld [vmem:[#allocation2 + $0x188] sm:$0xff]
        %v1286 = vld [vmem:[#allocation2 + $0x190] sm:$0xff]
        %v1287 = vld [vmem:[#allocation2 + $0x198] sm:$0xff]
        %v1288 = vld [vmem:[#allocation2 + $0x1a0] sm:$0xff]
        %v1289 = vld [vmem:[#allocation2 + $0x1a8] sm:$0xff]
        %v1290 = vld [vmem:[#allocation2 + $0x1b0] sm:$0xff]
        %v1291 = vld [vmem:[#allocation2 + $0x1b8] sm:$0xff]
        %v1292 = vld [vmem:[#allocation2 + $0x1c0] sm:$0xff]
        %v1293 = vld [vmem:[#allocation2 + $0x1c8] sm:$0xff]
        %v1294 = vld [vmem:[#allocation2 + $0x1d0] sm:$0xff]
        %v1295 = vld [vmem:[#allocation2 + $0x1d8] sm:$0xff]
        %v1296 = vld [vmem:[#allocation2 + $0x1e0] sm:$0xff]
        %v1297 = vld [vmem:[#allocation2 + $0x1e8] sm:$0xff]
        %v1298 = vld [vmem:[#allocation2 + $0x1f0] sm:$0xff]
        %v1299 = vld [vmem:[#allocation2 + $0x1f8] sm:$0xff]
        %v1300 = vld [vmem:[%s2] sm:$0x1]
        %v1302 = vlaneseq
        %v1303 = vshrl.u32 %v1302, 7
        %v1304 = vsub.s32 0, %v1303
        %v1305 = vrot.slane %v1300, %v1304
        %v1307 = vadd.f32 %v1236, %v1305
        %v1308 = vadd.f32 %v1237, %v1305
        %v1309 = vadd.f32 %v1238, %v1305
        %v1310 = vadd.f32 %v1239, %v1305
        %v1311 = vadd.f32 %v1240, %v1305
        %v1312 = vadd.f32 %v1241, %v1305
        %v1313 = vadd.f32 %v1242, %v1305
        %v1314 = vadd.f32 %v1243, %v1305
        %v1315 = vadd.f32 %v1244, %v1305
        %v1316 = vadd.f32 %v1245, %v1305
        %v1317 = vadd.f32 %v1246, %v1305
        %v1318 = vadd.f32 %v1247, %v1305
        %v1319 = vadd.f32 %v1248, %v1305
        %v1320 = vadd.f32 %v1249, %v1305
        %v1321 = vadd.f32 %v1250, %v1305
        %v1322 = vadd.f32 %v1251, %v1305
        %v1323 = vadd.f32 %v1252, %v1305
        %v1324 = vadd.f32 %v1253, %v1305
        %v1325 = vadd.f32 %v1254, %v1305
        %v1326 = vadd.f32 %v1255, %v1305
        %v1327 = vadd.f32 %v1256, %v1305
        %v1328 = vadd.f32 %v1257, %v1305
        %v1329 = vadd.f32 %v1258, %v1305
        %v1330 = vadd.f32 %v1259, %v1305
        %v1331 = vadd.f32 %v1260, %v1305
        %v1332 = vadd.f32 %v1261, %v1305
        %v1333 = vadd.f32 %v1262, %v1305
        %v1334 = vadd.f32 %v1263, %v1305
        %v1335 = vadd.f32 %v1264, %v1305
        %v1336 = vadd.f32 %v1265, %v1305
        %v1337 = vadd.f32 %v1266, %v1305
        %v1338 = vadd.f32 %v1267, %v1305
        %v1339 = vadd.f32 %v1268, %v1305
        %v1340 = vadd.f32 %v1269, %v1305
        %v1341 = vadd.f32 %v1270, %v1305
        %v1342 = vadd.f32 %v1271, %v1305
        %v1343 = vadd.f32 %v1272, %v1305
        %v1344 = vadd.f32 %v1273, %v1305
        %v1345 = vadd.f32 %v1274, %v1305
        %v1346 = vadd.f32 %v1275, %v1305
        %v1347 = vadd.f32 %v1276, %v1305
        %v1348 = vadd.f32 %v1277, %v1305
        %v1349 = vadd.f32 %v1278, %v1305
        %v1350 = vadd.f32 %v1279, %v1305
        %v1351 = vadd.f32 %v1280, %v1305
        %v1352 = vadd.f32 %v1281, %v1305
        %v1353 = vadd.f32 %v1282, %v1305
        %v1354 = vadd.f32 %v1283, %v1305
        %v1355 = vadd.f32 %v1284, %v1305
        %v1356 = vadd.f32 %v1285, %v1305
        %v1357 = vadd.f32 %v1286, %v1305
        %v1358 = vadd.f32 %v1287, %v1305
        %v1359 = vadd.f32 %v1288, %v1305
        %v1360 = vadd.f32 %v1289, %v1305
        %v1361 = vadd.f32 %v1290, %v1305
        %v1362 = vadd.f32 %v1291, %v1305
        %v1363 = vadd.f32 %v1292, %v1305
        %v1364 = vadd.f32 %v1293, %v1305
        %v1365 = vadd.f32 %v1294, %v1305
        %v1366 = vadd.f32 %v1295, %v1305
        %v1367 = vadd.f32 %v1296, %v1305
        %v1368 = vadd.f32 %v1297, %v1305
        %v1369 = vadd.f32 %v1298, %v1305
        %v1370 = vadd.f32 %v1299, %v1305
        %v1371 = vtanh.pop %v1307
        %v1372 = vtanh.pop %v1308
        %v1373 = vtanh.pop %v1309
        %v1374 = vtanh.pop %v1310
        %v1375 = vtanh.pop %v1311
        %v1376 = vtanh.pop %v1312
        %v1377 = vtanh.pop %v1313
        %v1378 = vtanh.pop %v1314
        %v1379 = vtanh.pop %v1315
        %v1380 = vtanh.pop %v1316
        %v1381 = vtanh.pop %v1317
        %v1382 = vtanh.pop %v1318
        %v1383 = vtanh.pop %v1319
        %v1384 = vtanh.pop %v1320
        %v1385 = vtanh.pop %v1321
        %v1386 = vtanh.pop %v1322
        %v1387 = vtanh.pop %v1323
        %v1388 = vtanh.pop %v1324
        %v1389 = vtanh.pop %v1325
        %v1390 = vtanh.pop %v1326
        %v1391 = vtanh.pop %v1327
        %v1392 = vtanh.pop %v1328
        %v1393 = vtanh.pop %v1329
        %v1394 = vtanh.pop %v1330
        %v1395 = vtanh.pop %v1331
        %v1396 = vtanh.pop %v1332
        %v1397 = vtanh.pop %v1333
        %v1398 = vtanh.pop %v1334
        %v1399 = vtanh.pop %v1335
        %v1400 = vtanh.pop %v1336
        %v1401 = vtanh.pop %v1337
        %v1402 = vtanh.pop %v1338
        %v1403 = vtanh.pop %v1339
        %v1404 = vtanh.pop %v1340
        %v1405 = vtanh.pop %v1341
        %v1406 = vtanh.pop %v1342
        %v1407 = vtanh.pop %v1343
        %v1408 = vtanh.pop %v1344
        %v1409 = vtanh.pop %v1345
        %v1410 = vtanh.pop %v1346
        %v1411 = vtanh.pop %v1347
        %v1412 = vtanh.pop %v1348
        %v1413 = vtanh.pop %v1349
        %v1414 = vtanh.pop %v1350
        %v1415 = vtanh.pop %v1351
        %v1416 = vtanh.pop %v1352
        %v1417 = vtanh.pop %v1353
        %v1418 = vtanh.pop %v1354
        %v1419 = vtanh.pop %v1355
        %v1420 = vtanh.pop %v1356
        %v1421 = vtanh.pop %v1357
        %v1422 = vtanh.pop %v1358
        %v1423 = vtanh.pop %v1359
        %v1424 = vtanh.pop %v1360
        %v1425 = vtanh.pop %v1361
        %v1426 = vtanh.pop %v1362
        %v1427 = vtanh.pop %v1363
        %v1428 = vtanh.pop %v1364
        %v1429 = vtanh.pop %v1365
        %v1430 = vtanh.pop %v1366
        %v1431 = vtanh.pop %v1367
        %v1432 = vtanh.pop %v1368
        %v1433 = vtanh.pop %v1369
        %v1434 = vtanh.pop %v1370
        %1435 = vst.msk [vmem:[%s262] sm:$0xff] %vm1168, %v1371
        %1436 = vst.msk [vmem:[%s262 + $0x8] sm:$0xff] %vm1168, %v1372
        %1437 = vst.msk [vmem:[%s262 + $0x10] sm:$0xff] %vm1168, %v1373
        %1438 = vst.msk [vmem:[%s262 + $0x18] sm:$0xff] %vm1168, %v1374
        %1439 = vst.msk [vmem:[%s262 + $0x20] sm:$0xff] %vm1168, %v1375
        %1440 = vst.msk [vmem:[%s262 + $0x28] sm:$0xff] %vm1168, %v1376
        %1441 = vst.msk [vmem:[%s262 + $0x30] sm:$0xff] %vm1168, %v1377
        %1442 = vst.msk [vmem:[%s262 + $0x38] sm:$0xff] %vm1168, %v1378
        %1443 = vst.msk [vmem:[%s262 + $0x40] sm:$0xff] %vm1168, %v1379
        %1444 = vst.msk [vmem:[%s262 + $0x48] sm:$0xff] %vm1168, %v1380
        %1445 = vst.msk [vmem:[%s262 + $0x50] sm:$0xff] %vm1168, %v1381
        %1446 = vst.msk [vmem:[%s262 + $0x58] sm:$0xff] %vm1168, %v1382
        %1447 = vst.msk [vmem:[%s262 + $0x60] sm:$0xff] %vm1168, %v1383
        %1448 = vst.msk [vmem:[%s262 + $0x68] sm:$0xff] %vm1168, %v1384
        %1449 = vst.msk [vmem:[%s262 + $0x70] sm:$0xff] %vm1168, %v1385
        %1450 = vst.msk [vmem:[%s262 + $0x78] sm:$0xff] %vm1168, %v1386
        %1451 = vst.msk [vmem:[%s262 + $0x80] sm:$0xff] %vm1168, %v1387
        %1452 = vst.msk [vmem:[%s262 + $0x88] sm:$0xff] %vm1168, %v1388
        %1453 = vst.msk [vmem:[%s262 + $0x90] sm:$0xff] %vm1168, %v1389
        %1454 = vst.msk [vmem:[%s262 + $0x98] sm:$0xff] %vm1168, %v1390
        %1455 = vst.msk [vmem:[%s262 + $0xa0] sm:$0xff] %vm1168, %v1391
        %1456 = vst.msk [vmem:[%s262 + $0xa8] sm:$0xff] %vm1168, %v1392
        %1457 = vst.msk [vmem:[%s262 + $0xb0] sm:$0xff] %vm1168, %v1393
        %1458 = vst.msk [vmem:[%s262 + $0xb8] sm:$0xff] %vm1168, %v1394
        %1459 = vst.msk [vmem:[%s262 + $0xc0] sm:$0xff] %vm1168, %v1395
        %1460 = vst.msk [vmem:[%s262 + $0xc8] sm:$0xff] %vm1168, %v1396
        %1461 = vst.msk [vmem:[%s262 + $0xd0] sm:$0xff] %vm1168, %v1397
        %1462 = vst.msk [vmem:[%s262 + $0xd8] sm:$0xff] %vm1168, %v1398
        %1463 = vst.msk [vmem:[%s262 + $0xe0] sm:$0xff] %vm1168, %v1399
        %1464 = vst.msk [vmem:[%s262 + $0xe8] sm:$0xff] %vm1168, %v1400
        %1465 = vst.msk [vmem:[%s262 + $0xf0] sm:$0xff] %vm1168, %v1401
        %1466 = vst.msk [vmem:[%s262 + $0xf8] sm:$0xff] %vm1168, %v1402
        %1467 = vst.msk [vmem:[%s262 + $0x100] sm:$0xff] %vm1168, %v1403
        %1468 = vst.msk [vmem:[%s262 + $0x108] sm:$0xff] %vm1168, %v1404
        %1469 = vst.msk [vmem:[%s262 + $0x110] sm:$0xff] %vm1168, %v1405
        %1470 = vst.msk [vmem:[%s262 + $0x118] sm:$0xff] %vm1168, %v1406
        %1471 = vst.msk [vmem:[%s262 + $0x120] sm:$0xff] %vm1168, %v1407
        %1472 = vst.msk [vmem:[%s262 + $0x128] sm:$0xff] %vm1168, %v1408
        %1473 = vst.msk [vmem:[%s262 + $0x130] sm:$0xff] %vm1168, %v1409
        %1474 = vst.msk [vmem:[%s262 + $0x138] sm:$0xff] %vm1168, %v1410
        %1475 = vst.msk [vmem:[%s262 + $0x140] sm:$0xff] %vm1168, %v1411
        %1476 = vst.msk [vmem:[%s262 + $0x148] sm:$0xff] %vm1168, %v1412
        %1477 = vst.msk [vmem:[%s262 + $0x150] sm:$0xff] %vm1168, %v1413
        %1478 = vst.msk [vmem:[%s262 + $0x158] sm:$0xff] %vm1168, %v1414
        %1479 = vst.msk [vmem:[%s262 + $0x160] sm:$0xff] %vm1168, %v1415
        %1480 = vst.msk [vmem:[%s262 + $0x168] sm:$0xff] %vm1168, %v1416
        %1481 = vst.msk [vmem:[%s262 + $0x170] sm:$0xff] %vm1168, %v1417
        %1482 = vst.msk [vmem:[%s262 + $0x178] sm:$0xff] %vm1168, %v1418
        %1483 = vst.msk [vmem:[%s262 + $0x180] sm:$0xff] %vm1168, %v1419
        %1484 = vst.msk [vmem:[%s262 + $0x188] sm:$0xff] %vm1168, %v1420
        %1485 = vst.msk [vmem:[%s262 + $0x190] sm:$0xff] %vm1168, %v1421
        %1486 = vst.msk [vmem:[%s262 + $0x198] sm:$0xff] %vm1168, %v1422
        %1487 = vst.msk [vmem:[%s262 + $0x1a0] sm:$0xff] %vm1168, %v1423
        %1488 = vst.msk [vmem:[%s262 + $0x1a8] sm:$0xff] %vm1168, %v1424
        %1489 = vst.msk [vmem:[%s262 + $0x1b0] sm:$0xff] %vm1168, %v1425
        %1490 = vst.msk [vmem:[%s262 + $0x1b8] sm:$0xff] %vm1168, %v1426
        %1491 = vst.msk [vmem:[%s262 + $0x1c0] sm:$0xff] %vm1168, %v1427
        %1492 = vst.msk [vmem:[%s262 + $0x1c8] sm:$0xff] %vm1168, %v1428
        %1493 = vst.msk [vmem:[%s262 + $0x1d0] sm:$0xff] %vm1168, %v1429
        %1494 = vst.msk [vmem:[%s262 + $0x1d8] sm:$0xff] %vm1168, %v1430
        %1495 = vst.msk [vmem:[%s262 + $0x1e0] sm:$0xff] %vm1168, %v1431
        %1496 = vst.msk [vmem:[%s262 + $0x1e8] sm:$0xff] %vm1168, %v1432
        %1497 = vst.msk [vmem:[%s262 + $0x1f0] sm:$0xff] %vm1168, %v1433
        %1498 = vst.msk [vmem:[%s262 + $0x1f8] sm:$0xff] %vm1168, %v1434
      $region40: #{_lambda_.33} parent=31 // pred_fallthru
        _
      %s1499 = smul.u32 64, %s20
      %p1500 = scmp.lt.s32.totalorder %s19, 3
      %s1501 = scalar_select %p1500, %s19, 3
      %p1502 = scmp.lt.s32.totalorder %s1499, 63
      %s1503 = scalar_select %p1502, %s1499, 63
      %s1504 = smul.addr %s1501, 64
      %s1505 = sadd.s32 %s1503, %s1504
      %s1506 = smul.addr %s1505, 8
      %s1507 = scalar_lea.vmem %s3, %s1506
      // Predicated region
      $region41: #{_lambda_.33} parent=31 // pred_check
        %p1508 = pneg %p132
      $region42: #{_lambda_.33} parent=31 // pred_check_branch
        %1510 = sbr.rel (%p1508) target = $region44
      $region43: #{_lambda_.33} parent=31 // pred_region
        %s1511 = smul.u32 64, %s20
      $region44: #{_lambda_.33} parent=31 // pred_fallthru
        _
    $region32: #{_lambda_.33} parent=5 // pred_fallthru
      _
    %p1512 = scmp.le.s32.totalorder 2, %s9
    // Predicated region
    $region45: #{_lambda_.33} parent=5 // pred_check
      %p1513 = pneg %p1512
    $region46: #{_lambda_.33} parent=5 // pred_check_branch
      %1515 = sbr.rel (%p1513) target = $region48
    $region47: #{_lambda_.33} parent=5 // pred_region
      %s1516 = ssub.s32 %s9, 2
      // Predicated region
      $region49: #{_lambda_.33} parent=47 // pred_check
        %p1517 = pneg %p138
      $region50: #{_lambda_.33} parent=47 // pred_check_branch
        %1519 = sbr.rel (%p1517) target = $region52
      $region51: #{_lambda_.33} parent=47 // pred_region
        %s1520 = smul.u32 64, %s23
        %p1521 = scmp.lt.s32.totalorder %s22, 3
        %s1522 = scalar_select %p1521, %s22, 3
        %p1523 = scmp.lt.s32.totalorder %s1520, 63
        %s1524 = scalar_select %p1523, %s1520, 63
        %s1525 = smul.addr %s1522, 64
        %s1526 = sadd.s32 %s1524, %s1525
        %s1527 = smul.addr %s1526, 8
        %s1528 = scalar_lea.vmem %s3, %s1527
      $region52: #{_lambda_.33} parent=47 // pred_fallthru
        _
    $region48: #{_lambda_.33} parent=5 // pred_fallthru
      _
  $region6: #{_lambda_.33} parent=0 // loop_footer
    %s13 = sadd.s32 1, %s9
  $region7: #{_lambda_.33} parent=0 // loop_footer_branch
    %8 = sbr.rel target = $region3
  $region8: #{_lambda_.33} parent=0 // loop_exit
    _

</llo_original>
